<compile_context>
chip_gen: v5e
topology: v5e:2x2
jax: 0.10.0
libtpu: 0.0.40
codegen_flags: <defaults>
</compile_context>

<pallas_src>
import jax
import jax.numpy as jnp
import numpy as np
from jax import lax
from jax.experimental import pallas as pl
from jax.experimental.pallas import tpu as pltpu

C1, C2, K = 8, 32, 5
H_IN = W_IN = 28
H1 = H_IN - K + 1        # 24 : conv1 output size
HP1 = H1 // 2            # 12 : after maxpool(2,2)
H2 = HP1 - K + 1         # 8  : conv2 output size
HP2 = H2 // 2            # 4  : after maxpool(2,2)

NB = 128                 # images per grid step (lane dimension); multiple of 128


def net_kernel(x_ref, w1_ref, b1_ref, w2_ref, b2_ref, wf_ref, bf_ref, o_ref,
               pool1_ref):
    f32 = jnp.float32
    nb = x_ref.shape[-1] // W_IN          # images in this block (lane width / 28)

    # Parameters, loaded once (hoisted out of all loops).
    w1 = w1_ref[...]                      # (25, 8, 1)  [tap, cout, 1]
    b1 = b1_ref[...]                      # (8, 1)
    w2 = w2_ref[...]                      # (32, 200)   [cout, (ki,kj,cin)]
    b2 = b2_ref[...]                      # (32, 1)

    # ---------- conv1 (1->8, valid 5x5) + bias + relu (VPU, lane dense) -------
    # Layout: conv rows on the leading dim, conv1 output channels on sublanes,
    # (column, image) folded onto lanes as j*nb + b.
    def conv1_row(r):                      # r: conv1 output row (traced scalar)
        acc = None
        for ki in range(K):
            xrow = x_ref[0, r + ki, :, :]                     # (8, 28*nb)
            for kj in range(K):
                xs = xrow[:, kj * nb:(kj + H1) * nb]          # (8, 24*nb)
                term = w1[ki * K + kj] * xs                   # per-cout scalar
                acc = term if acc is None else acc + term
        return jnp.maximum(acc + b1, 0.0)                     # (8, 24*nb)

    # ---------- maxpool 2x2 / 2 -> pooled rows into VMEM scratch --------------
    def pool1_body(i, carry):
        r = jnp.maximum(conv1_row(2 * i), conv1_row(2 * i + 1))   # (8, 24*nb)
        cols = [jnp.maximum(r[:, (2 * j) * nb:(2 * j + 1) * nb],
                            r[:, (2 * j + 1) * nb:(2 * j + 2) * nb])
                for j in range(HP1)]
        pool1_ref[i, :, :] = jnp.concatenate(cols, axis=-1)       # (8, 12*nb)
        return carry

    lax.fori_loop(0, HP1, pool1_body, 0)

    # ---------- conv2 (8->32, valid 5x5) on the MXU + bias + relu -------------
    # One matmul per output row: (32, 200) @ (200, 8*nb); the im2col patch is a
    # sublane-tile-aligned concat of 25 (8, 8*nb) windows (no data reshuffle).
    def conv2_row(i):                      # i: conv2 output row (static int)
        pieces = []
        for ki in range(K):
            prow = pool1_ref[i + ki, :, :]                      # (8, 12*nb)
            for kj in range(K):
                pieces.append(prow[:, kj * nb:(kj + H2) * nb])  # (8, 8*nb)
        patch = jnp.concatenate(pieces, axis=0)                 # (200, 8*nb)
        acc = jnp.dot(w2, patch, preferred_element_type=f32)    # (32, 8*nb)
        return jnp.maximum(acc + b2, 0.0)

    # ---------- maxpool 2x2 / 2 (-> 4x4) fused with avgpool 4x4 (-> 1x1) ------
    feat = jnp.zeros((C2, nb), f32)
    for i2 in range(HP2):
        rmax = jnp.maximum(conv2_row(2 * i2), conv2_row(2 * i2 + 1))  # (32, 8*nb)
        for j2 in range(HP2):
            a = rmax[:, (2 * j2) * nb:(2 * j2 + 1) * nb]              # (32, nb)
            b_ = rmax[:, (2 * j2 + 1) * nb:(2 * j2 + 2) * nb]
            feat = feat + jnp.maximum(a, b_)
    feat = feat * (1.0 / 16.0)                                        # (32, nb)

    # ---------- fc: y = W @ feat + b  (lane-dense (out_dim, nb) store) --------
    y = jnp.dot(wf_ref[...], feat, preferred_element_type=f32) + bf_ref[...]
    o_ref[...] = y.astype(o_ref.dtype)                                # (out, nb)


def net_forward(x_nchw, params, block=NB):
    """x_nchw: (B, 1, 28, 28) float32 (NCHW, like PyTorch). Returns (B, out)."""
    w1, b1, w2, b2, wf, bf = params
    B = x_nchw.shape[0]
    out_dim = wf.shape[0]
    nb = block
    n_blk = (B + nb - 1) // nb
    B_pad = n_blk * nb

    x = x_nchw[:, 0, :, :]                                    # (B, 28, 28)
    if B_pad != B:
        x = jnp.pad(x, ((0, B_pad - B), (0, 0), (0, 0)))

    # Layout plumbing (plain XLA, tiny arrays): batch folded onto lanes and the
    # image replicated across the 8 conv1-output-channel sublanes so every
    # in-kernel FMA operand is already dense (no in-kernel broadcasts).
    xk = x.reshape(n_blk, nb, H_IN, W_IN).transpose(0, 2, 3, 1)   # (nblk,28,28,nb)
    xk = xk.reshape(n_blk, H_IN, 1, W_IN * nb)
    xk = jnp.broadcast_to(xk, (n_blk, H_IN, C1, W_IN * nb))

    w1k = w1.reshape(C1, K * K).T.reshape(K * K, C1, 1)           # (25, 8, 1)
    b1k = b1.reshape(C1, 1)
    w2k = w2.transpose(0, 2, 3, 1).reshape(C2, C1 * K * K)        # (32, 200)
    b2k = b2.reshape(C2, 1)
    bfk = bf.reshape(out_dim, 1)

    flops = B_pad * (2 * C1 * H1 * H1 * K * K            # conv1
                     + 2 * C2 * H2 * H2 * C1 * K * K     # conv2
                     + 2 * out_dim * C2)                 # fc
    bytes_accessed = (B_pad * (H_IN * W_IN * C1 + out_dim) * 4
                      + n_blk * 4 * (K * K * C1 + C1 + C2 * C1 * K * K + C2
                                     + out_dim * C2 + out_dim))

    yt = pl.pallas_call(
        net_kernel,
        out_shape=jax.ShapeDtypeStruct((out_dim, B_pad), jnp.float32),
        grid_spec=pltpu.PrefetchScalarGridSpec(
            num_scalar_prefetch=0,
            grid=(n_blk,),
            in_specs=[
                pl.BlockSpec((1, H_IN, C1, W_IN * nb), lambda g: (g, 0, 0, 0)),  # x
                pl.BlockSpec((K * K, C1, 1), lambda g: (0, 0, 0)),               # w1
                pl.BlockSpec((C1, 1), lambda g: (0, 0)),                         # b1
                pl.BlockSpec((C2, C1 * K * K), lambda g: (0, 0)),                # w2
                pl.BlockSpec((C2, 1), lambda g: (0, 0)),                         # b2
                pl.BlockSpec((out_dim, C2), lambda g: (0, 0)),                   # fc W
                pl.BlockSpec((out_dim, 1), lambda g: (0, 0)),                    # fc b
            ],
            out_specs=pl.BlockSpec((out_dim, nb), lambda g: (0, g)),
            scratch_shapes=[pltpu.VMEM((HP1, C1, HP1 * nb), jnp.float32)],
        ),
        compiler_params=pltpu.CompilerParams(
            dimension_semantics=("parallel",),
            vmem_limit_bytes=48 * 1024 * 1024),
        cost_estimate=pl.CostEstimate(flops=flops, transcendentals=0,
                                      bytes_accessed=bytes_accessed),
    )(xk, w1k, b1k, w2k, b2k, wf, bfk)
    return yt.T[:B]


def init_params(key, out_dim):
    """Deterministic synthetic parameters (shapes match the torch module)."""
    k1, k2, k3, k4, k5, k6 = jax.random.split(key, 6)
    w1 = jax.random.normal(k1, (C1, 1, K, K), jnp.float32) * 0.10
    b1 = jax.random.normal(k2, (C1,), jnp.float32) * 0.10
    w2 = jax.random.normal(k3, (C2, C1, K, K), jnp.float32) * 0.05
    b2 = jax.random.normal(k4, (C2,), jnp.float32) * 0.05
    wf = jax.random.normal(k5, (out_dim, C2), jnp.float32) * 0.10
    bf = jax.random.normal(k6, (out_dim,), jnp.float32) * 0.10
    return (w1, b1, w2, b2, wf, bf)


def net_reference(x_nchw, params):
    """Pure-JAX reference replicating the PyTorch forward exactly."""
    w1, b1, w2, b2, wf, bf = params
    dn = ('NCHW', 'OIHW', 'NCHW')
    hp = lax.Precision.HIGHEST
    y = lax.conv_general_dilated(x_nchw, w1, (1, 1), 'VALID',
                                 dimension_numbers=dn, precision=hp)
    y = jax.nn.relu(y + b1.reshape(1, C1, 1, 1))
    y = lax.reduce_window(y, -jnp.inf, lax.max, (1, 1, 2, 2), (1, 1, 2, 2), 'VALID')
    y = lax.conv_general_dilated(y, w2, (1, 1), 'VALID', dimension_numbers=dn,
                                 precision=hp)
    y = jax.nn.relu(y + b2.reshape(1, C2, 1, 1))
    y = lax.reduce_window(y, -jnp.inf, lax.max, (1, 1, 2, 2), (1, 1, 2, 2), 'VALID')
    y = lax.reduce_window(y, 0.0, lax.add, (1, 1, 4, 4), (1, 1, 4, 4), 'VALID') / 16.0
    y = y.reshape(-1, C2)
    return y @ wf.T + bf


if __name__ == "__main__":
    # 256 images = 2 lane-dense blocks of 128 (2 parallel grid steps).
    B, out_dim = 256, 10
    key = jax.random.PRNGKey(0)
    kx, kp = jax.random.split(key)
    x = jax.random.normal(kx, (B, 1, H_IN, W_IN), jnp.float32)
    params = init_params(kp, out_dim)

    fwd = jax.jit(net_forward)
    y = jax.block_until_ready(fwd(x, params))
    assert y.shape == (B, out_dim) and y.dtype == jnp.float32

    y_ref = net_reference(x, params)
    np.testing.assert_allclose(np.asarray(y), np.asarray(y_ref), rtol=1e-2, atol=1e-2)

    print("KERNEL_OK")
</pallas_src>

<mosaic_0001>
module attributes {stable_mosaic.version = 11 : i64} {
  func.func @net_kernel(%arg0: i32, %arg1: memref<1x28x8x3584xf32, #tpu.memory_space<vmem>>, %arg2: memref<25x8x1xf32, #tpu.memory_space<vmem>>, %arg3: memref<8x1xf32, #tpu.memory_space<vmem>>, %arg4: memref<32x200xf32, #tpu.memory_space<vmem>>, %arg5: memref<32x1xf32, #tpu.memory_space<vmem>>, %arg6: memref<10x32xf32, #tpu.memory_space<vmem>>, %arg7: memref<10x1xf32, #tpu.memory_space<vmem>>, %arg8: memref<10x128xf32, #tpu.memory_space<vmem>>, %arg9: memref<12x8x1536xf32, #tpu.memory_space<vmem>>) attributes {dimension_semantics = [#tpu.dimension_semantics<parallel>], iteration_bounds = array<i64: 2>, scalar_prefetch = 0 : i64, scratch_operands = 1 : i64, tpu.core_type = #tpu.core_type<tc>, window_params = [{transform_indices = @transform_0, window_bounds = array<i64: 1, 28, 8, 3584>}, {pipeline_mode = #tpu.pipeline_mode<synchronous>, transform_indices = @transform_1, window_bounds = array<i64: 25, 8, 1>}, {pipeline_mode = #tpu.pipeline_mode<synchronous>, transform_indices = @transform_2, window_bounds = array<i64: 8, 1>}, {pipeline_mode = #tpu.pipeline_mode<synchronous>, transform_indices = @transform_3, window_bounds = array<i64: 32, 200>}, {pipeline_mode = #tpu.pipeline_mode<synchronous>, transform_indices = @transform_4, window_bounds = array<i64: 32, 1>}, {pipeline_mode = #tpu.pipeline_mode<synchronous>, transform_indices = @transform_5, window_bounds = array<i64: 10, 32>}, {pipeline_mode = #tpu.pipeline_mode<synchronous>, transform_indices = @transform_6, window_bounds = array<i64: 10, 1>}, {transform_indices = @transform_7, window_bounds = array<i64: 10, 128>}]} {
    %c0 = arith.constant 0 : index
    %c0_0 = arith.constant 0 : index
    %c0_1 = arith.constant 0 : index
    %0 = vector.load %arg2[%c0, %c0_0, %c0_1] : memref<25x8x1xf32, #tpu.memory_space<vmem>>, vector<25x8x1xf32>
    %c0_2 = arith.constant 0 : index
    %c0_3 = arith.constant 0 : index
    %1 = vector.load %arg3[%c0_2, %c0_3] : memref<8x1xf32, #tpu.memory_space<vmem>>, vector<8x1xf32>
    %c0_4 = arith.constant 0 : index
    %c0_5 = arith.constant 0 : index
    %2 = vector.load %arg4[%c0_4, %c0_5] : memref<32x200xf32, #tpu.memory_space<vmem>>, vector<32x200xf32>
    %c0_6 = arith.constant 0 : index
    %c0_7 = arith.constant 0 : index
    %3 = vector.load %arg5[%c0_6, %c0_7] : memref<32x1xf32, #tpu.memory_space<vmem>>, vector<32x1xf32>
    %c0_i32 = arith.constant 0 : i32
    %c12_i32 = arith.constant 12 : i32
    %4 = arith.addi %c0_i32, %c12_i32 : i32
    %c1_i32 = arith.constant 1 : i32
    scf.for %arg10 = %c0_i32 to %4 step %c1_i32  : i32 {
      %c2_i32 = arith.constant 2 : i32
      %426 = arith.muli %c2_i32, %arg10 : i32
      %c0_i32_142 = arith.constant 0 : i32
      %427 = arith.addi %426, %c0_i32_142 : i32
      %c0_143 = arith.constant 0 : index
      %428 = arith.index_cast %427 : i32 to index
      %c0_144 = arith.constant 0 : index
      %c0_145 = arith.constant 0 : index
      %429 = vector.load %arg1[%c0_143, %428, %c0_144, %c0_145] : memref<1x28x8x3584xf32, #tpu.memory_space<vmem>>, vector<1x1x8x3584xf32>
      %430 = vector.shape_cast %429 : vector<1x1x8x3584xf32> to vector<8x3584xf32>
      %431 = vector.extract_strided_slice %430 {offsets = [0, 0], sizes = [8, 3072], strides = [1, 1]} : vector<8x3584xf32> to vector<8x3072xf32>
      %432 = vector.extract_strided_slice %0 {offsets = [0, 0, 0], sizes = [1, 8, 1], strides = [1, 1, 1]} : vector<25x8x1xf32> to vector<1x8x1xf32>
      %433 = vector.shape_cast %432 : vector<1x8x1xf32> to vector<8x1xf32>
      %434 = vector.broadcast %433 : vector<8x1xf32> to vector<8x3072xf32>
      %435 = arith.mulf %434, %431 : vector<8x3072xf32>
      %436 = vector.extract_strided_slice %430 {offsets = [0, 128], sizes = [8, 3072], strides = [1, 1]} : vector<8x3584xf32> to vector<8x3072xf32>
      %437 = vector.extract_strided_slice %0 {offsets = [1, 0, 0], sizes = [1, 8, 1], strides = [1, 1, 1]} : vector<25x8x1xf32> to vector<1x8x1xf32>
      %438 = vector.shape_cast %437 : vector<1x8x1xf32> to vector<8x1xf32>
      %439 = vector.broadcast %438 : vector<8x1xf32> to vector<8x3072xf32>
      %440 = arith.mulf %439, %436 : vector<8x3072xf32>
      %441 = arith.addf %435, %440 : vector<8x3072xf32>
      %442 = vector.extract_strided_slice %430 {offsets = [0, 256], sizes = [8, 3072], strides = [1, 1]} : vector<8x3584xf32> to vector<8x3072xf32>
      %443 = vector.extract_strided_slice %0 {offsets = [2, 0, 0], sizes = [1, 8, 1], strides = [1, 1, 1]} : vector<25x8x1xf32> to vector<1x8x1xf32>
      %444 = vector.shape_cast %443 : vector<1x8x1xf32> to vector<8x1xf32>
      %445 = vector.broadcast %444 : vector<8x1xf32> to vector<8x3072xf32>
      %446 = arith.mulf %445, %442 : vector<8x3072xf32>
      %447 = arith.addf %441, %446 : vector<8x3072xf32>
      %448 = vector.extract_strided_slice %430 {offsets = [0, 384], sizes = [8, 3072], strides = [1, 1]} : vector<8x3584xf32> to vector<8x3072xf32>
      %449 = vector.extract_strided_slice %0 {offsets = [3, 0, 0], sizes = [1, 8, 1], strides = [1, 1, 1]} : vector<25x8x1xf32> to vector<1x8x1xf32>
      %450 = vector.shape_cast %449 : vector<1x8x1xf32> to vector<8x1xf32>
      %451 = vector.broadcast %450 : vector<8x1xf32> to vector<8x3072xf32>
      %452 = arith.mulf %451, %448 : vector<8x3072xf32>
      %453 = arith.addf %447, %452 : vector<8x3072xf32>
      %454 = vector.extract_strided_slice %430 {offsets = [0, 512], sizes = [8, 3072], strides = [1, 1]} : vector<8x3584xf32> to vector<8x3072xf32>
      %455 = vector.extract_strided_slice %0 {offsets = [4, 0, 0], sizes = [1, 8, 1], strides = [1, 1, 1]} : vector<25x8x1xf32> to vector<1x8x1xf32>
      %456 = vector.shape_cast %455 : vector<1x8x1xf32> to vector<8x1xf32>
      %457 = vector.broadcast %456 : vector<8x1xf32> to vector<8x3072xf32>
      %458 = arith.mulf %457, %454 : vector<8x3072xf32>
      %459 = arith.addf %453, %458 : vector<8x3072xf32>
      %c1_i32_146 = arith.constant 1 : i32
      %460 = arith.addi %426, %c1_i32_146 : i32
      %c0_147 = arith.constant 0 : index
      %461 = arith.index_cast %460 : i32 to index
      %c0_148 = arith.constant 0 : index
      %c0_149 = arith.constant 0 : index
      %462 = vector.load %arg1[%c0_147, %461, %c0_148, %c0_149] : memref<1x28x8x3584xf32, #tpu.memory_space<vmem>>, vector<1x1x8x3584xf32>
      %463 = vector.shape_cast %462 : vector<1x1x8x3584xf32> to vector<8x3584xf32>
      %464 = vector.extract_strided_slice %463 {offsets = [0, 0], sizes = [8, 3072], strides = [1, 1]} : vector<8x3584xf32> to vector<8x3072xf32>
      %465 = vector.extract_strided_slice %0 {offsets = [5, 0, 0], sizes = [1, 8, 1], strides = [1, 1, 1]} : vector<25x8x1xf32> to vector<1x8x1xf32>
      %466 = vector.shape_cast %465 : vector<1x8x1xf32> to vector<8x1xf32>
      %467 = vector.broadcast %466 : vector<8x1xf32> to vector<8x3072xf32>
      %468 = arith.mulf %467, %464 : vector<8x3072xf32>
      %469 = arith.addf %459, %468 : vector<8x3072xf32>
      %470 = vector.extract_strided_slice %463 {offsets = [0, 128], sizes = [8, 3072], strides = [1, 1]} : vector<8x3584xf32> to vector<8x3072xf32>
      %471 = vector.extract_strided_slice %0 {offsets = [6, 0, 0], sizes = [1, 8, 1], strides = [1, 1, 1]} : vector<25x8x1xf32> to vector<1x8x1xf32>
      %472 = vector.shape_cast %471 : vector<1x8x1xf32> to vector<8x1xf32>
      %473 = vector.broadcast %472 : vector<8x1xf32> to vector<8x3072xf32>
      %474 = arith.mulf %473, %470 : vector<8x3072xf32>
      %475 = arith.addf %469, %474 : vector<8x3072xf32>
      %476 = vector.extract_strided_slice %463 {offsets = [0, 256], sizes = [8, 3072], strides = [1, 1]} : vector<8x3584xf32> to vector<8x3072xf32>
      %477 = vector.extract_strided_slice %0 {offsets = [7, 0, 0], sizes = [1, 8, 1], strides = [1, 1, 1]} : vector<25x8x1xf32> to vector<1x8x1xf32>
      %478 = vector.shape_cast %477 : vector<1x8x1xf32> to vector<8x1xf32>
      %479 = vector.broadcast %478 : vector<8x1xf32> to vector<8x3072xf32>
      %480 = arith.mulf %479, %476 : vector<8x3072xf32>
      %481 = arith.addf %475, %480 : vector<8x3072xf32>
      %482 = vector.extract_strided_slice %463 {offsets = [0, 384], sizes = [8, 3072], strides = [1, 1]} : vector<8x3584xf32> to vector<8x3072xf32>
      %483 = vector.extract_strided_slice %0 {offsets = [8, 0, 0], sizes = [1, 8, 1], strides = [1, 1, 1]} : vector<25x8x1xf32> to vector<1x8x1xf32>
      %484 = vector.shape_cast %483 : vector<1x8x1xf32> to vector<8x1xf32>
      %485 = vector.broadcast %484 : vector<8x1xf32> to vector<8x3072xf32>
      %486 = arith.mulf %485, %482 : vector<8x3072xf32>
      %487 = arith.addf %481, %486 : vector<8x3072xf32>
      %488 = vector.extract_strided_slice %463 {offsets = [0, 512], sizes = [8, 3072], strides = [1, 1]} : vector<8x3584xf32> to vector<8x3072xf32>
      %489 = vector.extract_strided_slice %0 {offsets = [9, 0, 0], sizes = [1, 8, 1], strides = [1, 1, 1]} : vector<25x8x1xf32> to vector<1x8x1xf32>
      %490 = vector.shape_cast %489 : vector<1x8x1xf32> to vector<8x1xf32>
      %491 = vector.broadcast %490 : vector<8x1xf32> to vector<8x3072xf32>
      %492 = arith.mulf %491, %488 : vector<8x3072xf32>
      %493 = arith.addf %487, %492 : vector<8x3072xf32>
      %c2_i32_150 = arith.constant 2 : i32
      %494 = arith.addi %426, %c2_i32_150 : i32
      %c0_151 = arith.constant 0 : index
      %495 = arith.index_cast %494 : i32 to index
      %c0_152 = arith.constant 0 : index
      %c0_153 = arith.constant 0 : index
      %496 = vector.load %arg1[%c0_151, %495, %c0_152, %c0_153] : memref<1x28x8x3584xf32, #tpu.memory_space<vmem>>, vector<1x1x8x3584xf32>
      %497 = vector.shape_cast %496 : vector<1x1x8x3584xf32> to vector<8x3584xf32>
      %498 = vector.extract_strided_slice %497 {offsets = [0, 0], sizes = [8, 3072], strides = [1, 1]} : vector<8x3584xf32> to vector<8x3072xf32>
      %499 = vector.extract_strided_slice %0 {offsets = [10, 0, 0], sizes = [1, 8, 1], strides = [1, 1, 1]} : vector<25x8x1xf32> to vector<1x8x1xf32>
      %500 = vector.shape_cast %499 : vector<1x8x1xf32> to vector<8x1xf32>
      %501 = vector.broadcast %500 : vector<8x1xf32> to vector<8x3072xf32>
      %502 = arith.mulf %501, %498 : vector<8x3072xf32>
      %503 = arith.addf %493, %502 : vector<8x3072xf32>
      %504 = vector.extract_strided_slice %497 {offsets = [0, 128], sizes = [8, 3072], strides = [1, 1]} : vector<8x3584xf32> to vector<8x3072xf32>
      %505 = vector.extract_strided_slice %0 {offsets = [11, 0, 0], sizes = [1, 8, 1], strides = [1, 1, 1]} : vector<25x8x1xf32> to vector<1x8x1xf32>
      %506 = vector.shape_cast %505 : vector<1x8x1xf32> to vector<8x1xf32>
      %507 = vector.broadcast %506 : vector<8x1xf32> to vector<8x3072xf32>
      %508 = arith.mulf %507, %504 : vector<8x3072xf32>
      %509 = arith.addf %503, %508 : vector<8x3072xf32>
      %510 = vector.extract_strided_slice %497 {offsets = [0, 256], sizes = [8, 3072], strides = [1, 1]} : vector<8x3584xf32> to vector<8x3072xf32>
      %511 = vector.extract_strided_slice %0 {offsets = [12, 0, 0], sizes = [1, 8, 1], strides = [1, 1, 1]} : vector<25x8x1xf32> to vector<1x8x1xf32>
      %512 = vector.shape_cast %511 : vector<1x8x1xf32> to vector<8x1xf32>
      %513 = vector.broadcast %512 : vector<8x1xf32> to vector<8x3072xf32>
      %514 = arith.mulf %513, %510 : vector<8x3072xf32>
      %515 = arith.addf %509, %514 : vector<8x3072xf32>
      %516 = vector.extract_strided_slice %497 {offsets = [0, 384], sizes = [8, 3072], strides = [1, 1]} : vector<8x3584xf32> to vector<8x3072xf32>
      %517 = vector.extract_strided_slice %0 {offsets = [13, 0, 0], sizes = [1, 8, 1], strides = [1, 1, 1]} : vector<25x8x1xf32> to vector<1x8x1xf32>
      %518 = vector.shape_cast %517 : vector<1x8x1xf32> to vector<8x1xf32>
      %519 = vector.broadcast %518 : vector<8x1xf32> to vector<8x3072xf32>
      %520 = arith.mulf %519, %516 : vector<8x3072xf32>
      %521 = arith.addf %515, %520 : vector<8x3072xf32>
      %522 = vector.extract_strided_slice %497 {offsets = [0, 512], sizes = [8, 3072], strides = [1, 1]} : vector<8x3584xf32> to vector<8x3072xf32>
      %523 = vector.extract_strided_slice %0 {offsets = [14, 0, 0], sizes = [1, 8, 1], strides = [1, 1, 1]} : vector<25x8x1xf32> to vector<1x8x1xf32>
      %524 = vector.shape_cast %523 : vector<1x8x1xf32> to vector<8x1xf32>
      %525 = vector.broadcast %524 : vector<8x1xf32> to vector<8x3072xf32>
      %526 = arith.mulf %525, %522 : vector<8x3072xf32>
      %527 = arith.addf %521, %526 : vector<8x3072xf32>
      %c3_i32 = arith.constant 3 : i32
      %528 = arith.addi %426, %c3_i32 : i32
      %c0_154 = arith.constant 0 : index
      %529 = arith.index_cast %528 : i32 to index
      %c0_155 = arith.constant 0 : index
      %c0_156 = arith.constant 0 : index
      %530 = vector.load %arg1[%c0_154, %529, %c0_155, %c0_156] : memref<1x28x8x3584xf32, #tpu.memory_space<vmem>>, vector<1x1x8x3584xf32>
      %531 = vector.shape_cast %530 : vector<1x1x8x3584xf32> to vector<8x3584xf32>
      %532 = vector.extract_strided_slice %531 {offsets = [0, 0], sizes = [8, 3072], strides = [1, 1]} : vector<8x3584xf32> to vector<8x3072xf32>
      %533 = vector.extract_strided_slice %0 {offsets = [15, 0, 0], sizes = [1, 8, 1], strides = [1, 1, 1]} : vector<25x8x1xf32> to vector<1x8x1xf32>
      %534 = vector.shape_cast %533 : vector<1x8x1xf32> to vector<8x1xf32>
      %535 = vector.broadcast %534 : vector<8x1xf32> to vector<8x3072xf32>
      %536 = arith.mulf %535, %532 : vector<8x3072xf32>
      %537 = arith.addf %527, %536 : vector<8x3072xf32>
      %538 = vector.extract_strided_slice %531 {offsets = [0, 128], sizes = [8, 3072], strides = [1, 1]} : vector<8x3584xf32> to vector<8x3072xf32>
      %539 = vector.extract_strided_slice %0 {offsets = [16, 0, 0], sizes = [1, 8, 1], strides = [1, 1, 1]} : vector<25x8x1xf32> to vector<1x8x1xf32>
      %540 = vector.shape_cast %539 : vector<1x8x1xf32> to vector<8x1xf32>
      %541 = vector.broadcast %540 : vector<8x1xf32> to vector<8x3072xf32>
      %542 = arith.mulf %541, %538 : vector<8x3072xf32>
      %543 = arith.addf %537, %542 : vector<8x3072xf32>
      %544 = vector.extract_strided_slice %531 {offsets = [0, 256], sizes = [8, 3072], strides = [1, 1]} : vector<8x3584xf32> to vector<8x3072xf32>
      %545 = vector.extract_strided_slice %0 {offsets = [17, 0, 0], sizes = [1, 8, 1], strides = [1, 1, 1]} : vector<25x8x1xf32> to vector<1x8x1xf32>
      %546 = vector.shape_cast %545 : vector<1x8x1xf32> to vector<8x1xf32>
      %547 = vector.broadcast %546 : vector<8x1xf32> to vector<8x3072xf32>
      %548 = arith.mulf %547, %544 : vector<8x3072xf32>
      %549 = arith.addf %543, %548 : vector<8x3072xf32>
      %550 = vector.extract_strided_slice %531 {offsets = [0, 384], sizes = [8, 3072], strides = [1, 1]} : vector<8x3584xf32> to vector<8x3072xf32>
      %551 = vector.extract_strided_slice %0 {offsets = [18, 0, 0], sizes = [1, 8, 1], strides = [1, 1, 1]} : vector<25x8x1xf32> to vector<1x8x1xf32>
      %552 = vector.shape_cast %551 : vector<1x8x1xf32> to vector<8x1xf32>
      %553 = vector.broadcast %552 : vector<8x1xf32> to vector<8x3072xf32>
      %554 = arith.mulf %553, %550 : vector<8x3072xf32>
      %555 = arith.addf %549, %554 : vector<8x3072xf32>
      %556 = vector.extract_strided_slice %531 {offsets = [0, 512], sizes = [8, 3072], strides = [1, 1]} : vector<8x3584xf32> to vector<8x3072xf32>
      %557 = vector.extract_strided_slice %0 {offsets = [19, 0, 0], sizes = [1, 8, 1], strides = [1, 1, 1]} : vector<25x8x1xf32> to vector<1x8x1xf32>
      %558 = vector.shape_cast %557 : vector<1x8x1xf32> to vector<8x1xf32>
      %559 = vector.broadcast %558 : vector<8x1xf32> to vector<8x3072xf32>
      %560 = arith.mulf %559, %556 : vector<8x3072xf32>
      %561 = arith.addf %555, %560 : vector<8x3072xf32>
      %c4_i32 = arith.constant 4 : i32
      %562 = arith.addi %426, %c4_i32 : i32
      %c0_157 = arith.constant 0 : index
      %563 = arith.index_cast %562 : i32 to index
      %c0_158 = arith.constant 0 : index
      %c0_159 = arith.constant 0 : index
      %564 = vector.load %arg1[%c0_157, %563, %c0_158, %c0_159] : memref<1x28x8x3584xf32, #tpu.memory_space<vmem>>, vector<1x1x8x3584xf32>
      %565 = vector.shape_cast %564 : vector<1x1x8x3584xf32> to vector<8x3584xf32>
      %566 = vector.extract_strided_slice %565 {offsets = [0, 0], sizes = [8, 3072], strides = [1, 1]} : vector<8x3584xf32> to vector<8x3072xf32>
      %567 = vector.extract_strided_slice %0 {offsets = [20, 0, 0], sizes = [1, 8, 1], strides = [1, 1, 1]} : vector<25x8x1xf32> to vector<1x8x1xf32>
      %568 = vector.shape_cast %567 : vector<1x8x1xf32> to vector<8x1xf32>
      %569 = vector.broadcast %568 : vector<8x1xf32> to vector<8x3072xf32>
      %570 = arith.mulf %569, %566 : vector<8x3072xf32>
      %571 = arith.addf %561, %570 : vector<8x3072xf32>
      %572 = vector.extract_strided_slice %565 {offsets = [0, 128], sizes = [8, 3072], strides = [1, 1]} : vector<8x3584xf32> to vector<8x3072xf32>
      %573 = vector.extract_strided_slice %0 {offsets = [21, 0, 0], sizes = [1, 8, 1], strides = [1, 1, 1]} : vector<25x8x1xf32> to vector<1x8x1xf32>
      %574 = vector.shape_cast %573 : vector<1x8x1xf32> to vector<8x1xf32>
      %575 = vector.broadcast %574 : vector<8x1xf32> to vector<8x3072xf32>
      %576 = arith.mulf %575, %572 : vector<8x3072xf32>
      %577 = arith.addf %571, %576 : vector<8x3072xf32>
      %578 = vector.extract_strided_slice %565 {offsets = [0, 256], sizes = [8, 3072], strides = [1, 1]} : vector<8x3584xf32> to vector<8x3072xf32>
      %579 = vector.extract_strided_slice %0 {offsets = [22, 0, 0], sizes = [1, 8, 1], strides = [1, 1, 1]} : vector<25x8x1xf32> to vector<1x8x1xf32>
      %580 = vector.shape_cast %579 : vector<1x8x1xf32> to vector<8x1xf32>
      %581 = vector.broadcast %580 : vector<8x1xf32> to vector<8x3072xf32>
      %582 = arith.mulf %581, %578 : vector<8x3072xf32>
      %583 = arith.addf %577, %582 : vector<8x3072xf32>
      %584 = vector.extract_strided_slice %565 {offsets = [0, 384], sizes = [8, 3072], strides = [1, 1]} : vector<8x3584xf32> to vector<8x3072xf32>
      %585 = vector.extract_strided_slice %0 {offsets = [23, 0, 0], sizes = [1, 8, 1], strides = [1, 1, 1]} : vector<25x8x1xf32> to vector<1x8x1xf32>
      %586 = vector.shape_cast %585 : vector<1x8x1xf32> to vector<8x1xf32>
      %587 = vector.broadcast %586 : vector<8x1xf32> to vector<8x3072xf32>
      %588 = arith.mulf %587, %584 : vector<8x3072xf32>
      %589 = arith.addf %583, %588 : vector<8x3072xf32>
      %590 = vector.extract_strided_slice %565 {offsets = [0, 512], sizes = [8, 3072], strides = [1, 1]} : vector<8x3584xf32> to vector<8x3072xf32>
      %591 = vector.extract_strided_slice %0 {offsets = [24, 0, 0], sizes = [1, 8, 1], strides = [1, 1, 1]} : vector<25x8x1xf32> to vector<1x8x1xf32>
      %592 = vector.shape_cast %591 : vector<1x8x1xf32> to vector<8x1xf32>
      %593 = vector.broadcast %592 : vector<8x1xf32> to vector<8x3072xf32>
      %594 = arith.mulf %593, %590 : vector<8x3072xf32>
      %595 = arith.addf %589, %594 : vector<8x3072xf32>
      %596 = vector.broadcast %1 : vector<8x1xf32> to vector<8x3072xf32>
      %597 = arith.addf %595, %596 : vector<8x3072xf32>
      %cst_160 = arith.constant 0.000000e+00 : f32
      %598 = vector.broadcast %cst_160 : f32 to vector<8x3072xf32>
      %599 = arith.maximumf %597, %598 : vector<8x3072xf32>
      %c2_i32_161 = arith.constant 2 : i32
      %600 = arith.muli %c2_i32_161, %arg10 : i32
      %c1_i32_162 = arith.constant 1 : i32
      %601 = arith.addi %600, %c1_i32_162 : i32
      %c0_i32_163 = arith.constant 0 : i32
      %602 = arith.addi %601, %c0_i32_163 : i32
      %c0_164 = arith.constant 0 : index
      %603 = arith.index_cast %602 : i32 to index
      %c0_165 = arith.constant 0 : index
      %c0_166 = arith.constant 0 : index
      %604 = vector.load %arg1[%c0_164, %603, %c0_165, %c0_166] : memref<1x28x8x3584xf32, #tpu.memory_space<vmem>>, vector<1x1x8x3584xf32>
      %605 = vector.shape_cast %604 : vector<1x1x8x3584xf32> to vector<8x3584xf32>
      %606 = vector.extract_strided_slice %605 {offsets = [0, 0], sizes = [8, 3072], strides = [1, 1]} : vector<8x3584xf32> to vector<8x3072xf32>
      %607 = vector.extract_strided_slice %0 {offsets = [0, 0, 0], sizes = [1, 8, 1], strides = [1, 1, 1]} : vector<25x8x1xf32> to vector<1x8x1xf32>
      %608 = vector.shape_cast %607 : vector<1x8x1xf32> to vector<8x1xf32>
      %609 = vector.broadcast %608 : vector<8x1xf32> to vector<8x3072xf32>
      %610 = arith.mulf %609, %606 : vector<8x3072xf32>
      %611 = vector.extract_strided_slice %605 {offsets = [0, 128], sizes = [8, 3072], strides = [1, 1]} : vector<8x3584xf32> to vector<8x3072xf32>
      %612 = vector.extract_strided_slice %0 {offsets = [1, 0, 0], sizes = [1, 8, 1], strides = [1, 1, 1]} : vector<25x8x1xf32> to vector<1x8x1xf32>
      %613 = vector.shape_cast %612 : vector<1x8x1xf32> to vector<8x1xf32>
      %614 = vector.broadcast %613 : vector<8x1xf32> to vector<8x3072xf32>
      %615 = arith.mulf %614, %611 : vector<8x3072xf32>
      %616 = arith.addf %610, %615 : vector<8x3072xf32>
      %617 = vector.extract_strided_slice %605 {offsets = [0, 256], sizes = [8, 3072], strides = [1, 1]} : vector<8x3584xf32> to vector<8x3072xf32>
      %618 = vector.extract_strided_slice %0 {offsets = [2, 0, 0], sizes = [1, 8, 1], strides = [1, 1, 1]} : vector<25x8x1xf32> to vector<1x8x1xf32>
      %619 = vector.shape_cast %618 : vector<1x8x1xf32> to vector<8x1xf32>
      %620 = vector.broadcast %619 : vector<8x1xf32> to vector<8x3072xf32>
      %621 = arith.mulf %620, %617 : vector<8x3072xf32>
      %622 = arith.addf %616, %621 : vector<8x3072xf32>
      %623 = vector.extract_strided_slice %605 {offsets = [0, 384], sizes = [8, 3072], strides = [1, 1]} : vector<8x3584xf32> to vector<8x3072xf32>
      %624 = vector.extract_strided_slice %0 {offsets = [3, 0, 0], sizes = [1, 8, 1], strides = [1, 1, 1]} : vector<25x8x1xf32> to vector<1x8x1xf32>
      %625 = vector.shape_cast %624 : vector<1x8x1xf32> to vector<8x1xf32>
      %626 = vector.broadcast %625 : vector<8x1xf32> to vector<8x3072xf32>
      %627 = arith.mulf %626, %623 : vector<8x3072xf32>
      %628 = arith.addf %622, %627 : vector<8x3072xf32>
      %629 = vector.extract_strided_slice %605 {offsets = [0, 512], sizes = [8, 3072], strides = [1, 1]} : vector<8x3584xf32> to vector<8x3072xf32>
      %630 = vector.extract_strided_slice %0 {offsets = [4, 0, 0], sizes = [1, 8, 1], strides = [1, 1, 1]} : vector<25x8x1xf32> to vector<1x8x1xf32>
      %631 = vector.shape_cast %630 : vector<1x8x1xf32> to vector<8x1xf32>
      %632 = vector.broadcast %631 : vector<8x1xf32> to vector<8x3072xf32>
      %633 = arith.mulf %632, %629 : vector<8x3072xf32>
      %634 = arith.addf %628, %633 : vector<8x3072xf32>
      %c1_i32_167 = arith.constant 1 : i32
      %635 = arith.addi %601, %c1_i32_167 : i32
      %c0_168 = arith.constant 0 : index
      %636 = arith.index_cast %635 : i32 to index
      %c0_169 = arith.constant 0 : index
      %c0_170 = arith.constant 0 : index
      %637 = vector.load %arg1[%c0_168, %636, %c0_169, %c0_170] : memref<1x28x8x3584xf32, #tpu.memory_space<vmem>>, vector<1x1x8x3584xf32>
      %638 = vector.shape_cast %637 : vector<1x1x8x3584xf32> to vector<8x3584xf32>
      %639 = vector.extract_strided_slice %638 {offsets = [0, 0], sizes = [8, 3072], strides = [1, 1]} : vector<8x3584xf32> to vector<8x3072xf32>
      %640 = vector.extract_strided_slice %0 {offsets = [5, 0, 0], sizes = [1, 8, 1], strides = [1, 1, 1]} : vector<25x8x1xf32> to vector<1x8x1xf32>
      %641 = vector.shape_cast %640 : vector<1x8x1xf32> to vector<8x1xf32>
      %642 = vector.broadcast %641 : vector<8x1xf32> to vector<8x3072xf32>
      %643 = arith.mulf %642, %639 : vector<8x3072xf32>
      %644 = arith.addf %634, %643 : vector<8x3072xf32>
      %645 = vector.extract_strided_slice %638 {offsets = [0, 128], sizes = [8, 3072], strides = [1, 1]} : vector<8x3584xf32> to vector<8x3072xf32>
      %646 = vector.extract_strided_slice %0 {offsets = [6, 0, 0], sizes = [1, 8, 1], strides = [1, 1, 1]} : vector<25x8x1xf32> to vector<1x8x1xf32>
      %647 = vector.shape_cast %646 : vector<1x8x1xf32> to vector<8x1xf32>
      %648 = vector.broadcast %647 : vector<8x1xf32> to vector<8x3072xf32>
      %649 = arith.mulf %648, %645 : vector<8x3072xf32>
      %650 = arith.addf %644, %649 : vector<8x3072xf32>
      %651 = vector.extract_strided_slice %638 {offsets = [0, 256], sizes = [8, 3072], strides = [1, 1]} : vector<8x3584xf32> to vector<8x3072xf32>
      %652 = vector.extract_strided_slice %0 {offsets = [7, 0, 0], sizes = [1, 8, 1], strides = [1, 1, 1]} : vector<25x8x1xf32> to vector<1x8x1xf32>
      %653 = vector.shape_cast %652 : vector<1x8x1xf32> to vector<8x1xf32>
      %654 = vector.broadcast %653 : vector<8x1xf32> to vector<8x3072xf32>
      %655 = arith.mulf %654, %651 : vector<8x3072xf32>
      %656 = arith.addf %650, %655 : vector<8x3072xf32>
      %657 = vector.extract_strided_slice %638 {offsets = [0, 384], sizes = [8, 3072], strides = [1, 1]} : vector<8x3584xf32> to vector<8x3072xf32>
      %658 = vector.extract_strided_slice %0 {offsets = [8, 0, 0], sizes = [1, 8, 1], strides = [1, 1, 1]} : vector<25x8x1xf32> to vector<1x8x1xf32>
      %659 = vector.shape_cast %658 : vector<1x8x1xf32> to vector<8x1xf32>
      %660 = vector.broadcast %659 : vector<8x1xf32> to vector<8x3072xf32>
      %661 = arith.mulf %660, %657 : vector<8x3072xf32>
      %662 = arith.addf %656, %661 : vector<8x3072xf32>
      %663 = vector.extract_strided_slice %638 {offsets = [0, 512], sizes = [8, 3072], strides = [1, 1]} : vector<8x3584xf32> to vector<8x3072xf32>
      %664 = vector.extract_strided_slice %0 {offsets = [9, 0, 0], sizes = [1, 8, 1], strides = [1, 1, 1]} : vector<25x8x1xf32> to vector<1x8x1xf32>
      %665 = vector.shape_cast %664 : vector<1x8x1xf32> to vector<8x1xf32>
      %666 = vector.broadcast %665 : vector<8x1xf32> to vector<8x3072xf32>
      %667 = arith.mulf %666, %663 : vector<8x3072xf32>
      %668 = arith.addf %662, %667 : vector<8x3072xf32>
      %c2_i32_171 = arith.constant 2 : i32
      %669 = arith.addi %601, %c2_i32_171 : i32
      %c0_172 = arith.constant 0 : index
      %670 = arith.index_cast %669 : i32 to index
      %c0_173 = arith.constant 0 : index
      %c0_174 = arith.constant 0 : index
      %671 = vector.load %arg1[%c0_172, %670, %c0_173, %c0_174] : memref<1x28x8x3584xf32, #tpu.memory_space<vmem>>, vector<1x1x8x3584xf32>
      %672 = vector.shape_cast %671 : vector<1x1x8x3584xf32> to vector<8x3584xf32>
      %673 = vector.extract_strided_slice %672 {offsets = [0, 0], sizes = [8, 3072], strides = [1, 1]} : vector<8x3584xf32> to vector<8x3072xf32>
      %674 = vector.extract_strided_slice %0 {offsets = [10, 0, 0], sizes = [1, 8, 1], strides = [1, 1, 1]} : vector<25x8x1xf32> to vector<1x8x1xf32>
      %675 = vector.shape_cast %674 : vector<1x8x1xf32> to vector<8x1xf32>
      %676 = vector.broadcast %675 : vector<8x1xf32> to vector<8x3072xf32>
      %677 = arith.mulf %676, %673 : vector<8x3072xf32>
      %678 = arith.addf %668, %677 : vector<8x3072xf32>
      %679 = vector.extract_strided_slice %672 {offsets = [0, 128], sizes = [8, 3072], strides = [1, 1]} : vector<8x3584xf32> to vector<8x3072xf32>
      %680 = vector.extract_strided_slice %0 {offsets = [11, 0, 0], sizes = [1, 8, 1], strides = [1, 1, 1]} : vector<25x8x1xf32> to vector<1x8x1xf32>
      %681 = vector.shape_cast %680 : vector<1x8x1xf32> to vector<8x1xf32>
      %682 = vector.broadcast %681 : vector<8x1xf32> to vector<8x3072xf32>
      %683 = arith.mulf %682, %679 : vector<8x3072xf32>
      %684 = arith.addf %678, %683 : vector<8x3072xf32>
      %685 = vector.extract_strided_slice %672 {offsets = [0, 256], sizes = [8, 3072], strides = [1, 1]} : vector<8x3584xf32> to vector<8x3072xf32>
      %686 = vector.extract_strided_slice %0 {offsets = [12, 0, 0], sizes = [1, 8, 1], strides = [1, 1, 1]} : vector<25x8x1xf32> to vector<1x8x1xf32>
      %687 = vector.shape_cast %686 : vector<1x8x1xf32> to vector<8x1xf32>
      %688 = vector.broadcast %687 : vector<8x1xf32> to vector<8x3072xf32>
      %689 = arith.mulf %688, %685 : vector<8x3072xf32>
      %690 = arith.addf %684, %689 : vector<8x3072xf32>
      %691 = vector.extract_strided_slice %672 {offsets = [0, 384], sizes = [8, 3072], strides = [1, 1]} : vector<8x3584xf32> to vector<8x3072xf32>
      %692 = vector.extract_strided_slice %0 {offsets = [13, 0, 0], sizes = [1, 8, 1], strides = [1, 1, 1]} : vector<25x8x1xf32> to vector<1x8x1xf32>
      %693 = vector.shape_cast %692 : vector<1x8x1xf32> to vector<8x1xf32>
      %694 = vector.broadcast %693 : vector<8x1xf32> to vector<8x3072xf32>
      %695 = arith.mulf %694, %691 : vector<8x3072xf32>
      %696 = arith.addf %690, %695 : vector<8x3072xf32>
      %697 = vector.extract_strided_slice %672 {offsets = [0, 512], sizes = [8, 3072], strides = [1, 1]} : vector<8x3584xf32> to vector<8x3072xf32>
      %698 = vector.extract_strided_slice %0 {offsets = [14, 0, 0], sizes = [1, 8, 1], strides = [1, 1, 1]} : vector<25x8x1xf32> to vector<1x8x1xf32>
      %699 = vector.shape_cast %698 : vector<1x8x1xf32> to vector<8x1xf32>
      %700 = vector.broadcast %699 : vector<8x1xf32> to vector<8x3072xf32>
      %701 = arith.mulf %700, %697 : vector<8x3072xf32>
      %702 = arith.addf %696, %701 : vector<8x3072xf32>
      %c3_i32_175 = arith.constant 3 : i32
      %703 = arith.addi %601, %c3_i32_175 : i32
      %c0_176 = arith.constant 0 : index
      %704 = arith.index_cast %703 : i32 to index
      %c0_177 = arith.constant 0 : index
      %c0_178 = arith.constant 0 : index
      %705 = vector.load %arg1[%c0_176, %704, %c0_177, %c0_178] : memref<1x28x8x3584xf32, #tpu.memory_space<vmem>>, vector<1x1x8x3584xf32>
      %706 = vector.shape_cast %705 : vector<1x1x8x3584xf32> to vector<8x3584xf32>
      %707 = vector.extract_strided_slice %706 {offsets = [0, 0], sizes = [8, 3072], strides = [1, 1]} : vector<8x3584xf32> to vector<8x3072xf32>
      %708 = vector.extract_strided_slice %0 {offsets = [15, 0, 0], sizes = [1, 8, 1], strides = [1, 1, 1]} : vector<25x8x1xf32> to vector<1x8x1xf32>
      %709 = vector.shape_cast %708 : vector<1x8x1xf32> to vector<8x1xf32>
      %710 = vector.broadcast %709 : vector<8x1xf32> to vector<8x3072xf32>
      %711 = arith.mulf %710, %707 : vector<8x3072xf32>
      %712 = arith.addf %702, %711 : vector<8x3072xf32>
      %713 = vector.extract_strided_slice %706 {offsets = [0, 128], sizes = [8, 3072], strides = [1, 1]} : vector<8x3584xf32> to vector<8x3072xf32>
      %714 = vector.extract_strided_slice %0 {offsets = [16, 0, 0], sizes = [1, 8, 1], strides = [1, 1, 1]} : vector<25x8x1xf32> to vector<1x8x1xf32>
      %715 = vector.shape_cast %714 : vector<1x8x1xf32> to vector<8x1xf32>
      %716 = vector.broadcast %715 : vector<8x1xf32> to vector<8x3072xf32>
      %717 = arith.mulf %716, %713 : vector<8x3072xf32>
      %718 = arith.addf %712, %717 : vector<8x3072xf32>
      %719 = vector.extract_strided_slice %706 {offsets = [0, 256], sizes = [8, 3072], strides = [1, 1]} : vector<8x3584xf32> to vector<8x3072xf32>
      %720 = vector.extract_strided_slice %0 {offsets = [17, 0, 0], sizes = [1, 8, 1], strides = [1, 1, 1]} : vector<25x8x1xf32> to vector<1x8x1xf32>
      %721 = vector.shape_cast %720 : vector<1x8x1xf32> to vector<8x1xf32>
      %722 = vector.broadcast %721 : vector<8x1xf32> to vector<8x3072xf32>
      %723 = arith.mulf %722, %719 : vector<8x3072xf32>
      %724 = arith.addf %718, %723 : vector<8x3072xf32>
      %725 = vector.extract_strided_slice %706 {offsets = [0, 384], sizes = [8, 3072], strides = [1, 1]} : vector<8x3584xf32> to vector<8x3072xf32>
      %726 = vector.extract_strided_slice %0 {offsets = [18, 0, 0], sizes = [1, 8, 1], strides = [1, 1, 1]} : vector<25x8x1xf32> to vector<1x8x1xf32>
      %727 = vector.shape_cast %726 : vector<1x8x1xf32> to vector<8x1xf32>
      %728 = vector.broadcast %727 : vector<8x1xf32> to vector<8x3072xf32>
      %729 = arith.mulf %728, %725 : vector<8x3072xf32>
      %730 = arith.addf %724, %729 : vector<8x3072xf32>
      %731 = vector.extract_strided_slice %706 {offsets = [0, 512], sizes = [8, 3072], strides = [1, 1]} : vector<8x3584xf32> to vector<8x3072xf32>
      %732 = vector.extract_strided_slice %0 {offsets = [19, 0, 0], sizes = [1, 8, 1], strides = [1, 1, 1]} : vector<25x8x1xf32> to vector<1x8x1xf32>
      %733 = vector.shape_cast %732 : vector<1x8x1xf32> to vector<8x1xf32>
      %734 = vector.broadcast %733 : vector<8x1xf32> to vector<8x3072xf32>
      %735 = arith.mulf %734, %731 : vector<8x3072xf32>
      %736 = arith.addf %730, %735 : vector<8x3072xf32>
      %c4_i32_179 = arith.constant 4 : i32
      %737 = arith.addi %601, %c4_i32_179 : i32
      %c0_180 = arith.constant 0 : index
      %738 = arith.index_cast %737 : i32 to index
      %c0_181 = arith.constant 0 : index
      %c0_182 = arith.constant 0 : index
      %739 = vector.load %arg1[%c0_180, %738, %c0_181, %c0_182] : memref<1x28x8x3584xf32, #tpu.memory_space<vmem>>, vector<1x1x8x3584xf32>
      %740 = vector.shape_cast %739 : vector<1x1x8x3584xf32> to vector<8x3584xf32>
      %741 = vector.extract_strided_slice %740 {offsets = [0, 0], sizes = [8, 3072], strides = [1, 1]} : vector<8x3584xf32> to vector<8x3072xf32>
      %742 = vector.extract_strided_slice %0 {offsets = [20, 0, 0], sizes = [1, 8, 1], strides = [1, 1, 1]} : vector<25x8x1xf32> to vector<1x8x1xf32>
      %743 = vector.shape_cast %742 : vector<1x8x1xf32> to vector<8x1xf32>
      %744 = vector.broadcast %743 : vector<8x1xf32> to vector<8x3072xf32>
      %745 = arith.mulf %744, %741 : vector<8x3072xf32>
      %746 = arith.addf %736, %745 : vector<8x3072xf32>
      %747 = vector.extract_strided_slice %740 {offsets = [0, 128], sizes = [8, 3072], strides = [1, 1]} : vector<8x3584xf32> to vector<8x3072xf32>
      %748 = vector.extract_strided_slice %0 {offsets = [21, 0, 0], sizes = [1, 8, 1], strides = [1, 1, 1]} : vector<25x8x1xf32> to vector<1x8x1xf32>
      %749 = vector.shape_cast %748 : vector<1x8x1xf32> to vector<8x1xf32>
      %750 = vector.broadcast %749 : vector<8x1xf32> to vector<8x3072xf32>
      %751 = arith.mulf %750, %747 : vector<8x3072xf32>
      %752 = arith.addf %746, %751 : vector<8x3072xf32>
      %753 = vector.extract_strided_slice %740 {offsets = [0, 256], sizes = [8, 3072], strides = [1, 1]} : vector<8x3584xf32> to vector<8x3072xf32>
      %754 = vector.extract_strided_slice %0 {offsets = [22, 0, 0], sizes = [1, 8, 1], strides = [1, 1, 1]} : vector<25x8x1xf32> to vector<1x8x1xf32>
      %755 = vector.shape_cast %754 : vector<1x8x1xf32> to vector<8x1xf32>
      %756 = vector.broadcast %755 : vector<8x1xf32> to vector<8x3072xf32>
      %757 = arith.mulf %756, %753 : vector<8x3072xf32>
      %758 = arith.addf %752, %757 : vector<8x3072xf32>
      %759 = vector.extract_strided_slice %740 {offsets = [0, 384], sizes = [8, 3072], strides = [1, 1]} : vector<8x3584xf32> to vector<8x3072xf32>
      %760 = vector.extract_strided_slice %0 {offsets = [23, 0, 0], sizes = [1, 8, 1], strides = [1, 1, 1]} : vector<25x8x1xf32> to vector<1x8x1xf32>
      %761 = vector.shape_cast %760 : vector<1x8x1xf32> to vector<8x1xf32>
      %762 = vector.broadcast %761 : vector<8x1xf32> to vector<8x3072xf32>
      %763 = arith.mulf %762, %759 : vector<8x3072xf32>
      %764 = arith.addf %758, %763 : vector<8x3072xf32>
      %765 = vector.extract_strided_slice %740 {offsets = [0, 512], sizes = [8, 3072], strides = [1, 1]} : vector<8x3584xf32> to vector<8x3072xf32>
      %766 = vector.extract_strided_slice %0 {offsets = [24, 0, 0], sizes = [1, 8, 1], strides = [1, 1, 1]} : vector<25x8x1xf32> to vector<1x8x1xf32>
      %767 = vector.shape_cast %766 : vector<1x8x1xf32> to vector<8x1xf32>
      %768 = vector.broadcast %767 : vector<8x1xf32> to vector<8x3072xf32>
      %769 = arith.mulf %768, %765 : vector<8x3072xf32>
      %770 = arith.addf %764, %769 : vector<8x3072xf32>
      %771 = vector.broadcast %1 : vector<8x1xf32> to vector<8x3072xf32>
      %772 = arith.addf %770, %771 : vector<8x3072xf32>
      %cst_183 = arith.constant 0.000000e+00 : f32
      %773 = vector.broadcast %cst_183 : f32 to vector<8x3072xf32>
      %774 = arith.maximumf %772, %773 : vector<8x3072xf32>
      %775 = arith.maximumf %599, %774 : vector<8x3072xf32>
      %776 = vector.extract_strided_slice %775 {offsets = [0, 0], sizes = [8, 128], strides = [1, 1]} : vector<8x3072xf32> to vector<8x128xf32>
      %777 = vector.extract_strided_slice %775 {offsets = [0, 128], sizes = [8, 128], strides = [1, 1]} : vector<8x3072xf32> to vector<8x128xf32>
      %778 = arith.maximumf %776, %777 : vector<8x128xf32>
      %779 = vector.extract_strided_slice %775 {offsets = [0, 256], sizes = [8, 128], strides = [1, 1]} : vector<8x3072xf32> to vector<8x128xf32>
      %780 = vector.extract_strided_slice %775 {offsets = [0, 384], sizes = [8, 128], strides = [1, 1]} : vector<8x3072xf32> to vector<8x128xf32>
      %781 = arith.maximumf %779, %780 : vector<8x128xf32>
      %782 = vector.extract_strided_slice %775 {offsets = [0, 512], sizes = [8, 128], strides = [1, 1]} : vector<8x3072xf32> to vector<8x128xf32>
      %783 = vector.extract_strided_slice %775 {offsets = [0, 640], sizes = [8, 128], strides = [1, 1]} : vector<8x3072xf32> to vector<8x128xf32>
      %784 = arith.maximumf %782, %783 : vector<8x128xf32>
      %785 = vector.extract_strided_slice %775 {offsets = [0, 768], sizes = [8, 128], strides = [1, 1]} : vector<8x3072xf32> to vector<8x128xf32>
      %786 = vector.extract_strided_slice %775 {offsets = [0, 896], sizes = [8, 128], strides = [1, 1]} : vector<8x3072xf32> to vector<8x128xf32>
      %787 = arith.maximumf %785, %786 : vector<8x128xf32>
      %788 = vector.extract_strided_slice %775 {offsets = [0, 1024], sizes = [8, 128], strides = [1, 1]} : vector<8x3072xf32> to vector<8x128xf32>
      %789 = vector.extract_strided_slice %775 {offsets = [0, 1152], sizes = [8, 128], strides = [1, 1]} : vector<8x3072xf32> to vector<8x128xf32>
      %790 = arith.maximumf %788, %789 : vector<8x128xf32>
      %791 = vector.extract_strided_slice %775 {offsets = [0, 1280], sizes = [8, 128], strides = [1, 1]} : vector<8x3072xf32> to vector<8x128xf32>
      %792 = vector.extract_strided_slice %775 {offsets = [0, 1408], sizes = [8, 128], strides = [1, 1]} : vector<8x3072xf32> to vector<8x128xf32>
      %793 = arith.maximumf %791, %792 : vector<8x128xf32>
      %794 = vector.extract_strided_slice %775 {offsets = [0, 1536], sizes = [8, 128], strides = [1, 1]} : vector<8x3072xf32> to vector<8x128xf32>
      %795 = vector.extract_strided_slice %775 {offsets = [0, 1664], sizes = [8, 128], strides = [1, 1]} : vector<8x3072xf32> to vector<8x128xf32>
      %796 = arith.maximumf %794, %795 : vector<8x128xf32>
      %797 = vector.extract_strided_slice %775 {offsets = [0, 1792], sizes = [8, 128], strides = [1, 1]} : vector<8x3072xf32> to vector<8x128xf32>
      %798 = vector.extract_strided_slice %775 {offsets = [0, 1920], sizes = [8, 128], strides = [1, 1]} : vector<8x3072xf32> to vector<8x128xf32>
      %799 = arith.maximumf %797, %798 : vector<8x128xf32>
      %800 = vector.extract_strided_slice %775 {offsets = [0, 2048], sizes = [8, 128], strides = [1, 1]} : vector<8x3072xf32> to vector<8x128xf32>
      %801 = vector.extract_strided_slice %775 {offsets = [0, 2176], sizes = [8, 128], strides = [1, 1]} : vector<8x3072xf32> to vector<8x128xf32>
      %802 = arith.maximumf %800, %801 : vector<8x128xf32>
      %803 = vector.extract_strided_slice %775 {offsets = [0, 2304], sizes = [8, 128], strides = [1, 1]} : vector<8x3072xf32> to vector<8x128xf32>
      %804 = vector.extract_strided_slice %775 {offsets = [0, 2432], sizes = [8, 128], strides = [1, 1]} : vector<8x3072xf32> to vector<8x128xf32>
      %805 = arith.maximumf %803, %804 : vector<8x128xf32>
      %806 = vector.extract_strided_slice %775 {offsets = [0, 2560], sizes = [8, 128], strides = [1, 1]} : vector<8x3072xf32> to vector<8x128xf32>
      %807 = vector.extract_strided_slice %775 {offsets = [0, 2688], sizes = [8, 128], strides = [1, 1]} : vector<8x3072xf32> to vector<8x128xf32>
      %808 = arith.maximumf %806, %807 : vector<8x128xf32>
      %809 = vector.extract_strided_slice %775 {offsets = [0, 2816], sizes = [8, 128], strides = [1, 1]} : vector<8x3072xf32> to vector<8x128xf32>
      %810 = vector.extract_strided_slice %775 {offsets = [0, 2944], sizes = [8, 128], strides = [1, 1]} : vector<8x3072xf32> to vector<8x128xf32>
      %811 = arith.maximumf %809, %810 : vector<8x128xf32>
      %812 = tpu.concatenate %778, %781, %784, %787, %790, %793, %796, %799, %802, %805, %808, %811 in 1 : vector<8x128xf32>, vector<8x128xf32>, vector<8x128xf32>, vector<8x128xf32>, vector<8x128xf32>, vector<8x128xf32>, vector<8x128xf32>, vector<8x128xf32>, vector<8x128xf32>, vector<8x128xf32>, vector<8x128xf32>, vector<8x128xf32> -> vector<8x1536xf32>
      %813 = arith.index_cast %arg10 : i32 to index
      %c0_184 = arith.constant 0 : index
      %c0_185 = arith.constant 0 : index
      %814 = vector.load %arg9[%813, %c0_184, %c0_185] : memref<12x8x1536xf32, #tpu.memory_space<vmem>>, vector<1x8x1536xf32>
      %815 = vector.shape_cast %814 : vector<1x8x1536xf32> to vector<8x1536xf32>
      %816 = vector.shape_cast %812 : vector<8x1536xf32> to vector<1x8x1536xf32>
      tpu.vector_store %arg9[%813, %c0_184, %c0_185], %816 {strides = array<i32>} : memref<12x8x1536xf32, #tpu.memory_space<vmem>>, vector<1x8x1536xf32>,
    }
    %c12_i32_8 = arith.constant 12 : i32
    %cst = arith.constant 0.000000e+00 : f32
    %5 = vector.broadcast %cst : f32 to vector<32x128xf32>
    %c0_9 = arith.constant 0 : index
    %c0_10 = arith.constant 0 : index
    %c0_11 = arith.constant 0 : index
    %6 = vector.load %arg9[%c0_9, %c0_10, %c0_11] : memref<12x8x1536xf32, #tpu.memory_space<vmem>>, vector<1x8x1536xf32>
    %7 = vector.shape_cast %6 : vector<1x8x1536xf32> to vector<8x1536xf32>
    %8 = vector.extract_strided_slice %7 {offsets = [0, 0], sizes = [8, 1024], strides = [1, 1]} : vector<8x1536xf32> to vector<8x1024xf32>
    %9 = vector.extract_strided_slice %7 {offsets = [0, 128], sizes = [8, 1024], strides = [1, 1]} : vector<8x1536xf32> to vector<8x1024xf32>
    %10 = vector.extract_strided_slice %7 {offsets = [0, 256], sizes = [8, 1024], strides = [1, 1]} : vector<8x1536xf32> to vector<8x1024xf32>
    %11 = vector.extract_strided_slice %7 {offsets = [0, 384], sizes = [8, 1024], strides = [1, 1]} : vector<8x1536xf32> to vector<8x1024xf32>
    %12 = vector.extract_strided_slice %7 {offsets = [0, 512], sizes = [8, 1024], strides = [1, 1]} : vector<8x1536xf32> to vector<8x1024xf32>
    %c1 = arith.constant 1 : index
    %c0_12 = arith.constant 0 : index
    %c0_13 = arith.constant 0 : index
    %13 = vector.load %arg9[%c1, %c0_12, %c0_13] : memref<12x8x1536xf32, #tpu.memory_space<vmem>>, vector<1x8x1536xf32>
    %14 = vector.shape_cast %13 : vector<1x8x1536xf32> to vector<8x1536xf32>
    %15 = vector.extract_strided_slice %14 {offsets = [0, 0], sizes = [8, 1024], strides = [1, 1]} : vector<8x1536xf32> to vector<8x1024xf32>
    %16 = vector.extract_strided_slice %14 {offsets = [0, 128], sizes = [8, 1024], strides = [1, 1]} : vector<8x1536xf32> to vector<8x1024xf32>
    %17 = vector.extract_strided_slice %14 {offsets = [0, 256], sizes = [8, 1024], strides = [1, 1]} : vector<8x1536xf32> to vector<8x1024xf32>
    %18 = vector.extract_strided_slice %14 {offsets = [0, 384], sizes = [8, 1024], strides = [1, 1]} : vector<8x1536xf32> to vector<8x1024xf32>
    %19 = vector.extract_strided_slice %14 {offsets = [0, 512], sizes = [8, 1024], strides = [1, 1]} : vector<8x1536xf32> to vector<8x1024xf32>
    %c2 = arith.constant 2 : index
    %c0_14 = arith.constant 0 : index
    %c0_15 = arith.constant 0 : index
    %20 = vector.load %arg9[%c2, %c0_14, %c0_15] : memref<12x8x1536xf32, #tpu.memory_space<vmem>>, vector<1x8x1536xf32>
    %21 = vector.shape_cast %20 : vector<1x8x1536xf32> to vector<8x1536xf32>
    %22 = vector.extract_strided_slice %21 {offsets = [0, 0], sizes = [8, 1024], strides = [1, 1]} : vector<8x1536xf32> to vector<8x1024xf32>
    %23 = vector.extract_strided_slice %21 {offsets = [0, 128], sizes = [8, 1024], strides = [1, 1]} : vector<8x1536xf32> to vector<8x1024xf32>
    %24 = vector.extract_strided_slice %21 {offsets = [0, 256], sizes = [8, 1024], strides = [1, 1]} : vector<8x1536xf32> to vector<8x1024xf32>
    %25 = vector.extract_strided_slice %21 {offsets = [0, 384], sizes = [8, 1024], strides = [1, 1]} : vector<8x1536xf32> to vector<8x1024xf32>
    %26 = vector.extract_strided_slice %21 {offsets = [0, 512], sizes = [8, 1024], strides = [1, 1]} : vector<8x1536xf32> to vector<8x1024xf32>
    %c3 = arith.constant 3 : index
    %c0_16 = arith.constant 0 : index
    %c0_17 = arith.constant 0 : index
    %27 = vector.load %arg9[%c3, %c0_16, %c0_17] : memref<12x8x1536xf32, #tpu.memory_space<vmem>>, vector<1x8x1536xf32>
    %28 = vector.shape_cast %27 : vector<1x8x1536xf32> to vector<8x1536xf32>
    %29 = vector.extract_strided_slice %28 {offsets = [0, 0], sizes = [8, 1024], strides = [1, 1]} : vector<8x1536xf32> to vector<8x1024xf32>
    %30 = vector.extract_strided_slice %28 {offsets = [0, 128], sizes = [8, 1024], strides = [1, 1]} : vector<8x1536xf32> to vector<8x1024xf32>
    %31 = vector.extract_strided_slice %28 {offsets = [0, 256], sizes = [8, 1024], strides = [1, 1]} : vector<8x1536xf32> to vector<8x1024xf32>
    %32 = vector.extract_strided_slice %28 {offsets = [0, 384], sizes = [8, 1024], strides = [1, 1]} : vector<8x1536xf32> to vector<8x1024xf32>
    %33 = vector.extract_strided_slice %28 {offsets = [0, 512], sizes = [8, 1024], strides = [1, 1]} : vector<8x1536xf32> to vector<8x1024xf32>
    %c4 = arith.constant 4 : index
    %c0_18 = arith.constant 0 : index
    %c0_19 = arith.constant 0 : index
    %34 = vector.load %arg9[%c4, %c0_18, %c0_19] : memref<12x8x1536xf32, #tpu.memory_space<vmem>>, vector<1x8x1536xf32>
    %35 = vector.shape_cast %34 : vector<1x8x1536xf32> to vector<8x1536xf32>
    %36 = vector.extract_strided_slice %35 {offsets = [0, 0], sizes = [8, 1024], strides = [1, 1]} : vector<8x1536xf32> to vector<8x1024xf32>
    %37 = vector.extract_strided_slice %35 {offsets = [0, 128], sizes = [8, 1024], strides = [1, 1]} : vector<8x1536xf32> to vector<8x1024xf32>
    %38 = vector.extract_strided_slice %35 {offsets = [0, 256], sizes = [8, 1024], strides = [1, 1]} : vector<8x1536xf32> to vector<8x1024xf32>
    %39 = vector.extract_strided_slice %35 {offsets = [0, 384], sizes = [8, 1024], strides = [1, 1]} : vector<8x1536xf32> to vector<8x1024xf32>
    %40 = vector.extract_strided_slice %35 {offsets = [0, 512], sizes = [8, 1024], strides = [1, 1]} : vector<8x1536xf32> to vector<8x1024xf32>
    %41 = tpu.concatenate %8, %9, %10, %11, %12, %15, %16, %17, %18, %19, %22, %23, %24, %25, %26, %29 in 0 : vector<8x1024xf32>, vector<8x1024xf32>, vector<8x1024xf32>, vector<8x1024xf32>, vector<8x1024xf32>, vector<8x1024xf32>, vector<8x1024xf32>, vector<8x1024xf32>, vector<8x1024xf32>, vector<8x1024xf32>, vector<8x1024xf32>, vector<8x1024xf32>, vector<8x1024xf32>, vector<8x1024xf32>, vector<8x1024xf32>, vector<8x1024xf32> -> vector<128x1024xf32>
    %42 = tpu.concatenate %30, %31, %32, %33, %36, %37, %38, %39, %40 in 0 : vector<8x1024xf32>, vector<8x1024xf32>, vector<8x1024xf32>, vector<8x1024xf32>, vector<8x1024xf32>, vector<8x1024xf32>, vector<8x1024xf32>, vector<8x1024xf32>, vector<8x1024xf32> -> vector<72x1024xf32>
    %43 = tpu.concatenate %41, %42 in 0 : vector<128x1024xf32>, vector<72x1024xf32> -> vector<200x1024xf32>
    %cst_20 = arith.constant dense<0.000000e+00> : vector<32x1024xf32>
    %44 = tpu.matmul %2, %43, %cst_20 {dimension_numbers = #tpu.dot_dimension_numbers<[1], [0], [0], [1], [0, 0, 1, 1], [], []>} : vector<32x200xf32>, vector<200x1024xf32>, vector<32x1024xf32> -> vector<32x1024xf32>
    %45 = vector.broadcast %3 : vector<32x1xf32> to vector<32x1024xf32>
    %46 = arith.addf %44, %45 : vector<32x1024xf32>
    %cst_21 = arith.constant 0.000000e+00 : f32
    %47 = vector.broadcast %cst_21 : f32 to vector<32x1024xf32>
    %48 = arith.maximumf %46, %47 : vector<32x1024xf32>
    %c1_22 = arith.constant 1 : index
    %c0_23 = arith.constant 0 : index
    %c0_24 = arith.constant 0 : index
    %49 = vector.load %arg9[%c1_22, %c0_23, %c0_24] : memref<12x8x1536xf32, #tpu.memory_space<vmem>>, vector<1x8x1536xf32>
    %50 = vector.shape_cast %49 : vector<1x8x1536xf32> to vector<8x1536xf32>
    %51 = vector.extract_strided_slice %50 {offsets = [0, 0], sizes = [8, 1024], strides = [1, 1]} : vector<8x1536xf32> to vector<8x1024xf32>
    %52 = vector.extract_strided_slice %50 {offsets = [0, 128], sizes = [8, 1024], strides = [1, 1]} : vector<8x1536xf32> to vector<8x1024xf32>
    %53 = vector.extract_strided_slice %50 {offsets = [0, 256], sizes = [8, 1024], strides = [1, 1]} : vector<8x1536xf32> to vector<8x1024xf32>
    %54 = vector.extract_strided_slice %50 {offsets = [0, 384], sizes = [8, 1024], strides = [1, 1]} : vector<8x1536xf32> to vector<8x1024xf32>
    %55 = vector.extract_strided_slice %50 {offsets = [0, 512], sizes = [8, 1024], strides = [1, 1]} : vector<8x1536xf32> to vector<8x1024xf32>
    %c2_25 = arith.constant 2 : index
    %c0_26 = arith.constant 0 : index
    %c0_27 = arith.constant 0 : index
    %56 = vector.load %arg9[%c2_25, %c0_26, %c0_27] : memref<12x8x1536xf32, #tpu.memory_space<vmem>>, vector<1x8x1536xf32>
    %57 = vector.shape_cast %56 : vector<1x8x1536xf32> to vector<8x1536xf32>
    %58 = vector.extract_strided_slice %57 {offsets = [0, 0], sizes = [8, 1024], strides = [1, 1]} : vector<8x1536xf32> to vector<8x1024xf32>
    %59 = vector.extract_strided_slice %57 {offsets = [0, 128], sizes = [8, 1024], strides = [1, 1]} : vector<8x1536xf32> to vector<8x1024xf32>
    %60 = vector.extract_strided_slice %57 {offsets = [0, 256], sizes = [8, 1024], strides = [1, 1]} : vector<8x1536xf32> to vector<8x1024xf32>
    %61 = vector.extract_strided_slice %57 {offsets = [0, 384], sizes = [8, 1024], strides = [1, 1]} : vector<8x1536xf32> to vector<8x1024xf32>
    %62 = vector.extract_strided_slice %57 {offsets = [0, 512], sizes = [8, 1024], strides = [1, 1]} : vector<8x1536xf32> to vector<8x1024xf32>
    %c3_28 = arith.constant 3 : index
    %c0_29 = arith.constant 0 : index
    %c0_30 = arith.constant 0 : index
    %63 = vector.load %arg9[%c3_28, %c0_29, %c0_30] : memref<12x8x1536xf32, #tpu.memory_space<vmem>>, vector<1x8x1536xf32>
    %64 = vector.shape_cast %63 : vector<1x8x1536xf32> to vector<8x1536xf32>
    %65 = vector.extract_strided_slice %64 {offsets = [0, 0], sizes = [8, 1024], strides = [1, 1]} : vector<8x1536xf32> to vector<8x1024xf32>
    %66 = vector.extract_strided_slice %64 {offsets = [0, 128], sizes = [8, 1024], strides = [1, 1]} : vector<8x1536xf32> to vector<8x1024xf32>
    %67 = vector.extract_strided_slice %64 {offsets = [0, 256], sizes = [8, 1024], strides = [1, 1]} : vector<8x1536xf32> to vector<8x1024xf32>
    %68 = vector.extract_strided_slice %64 {offsets = [0, 384], sizes = [8, 1024], strides = [1, 1]} : vector<8x1536xf32> to vector<8x1024xf32>
    %69 = vector.extract_strided_slice %64 {offsets = [0, 512], sizes = [8, 1024], strides = [1, 1]} : vector<8x1536xf32> to vector<8x1024xf32>
    %c4_31 = arith.constant 4 : index
    %c0_32 = arith.constant 0 : index
    %c0_33 = arith.constant 0 : index
    %70 = vector.load %arg9[%c4_31, %c0_32, %c0_33] : memref<12x8x1536xf32, #tpu.memory_space<vmem>>, vector<1x8x1536xf32>
    %71 = vector.shape_cast %70 : vector<1x8x1536xf32> to vector<8x1536xf32>
    %72 = vector.extract_strided_slice %71 {offsets = [0, 0], sizes = [8, 1024], strides = [1, 1]} : vector<8x1536xf32> to vector<8x1024xf32>
    %73 = vector.extract_strided_slice %71 {offsets = [0, 128], sizes = [8, 1024], strides = [1, 1]} : vector<8x1536xf32> to vector<8x1024xf32>
    %74 = vector.extract_strided_slice %71 {offsets = [0, 256], sizes = [8, 1024], strides = [1, 1]} : vector<8x1536xf32> to vector<8x1024xf32>
    %75 = vector.extract_strided_slice %71 {offsets = [0, 384], sizes = [8, 1024], strides = [1, 1]} : vector<8x1536xf32> to vector<8x1024xf32>
    %76 = vector.extract_strided_slice %71 {offsets = [0, 512], sizes = [8, 1024], strides = [1, 1]} : vector<8x1536xf32> to vector<8x1024xf32>
    %c5 = arith.constant 5 : index
    %c0_34 = arith.constant 0 : index
    %c0_35 = arith.constant 0 : index
    %77 = vector.load %arg9[%c5, %c0_34, %c0_35] : memref<12x8x1536xf32, #tpu.memory_space<vmem>>, vector<1x8x1536xf32>
    %78 = vector.shape_cast %77 : vector<1x8x1536xf32> to vector<8x1536xf32>
    %79 = vector.extract_strided_slice %78 {offsets = [0, 0], sizes = [8, 1024], strides = [1, 1]} : vector<8x1536xf32> to vector<8x1024xf32>
    %80 = vector.extract_strided_slice %78 {offsets = [0, 128], sizes = [8, 1024], strides = [1, 1]} : vector<8x1536xf32> to vector<8x1024xf32>
    %81 = vector.extract_strided_slice %78 {offsets = [0, 256], sizes = [8, 1024], strides = [1, 1]} : vector<8x1536xf32> to vector<8x1024xf32>
    %82 = vector.extract_strided_slice %78 {offsets = [0, 384], sizes = [8, 1024], strides = [1, 1]} : vector<8x1536xf32> to vector<8x1024xf32>
    %83 = vector.extract_strided_slice %78 {offsets = [0, 512], sizes = [8, 1024], strides = [1, 1]} : vector<8x1536xf32> to vector<8x1024xf32>
    %84 = tpu.concatenate %51, %52, %53, %54, %55, %58, %59, %60, %61, %62, %65, %66, %67, %68, %69, %72 in 0 : vector<8x1024xf32>, vector<8x1024xf32>, vector<8x1024xf32>, vector<8x1024xf32>, vector<8x1024xf32>, vector<8x1024xf32>, vector<8x1024xf32>, vector<8x1024xf32>, vector<8x1024xf32>, vector<8x1024xf32>, vector<8x1024xf32>, vector<8x1024xf32>, vector<8x1024xf32>, vector<8x1024xf32>, vector<8x1024xf32>, vector<8x1024xf32> -> vector<128x1024xf32>
    %85 = tpu.concatenate %73, %74, %75, %76, %79, %80, %81, %82, %83 in 0 : vector<8x1024xf32>, vector<8x1024xf32>, vector<8x1024xf32>, vector<8x1024xf32>, vector<8x1024xf32>, vector<8x1024xf32>, vector<8x1024xf32>, vector<8x1024xf32>, vector<8x1024xf32> -> vector<72x1024xf32>
    %86 = tpu.concatenate %84, %85 in 0 : vector<128x1024xf32>, vector<72x1024xf32> -> vector<200x1024xf32>
    %cst_36 = arith.constant dense<0.000000e+00> : vector<32x1024xf32>
    %87 = tpu.matmul %2, %86, %cst_36 {dimension_numbers = #tpu.dot_dimension_numbers<[1], [0], [0], [1], [0, 0, 1, 1], [], []>} : vector<32x200xf32>, vector<200x1024xf32>, vector<32x1024xf32> -> vector<32x1024xf32>
    %88 = vector.broadcast %3 : vector<32x1xf32> to vector<32x1024xf32>
    %89 = arith.addf %87, %88 : vector<32x1024xf32>
    %cst_37 = arith.constant 0.000000e+00 : f32
    %90 = vector.broadcast %cst_37 : f32 to vector<32x1024xf32>
    %91 = arith.maximumf %89, %90 : vector<32x1024xf32>
    %92 = arith.maximumf %48, %91 : vector<32x1024xf32>
    %93 = vector.extract_strided_slice %92 {offsets = [0, 0], sizes = [32, 128], strides = [1, 1]} : vector<32x1024xf32> to vector<32x128xf32>
    %94 = vector.extract_strided_slice %92 {offsets = [0, 128], sizes = [32, 128], strides = [1, 1]} : vector<32x1024xf32> to vector<32x128xf32>
    %95 = arith.maximumf %93, %94 : vector<32x128xf32>
    %96 = arith.addf %5, %95 : vector<32x128xf32>
    %97 = vector.extract_strided_slice %92 {offsets = [0, 256], sizes = [32, 128], strides = [1, 1]} : vector<32x1024xf32> to vector<32x128xf32>
    %98 = vector.extract_strided_slice %92 {offsets = [0, 384], sizes = [32, 128], strides = [1, 1]} : vector<32x1024xf32> to vector<32x128xf32>
    %99 = arith.maximumf %97, %98 : vector<32x128xf32>
    %100 = arith.addf %96, %99 : vector<32x128xf32>
    %101 = vector.extract_strided_slice %92 {offsets = [0, 512], sizes = [32, 128], strides = [1, 1]} : vector<32x1024xf32> to vector<32x128xf32>
    %102 = vector.extract_strided_slice %92 {offsets = [0, 640], sizes = [32, 128], strides = [1, 1]} : vector<32x1024xf32> to vector<32x128xf32>
    %103 = arith.maximumf %101, %102 : vector<32x128xf32>
    %104 = arith.addf %100, %103 : vector<32x128xf32>
    %105 = vector.extract_strided_slice %92 {offsets = [0, 768], sizes = [32, 128], strides = [1, 1]} : vector<32x1024xf32> to vector<32x128xf32>
    %106 = vector.extract_strided_slice %92 {offsets = [0, 896], sizes = [32, 128], strides = [1, 1]} : vector<32x1024xf32> to vector<32x128xf32>
    %107 = arith.maximumf %105, %106 : vector<32x128xf32>
    %108 = arith.addf %104, %107 : vector<32x128xf32>
    %c2_38 = arith.constant 2 : index
    %c0_39 = arith.constant 0 : index
    %c0_40 = arith.constant 0 : index
    %109 = vector.load %arg9[%c2_38, %c0_39, %c0_40] : memref<12x8x1536xf32, #tpu.memory_space<vmem>>, vector<1x8x1536xf32>
    %110 = vector.shape_cast %109 : vector<1x8x1536xf32> to vector<8x1536xf32>
    %111 = vector.extract_strided_slice %110 {offsets = [0, 0], sizes = [8, 1024], strides = [1, 1]} : vector<8x1536xf32> to vector<8x1024xf32>
    %112 = vector.extract_strided_slice %110 {offsets = [0, 128], sizes = [8, 1024], strides = [1, 1]} : vector<8x1536xf32> to vector<8x1024xf32>
    %113 = vector.extract_strided_slice %110 {offsets = [0, 256], sizes = [8, 1024], strides = [1, 1]} : vector<8x1536xf32> to vector<8x1024xf32>
    %114 = vector.extract_strided_slice %110 {offsets = [0, 384], sizes = [8, 1024], strides = [1, 1]} : vector<8x1536xf32> to vector<8x1024xf32>
    %115 = vector.extract_strided_slice %110 {offsets = [0, 512], sizes = [8, 1024], strides = [1, 1]} : vector<8x1536xf32> to vector<8x1024xf32>
    %c3_41 = arith.constant 3 : index
    %c0_42 = arith.constant 0 : index
    %c0_43 = arith.constant 0 : index
    %116 = vector.load %arg9[%c3_41, %c0_42, %c0_43] : memref<12x8x1536xf32, #tpu.memory_space<vmem>>, vector<1x8x1536xf32>
    %117 = vector.shape_cast %116 : vector<1x8x1536xf32> to vector<8x1536xf32>
    %118 = vector.extract_strided_slice %117 {offsets = [0, 0], sizes = [8, 1024], strides = [1, 1]} : vector<8x1536xf32> to vector<8x1024xf32>
    %119 = vector.extract_strided_slice %117 {offsets = [0, 128], sizes = [8, 1024], strides = [1, 1]} : vector<8x1536xf32> to vector<8x1024xf32>
    %120 = vector.extract_strided_slice %117 {offsets = [0, 256], sizes = [8, 1024], strides = [1, 1]} : vector<8x1536xf32> to vector<8x1024xf32>
    %121 = vector.extract_strided_slice %117 {offsets = [0, 384], sizes = [8, 1024], strides = [1, 1]} : vector<8x1536xf32> to vector<8x1024xf32>
    %122 = vector.extract_strided_slice %117 {offsets = [0, 512], sizes = [8, 1024], strides = [1, 1]} : vector<8x1536xf32> to vector<8x1024xf32>
    %c4_44 = arith.constant 4 : index
    %c0_45 = arith.constant 0 : index
    %c0_46 = arith.constant 0 : index
    %123 = vector.load %arg9[%c4_44, %c0_45, %c0_46] : memref<12x8x1536xf32, #tpu.memory_space<vmem>>, vector<1x8x1536xf32>
    %124 = vector.shape_cast %123 : vector<1x8x1536xf32> to vector<8x1536xf32>
    %125 = vector.extract_strided_slice %124 {offsets = [0, 0], sizes = [8, 1024], strides = [1, 1]} : vector<8x1536xf32> to vector<8x1024xf32>
    %126 = vector.extract_strided_slice %124 {offsets = [0, 128], sizes = [8, 1024], strides = [1, 1]} : vector<8x1536xf32> to vector<8x1024xf32>
    %127 = vector.extract_strided_slice %124 {offsets = [0, 256], sizes = [8, 1024], strides = [1, 1]} : vector<8x1536xf32> to vector<8x1024xf32>
    %128 = vector.extract_strided_slice %124 {offsets = [0, 384], sizes = [8, 1024], strides = [1, 1]} : vector<8x1536xf32> to vector<8x1024xf32>
    %129 = vector.extract_strided_slice %124 {offsets = [0, 512], sizes = [8, 1024], strides = [1, 1]} : vector<8x1536xf32> to vector<8x1024xf32>
    %c5_47 = arith.constant 5 : index
    %c0_48 = arith.constant 0 : index
    %c0_49 = arith.constant 0 : index
    %130 = vector.load %arg9[%c5_47, %c0_48, %c0_49] : memref<12x8x1536xf32, #tpu.memory_space<vmem>>, vector<1x8x1536xf32>
    %131 = vector.shape_cast %130 : vector<1x8x1536xf32> to vector<8x1536xf32>
    %132 = vector.extract_strided_slice %131 {offsets = [0, 0], sizes = [8, 1024], strides = [1, 1]} : vector<8x1536xf32> to vector<8x1024xf32>
    %133 = vector.extract_strided_slice %131 {offsets = [0, 128], sizes = [8, 1024], strides = [1, 1]} : vector<8x1536xf32> to vector<8x1024xf32>
    %134 = vector.extract_strided_slice %131 {offsets = [0, 256], sizes = [8, 1024], strides = [1, 1]} : vector<8x1536xf32> to vector<8x1024xf32>
    %135 = vector.extract_strided_slice %131 {offsets = [0, 384], sizes = [8, 1024], strides = [1, 1]} : vector<8x1536xf32> to vector<8x1024xf32>
    %136 = vector.extract_strided_slice %131 {offsets = [0, 512], sizes = [8, 1024], strides = [1, 1]} : vector<8x1536xf32> to vector<8x1024xf32>
    %c6 = arith.constant 6 : index
    %c0_50 = arith.constant 0 : index
    %c0_51 = arith.constant 0 : index
    %137 = vector.load %arg9[%c6, %c0_50, %c0_51] : memref<12x8x1536xf32, #tpu.memory_space<vmem>>, vector<1x8x1536xf32>
    %138 = vector.shape_cast %137 : vector<1x8x1536xf32> to vector<8x1536xf32>
    %139 = vector.extract_strided_slice %138 {offsets = [0, 0], sizes = [8, 1024], strides = [1, 1]} : vector<8x1536xf32> to vector<8x1024xf32>
    %140 = vector.extract_strided_slice %138 {offsets = [0, 128], sizes = [8, 1024], strides = [1, 1]} : vector<8x1536xf32> to vector<8x1024xf32>
    %141 = vector.extract_strided_slice %138 {offsets = [0, 256], sizes = [8, 1024], strides = [1, 1]} : vector<8x1536xf32> to vector<8x1024xf32>
    %142 = vector.extract_strided_slice %138 {offsets = [0, 384], sizes = [8, 1024], strides = [1, 1]} : vector<8x1536xf32> to vector<8x1024xf32>
    %143 = vector.extract_strided_slice %138 {offsets = [0, 512], sizes = [8, 1024], strides = [1, 1]} : vector<8x1536xf32> to vector<8x1024xf32>
    %144 = tpu.concatenate %111, %112, %113, %114, %115, %118, %119, %120, %121, %122, %125, %126, %127, %128, %129, %132 in 0 : vector<8x1024xf32>, vector<8x1024xf32>, vector<8x1024xf32>, vector<8x1024xf32>, vector<8x1024xf32>, vector<8x1024xf32>, vector<8x1024xf32>, vector<8x1024xf32>, vector<8x1024xf32>, vector<8x1024xf32>, vector<8x1024xf32>, vector<8x1024xf32>, vector<8x1024xf32>, vector<8x1024xf32>, vector<8x1024xf32>, vector<8x1024xf32> -> vector<128x1024xf32>
    %145 = tpu.concatenate %133, %134, %135, %136, %139, %140, %141, %142, %143 in 0 : vector<8x1024xf32>, vector<8x1024xf32>, vector<8x1024xf32>, vector<8x1024xf32>, vector<8x1024xf32>, vector<8x1024xf32>, vector<8x1024xf32>, vector<8x1024xf32>, vector<8x1024xf32> -> vector<72x1024xf32>
    %146 = tpu.concatenate %144, %145 in 0 : vector<128x1024xf32>, vector<72x1024xf32> -> vector<200x1024xf32>
    %cst_52 = arith.constant dense<0.000000e+00> : vector<32x1024xf32>
    %147 = tpu.matmul %2, %146, %cst_52 {dimension_numbers = #tpu.dot_dimension_numbers<[1], [0], [0], [1], [0, 0, 1, 1], [], []>} : vector<32x200xf32>, vector<200x1024xf32>, vector<32x1024xf32> -> vector<32x1024xf32>
    %148 = vector.broadcast %3 : vector<32x1xf32> to vector<32x1024xf32>
    %149 = arith.addf %147, %148 : vector<32x1024xf32>
    %cst_53 = arith.constant 0.000000e+00 : f32
    %150 = vector.broadcast %cst_53 : f32 to vector<32x1024xf32>
    %151 = arith.maximumf %149, %150 : vector<32x1024xf32>
    %c3_54 = arith.constant 3 : index
    %c0_55 = arith.constant 0 : index
    %c0_56 = arith.constant 0 : index
    %152 = vector.load %arg9[%c3_54, %c0_55, %c0_56] : memref<12x8x1536xf32, #tpu.memory_space<vmem>>, vector<1x8x1536xf32>
    %153 = vector.shape_cast %152 : vector<1x8x1536xf32> to vector<8x1536xf32>
    %154 = vector.extract_strided_slice %153 {offsets = [0, 0], sizes = [8, 1024], strides = [1, 1]} : vector<8x1536xf32> to vector<8x1024xf32>
    %155 = vector.extract_strided_slice %153 {offsets = [0, 128], sizes = [8, 1024], strides = [1, 1]} : vector<8x1536xf32> to vector<8x1024xf32>
    %156 = vector.extract_strided_slice %153 {offsets = [0, 256], sizes = [8, 1024], strides = [1, 1]} : vector<8x1536xf32> to vector<8x1024xf32>
    %157 = vector.extract_strided_slice %153 {offsets = [0, 384], sizes = [8, 1024], strides = [1, 1]} : vector<8x1536xf32> to vector<8x1024xf32>
    %158 = vector.extract_strided_slice %153 {offsets = [0, 512], sizes = [8, 1024], strides = [1, 1]} : vector<8x1536xf32> to vector<8x1024xf32>
    %c4_57 = arith.constant 4 : index
    %c0_58 = arith.constant 0 : index
    %c0_59 = arith.constant 0 : index
    %159 = vector.load %arg9[%c4_57, %c0_58, %c0_59] : memref<12x8x1536xf32, #tpu.memory_space<vmem>>, vector<1x8x1536xf32>
    %160 = vector.shape_cast %159 : vector<1x8x1536xf32> to vector<8x1536xf32>
    %161 = vector.extract_strided_slice %160 {offsets = [0, 0], sizes = [8, 1024], strides = [1, 1]} : vector<8x1536xf32> to vector<8x1024xf32>
    %162 = vector.extract_strided_slice %160 {offsets = [0, 128], sizes = [8, 1024], strides = [1, 1]} : vector<8x1536xf32> to vector<8x1024xf32>
    %163 = vector.extract_strided_slice %160 {offsets = [0, 256], sizes = [8, 1024], strides = [1, 1]} : vector<8x1536xf32> to vector<8x1024xf32>
    %164 = vector.extract_strided_slice %160 {offsets = [0, 384], sizes = [8, 1024], strides = [1, 1]} : vector<8x1536xf32> to vector<8x1024xf32>
    %165 = vector.extract_strided_slice %160 {offsets = [0, 512], sizes = [8, 1024], strides = [1, 1]} : vector<8x1536xf32> to vector<8x1024xf32>
    %c5_60 = arith.constant 5 : index
    %c0_61 = arith.constant 0 : index
    %c0_62 = arith.constant 0 : index
    %166 = vector.load %arg9[%c5_60, %c0_61, %c0_62] : memref<12x8x1536xf32, #tpu.memory_space<vmem>>, vector<1x8x1536xf32>
    %167 = vector.shape_cast %166 : vector<1x8x1536xf32> to vector<8x1536xf32>
    %168 = vector.extract_strided_slice %167 {offsets = [0, 0], sizes = [8, 1024], strides = [1, 1]} : vector<8x1536xf32> to vector<8x1024xf32>
    %169 = vector.extract_strided_slice %167 {offsets = [0, 128], sizes = [8, 1024], strides = [1, 1]} : vector<8x1536xf32> to vector<8x1024xf32>
    %170 = vector.extract_strided_slice %167 {offsets = [0, 256], sizes = [8, 1024], strides = [1, 1]} : vector<8x1536xf32> to vector<8x1024xf32>
    %171 = vector.extract_strided_slice %167 {offsets = [0, 384], sizes = [8, 1024], strides = [1, 1]} : vector<8x1536xf32> to vector<8x1024xf32>
    %172 = vector.extract_strided_slice %167 {offsets = [0, 512], sizes = [8, 1024], strides = [1, 1]} : vector<8x1536xf32> to vector<8x1024xf32>
    %c6_63 = arith.constant 6 : index
    %c0_64 = arith.constant 0 : index
    %c0_65 = arith.constant 0 : index
    %173 = vector.load %arg9[%c6_63, %c0_64, %c0_65] : memref<12x8x1536xf32, #tpu.memory_space<vmem>>, vector<1x8x1536xf32>
    %174 = vector.shape_cast %173 : vector<1x8x1536xf32> to vector<8x1536xf32>
    %175 = vector.extract_strided_slice %174 {offsets = [0, 0], sizes = [8, 1024], strides = [1, 1]} : vector<8x1536xf32> to vector<8x1024xf32>
    %176 = vector.extract_strided_slice %174 {offsets = [0, 128], sizes = [8, 1024], strides = [1, 1]} : vector<8x1536xf32> to vector<8x1024xf32>
    %177 = vector.extract_strided_slice %174 {offsets = [0, 256], sizes = [8, 1024], strides = [1, 1]} : vector<8x1536xf32> to vector<8x1024xf32>
    %178 = vector.extract_strided_slice %174 {offsets = [0, 384], sizes = [8, 1024], strides = [1, 1]} : vector<8x1536xf32> to vector<8x1024xf32>
    %179 = vector.extract_strided_slice %174 {offsets = [0, 512], sizes = [8, 1024], strides = [1, 1]} : vector<8x1536xf32> to vector<8x1024xf32>
    %c7 = arith.constant 7 : index
    %c0_66 = arith.constant 0 : index
    %c0_67 = arith.constant 0 : index
    %180 = vector.load %arg9[%c7, %c0_66, %c0_67] : memref<12x8x1536xf32, #tpu.memory_space<vmem>>, vector<1x8x1536xf32>
    %181 = vector.shape_cast %180 : vector<1x8x1536xf32> to vector<8x1536xf32>
    %182 = vector.extract_strided_slice %181 {offsets = [0, 0], sizes = [8, 1024], strides = [1, 1]} : vector<8x1536xf32> to vector<8x1024xf32>
    %183 = vector.extract_strided_slice %181 {offsets = [0, 128], sizes = [8, 1024], strides = [1, 1]} : vector<8x1536xf32> to vector<8x1024xf32>
    %184 = vector.extract_strided_slice %181 {offsets = [0, 256], sizes = [8, 1024], strides = [1, 1]} : vector<8x1536xf32> to vector<8x1024xf32>
    %185 = vector.extract_strided_slice %181 {offsets = [0, 384], sizes = [8, 1024], strides = [1, 1]} : vector<8x1536xf32> to vector<8x1024xf32>
    %186 = vector.extract_strided_slice %181 {offsets = [0, 512], sizes = [8, 1024], strides = [1, 1]} : vector<8x1536xf32> to vector<8x1024xf32>
    %187 = tpu.concatenate %154, %155, %156, %157, %158, %161, %162, %163, %164, %165, %168, %169, %170, %171, %172, %175 in 0 : vector<8x1024xf32>, vector<8x1024xf32>, vector<8x1024xf32>, vector<8x1024xf32>, vector<8x1024xf32>, vector<8x1024xf32>, vector<8x1024xf32>, vector<8x1024xf32>, vector<8x1024xf32>, vector<8x1024xf32>, vector<8x1024xf32>, vector<8x1024xf32>, vector<8x1024xf32>, vector<8x1024xf32>, vector<8x1024xf32>, vector<8x1024xf32> -> vector<128x1024xf32>
    %188 = tpu.concatenate %176, %177, %178, %179, %182, %183, %184, %185, %186 in 0 : vector<8x1024xf32>, vector<8x1024xf32>, vector<8x1024xf32>, vector<8x1024xf32>, vector<8x1024xf32>, vector<8x1024xf32>, vector<8x1024xf32>, vector<8x1024xf32>, vector<8x1024xf32> -> vector<72x1024xf32>
    %189 = tpu.concatenate %187, %188 in 0 : vector<128x1024xf32>, vector<72x1024xf32> -> vector<200x1024xf32>
    %cst_68 = arith.constant dense<0.000000e+00> : vector<32x1024xf32>
    %190 = tpu.matmul %2, %189, %cst_68 {dimension_numbers = #tpu.dot_dimension_numbers<[1], [0], [0], [1], [0, 0, 1, 1], [], []>} : vector<32x200xf32>, vector<200x1024xf32>, vector<32x1024xf32> -> vector<32x1024xf32>
    %191 = vector.broadcast %3 : vector<32x1xf32> to vector<32x1024xf32>
    %192 = arith.addf %190, %191 : vector<32x1024xf32>
    %cst_69 = arith.constant 0.000000e+00 : f32
    %193 = vector.broadcast %cst_69 : f32 to vector<32x1024xf32>
    %194 = arith.maximumf %192, %193 : vector<32x1024xf32>
    %195 = arith.maximumf %151, %194 : vector<32x1024xf32>
    %196 = vector.extract_strided_slice %195 {offsets = [0, 0], sizes = [32, 128], strides = [1, 1]} : vector<32x1024xf32> to vector<32x128xf32>
    %197 = vector.extract_strided_slice %195 {offsets = [0, 128], sizes = [32, 128], strides = [1, 1]} : vector<32x1024xf32> to vector<32x128xf32>
    %198 = arith.maximumf %196, %197 : vector<32x128xf32>
    %199 = arith.addf %108, %198 : vector<32x128xf32>
    %200 = vector.extract_strided_slice %195 {offsets = [0, 256], sizes = [32, 128], strides = [1, 1]} : vector<32x1024xf32> to vector<32x128xf32>
    %201 = vector.extract_strided_slice %195 {offsets = [0, 384], sizes = [32, 128], strides = [1, 1]} : vector<32x1024xf32> to vector<32x128xf32>
    %202 = arith.maximumf %200, %201 : vector<32x128xf32>
    %203 = arith.addf %199, %202 : vector<32x128xf32>
    %204 = vector.extract_strided_slice %195 {offsets = [0, 512], sizes = [32, 128], strides = [1, 1]} : vector<32x1024xf32> to vector<32x128xf32>
    %205 = vector.extract_strided_slice %195 {offsets = [0, 640], sizes = [32, 128], strides = [1, 1]} : vector<32x1024xf32> to vector<32x128xf32>
    %206 = arith.maximumf %204, %205 : vector<32x128xf32>
    %207 = arith.addf %203, %206 : vector<32x128xf32>
    %208 = vector.extract_strided_slice %195 {offsets = [0, 768], sizes = [32, 128], strides = [1, 1]} : vector<32x1024xf32> to vector<32x128xf32>
    %209 = vector.extract_strided_slice %195 {offsets = [0, 896], sizes = [32, 128], strides = [1, 1]} : vector<32x1024xf32> to vector<32x128xf32>
    %210 = arith.maximumf %208, %209 : vector<32x128xf32>
    %211 = arith.addf %207, %210 : vector<32x128xf32>
    %c4_70 = arith.constant 4 : index
    %c0_71 = arith.constant 0 : index
    %c0_72 = arith.constant 0 : index
    %212 = vector.load %arg9[%c4_70, %c0_71, %c0_72] : memref<12x8x1536xf32, #tpu.memory_space<vmem>>, vector<1x8x1536xf32>
    %213 = vector.shape_cast %212 : vector<1x8x1536xf32> to vector<8x1536xf32>
    %214 = vector.extract_strided_slice %213 {offsets = [0, 0], sizes = [8, 1024], strides = [1, 1]} : vector<8x1536xf32> to vector<8x1024xf32>
    %215 = vector.extract_strided_slice %213 {offsets = [0, 128], sizes = [8, 1024], strides = [1, 1]} : vector<8x1536xf32> to vector<8x1024xf32>
    %216 = vector.extract_strided_slice %213 {offsets = [0, 256], sizes = [8, 1024], strides = [1, 1]} : vector<8x1536xf32> to vector<8x1024xf32>
    %217 = vector.extract_strided_slice %213 {offsets = [0, 384], sizes = [8, 1024], strides = [1, 1]} : vector<8x1536xf32> to vector<8x1024xf32>
    %218 = vector.extract_strided_slice %213 {offsets = [0, 512], sizes = [8, 1024], strides = [1, 1]} : vector<8x1536xf32> to vector<8x1024xf32>
    %c5_73 = arith.constant 5 : index
    %c0_74 = arith.constant 0 : index
    %c0_75 = arith.constant 0 : index
    %219 = vector.load %arg9[%c5_73, %c0_74, %c0_75] : memref<12x8x1536xf32, #tpu.memory_space<vmem>>, vector<1x8x1536xf32>
    %220 = vector.shape_cast %219 : vector<1x8x1536xf32> to vector<8x1536xf32>
    %221 = vector.extract_strided_slice %220 {offsets = [0, 0], sizes = [8, 1024], strides = [1, 1]} : vector<8x1536xf32> to vector<8x1024xf32>
    %222 = vector.extract_strided_slice %220 {offsets = [0, 128], sizes = [8, 1024], strides = [1, 1]} : vector<8x1536xf32> to vector<8x1024xf32>
    %223 = vector.extract_strided_slice %220 {offsets = [0, 256], sizes = [8, 1024], strides = [1, 1]} : vector<8x1536xf32> to vector<8x1024xf32>
    %224 = vector.extract_strided_slice %220 {offsets = [0, 384], sizes = [8, 1024], strides = [1, 1]} : vector<8x1536xf32> to vector<8x1024xf32>
    %225 = vector.extract_strided_slice %220 {offsets = [0, 512], sizes = [8, 1024], strides = [1, 1]} : vector<8x1536xf32> to vector<8x1024xf32>
    %c6_76 = arith.constant 6 : index
    %c0_77 = arith.constant 0 : index
    %c0_78 = arith.constant 0 : index
    %226 = vector.load %arg9[%c6_76, %c0_77, %c0_78] : memref<12x8x1536xf32, #tpu.memory_space<vmem>>, vector<1x8x1536xf32>
    %227 = vector.shape_cast %226 : vector<1x8x1536xf32> to vector<8x1536xf32>
    %228 = vector.extract_strided_slice %227 {offsets = [0, 0], sizes = [8, 1024], strides = [1, 1]} : vector<8x1536xf32> to vector<8x1024xf32>
    %229 = vector.extract_strided_slice %227 {offsets = [0, 128], sizes = [8, 1024], strides = [1, 1]} : vector<8x1536xf32> to vector<8x1024xf32>
    %230 = vector.extract_strided_slice %227 {offsets = [0, 256], sizes = [8, 1024], strides = [1, 1]} : vector<8x1536xf32> to vector<8x1024xf32>
    %231 = vector.extract_strided_slice %227 {offsets = [0, 384], sizes = [8, 1024], strides = [1, 1]} : vector<8x1536xf32> to vector<8x1024xf32>
    %232 = vector.extract_strided_slice %227 {offsets = [0, 512], sizes = [8, 1024], strides = [1, 1]} : vector<8x1536xf32> to vector<8x1024xf32>
    %c7_79 = arith.constant 7 : index
    %c0_80 = arith.constant 0 : index
    %c0_81 = arith.constant 0 : index
    %233 = vector.load %arg9[%c7_79, %c0_80, %c0_81] : memref<12x8x1536xf32, #tpu.memory_space<vmem>>, vector<1x8x1536xf32>
    %234 = vector.shape_cast %233 : vector<1x8x1536xf32> to vector<8x1536xf32>
    %235 = vector.extract_strided_slice %234 {offsets = [0, 0], sizes = [8, 1024], strides = [1, 1]} : vector<8x1536xf32> to vector<8x1024xf32>
    %236 = vector.extract_strided_slice %234 {offsets = [0, 128], sizes = [8, 1024], strides = [1, 1]} : vector<8x1536xf32> to vector<8x1024xf32>
    %237 = vector.extract_strided_slice %234 {offsets = [0, 256], sizes = [8, 1024], strides = [1, 1]} : vector<8x1536xf32> to vector<8x1024xf32>
    %238 = vector.extract_strided_slice %234 {offsets = [0, 384], sizes = [8, 1024], strides = [1, 1]} : vector<8x1536xf32> to vector<8x1024xf32>
    %239 = vector.extract_strided_slice %234 {offsets = [0, 512], sizes = [8, 1024], strides = [1, 1]} : vector<8x1536xf32> to vector<8x1024xf32>
    %c8 = arith.constant 8 : index
    %c0_82 = arith.constant 0 : index
    %c0_83 = arith.constant 0 : index
    %240 = vector.load %arg9[%c8, %c0_82, %c0_83] : memref<12x8x1536xf32, #tpu.memory_space<vmem>>, vector<1x8x1536xf32>
    %241 = vector.shape_cast %240 : vector<1x8x1536xf32> to vector<8x1536xf32>
    %242 = vector.extract_strided_slice %241 {offsets = [0, 0], sizes = [8, 1024], strides = [1, 1]} : vector<8x1536xf32> to vector<8x1024xf32>
    %243 = vector.extract_strided_slice %241 {offsets = [0, 128], sizes = [8, 1024], strides = [1, 1]} : vector<8x1536xf32> to vector<8x1024xf32>
    %244 = vector.extract_strided_slice %241 {offsets = [0, 256], sizes = [8, 1024], strides = [1, 1]} : vector<8x1536xf32> to vector<8x1024xf32>
    %245 = vector.extract_strided_slice %241 {offsets = [0, 384], sizes = [8, 1024], strides = [1, 1]} : vector<8x1536xf32> to vector<8x1024xf32>
    %246 = vector.extract_strided_slice %241 {offsets = [0, 512], sizes = [8, 1024], strides = [1, 1]} : vector<8x1536xf32> to vector<8x1024xf32>
    %247 = tpu.concatenate %214, %215, %216, %217, %218, %221, %222, %223, %224, %225, %228, %229, %230, %231, %232, %235 in 0 : vector<8x1024xf32>, vector<8x1024xf32>, vector<8x1024xf32>, vector<8x1024xf32>, vector<8x1024xf32>, vector<8x1024xf32>, vector<8x1024xf32>, vector<8x1024xf32>, vector<8x1024xf32>, vector<8x1024xf32>, vector<8x1024xf32>, vector<8x1024xf32>, vector<8x1024xf32>, vector<8x1024xf32>, vector<8x1024xf32>, vector<8x1024xf32> -> vector<128x1024xf32>
    %248 = tpu.concatenate %236, %237, %238, %239, %242, %243, %244, %245, %246 in 0 : vector<8x1024xf32>, vector<8x1024xf32>, vector<8x1024xf32>, vector<8x1024xf32>, vector<8x1024xf32>, vector<8x1024xf32>, vector<8x1024xf32>, vector<8x1024xf32>, vector<8x1024xf32> -> vector<72x1024xf32>
    %249 = tpu.concatenate %247, %248 in 0 : vector<128x1024xf32>, vector<72x1024xf32> -> vector<200x1024xf32>
    %cst_84 = arith.constant dense<0.000000e+00> : vector<32x1024xf32>
    %250 = tpu.matmul %2, %249, %cst_84 {dimension_numbers = #tpu.dot_dimension_numbers<[1], [0], [0], [1], [0, 0, 1, 1], [], []>} : vector<32x200xf32>, vector<200x1024xf32>, vector<32x1024xf32> -> vector<32x1024xf32>
    %251 = vector.broadcast %3 : vector<32x1xf32> to vector<32x1024xf32>
    %252 = arith.addf %250, %251 : vector<32x1024xf32>
    %cst_85 = arith.constant 0.000000e+00 : f32
    %253 = vector.broadcast %cst_85 : f32 to vector<32x1024xf32>
    %254 = arith.maximumf %252, %253 : vector<32x1024xf32>
    %c5_86 = arith.constant 5 : index
    %c0_87 = arith.constant 0 : index
    %c0_88 = arith.constant 0 : index
    %255 = vector.load %arg9[%c5_86, %c0_87, %c0_88] : memref<12x8x1536xf32, #tpu.memory_space<vmem>>, vector<1x8x1536xf32>
    %256 = vector.shape_cast %255 : vector<1x8x1536xf32> to vector<8x1536xf32>
    %257 = vector.extract_strided_slice %256 {offsets = [0, 0], sizes = [8, 1024], strides = [1, 1]} : vector<8x1536xf32> to vector<8x1024xf32>
    %258 = vector.extract_strided_slice %256 {offsets = [0, 128], sizes = [8, 1024], strides = [1, 1]} : vector<8x1536xf32> to vector<8x1024xf32>
    %259 = vector.extract_strided_slice %256 {offsets = [0, 256], sizes = [8, 1024], strides = [1, 1]} : vector<8x1536xf32> to vector<8x1024xf32>
    %260 = vector.extract_strided_slice %256 {offsets = [0, 384], sizes = [8, 1024], strides = [1, 1]} : vector<8x1536xf32> to vector<8x1024xf32>
    %261 = vector.extract_strided_slice %256 {offsets = [0, 512], sizes = [8, 1024], strides = [1, 1]} : vector<8x1536xf32> to vector<8x1024xf32>
    %c6_89 = arith.constant 6 : index
    %c0_90 = arith.constant 0 : index
    %c0_91 = arith.constant 0 : index
    %262 = vector.load %arg9[%c6_89, %c0_90, %c0_91] : memref<12x8x1536xf32, #tpu.memory_space<vmem>>, vector<1x8x1536xf32>
    %263 = vector.shape_cast %262 : vector<1x8x1536xf32> to vector<8x1536xf32>
    %264 = vector.extract_strided_slice %263 {offsets = [0, 0], sizes = [8, 1024], strides = [1, 1]} : vector<8x1536xf32> to vector<8x1024xf32>
    %265 = vector.extract_strided_slice %263 {offsets = [0, 128], sizes = [8, 1024], strides = [1, 1]} : vector<8x1536xf32> to vector<8x1024xf32>
    %266 = vector.extract_strided_slice %263 {offsets = [0, 256], sizes = [8, 1024], strides = [1, 1]} : vector<8x1536xf32> to vector<8x1024xf32>
    %267 = vector.extract_strided_slice %263 {offsets = [0, 384], sizes = [8, 1024], strides = [1, 1]} : vector<8x1536xf32> to vector<8x1024xf32>
    %268 = vector.extract_strided_slice %263 {offsets = [0, 512], sizes = [8, 1024], strides = [1, 1]} : vector<8x1536xf32> to vector<8x1024xf32>
    %c7_92 = arith.constant 7 : index
    %c0_93 = arith.constant 0 : index
    %c0_94 = arith.constant 0 : index
    %269 = vector.load %arg9[%c7_92, %c0_93, %c0_94] : memref<12x8x1536xf32, #tpu.memory_space<vmem>>, vector<1x8x1536xf32>
    %270 = vector.shape_cast %269 : vector<1x8x1536xf32> to vector<8x1536xf32>
    %271 = vector.extract_strided_slice %270 {offsets = [0, 0], sizes = [8, 1024], strides = [1, 1]} : vector<8x1536xf32> to vector<8x1024xf32>
    %272 = vector.extract_strided_slice %270 {offsets = [0, 128], sizes = [8, 1024], strides = [1, 1]} : vector<8x1536xf32> to vector<8x1024xf32>
    %273 = vector.extract_strided_slice %270 {offsets = [0, 256], sizes = [8, 1024], strides = [1, 1]} : vector<8x1536xf32> to vector<8x1024xf32>
    %274 = vector.extract_strided_slice %270 {offsets = [0, 384], sizes = [8, 1024], strides = [1, 1]} : vector<8x1536xf32> to vector<8x1024xf32>
    %275 = vector.extract_strided_slice %270 {offsets = [0, 512], sizes = [8, 1024], strides = [1, 1]} : vector<8x1536xf32> to vector<8x1024xf32>
    %c8_95 = arith.constant 8 : index
    %c0_96 = arith.constant 0 : index
    %c0_97 = arith.constant 0 : index
    %276 = vector.load %arg9[%c8_95, %c0_96, %c0_97] : memref<12x8x1536xf32, #tpu.memory_space<vmem>>, vector<1x8x1536xf32>
    %277 = vector.shape_cast %276 : vector<1x8x1536xf32> to vector<8x1536xf32>
    %278 = vector.extract_strided_slice %277 {offsets = [0, 0], sizes = [8, 1024], strides = [1, 1]} : vector<8x1536xf32> to vector<8x1024xf32>
    %279 = vector.extract_strided_slice %277 {offsets = [0, 128], sizes = [8, 1024], strides = [1, 1]} : vector<8x1536xf32> to vector<8x1024xf32>
    %280 = vector.extract_strided_slice %277 {offsets = [0, 256], sizes = [8, 1024], strides = [1, 1]} : vector<8x1536xf32> to vector<8x1024xf32>
    %281 = vector.extract_strided_slice %277 {offsets = [0, 384], sizes = [8, 1024], strides = [1, 1]} : vector<8x1536xf32> to vector<8x1024xf32>
    %282 = vector.extract_strided_slice %277 {offsets = [0, 512], sizes = [8, 1024], strides = [1, 1]} : vector<8x1536xf32> to vector<8x1024xf32>
    %c9 = arith.constant 9 : index
    %c0_98 = arith.constant 0 : index
    %c0_99 = arith.constant 0 : index
    %283 = vector.load %arg9[%c9, %c0_98, %c0_99] : memref<12x8x1536xf32, #tpu.memory_space<vmem>>, vector<1x8x1536xf32>
    %284 = vector.shape_cast %283 : vector<1x8x1536xf32> to vector<8x1536xf32>
    %285 = vector.extract_strided_slice %284 {offsets = [0, 0], sizes = [8, 1024], strides = [1, 1]} : vector<8x1536xf32> to vector<8x1024xf32>
    %286 = vector.extract_strided_slice %284 {offsets = [0, 128], sizes = [8, 1024], strides = [1, 1]} : vector<8x1536xf32> to vector<8x1024xf32>
    %287 = vector.extract_strided_slice %284 {offsets = [0, 256], sizes = [8, 1024], strides = [1, 1]} : vector<8x1536xf32> to vector<8x1024xf32>
    %288 = vector.extract_strided_slice %284 {offsets = [0, 384], sizes = [8, 1024], strides = [1, 1]} : vector<8x1536xf32> to vector<8x1024xf32>
    %289 = vector.extract_strided_slice %284 {offsets = [0, 512], sizes = [8, 1024], strides = [1, 1]} : vector<8x1536xf32> to vector<8x1024xf32>
    %290 = tpu.concatenate %257, %258, %259, %260, %261, %264, %265, %266, %267, %268, %271, %272, %273, %274, %275, %278 in 0 : vector<8x1024xf32>, vector<8x1024xf32>, vector<8x1024xf32>, vector<8x1024xf32>, vector<8x1024xf32>, vector<8x1024xf32>, vector<8x1024xf32>, vector<8x1024xf32>, vector<8x1024xf32>, vector<8x1024xf32>, vector<8x1024xf32>, vector<8x1024xf32>, vector<8x1024xf32>, vector<8x1024xf32>, vector<8x1024xf32>, vector<8x1024xf32> -> vector<128x1024xf32>
    %291 = tpu.concatenate %279, %280, %281, %282, %285, %286, %287, %288, %289 in 0 : vector<8x1024xf32>, vector<8x1024xf32>, vector<8x1024xf32>, vector<8x1024xf32>, vector<8x1024xf32>, vector<8x1024xf32>, vector<8x1024xf32>, vector<8x1024xf32>, vector<8x1024xf32> -> vector<72x1024xf32>
    %292 = tpu.concatenate %290, %291 in 0 : vector<128x1024xf32>, vector<72x1024xf32> -> vector<200x1024xf32>
    %cst_100 = arith.constant dense<0.000000e+00> : vector<32x1024xf32>
    %293 = tpu.matmul %2, %292, %cst_100 {dimension_numbers = #tpu.dot_dimension_numbers<[1], [0], [0], [1], [0, 0, 1, 1], [], []>} : vector<32x200xf32>, vector<200x1024xf32>, vector<32x1024xf32> -> vector<32x1024xf32>
    %294 = vector.broadcast %3 : vector<32x1xf32> to vector<32x1024xf32>
    %295 = arith.addf %293, %294 : vector<32x1024xf32>
    %cst_101 = arith.constant 0.000000e+00 : f32
    %296 = vector.broadcast %cst_101 : f32 to vector<32x1024xf32>
    %297 = arith.maximumf %295, %296 : vector<32x1024xf32>
    %298 = arith.maximumf %254, %297 : vector<32x1024xf32>
    %299 = vector.extract_strided_slice %298 {offsets = [0, 0], sizes = [32, 128], strides = [1, 1]} : vector<32x1024xf32> to vector<32x128xf32>
    %300 = vector.extract_strided_slice %298 {offsets = [0, 128], sizes = [32, 128], strides = [1, 1]} : vector<32x1024xf32> to vector<32x128xf32>
    %301 = arith.maximumf %299, %300 : vector<32x128xf32>
    %302 = arith.addf %211, %301 : vector<32x128xf32>
    %303 = vector.extract_strided_slice %298 {offsets = [0, 256], sizes = [32, 128], strides = [1, 1]} : vector<32x1024xf32> to vector<32x128xf32>
    %304 = vector.extract_strided_slice %298 {offsets = [0, 384], sizes = [32, 128], strides = [1, 1]} : vector<32x1024xf32> to vector<32x128xf32>
    %305 = arith.maximumf %303, %304 : vector<32x128xf32>
    %306 = arith.addf %302, %305 : vector<32x128xf32>
    %307 = vector.extract_strided_slice %298 {offsets = [0, 512], sizes = [32, 128], strides = [1, 1]} : vector<32x1024xf32> to vector<32x128xf32>
    %308 = vector.extract_strided_slice %298 {offsets = [0, 640], sizes = [32, 128], strides = [1, 1]} : vector<32x1024xf32> to vector<32x128xf32>
    %309 = arith.maximumf %307, %308 : vector<32x128xf32>
    %310 = arith.addf %306, %309 : vector<32x128xf32>
    %311 = vector.extract_strided_slice %298 {offsets = [0, 768], sizes = [32, 128], strides = [1, 1]} : vector<32x1024xf32> to vector<32x128xf32>
    %312 = vector.extract_strided_slice %298 {offsets = [0, 896], sizes = [32, 128], strides = [1, 1]} : vector<32x1024xf32> to vector<32x128xf32>
    %313 = arith.maximumf %311, %312 : vector<32x128xf32>
    %314 = arith.addf %310, %313 : vector<32x128xf32>
    %c6_102 = arith.constant 6 : index
    %c0_103 = arith.constant 0 : index
    %c0_104 = arith.constant 0 : index
    %315 = vector.load %arg9[%c6_102, %c0_103, %c0_104] : memref<12x8x1536xf32, #tpu.memory_space<vmem>>, vector<1x8x1536xf32>
    %316 = vector.shape_cast %315 : vector<1x8x1536xf32> to vector<8x1536xf32>
    %317 = vector.extract_strided_slice %316 {offsets = [0, 0], sizes = [8, 1024], strides = [1, 1]} : vector<8x1536xf32> to vector<8x1024xf32>
    %318 = vector.extract_strided_slice %316 {offsets = [0, 128], sizes = [8, 1024], strides = [1, 1]} : vector<8x1536xf32> to vector<8x1024xf32>
    %319 = vector.extract_strided_slice %316 {offsets = [0, 256], sizes = [8, 1024], strides = [1, 1]} : vector<8x1536xf32> to vector<8x1024xf32>
    %320 = vector.extract_strided_slice %316 {offsets = [0, 384], sizes = [8, 1024], strides = [1, 1]} : vector<8x1536xf32> to vector<8x1024xf32>
    %321 = vector.extract_strided_slice %316 {offsets = [0, 512], sizes = [8, 1024], strides = [1, 1]} : vector<8x1536xf32> to vector<8x1024xf32>
    %c7_105 = arith.constant 7 : index
    %c0_106 = arith.constant 0 : index
    %c0_107 = arith.constant 0 : index
    %322 = vector.load %arg9[%c7_105, %c0_106, %c0_107] : memref<12x8x1536xf32, #tpu.memory_space<vmem>>, vector<1x8x1536xf32>
    %323 = vector.shape_cast %322 : vector<1x8x1536xf32> to vector<8x1536xf32>
    %324 = vector.extract_strided_slice %323 {offsets = [0, 0], sizes = [8, 1024], strides = [1, 1]} : vector<8x1536xf32> to vector<8x1024xf32>
    %325 = vector.extract_strided_slice %323 {offsets = [0, 128], sizes = [8, 1024], strides = [1, 1]} : vector<8x1536xf32> to vector<8x1024xf32>
    %326 = vector.extract_strided_slice %323 {offsets = [0, 256], sizes = [8, 1024], strides = [1, 1]} : vector<8x1536xf32> to vector<8x1024xf32>
    %327 = vector.extract_strided_slice %323 {offsets = [0, 384], sizes = [8, 1024], strides = [1, 1]} : vector<8x1536xf32> to vector<8x1024xf32>
    %328 = vector.extract_strided_slice %323 {offsets = [0, 512], sizes = [8, 1024], strides = [1, 1]} : vector<8x1536xf32> to vector<8x1024xf32>
    %c8_108 = arith.constant 8 : index
    %c0_109 = arith.constant 0 : index
    %c0_110 = arith.constant 0 : index
    %329 = vector.load %arg9[%c8_108, %c0_109, %c0_110] : memref<12x8x1536xf32, #tpu.memory_space<vmem>>, vector<1x8x1536xf32>
    %330 = vector.shape_cast %329 : vector<1x8x1536xf32> to vector<8x1536xf32>
    %331 = vector.extract_strided_slice %330 {offsets = [0, 0], sizes = [8, 1024], strides = [1, 1]} : vector<8x1536xf32> to vector<8x1024xf32>
    %332 = vector.extract_strided_slice %330 {offsets = [0, 128], sizes = [8, 1024], strides = [1, 1]} : vector<8x1536xf32> to vector<8x1024xf32>
    %333 = vector.extract_strided_slice %330 {offsets = [0, 256], sizes = [8, 1024], strides = [1, 1]} : vector<8x1536xf32> to vector<8x1024xf32>
    %334 = vector.extract_strided_slice %330 {offsets = [0, 384], sizes = [8, 1024], strides = [1, 1]} : vector<8x1536xf32> to vector<8x1024xf32>
    %335 = vector.extract_strided_slice %330 {offsets = [0, 512], sizes = [8, 1024], strides = [1, 1]} : vector<8x1536xf32> to vector<8x1024xf32>
    %c9_111 = arith.constant 9 : index
    %c0_112 = arith.constant 0 : index
    %c0_113 = arith.constant 0 : index
    %336 = vector.load %arg9[%c9_111, %c0_112, %c0_113] : memref<12x8x1536xf32, #tpu.memory_space<vmem>>, vector<1x8x1536xf32>
    %337 = vector.shape_cast %336 : vector<1x8x1536xf32> to vector<8x1536xf32>
    %338 = vector.extract_strided_slice %337 {offsets = [0, 0], sizes = [8, 1024], strides = [1, 1]} : vector<8x1536xf32> to vector<8x1024xf32>
    %339 = vector.extract_strided_slice %337 {offsets = [0, 128], sizes = [8, 1024], strides = [1, 1]} : vector<8x1536xf32> to vector<8x1024xf32>
    %340 = vector.extract_strided_slice %337 {offsets = [0, 256], sizes = [8, 1024], strides = [1, 1]} : vector<8x1536xf32> to vector<8x1024xf32>
    %341 = vector.extract_strided_slice %337 {offsets = [0, 384], sizes = [8, 1024], strides = [1, 1]} : vector<8x1536xf32> to vector<8x1024xf32>
    %342 = vector.extract_strided_slice %337 {offsets = [0, 512], sizes = [8, 1024], strides = [1, 1]} : vector<8x1536xf32> to vector<8x1024xf32>
    %c10 = arith.constant 10 : index
    %c0_114 = arith.constant 0 : index
    %c0_115 = arith.constant 0 : index
    %343 = vector.load %arg9[%c10, %c0_114, %c0_115] : memref<12x8x1536xf32, #tpu.memory_space<vmem>>, vector<1x8x1536xf32>
    %344 = vector.shape_cast %343 : vector<1x8x1536xf32> to vector<8x1536xf32>
    %345 = vector.extract_strided_slice %344 {offsets = [0, 0], sizes = [8, 1024], strides = [1, 1]} : vector<8x1536xf32> to vector<8x1024xf32>
    %346 = vector.extract_strided_slice %344 {offsets = [0, 128], sizes = [8, 1024], strides = [1, 1]} : vector<8x1536xf32> to vector<8x1024xf32>
    %347 = vector.extract_strided_slice %344 {offsets = [0, 256], sizes = [8, 1024], strides = [1, 1]} : vector<8x1536xf32> to vector<8x1024xf32>
    %348 = vector.extract_strided_slice %344 {offsets = [0, 384], sizes = [8, 1024], strides = [1, 1]} : vector<8x1536xf32> to vector<8x1024xf32>
    %349 = vector.extract_strided_slice %344 {offsets = [0, 512], sizes = [8, 1024], strides = [1, 1]} : vector<8x1536xf32> to vector<8x1024xf32>
    %350 = tpu.concatenate %317, %318, %319, %320, %321, %324, %325, %326, %327, %328, %331, %332, %333, %334, %335, %338 in 0 : vector<8x1024xf32>, vector<8x1024xf32>, vector<8x1024xf32>, vector<8x1024xf32>, vector<8x1024xf32>, vector<8x1024xf32>, vector<8x1024xf32>, vector<8x1024xf32>, vector<8x1024xf32>, vector<8x1024xf32>, vector<8x1024xf32>, vector<8x1024xf32>, vector<8x1024xf32>, vector<8x1024xf32>, vector<8x1024xf32>, vector<8x1024xf32> -> vector<128x1024xf32>
    %351 = tpu.concatenate %339, %340, %341, %342, %345, %346, %347, %348, %349 in 0 : vector<8x1024xf32>, vector<8x1024xf32>, vector<8x1024xf32>, vector<8x1024xf32>, vector<8x1024xf32>, vector<8x1024xf32>, vector<8x1024xf32>, vector<8x1024xf32>, vector<8x1024xf32> -> vector<72x1024xf32>
    %352 = tpu.concatenate %350, %351 in 0 : vector<128x1024xf32>, vector<72x1024xf32> -> vector<200x1024xf32>
    %cst_116 = arith.constant dense<0.000000e+00> : vector<32x1024xf32>
    %353 = tpu.matmul %2, %352, %cst_116 {dimension_numbers = #tpu.dot_dimension_numbers<[1], [0], [0], [1], [0, 0, 1, 1], [], []>} : vector<32x200xf32>, vector<200x1024xf32>, vector<32x1024xf32> -> vector<32x1024xf32>
    %354 = vector.broadcast %3 : vector<32x1xf32> to vector<32x1024xf32>
    %355 = arith.addf %353, %354 : vector<32x1024xf32>
    %cst_117 = arith.constant 0.000000e+00 : f32
    %356 = vector.broadcast %cst_117 : f32 to vector<32x1024xf32>
    %357 = arith.maximumf %355, %356 : vector<32x1024xf32>
    %c7_118 = arith.constant 7 : index
    %c0_119 = arith.constant 0 : index
    %c0_120 = arith.constant 0 : index
    %358 = vector.load %arg9[%c7_118, %c0_119, %c0_120] : memref<12x8x1536xf32, #tpu.memory_space<vmem>>, vector<1x8x1536xf32>
    %359 = vector.shape_cast %358 : vector<1x8x1536xf32> to vector<8x1536xf32>
    %360 = vector.extract_strided_slice %359 {offsets = [0, 0], sizes = [8, 1024], strides = [1, 1]} : vector<8x1536xf32> to vector<8x1024xf32>
    %361 = vector.extract_strided_slice %359 {offsets = [0, 128], sizes = [8, 1024], strides = [1, 1]} : vector<8x1536xf32> to vector<8x1024xf32>
    %362 = vector.extract_strided_slice %359 {offsets = [0, 256], sizes = [8, 1024], strides = [1, 1]} : vector<8x1536xf32> to vector<8x1024xf32>
    %363 = vector.extract_strided_slice %359 {offsets = [0, 384], sizes = [8, 1024], strides = [1, 1]} : vector<8x1536xf32> to vector<8x1024xf32>
    %364 = vector.extract_strided_slice %359 {offsets = [0, 512], sizes = [8, 1024], strides = [1, 1]} : vector<8x1536xf32> to vector<8x1024xf32>
    %c8_121 = arith.constant 8 : index
    %c0_122 = arith.constant 0 : index
    %c0_123 = arith.constant 0 : index
    %365 = vector.load %arg9[%c8_121, %c0_122, %c0_123] : memref<12x8x1536xf32, #tpu.memory_space<vmem>>, vector<1x8x1536xf32>
    %366 = vector.shape_cast %365 : vector<1x8x1536xf32> to vector<8x1536xf32>
    %367 = vector.extract_strided_slice %366 {offsets = [0, 0], sizes = [8, 1024], strides = [1, 1]} : vector<8x1536xf32> to vector<8x1024xf32>
    %368 = vector.extract_strided_slice %366 {offsets = [0, 128], sizes = [8, 1024], strides = [1, 1]} : vector<8x1536xf32> to vector<8x1024xf32>
    %369 = vector.extract_strided_slice %366 {offsets = [0, 256], sizes = [8, 1024], strides = [1, 1]} : vector<8x1536xf32> to vector<8x1024xf32>
    %370 = vector.extract_strided_slice %366 {offsets = [0, 384], sizes = [8, 1024], strides = [1, 1]} : vector<8x1536xf32> to vector<8x1024xf32>
    %371 = vector.extract_strided_slice %366 {offsets = [0, 512], sizes = [8, 1024], strides = [1, 1]} : vector<8x1536xf32> to vector<8x1024xf32>
    %c9_124 = arith.constant 9 : index
    %c0_125 = arith.constant 0 : index
    %c0_126 = arith.constant 0 : index
    %372 = vector.load %arg9[%c9_124, %c0_125, %c0_126] : memref<12x8x1536xf32, #tpu.memory_space<vmem>>, vector<1x8x1536xf32>
    %373 = vector.shape_cast %372 : vector<1x8x1536xf32> to vector<8x1536xf32>
    %374 = vector.extract_strided_slice %373 {offsets = [0, 0], sizes = [8, 1024], strides = [1, 1]} : vector<8x1536xf32> to vector<8x1024xf32>
    %375 = vector.extract_strided_slice %373 {offsets = [0, 128], sizes = [8, 1024], strides = [1, 1]} : vector<8x1536xf32> to vector<8x1024xf32>
    %376 = vector.extract_strided_slice %373 {offsets = [0, 256], sizes = [8, 1024], strides = [1, 1]} : vector<8x1536xf32> to vector<8x1024xf32>
    %377 = vector.extract_strided_slice %373 {offsets = [0, 384], sizes = [8, 1024], strides = [1, 1]} : vector<8x1536xf32> to vector<8x1024xf32>
    %378 = vector.extract_strided_slice %373 {offsets = [0, 512], sizes = [8, 1024], strides = [1, 1]} : vector<8x1536xf32> to vector<8x1024xf32>
    %c10_127 = arith.constant 10 : index
    %c0_128 = arith.constant 0 : index
    %c0_129 = arith.constant 0 : index
    %379 = vector.load %arg9[%c10_127, %c0_128, %c0_129] : memref<12x8x1536xf32, #tpu.memory_space<vmem>>, vector<1x8x1536xf32>
    %380 = vector.shape_cast %379 : vector<1x8x1536xf32> to vector<8x1536xf32>
    %381 = vector.extract_strided_slice %380 {offsets = [0, 0], sizes = [8, 1024], strides = [1, 1]} : vector<8x1536xf32> to vector<8x1024xf32>
    %382 = vector.extract_strided_slice %380 {offsets = [0, 128], sizes = [8, 1024], strides = [1, 1]} : vector<8x1536xf32> to vector<8x1024xf32>
    %383 = vector.extract_strided_slice %380 {offsets = [0, 256], sizes = [8, 1024], strides = [1, 1]} : vector<8x1536xf32> to vector<8x1024xf32>
    %384 = vector.extract_strided_slice %380 {offsets = [0, 384], sizes = [8, 1024], strides = [1, 1]} : vector<8x1536xf32> to vector<8x1024xf32>
    %385 = vector.extract_strided_slice %380 {offsets = [0, 512], sizes = [8, 1024], strides = [1, 1]} : vector<8x1536xf32> to vector<8x1024xf32>
    %c11 = arith.constant 11 : index
    %c0_130 = arith.constant 0 : index
    %c0_131 = arith.constant 0 : index
    %386 = vector.load %arg9[%c11, %c0_130, %c0_131] : memref<12x8x1536xf32, #tpu.memory_space<vmem>>, vector<1x8x1536xf32>
    %387 = vector.shape_cast %386 : vector<1x8x1536xf32> to vector<8x1536xf32>
    %388 = vector.extract_strided_slice %387 {offsets = [0, 0], sizes = [8, 1024], strides = [1, 1]} : vector<8x1536xf32> to vector<8x1024xf32>
    %389 = vector.extract_strided_slice %387 {offsets = [0, 128], sizes = [8, 1024], strides = [1, 1]} : vector<8x1536xf32> to vector<8x1024xf32>
    %390 = vector.extract_strided_slice %387 {offsets = [0, 256], sizes = [8, 1024], strides = [1, 1]} : vector<8x1536xf32> to vector<8x1024xf32>
    %391 = vector.extract_strided_slice %387 {offsets = [0, 384], sizes = [8, 1024], strides = [1, 1]} : vector<8x1536xf32> to vector<8x1024xf32>
    %392 = vector.extract_strided_slice %387 {offsets = [0, 512], sizes = [8, 1024], strides = [1, 1]} : vector<8x1536xf32> to vector<8x1024xf32>
    %393 = tpu.concatenate %360, %361, %362, %363, %364, %367, %368, %369, %370, %371, %374, %375, %376, %377, %378, %381 in 0 : vector<8x1024xf32>, vector<8x1024xf32>, vector<8x1024xf32>, vector<8x1024xf32>, vector<8x1024xf32>, vector<8x1024xf32>, vector<8x1024xf32>, vector<8x1024xf32>, vector<8x1024xf32>, vector<8x1024xf32>, vector<8x1024xf32>, vector<8x1024xf32>, vector<8x1024xf32>, vector<8x1024xf32>, vector<8x1024xf32>, vector<8x1024xf32> -> vector<128x1024xf32>
    %394 = tpu.concatenate %382, %383, %384, %385, %388, %389, %390, %391, %392 in 0 : vector<8x1024xf32>, vector<8x1024xf32>, vector<8x1024xf32>, vector<8x1024xf32>, vector<8x1024xf32>, vector<8x1024xf32>, vector<8x1024xf32>, vector<8x1024xf32>, vector<8x1024xf32> -> vector<72x1024xf32>
    %395 = tpu.concatenate %393, %394 in 0 : vector<128x1024xf32>, vector<72x1024xf32> -> vector<200x1024xf32>
    %cst_132 = arith.constant dense<0.000000e+00> : vector<32x1024xf32>
    %396 = tpu.matmul %2, %395, %cst_132 {dimension_numbers = #tpu.dot_dimension_numbers<[1], [0], [0], [1], [0, 0, 1, 1], [], []>} : vector<32x200xf32>, vector<200x1024xf32>, vector<32x1024xf32> -> vector<32x1024xf32>
    %397 = vector.broadcast %3 : vector<32x1xf32> to vector<32x1024xf32>
    %398 = arith.addf %396, %397 : vector<32x1024xf32>
    %cst_133 = arith.constant 0.000000e+00 : f32
    %399 = vector.broadcast %cst_133 : f32 to vector<32x1024xf32>
    %400 = arith.maximumf %398, %399 : vector<32x1024xf32>
    %401 = arith.maximumf %357, %400 : vector<32x1024xf32>
    %402 = vector.extract_strided_slice %401 {offsets = [0, 0], sizes = [32, 128], strides = [1, 1]} : vector<32x1024xf32> to vector<32x128xf32>
    %403 = vector.extract_strided_slice %401 {offsets = [0, 128], sizes = [32, 128], strides = [1, 1]} : vector<32x1024xf32> to vector<32x128xf32>
    %404 = arith.maximumf %402, %403 : vector<32x128xf32>
    %405 = arith.addf %314, %404 : vector<32x128xf32>
    %406 = vector.extract_strided_slice %401 {offsets = [0, 256], sizes = [32, 128], strides = [1, 1]} : vector<32x1024xf32> to vector<32x128xf32>
    %407 = vector.extract_strided_slice %401 {offsets = [0, 384], sizes = [32, 128], strides = [1, 1]} : vector<32x1024xf32> to vector<32x128xf32>
    %408 = arith.maximumf %406, %407 : vector<32x128xf32>
    %409 = arith.addf %405, %408 : vector<32x128xf32>
    %410 = vector.extract_strided_slice %401 {offsets = [0, 512], sizes = [32, 128], strides = [1, 1]} : vector<32x1024xf32> to vector<32x128xf32>
    %411 = vector.extract_strided_slice %401 {offsets = [0, 640], sizes = [32, 128], strides = [1, 1]} : vector<32x1024xf32> to vector<32x128xf32>
    %412 = arith.maximumf %410, %411 : vector<32x128xf32>
    %413 = arith.addf %409, %412 : vector<32x128xf32>
    %414 = vector.extract_strided_slice %401 {offsets = [0, 768], sizes = [32, 128], strides = [1, 1]} : vector<32x1024xf32> to vector<32x128xf32>
    %415 = vector.extract_strided_slice %401 {offsets = [0, 896], sizes = [32, 128], strides = [1, 1]} : vector<32x1024xf32> to vector<32x128xf32>
    %416 = arith.maximumf %414, %415 : vector<32x128xf32>
    %417 = arith.addf %413, %416 : vector<32x128xf32>
    %cst_134 = arith.constant 6.250000e-02 : f32
    %418 = vector.broadcast %cst_134 : f32 to vector<32x128xf32>
    %419 = arith.mulf %417, %418 : vector<32x128xf32>
    %c0_135 = arith.constant 0 : index
    %c0_136 = arith.constant 0 : index
    %420 = vector.load %arg6[%c0_135, %c0_136] : memref<10x32xf32, #tpu.memory_space<vmem>>, vector<10x32xf32>
    %cst_137 = arith.constant dense<0.000000e+00> : vector<10x128xf32>
    %421 = tpu.matmul %420, %419, %cst_137 {dimension_numbers = #tpu.dot_dimension_numbers<[1], [0], [0], [1], [0, 0, 1, 1], [], []>} : vector<10x32xf32>, vector<32x128xf32>, vector<10x128xf32> -> vector<10x128xf32>
    %c0_138 = arith.constant 0 : index
    %c0_139 = arith.constant 0 : index
    %422 = vector.load %arg7[%c0_138, %c0_139] : memref<10x1xf32, #tpu.memory_space<vmem>>, vector<10x1xf32>
    %423 = vector.broadcast %422 : vector<10x1xf32> to vector<10x128xf32>
    %424 = arith.addf %421, %423 : vector<10x128xf32>
    %c0_140 = arith.constant 0 : index
    %c0_141 = arith.constant 0 : index
    %425 = vector.load %arg8[%c0_140, %c0_141] : memref<10x128xf32, #tpu.memory_space<vmem>>, vector<10x128xf32>
    tpu.vector_store %arg8[%c0_140, %c0_141], %424 {strides = array<i32>} : memref<10x128xf32, #tpu.memory_space<vmem>>, vector<10x128xf32>,
    return
  }
  func.func @transform_0(%arg0: i32) -> (i32, i32, i32, i32) {
    %c0_i32 = arith.constant 0 : i32
    %c0_i32_0 = arith.constant 0 : i32
    %c0_i32_1 = arith.constant 0 : i32
    %c0_i32_2 = arith.constant 0 : i32
    return %arg0, %c0_i32, %c0_i32_0, %c0_i32_1 : i32, i32, i32, i32
  }
  func.func @transform_1(%arg0: i32) -> (i32, i32, i32) {
    %c0_i32 = arith.constant 0 : i32
    %c0_i32_0 = arith.constant 0 : i32
    %c0_i32_1 = arith.constant 0 : i32
    %c0_i32_2 = arith.constant 0 : i32
    return %c0_i32, %c0_i32_0, %c0_i32_1 : i32, i32, i32
  }
  func.func @transform_2(%arg0: i32) -> (i32, i32) {
    %c0_i32 = arith.constant 0 : i32
    %c0_i32_0 = arith.constant 0 : i32
    %c0_i32_1 = arith.constant 0 : i32
    return %c0_i32, %c0_i32_0 : i32, i32
  }
  func.func @transform_3(%arg0: i32) -> (i32, i32) {
    %c0_i32 = arith.constant 0 : i32
    %c0_i32_0 = arith.constant 0 : i32
    %c0_i32_1 = arith.constant 0 : i32
    return %c0_i32, %c0_i32_0 : i32, i32
  }
  func.func @transform_4(%arg0: i32) -> (i32, i32) {
    %c0_i32 = arith.constant 0 : i32
    %c0_i32_0 = arith.constant 0 : i32
    %c0_i32_1 = arith.constant 0 : i32
    return %c0_i32, %c0_i32_0 : i32, i32
  }
  func.func @transform_5(%arg0: i32) -> (i32, i32) {
    %c0_i32 = arith.constant 0 : i32
    %c0_i32_0 = arith.constant 0 : i32
    %c0_i32_1 = arith.constant 0 : i32
    return %c0_i32, %c0_i32_0 : i32, i32
  }
  func.func @transform_6(%arg0: i32) -> (i32, i32) {
    %c0_i32 = arith.constant 0 : i32
    %c0_i32_0 = arith.constant 0 : i32
    %c0_i32_1 = arith.constant 0 : i32
    return %c0_i32, %c0_i32_0 : i32, i32
  }
  func.func @transform_7(%arg0: i32) -> (i32, i32) {
    %c0_i32 = arith.constant 0 : i32
    %c0_i32_0 = arith.constant 0 : i32
    return %c0_i32, %arg0 : i32, i32
  }
}

</mosaic_0001>

<llo_original>
// kernel: net_forward.1
$region0: #{net_forward.1}
  #allocation0 [shape = 'u32[]', space=smem, size = 0x4, offset = 0x4, fixed_abs, tag = 'smem constant byte address 0x4 - core index']
  #allocation1 [shape = 'u32[72,128]{1,0:T(1,128)}', space=vmem, size = 0x9000, scoped, tag = 'internal scratch']
  #allocation2 [shape = 'f32[12,8,1536]{2,1,0:T(8,128)}', space=vmem, size = 0x90000, scoped, tag = 'scratch operand']
  %s0 = inlined_call_operand.vmem [shape: f32[2,28,8,3584], index: 0, kind: input, shape index: {}]
  %s1 = inlined_call_operand.vmem [shape: f32[25,8,1], index: 1, kind: input, shape index: {}]
  %s2 = inlined_call_operand.vmem [shape: f32[8,1], index: 2, kind: input, shape index: {}]
  %s3 = inlined_call_operand.vmem [shape: f32[32,200], index: 3, kind: input, shape index: {}]
  %s4 = inlined_call_operand.vmem [shape: f32[32,1], index: 4, kind: input, shape index: {}]
  %s5 = inlined_call_operand.vmem [shape: f32[10,32], index: 5, kind: input, shape index: {}]
  %s6 = inlined_call_operand.vmem [shape: f32[10,1], index: 6, kind: input, shape index: {}]
  %s7 = inlined_call_operand.hbm [shape: f32[10,256], index: 7, kind: output, shape index: {}]
  %s8 = sld [smem:[#allocation0]]
  $region68: #{net_forward.1} parent=0
    _
  %s10 = ssub.s32 1, %s8
  %s11 = scalar_select 0, %s10, %s8
  $region1: #{net_forward.1} parent=0
    #allocation3 [shape = 'u8[16384]{0}', space=vmem, size = 0x4000, scoped, tag = 'output window, operand 0']
    #allocation4 [shape = 's32[2]{0}', space=sflag, size = 0x8, scoped, tag = 'scoped memory for net_forward.1']
    %12 = vsyncpa [#allocation4], 0
    %s13 = scalar_lea.sflag [#allocation4], 1
    %14 = vsyncpa %s13, 0
    loop: start=0, step=1, limit=4
    $region2: #{net_forward.1} parent=1 // loop_pre_header
      _
    $region3: #{net_forward.1} parent=1 // loop_header
      %s16 = sphi 0, %s20
      %p17 = scmp.ge.s32.totalorder %s16, 4
      %s26 = sphi 0, %s28
      %s29 = sphi 0, %s26
      %s30 = sphi 0, %s29
      %s46 = sphi 0, %s30
      %s50 = sphi 0, %s50
      %s52 = sphi 0, %s50
      %s53 = sphi 0, %s52
      %s67 = sphi 0, %s53
      %s71 = sphi 0, %s71
      %s73 = sphi 0, %s71
      %s74 = sphi 0, %s73
      %s88 = sphi 0, %s74
      %s92 = sphi 0, %s92
      %s94 = sphi 0, %s92
      %s95 = sphi 0, %s94
      %s109 = sphi 0, %s95
      %s113 = sphi 0, %s113
      %s115 = sphi 0, %s113
      %s116 = sphi 0, %s115
      %s130 = sphi 0, %s116
      %s134 = sphi 0, %s134
      %s136 = sphi 0, %s134
      %s137 = sphi 0, %s136
      %s151 = sphi 0, %s137
      %s155 = sphi 0, %s155
      %s157 = sphi 0, %s155
      %s158 = sphi 0, %s157
      %s172 = sphi 0, %s158
      %s178 = sphi 0, %s180
      %s181 = sphi 0, %s178
      %s182 = sphi 0, %s181
      %s198 = sphi 0, %s182
    $region4: #{net_forward.1} parent=1 // loop_header_branch
      %19 = sbr.rel (%p17) target = $region8
    $region5: #{net_forward.1} parent=1 // loop_body
      %s21 = ssub.s32 %s16, 1
      %s22 = ssub.s32 %s16, 2
      %s23 = sadd.s32 %s16, 1
      %s24 = ssub.s32 %s16, %s23
      %p25 = scmp.eq.s32.totalorder %s24, 0
      %s27 = sadd.s32 %s26, 1
      %s28 = scalar_select %p25, %s26, %s27
      %p31 = pneg %p25
      %p32 = scmp.eq.s32.totalorder %s16, 1
      %p33 = por %p31, %p32
      %p34 = scmp.ne.s32.totalorder %s26, %s29
      %p35 = scmp.eq.s32.totalorder %s16, 0
      %p36 = por %p34, %p35
      %p37 = scmp.ne.s32.totalorder %s26, %s29
      %p38 = scmp.eq.s32.totalorder %s21, 1
      %p39 = por %p37, %p38
      %p40 = scmp.ne.s32.totalorder %s29, %s30
      %p41 = scmp.eq.s32.totalorder %s21, 0
      %p42 = por %p40, %p41
      %p43 = scmp.ne.s32.totalorder %s29, %s30
      %p44 = scmp.eq.s32.totalorder %s22, 1
      %p45 = por %p43, %p44
      %p47 = scmp.ne.s32.totalorder %s30, %s46
      %p48 = scmp.eq.s32.totalorder %s22, 0
      %p49 = por %p47, %p48
      %s51 = sadd.s32 %s50, 1
      %p54 = scmp.eq.s32.totalorder %s16, 1
      %p55 = scmp.ne.s32.totalorder %s50, %s52
      %p56 = scmp.eq.s32.totalorder %s16, 0
      %p57 = por %p55, %p56
      %p58 = scmp.ne.s32.totalorder %s50, %s52
      %p59 = scmp.eq.s32.totalorder %s21, 1
      %p60 = por %p58, %p59
      %p61 = scmp.ne.s32.totalorder %s52, %s53
      %p62 = scmp.eq.s32.totalorder %s21, 0
      %p63 = por %p61, %p62
      %p64 = scmp.ne.s32.totalorder %s52, %s53
      %p65 = scmp.eq.s32.totalorder %s22, 1
      %p66 = por %p64, %p65
      %p68 = scmp.ne.s32.totalorder %s53, %s67
      %p69 = scmp.eq.s32.totalorder %s22, 0
      %p70 = por %p68, %p69
      %s72 = sadd.s32 %s71, 1
      %p75 = scmp.eq.s32.totalorder %s16, 1
      %p76 = scmp.ne.s32.totalorder %s71, %s73
      %p77 = scmp.eq.s32.totalorder %s16, 0
      %p78 = por %p76, %p77
      %p79 = scmp.ne.s32.totalorder %s71, %s73
      %p80 = scmp.eq.s32.totalorder %s21, 1
      %p81 = por %p79, %p80
      %p82 = scmp.ne.s32.totalorder %s73, %s74
      %p83 = scmp.eq.s32.totalorder %s21, 0
      %p84 = por %p82, %p83
      %p85 = scmp.ne.s32.totalorder %s73, %s74
      %p86 = scmp.eq.s32.totalorder %s22, 1
      %p87 = por %p85, %p86
      %p89 = scmp.ne.s32.totalorder %s74, %s88
      %p90 = scmp.eq.s32.totalorder %s22, 0
      %p91 = por %p89, %p90
      %s93 = sadd.s32 %s92, 1
      %p96 = scmp.eq.s32.totalorder %s16, 1
      %p97 = scmp.ne.s32.totalorder %s92, %s94
      %p98 = scmp.eq.s32.totalorder %s16, 0
      %p99 = por %p97, %p98
      %p100 = scmp.ne.s32.totalorder %s92, %s94
      %p101 = scmp.eq.s32.totalorder %s21, 1
      %p102 = por %p100, %p101
      %p103 = scmp.ne.s32.totalorder %s94, %s95
      %p104 = scmp.eq.s32.totalorder %s21, 0
      %p105 = por %p103, %p104
      %p106 = scmp.ne.s32.totalorder %s94, %s95
      %p107 = scmp.eq.s32.totalorder %s22, 1
      %p108 = por %p106, %p107
      %p110 = scmp.ne.s32.totalorder %s95, %s109
      %p111 = scmp.eq.s32.totalorder %s22, 0
      %p112 = por %p110, %p111
      %s114 = sadd.s32 %s113, 1
      %p117 = scmp.eq.s32.totalorder %s16, 1
      %p118 = scmp.ne.s32.totalorder %s113, %s115
      %p119 = scmp.eq.s32.totalorder %s16, 0
      %p120 = por %p118, %p119
      %p121 = scmp.ne.s32.totalorder %s113, %s115
      %p122 = scmp.eq.s32.totalorder %s21, 1
      %p123 = por %p121, %p122
      %p124 = scmp.ne.s32.totalorder %s115, %s116
      %p125 = scmp.eq.s32.totalorder %s21, 0
      %p126 = por %p124, %p125
      %p127 = scmp.ne.s32.totalorder %s115, %s116
      %p128 = scmp.eq.s32.totalorder %s22, 1
      %p129 = por %p127, %p128
      %p131 = scmp.ne.s32.totalorder %s116, %s130
      %p132 = scmp.eq.s32.totalorder %s22, 0
      %p133 = por %p131, %p132
      %s135 = sadd.s32 %s134, 1
      %p138 = scmp.eq.s32.totalorder %s16, 1
      %p139 = scmp.ne.s32.totalorder %s134, %s136
      %p140 = scmp.eq.s32.totalorder %s16, 0
      %p141 = por %p139, %p140
      %p142 = scmp.ne.s32.totalorder %s134, %s136
      %p143 = scmp.eq.s32.totalorder %s21, 1
      %p144 = por %p142, %p143
      %p145 = scmp.ne.s32.totalorder %s136, %s137
      %p146 = scmp.eq.s32.totalorder %s21, 0
      %p147 = por %p145, %p146
      %p148 = scmp.ne.s32.totalorder %s136, %s137
      %p149 = scmp.eq.s32.totalorder %s22, 1
      %p150 = por %p148, %p149
      %p152 = scmp.ne.s32.totalorder %s137, %s151
      %p153 = scmp.eq.s32.totalorder %s22, 0
      %p154 = por %p152, %p153
      %s156 = sadd.s32 %s155, 1
      %p159 = scmp.eq.s32.totalorder %s16, 1
      %p160 = scmp.ne.s32.totalorder %s155, %s157
      %p161 = scmp.eq.s32.totalorder %s16, 0
      %p162 = por %p160, %p161
      %p163 = scmp.ne.s32.totalorder %s155, %s157
      %p164 = scmp.eq.s32.totalorder %s21, 1
      %p165 = por %p163, %p164
      %p166 = scmp.ne.s32.totalorder %s157, %s158
      %p167 = scmp.eq.s32.totalorder %s21, 0
      %p168 = por %p166, %p167
      %p169 = scmp.ne.s32.totalorder %s157, %s158
      %p170 = scmp.eq.s32.totalorder %s22, 1
      %p171 = por %p169, %p170
      %p173 = scmp.ne.s32.totalorder %s158, %s172
      %p174 = scmp.eq.s32.totalorder %s22, 0
      %p175 = por %p173, %p174
      %s176 = ssub.s32 %s16, %s23
      %p177 = scmp.eq.s32.totalorder %s176, 0
      %s179 = sadd.s32 %s178, 1
      %s180 = scalar_select %p177, %s178, %s179
      %p183 = pneg %p177
      %p184 = scmp.eq.s32.totalorder %s16, 1
      %p185 = por %p183, %p184
      %p186 = scmp.ne.s32.totalorder %s178, %s181
      %p187 = scmp.eq.s32.totalorder %s16, 0
      %p188 = por %p186, %p187
      %p189 = scmp.ne.s32.totalorder %s178, %s181
      %p190 = scmp.eq.s32.totalorder %s21, 1
      %p191 = por %p189, %p190
      %p192 = scmp.ne.s32.totalorder %s181, %s182
      %p193 = scmp.eq.s32.totalorder %s21, 0
      %p194 = por %p192, %p193
      %p195 = scmp.ne.s32.totalorder %s181, %s182
      %p196 = scmp.eq.s32.totalorder %s22, 1
      %p197 = por %p195, %p196
      %p199 = scmp.ne.s32.totalorder %s182, %s198
      %p200 = scmp.eq.s32.totalorder %s22, 0
      %p201 = por %p199, %p200
      %p202 = scmp.le.s32.totalorder 1, %s16
      %p203 = scmp.lt.s32.totalorder %s16, 3
      %p204 = pnand %p202, %p203
      %p205 = pneg %p204
      // Predicated region
      $region9: #{net_forward.1} parent=5 // pred_check
        _
      $region10: #{net_forward.1} parent=5 // pred_check_branch
        %207 = sbr.rel (%p204) target = $region12
      $region11: #{net_forward.1} parent=5 // pred_region
        %s208 = ssub.s32 %s16, 1
        // Predicated region
        $region13: #{net_forward.1} parent=11 // pred_check
          %p209 = pneg %p63
        $region14: #{net_forward.1} parent=11 // pred_check_branch
          %211 = sbr.rel (%p209) target = $region16
        $region15: #{net_forward.1} parent=11 // pred_region
          _
        $region16: #{net_forward.1} parent=11 // pred_fallthru
          _
        // Predicated region
        $region17: #{net_forward.1} parent=11 // pred_check
          %p212 = pneg %p84
        $region18: #{net_forward.1} parent=11 // pred_check_branch
          %214 = sbr.rel (%p212) target = $region20
        $region19: #{net_forward.1} parent=11 // pred_region
          _
        $region20: #{net_forward.1} parent=11 // pred_fallthru
          _
        // Predicated region
        $region21: #{net_forward.1} parent=11 // pred_check
          %p215 = pneg %p105
        $region22: #{net_forward.1} parent=11 // pred_check_branch
          %217 = sbr.rel (%p215) target = $region24
        $region23: #{net_forward.1} parent=11 // pred_region
          _
        $region24: #{net_forward.1} parent=11 // pred_fallthru
          _
        // Predicated region
        $region25: #{net_forward.1} parent=11 // pred_check
          %p218 = pneg %p126
        $region26: #{net_forward.1} parent=11 // pred_check_branch
          %220 = sbr.rel (%p218) target = $region28
        $region27: #{net_forward.1} parent=11 // pred_region
          _
        $region28: #{net_forward.1} parent=11 // pred_fallthru
          _
        // Predicated region
        $region29: #{net_forward.1} parent=11 // pred_check
          %p221 = pneg %p147
        $region30: #{net_forward.1} parent=11 // pred_check_branch
          %223 = sbr.rel (%p221) target = $region32
        $region31: #{net_forward.1} parent=11 // pred_region
          _
        $region32: #{net_forward.1} parent=11 // pred_fallthru
          _
        // Predicated region
        $region33: #{net_forward.1} parent=11 // pred_check
          %p224 = pneg %p168
        $region34: #{net_forward.1} parent=11 // pred_check_branch
          %226 = sbr.rel (%p224) target = $region36
        $region35: #{net_forward.1} parent=11 // pred_region
          _
        $region36: #{net_forward.1} parent=11 // pred_fallthru
          _
      $region12: #{net_forward.1} parent=5 // pred_fallthru
        _
      %p227 = scmp.lt.s32.totalorder %s16, 2
      // Predicated region
      $region37: #{net_forward.1} parent=5 // pred_check
        %p228 = pneg %p227
      $region38: #{net_forward.1} parent=5 // pred_check_branch
        %230 = sbr.rel (%p228) target = $region40
      $region39: #{net_forward.1} parent=5 // pred_region
        // Predicated region
        $region41: #{net_forward.1} parent=39 // pred_check
          %p231 = pneg %p36
        $region42: #{net_forward.1} parent=39 // pred_check_branch
          %233 = sbr.rel (%p231) target = $region44
        $region43: #{net_forward.1} parent=39 // pred_region
          %p234 = scmp.lt.s32.totalorder %s16, 1
          %s235 = scalar_select %p234, %s16, 1
          %s236 = smul.addr %s235, 784
          %s237 = smul.addr %s236, 8
          %s238 = scalar_lea.vmem %s0, %s237
        $region44: #{net_forward.1} parent=39 // pred_fallthru
          _
      $region40: #{net_forward.1} parent=5 // pred_fallthru
        _
      %p239 = scmp.le.s32.totalorder 1, %s16
      %p240 = scmp.lt.s32.totalorder %s16, 3
      %p241 = pnand %p239, %p240
      %p242 = pneg %p241
      // Predicated region
      $region45: #{net_forward.1} parent=5 // pred_check
        _
      $region46: #{net_forward.1} parent=5 // pred_check_branch
        %244 = sbr.rel (%p241) target = $region48
      $region47: #{net_forward.1} parent=5 // pred_region
        %s245 = ssub.s32 %s16, 1
        %p246 = scmp.lt.s32.totalorder %s21, 1
        %s247 = scalar_select %p246, %s21, 1
        %s248 = smul.addr %s247, 784
        %s249 = smul.addr %s248, 8
        %s250 = scalar_lea.vmem %s0, %s249
        %p251 = pneg %p42
        %p252 = pneg %p39
        %p253 = pneg %p63
        %p254 = pneg %p60
        %p255 = pneg %p84
        %p256 = pneg %p81
        %p257 = pneg %p105
        %p258 = pneg %p102
        %p259 = pneg %p126
        %p260 = pneg %p123
        %p261 = pneg %p147
        %p262 = pneg %p144
        %p263 = pneg %p168
        %p264 = pneg %p165
        %p265 = pneg %p194
        %p266 = pneg %p191
        %s267 = sand.u32 %s181, 1
        %s268 = scalar_lea.sflag [#allocation4], %s267
        %s269 = sand.u32 %s181, 1
        %s270 = smul.addr %s269, 16
        %s271 = scalar_lea.vmem [#allocation3], %s270
        %p272 = scmp.lt.s32.totalorder %s21, 1
        %s273 = scalar_select %p272, %s21, 1
        %s274 = smul.addr %s273, 784
        %s275 = smul.addr %s274, 8
        %s276 = scalar_lea.vmem %s0, %s275
        %v277 = vld [vmem:[%s1] sm:$0xff]
        %v278 = vld [vmem:[%s1 + $0x8] sm:$0xff]
        %v279 = vld [vmem:[%s1 + $0x10] sm:$0xff]
        %v280 = vld [vmem:[%s1 + $0x18] sm:$0xff]
        %v281 = vld [vmem:[%s1 + $0x20] sm:$0xff]
        %v282 = vld [vmem:[%s1 + $0x28] sm:$0xff]
        %v283 = vld [vmem:[%s1 + $0x30] sm:$0xff]
        %v284 = vld [vmem:[%s1 + $0x38] sm:$0xff]
        %v285 = vld [vmem:[%s1 + $0x40] sm:$0xff]
        %v286 = vld [vmem:[%s1 + $0x48] sm:$0xff]
        %v287 = vld [vmem:[%s1 + $0x50] sm:$0xff]
        %v288 = vld [vmem:[%s1 + $0x58] sm:$0xff]
        %v289 = vld [vmem:[%s1 + $0x60] sm:$0xff]
        %v290 = vld [vmem:[%s1 + $0x68] sm:$0xff]
        %v291 = vld [vmem:[%s1 + $0x70] sm:$0xff]
        %v292 = vld [vmem:[%s1 + $0x78] sm:$0xff]
        %v293 = vld [vmem:[%s1 + $0x80] sm:$0xff]
        %v294 = vld [vmem:[%s1 + $0x88] sm:$0xff]
        %v295 = vld [vmem:[%s1 + $0x90] sm:$0xff]
        %v296 = vld [vmem:[%s1 + $0x98] sm:$0xff]
        %v297 = vld [vmem:[%s1 + $0xa0] sm:$0xff]
        %v298 = vld [vmem:[%s1 + $0xa8] sm:$0xff]
        %v299 = vld [vmem:[%s1 + $0xb0] sm:$0xff]
        %v300 = vld [vmem:[%s1 + $0xb8] sm:$0xff]
        %v301 = vld [vmem:[%s1 + $0xc0] sm:$0xff]
        %v302 = vld [vmem:[%s2] sm:$0xff]
        %v303 = vld [vmem:[%s3] sm:$0xff]
        %v304 = vld [vmem:[%s3 + $0x8] sm:$0xff]
        %v305 = vld [vmem:[%s3 + $0x10] sm:$0xff]
        %v306 = vld [vmem:[%s3 + $0x18] sm:$0xff]
        %v307 = vld [vmem:[%s3 + $0x20] sm:$0xff]
        %v308 = vld [vmem:[%s3 + $0x28] sm:$0xff]
        %v309 = vld [vmem:[%s3 + $0x30] sm:$0xff]
        %v310 = vld [vmem:[%s3 + $0x38] sm:$0xff]
        %v311 = vld [vmem:[%s4] sm:$0xff]
        %v312 = vld [vmem:[%s4 + $0x8] sm:$0xff]
        %v313 = vld [vmem:[%s4 + $0x10] sm:$0xff]
        %v314 = vld [vmem:[%s4 + $0x18] sm:$0xff]
        loop: start=0, step=1, limit=12
        $region49: #{net_forward.1} parent=47 // loop_pre_header
          _
        $region50: #{net_forward.1} parent=47 // loop_header
          %s316 = sphi 0, %s320
          %p317 = scmp.ge.s32.totalorder %s316, 12
        $region51: #{net_forward.1} parent=47 // loop_header_branch
          %319 = sbr.rel (%p317) target = $region55
        $region52: #{net_forward.1} parent=47 // loop_body
          %s321 = smul.u32 %s316, 2
          %s322 = smul.u32 %s321, 28
          %s323 = smul.addr %s322, 8
          %s324 = scalar_lea.vmem %s276, %s323
          %v325 = vld [vmem:[%s324] sm:$0xff]
          %v326 = vld [vmem:[%s324 + $0x8] sm:$0xff]
          %v327 = vld [vmem:[%s324 + $0x10] sm:$0xff]
          %v328 = vld [vmem:[%s324 + $0x18] sm:$0xff]
          %v329 = vld [vmem:[%s324 + $0x20] sm:$0xff]
          %v330 = vld [vmem:[%s324 + $0x28] sm:$0xff]
          %v331 = vld [vmem:[%s324 + $0x30] sm:$0xff]
          %v332 = vld [vmem:[%s324 + $0x38] sm:$0xff]
          %v333 = vld [vmem:[%s324 + $0x40] sm:$0xff]
          %v334 = vld [vmem:[%s324 + $0x48] sm:$0xff]
          %v335 = vld [vmem:[%s324 + $0x50] sm:$0xff]
          %v336 = vld [vmem:[%s324 + $0x58] sm:$0xff]
          %v337 = vld [vmem:[%s324 + $0x60] sm:$0xff]
          %v338 = vld [vmem:[%s324 + $0x68] sm:$0xff]
          %v339 = vld [vmem:[%s324 + $0x70] sm:$0xff]
          %v340 = vld [vmem:[%s324 + $0x78] sm:$0xff]
          %v341 = vld [vmem:[%s324 + $0x80] sm:$0xff]
          %v342 = vld [vmem:[%s324 + $0x88] sm:$0xff]
          %v343 = vld [vmem:[%s324 + $0x90] sm:$0xff]
          %v344 = vld [vmem:[%s324 + $0x98] sm:$0xff]
          %v345 = vld [vmem:[%s324 + $0xa0] sm:$0xff]
          %v346 = vld [vmem:[%s324 + $0xa8] sm:$0xff]
          %v347 = vld [vmem:[%s324 + $0xb0] sm:$0xff]
          %v348 = vld [vmem:[%s324 + $0xb8] sm:$0xff]
          %v349 = vld [vmem:[%s324 + $0xc0] sm:$0xff]
          %v350 = vld [vmem:[%s324 + $0xc8] sm:$0xff]
          %v351 = vld [vmem:[%s324 + $0xd0] sm:$0xff]
          %v352 = vld [vmem:[%s324 + $0xd8] sm:$0xff]
          %354 = vset.pattern.permute.xlu0 0
          %355 = vperm.xlu0 %354, %v277
          %v356 = vpop.permute.xlu0 %355
          %v358 = vmul.f32 %v356, %v325
          %v359 = vmul.f32 %v356, %v326
          %v360 = vmul.f32 %v356, %v327
          %v361 = vmul.f32 %v356, %v328
          %v362 = vmul.f32 %v356, %v329
          %v363 = vmul.f32 %v356, %v330
          %v364 = vmul.f32 %v356, %v331
          %v365 = vmul.f32 %v356, %v332
          %v366 = vmul.f32 %v356, %v333
          %v367 = vmul.f32 %v356, %v334
          %v368 = vmul.f32 %v356, %v335
          %v369 = vmul.f32 %v356, %v336
          %v370 = vmul.f32 %v356, %v337
          %v371 = vmul.f32 %v356, %v338
          %v372 = vmul.f32 %v356, %v339
          %v373 = vmul.f32 %v356, %v340
          %v374 = vmul.f32 %v356, %v341
          %v375 = vmul.f32 %v356, %v342
          %v376 = vmul.f32 %v356, %v343
          %v377 = vmul.f32 %v356, %v344
          %v378 = vmul.f32 %v356, %v345
          %v379 = vmul.f32 %v356, %v346
          %v380 = vmul.f32 %v356, %v347
          %v381 = vmul.f32 %v356, %v348
          %383 = vset.pattern.permute.xlu0 0
          %384 = vperm.xlu0 %383, %v278
          %v385 = vpop.permute.xlu0 %384
          %v387 = vmul.f32 %v385, %v326
          %v388 = vmul.f32 %v385, %v327
          %v389 = vmul.f32 %v385, %v328
          %v390 = vmul.f32 %v385, %v329
          %v391 = vmul.f32 %v385, %v330
          %v392 = vmul.f32 %v385, %v331
          %v393 = vmul.f32 %v385, %v332
          %v394 = vmul.f32 %v385, %v333
          %v395 = vmul.f32 %v385, %v334
          %v396 = vmul.f32 %v385, %v335
          %v397 = vmul.f32 %v385, %v336
          %v398 = vmul.f32 %v385, %v337
          %v399 = vmul.f32 %v385, %v338
          %v400 = vmul.f32 %v385, %v339
          %v401 = vmul.f32 %v385, %v340
          %v402 = vmul.f32 %v385, %v341
          %v403 = vmul.f32 %v385, %v342
          %v404 = vmul.f32 %v385, %v343
          %v405 = vmul.f32 %v385, %v344
          %v406 = vmul.f32 %v385, %v345
          %v407 = vmul.f32 %v385, %v346
          %v408 = vmul.f32 %v385, %v347
          %v409 = vmul.f32 %v385, %v348
          %v410 = vmul.f32 %v385, %v349
          %v411 = vadd.f32 %v358, %v387
          %v412 = vadd.f32 %v359, %v388
          %v413 = vadd.f32 %v360, %v389
          %v414 = vadd.f32 %v361, %v390
          %v415 = vadd.f32 %v362, %v391
          %v416 = vadd.f32 %v363, %v392
          %v417 = vadd.f32 %v364, %v393
          %v418 = vadd.f32 %v365, %v394
          %v419 = vadd.f32 %v366, %v395
          %v420 = vadd.f32 %v367, %v396
          %v421 = vadd.f32 %v368, %v397
          %v422 = vadd.f32 %v369, %v398
          %v423 = vadd.f32 %v370, %v399
          %v424 = vadd.f32 %v371, %v400
          %v425 = vadd.f32 %v372, %v401
          %v426 = vadd.f32 %v373, %v402
          %v427 = vadd.f32 %v374, %v403
          %v428 = vadd.f32 %v375, %v404
          %v429 = vadd.f32 %v376, %v405
          %v430 = vadd.f32 %v377, %v406
          %v431 = vadd.f32 %v378, %v407
          %v432 = vadd.f32 %v379, %v408
          %v433 = vadd.f32 %v380, %v409
          %v434 = vadd.f32 %v381, %v410
          %436 = vset.pattern.permute.xlu0 0
          %437 = vperm.xlu0 %436, %v279
          %v438 = vpop.permute.xlu0 %437
          %v440 = vmul.f32 %v438, %v327
          %v441 = vmul.f32 %v438, %v328
          %v442 = vmul.f32 %v438, %v329
          %v443 = vmul.f32 %v438, %v330
          %v444 = vmul.f32 %v438, %v331
          %v445 = vmul.f32 %v438, %v332
          %v446 = vmul.f32 %v438, %v333
          %v447 = vmul.f32 %v438, %v334
          %v448 = vmul.f32 %v438, %v335
          %v449 = vmul.f32 %v438, %v336
          %v450 = vmul.f32 %v438, %v337
          %v451 = vmul.f32 %v438, %v338
          %v452 = vmul.f32 %v438, %v339
          %v453 = vmul.f32 %v438, %v340
          %v454 = vmul.f32 %v438, %v341
          %v455 = vmul.f32 %v438, %v342
          %v456 = vmul.f32 %v438, %v343
          %v457 = vmul.f32 %v438, %v344
          %v458 = vmul.f32 %v438, %v345
          %v459 = vmul.f32 %v438, %v346
          %v460 = vmul.f32 %v438, %v347
          %v461 = vmul.f32 %v438, %v348
          %v462 = vmul.f32 %v438, %v349
          %v463 = vmul.f32 %v438, %v350
          %v464 = vadd.f32 %v411, %v440
          %v465 = vadd.f32 %v412, %v441
          %v466 = vadd.f32 %v413, %v442
          %v467 = vadd.f32 %v414, %v443
          %v468 = vadd.f32 %v415, %v444
          %v469 = vadd.f32 %v416, %v445
          %v470 = vadd.f32 %v417, %v446
          %v471 = vadd.f32 %v418, %v447
          %v472 = vadd.f32 %v419, %v448
          %v473 = vadd.f32 %v420, %v449
          %v474 = vadd.f32 %v421, %v450
          %v475 = vadd.f32 %v422, %v451
          %v476 = vadd.f32 %v423, %v452
          %v477 = vadd.f32 %v424, %v453
          %v478 = vadd.f32 %v425, %v454
          %v479 = vadd.f32 %v426, %v455
          %v480 = vadd.f32 %v427, %v456
          %v481 = vadd.f32 %v428, %v457
          %v482 = vadd.f32 %v429, %v458
          %v483 = vadd.f32 %v430, %v459
          %v484 = vadd.f32 %v431, %v460
          %v485 = vadd.f32 %v432, %v461
          %v486 = vadd.f32 %v433, %v462
          %v487 = vadd.f32 %v434, %v463
          %489 = vset.pattern.permute.xlu0 0
          %490 = vperm.xlu0 %489, %v280
          %v491 = vpop.permute.xlu0 %490
          %v493 = vmul.f32 %v491, %v328
          %v494 = vmul.f32 %v491, %v329
          %v495 = vmul.f32 %v491, %v330
          %v496 = vmul.f32 %v491, %v331
          %v497 = vmul.f32 %v491, %v332
          %v498 = vmul.f32 %v491, %v333
          %v499 = vmul.f32 %v491, %v334
          %v500 = vmul.f32 %v491, %v335
          %v501 = vmul.f32 %v491, %v336
          %v502 = vmul.f32 %v491, %v337
          %v503 = vmul.f32 %v491, %v338
          %v504 = vmul.f32 %v491, %v339
          %v505 = vmul.f32 %v491, %v340
          %v506 = vmul.f32 %v491, %v341
          %v507 = vmul.f32 %v491, %v342
          %v508 = vmul.f32 %v491, %v343
          %v509 = vmul.f32 %v491, %v344
          %v510 = vmul.f32 %v491, %v345
          %v511 = vmul.f32 %v491, %v346
          %v512 = vmul.f32 %v491, %v347
          %v513 = vmul.f32 %v491, %v348
          %v514 = vmul.f32 %v491, %v349
          %v515 = vmul.f32 %v491, %v350
          %v516 = vmul.f32 %v491, %v351
          %v517 = vadd.f32 %v464, %v493
          %v518 = vadd.f32 %v465, %v494
          %v519 = vadd.f32 %v466, %v495
          %v520 = vadd.f32 %v467, %v496
          %v521 = vadd.f32 %v468, %v497
          %v522 = vadd.f32 %v469, %v498
          %v523 = vadd.f32 %v470, %v499
          %v524 = vadd.f32 %v471, %v500
          %v525 = vadd.f32 %v472, %v501
          %v526 = vadd.f32 %v473, %v502
          %v527 = vadd.f32 %v474, %v503
          %v528 = vadd.f32 %v475, %v504
          %v529 = vadd.f32 %v476, %v505
          %v530 = vadd.f32 %v477, %v506
          %v531 = vadd.f32 %v478, %v507
          %v532 = vadd.f32 %v479, %v508
          %v533 = vadd.f32 %v480, %v509
          %v534 = vadd.f32 %v481, %v510
          %v535 = vadd.f32 %v482, %v511
          %v536 = vadd.f32 %v483, %v512
          %v537 = vadd.f32 %v484, %v513
          %v538 = vadd.f32 %v485, %v514
          %v539 = vadd.f32 %v486, %v515
          %v540 = vadd.f32 %v487, %v516
          %542 = vset.pattern.permute.xlu0 0
          %543 = vperm.xlu0 %542, %v281
          %v544 = vpop.permute.xlu0 %543
          %v546 = vmul.f32 %v544, %v329
          %v547 = vmul.f32 %v544, %v330
          %v548 = vmul.f32 %v544, %v331
          %v549 = vmul.f32 %v544, %v332
          %v550 = vmul.f32 %v544, %v333
          %v551 = vmul.f32 %v544, %v334
          %v552 = vmul.f32 %v544, %v335
          %v553 = vmul.f32 %v544, %v336
          %v554 = vmul.f32 %v544, %v337
          %v555 = vmul.f32 %v544, %v338
          %v556 = vmul.f32 %v544, %v339
          %v557 = vmul.f32 %v544, %v340
          %v558 = vmul.f32 %v544, %v341
          %v559 = vmul.f32 %v544, %v342
          %v560 = vmul.f32 %v544, %v343
          %v561 = vmul.f32 %v544, %v344
          %v562 = vmul.f32 %v544, %v345
          %v563 = vmul.f32 %v544, %v346
          %v564 = vmul.f32 %v544, %v347
          %v565 = vmul.f32 %v544, %v348
          %v566 = vmul.f32 %v544, %v349
          %v567 = vmul.f32 %v544, %v350
          %v568 = vmul.f32 %v544, %v351
          %v569 = vmul.f32 %v544, %v352
          %v570 = vadd.f32 %v517, %v546
          %v571 = vadd.f32 %v518, %v547
          %v572 = vadd.f32 %v519, %v548
          %v573 = vadd.f32 %v520, %v549
          %v574 = vadd.f32 %v521, %v550
          %v575 = vadd.f32 %v522, %v551
          %v576 = vadd.f32 %v523, %v552
          %v577 = vadd.f32 %v524, %v553
          %v578 = vadd.f32 %v525, %v554
          %v579 = vadd.f32 %v526, %v555
          %v580 = vadd.f32 %v527, %v556
          %v581 = vadd.f32 %v528, %v557
          %v582 = vadd.f32 %v529, %v558
          %v583 = vadd.f32 %v530, %v559
          %v584 = vadd.f32 %v531, %v560
          %v585 = vadd.f32 %v532, %v561
          %v586 = vadd.f32 %v533, %v562
          %v587 = vadd.f32 %v534, %v563
          %v588 = vadd.f32 %v535, %v564
          %v589 = vadd.f32 %v536, %v565
          %v590 = vadd.f32 %v537, %v566
          %v591 = vadd.f32 %v538, %v567
          %v592 = vadd.f32 %v539, %v568
          %v593 = vadd.f32 %v540, %v569
          %s594 = sadd.s32 %s321, 1
          %s595 = smul.u32 %s594, 28
          %s596 = smul.addr %s595, 8
          %s597 = scalar_lea.vmem %s276, %s596
          %v598 = vld [vmem:[%s597] sm:$0xff]
          %v599 = vld [vmem:[%s597 + $0x8] sm:$0xff]
          %v600 = vld [vmem:[%s597 + $0x10] sm:$0xff]
          %v601 = vld [vmem:[%s597 + $0x18] sm:$0xff]
          %v602 = vld [vmem:[%s597 + $0x20] sm:$0xff]
          %v603 = vld [vmem:[%s597 + $0x28] sm:$0xff]
          %v604 = vld [vmem:[%s597 + $0x30] sm:$0xff]
          %v605 = vld [vmem:[%s597 + $0x38] sm:$0xff]
          %v606 = vld [vmem:[%s597 + $0x40] sm:$0xff]
          %v607 = vld [vmem:[%s597 + $0x48] sm:$0xff]
          %v608 = vld [vmem:[%s597 + $0x50] sm:$0xff]
          %v609 = vld [vmem:[%s597 + $0x58] sm:$0xff]
          %v610 = vld [vmem:[%s597 + $0x60] sm:$0xff]
          %v611 = vld [vmem:[%s597 + $0x68] sm:$0xff]
          %v612 = vld [vmem:[%s597 + $0x70] sm:$0xff]
          %v613 = vld [vmem:[%s597 + $0x78] sm:$0xff]
          %v614 = vld [vmem:[%s597 + $0x80] sm:$0xff]
          %v615 = vld [vmem:[%s597 + $0x88] sm:$0xff]
          %v616 = vld [vmem:[%s597 + $0x90] sm:$0xff]
          %v617 = vld [vmem:[%s597 + $0x98] sm:$0xff]
          %v618 = vld [vmem:[%s597 + $0xa0] sm:$0xff]
          %v619 = vld [vmem:[%s597 + $0xa8] sm:$0xff]
          %v620 = vld [vmem:[%s597 + $0xb0] sm:$0xff]
          %v621 = vld [vmem:[%s597 + $0xb8] sm:$0xff]
          %v622 = vld [vmem:[%s597 + $0xc0] sm:$0xff]
          %v623 = vld [vmem:[%s597 + $0xc8] sm:$0xff]
          %v624 = vld [vmem:[%s597 + $0xd0] sm:$0xff]
          %v625 = vld [vmem:[%s597 + $0xd8] sm:$0xff]
          %627 = vset.pattern.permute.xlu0 0
          %628 = vperm.xlu0 %627, %v282
          %v629 = vpop.permute.xlu0 %628
          %v631 = vmul.f32 %v629, %v598
          %v632 = vmul.f32 %v629, %v599
          %v633 = vmul.f32 %v629, %v600
          %v634 = vmul.f32 %v629, %v601
          %v635 = vmul.f32 %v629, %v602
          %v636 = vmul.f32 %v629, %v603
          %v637 = vmul.f32 %v629, %v604
          %v638 = vmul.f32 %v629, %v605
          %v639 = vmul.f32 %v629, %v606
          %v640 = vmul.f32 %v629, %v607
          %v641 = vmul.f32 %v629, %v608
          %v642 = vmul.f32 %v629, %v609
          %v643 = vmul.f32 %v629, %v610
          %v644 = vmul.f32 %v629, %v611
          %v645 = vmul.f32 %v629, %v612
          %v646 = vmul.f32 %v629, %v613
          %v647 = vmul.f32 %v629, %v614
          %v648 = vmul.f32 %v629, %v615
          %v649 = vmul.f32 %v629, %v616
          %v650 = vmul.f32 %v629, %v617
          %v651 = vmul.f32 %v629, %v618
          %v652 = vmul.f32 %v629, %v619
          %v653 = vmul.f32 %v629, %v620
          %v654 = vmul.f32 %v629, %v621
          %v655 = vadd.f32 %v570, %v631
          %v656 = vadd.f32 %v571, %v632
          %v657 = vadd.f32 %v572, %v633
          %v658 = vadd.f32 %v573, %v634
          %v659 = vadd.f32 %v574, %v635
          %v660 = vadd.f32 %v575, %v636
          %v661 = vadd.f32 %v576, %v637
          %v662 = vadd.f32 %v577, %v638
          %v663 = vadd.f32 %v578, %v639
          %v664 = vadd.f32 %v579, %v640
          %v665 = vadd.f32 %v580, %v641
          %v666 = vadd.f32 %v581, %v642
          %v667 = vadd.f32 %v582, %v643
          %v668 = vadd.f32 %v583, %v644
          %v669 = vadd.f32 %v584, %v645
          %v670 = vadd.f32 %v585, %v646
          %v671 = vadd.f32 %v586, %v647
          %v672 = vadd.f32 %v587, %v648
          %v673 = vadd.f32 %v588, %v649
          %v674 = vadd.f32 %v589, %v650
          %v675 = vadd.f32 %v590, %v651
          %v676 = vadd.f32 %v591, %v652
          %v677 = vadd.f32 %v592, %v653
          %v678 = vadd.f32 %v593, %v654
          %680 = vset.pattern.permute.xlu0 0
          %681 = vperm.xlu0 %680, %v283
          %v682 = vpop.permute.xlu0 %681
          %v684 = vmul.f32 %v682, %v599
          %v685 = vmul.f32 %v682, %v600
          %v686 = vmul.f32 %v682, %v601
          %v687 = vmul.f32 %v682, %v602
          %v688 = vmul.f32 %v682, %v603
          %v689 = vmul.f32 %v682, %v604
          %v690 = vmul.f32 %v682, %v605
          %v691 = vmul.f32 %v682, %v606
          %v692 = vmul.f32 %v682, %v607
          %v693 = vmul.f32 %v682, %v608
          %v694 = vmul.f32 %v682, %v609
          %v695 = vmul.f32 %v682, %v610
          %v696 = vmul.f32 %v682, %v611
          %v697 = vmul.f32 %v682, %v612
          %v698 = vmul.f32 %v682, %v613
          %v699 = vmul.f32 %v682, %v614
          %v700 = vmul.f32 %v682, %v615
          %v701 = vmul.f32 %v682, %v616
          %v702 = vmul.f32 %v682, %v617
          %v703 = vmul.f32 %v682, %v618
          %v704 = vmul.f32 %v682, %v619
          %v705 = vmul.f32 %v682, %v620
          %v706 = vmul.f32 %v682, %v621
          %v707 = vmul.f32 %v682, %v622
          %v708 = vadd.f32 %v655, %v684
          %v709 = vadd.f32 %v656, %v685
          %v710 = vadd.f32 %v657, %v686
          %v711 = vadd.f32 %v658, %v687
          %v712 = vadd.f32 %v659, %v688
          %v713 = vadd.f32 %v660, %v689
          %v714 = vadd.f32 %v661, %v690
          %v715 = vadd.f32 %v662, %v691
          %v716 = vadd.f32 %v663, %v692
          %v717 = vadd.f32 %v664, %v693
          %v718 = vadd.f32 %v665, %v694
          %v719 = vadd.f32 %v666, %v695
          %v720 = vadd.f32 %v667, %v696
          %v721 = vadd.f32 %v668, %v697
          %v722 = vadd.f32 %v669, %v698
          %v723 = vadd.f32 %v670, %v699
          %v724 = vadd.f32 %v671, %v700
          %v725 = vadd.f32 %v672, %v701
          %v726 = vadd.f32 %v673, %v702
          %v727 = vadd.f32 %v674, %v703
          %v728 = vadd.f32 %v675, %v704
          %v729 = vadd.f32 %v676, %v705
          %v730 = vadd.f32 %v677, %v706
          %v731 = vadd.f32 %v678, %v707
          %733 = vset.pattern.permute.xlu0 0
          %734 = vperm.xlu0 %733, %v284
          %v735 = vpop.permute.xlu0 %734
          %v737 = vmul.f32 %v735, %v600
          %v738 = vmul.f32 %v735, %v601
          %v739 = vmul.f32 %v735, %v602
          %v740 = vmul.f32 %v735, %v603
          %v741 = vmul.f32 %v735, %v604
          %v742 = vmul.f32 %v735, %v605
          %v743 = vmul.f32 %v735, %v606
          %v744 = vmul.f32 %v735, %v607
          %v745 = vmul.f32 %v735, %v608
          %v746 = vmul.f32 %v735, %v609
          %v747 = vmul.f32 %v735, %v610
          %v748 = vmul.f32 %v735, %v611
          %v749 = vmul.f32 %v735, %v612
          %v750 = vmul.f32 %v735, %v613
          %v751 = vmul.f32 %v735, %v614
          %v752 = vmul.f32 %v735, %v615
          %v753 = vmul.f32 %v735, %v616
          %v754 = vmul.f32 %v735, %v617
          %v755 = vmul.f32 %v735, %v618
          %v756 = vmul.f32 %v735, %v619
          %v757 = vmul.f32 %v735, %v620
          %v758 = vmul.f32 %v735, %v621
          %v759 = vmul.f32 %v735, %v622
          %v760 = vmul.f32 %v735, %v623
          %v761 = vadd.f32 %v708, %v737
          %v762 = vadd.f32 %v709, %v738
          %v763 = vadd.f32 %v710, %v739
          %v764 = vadd.f32 %v711, %v740
          %v765 = vadd.f32 %v712, %v741
          %v766 = vadd.f32 %v713, %v742
          %v767 = vadd.f32 %v714, %v743
          %v768 = vadd.f32 %v715, %v744
          %v769 = vadd.f32 %v716, %v745
          %v770 = vadd.f32 %v717, %v746
          %v771 = vadd.f32 %v718, %v747
          %v772 = vadd.f32 %v719, %v748
          %v773 = vadd.f32 %v720, %v749
          %v774 = vadd.f32 %v721, %v750
          %v775 = vadd.f32 %v722, %v751
          %v776 = vadd.f32 %v723, %v752
          %v777 = vadd.f32 %v724, %v753
          %v778 = vadd.f32 %v725, %v754
          %v779 = vadd.f32 %v726, %v755
          %v780 = vadd.f32 %v727, %v756
          %v781 = vadd.f32 %v728, %v757
          %v782 = vadd.f32 %v729, %v758
          %v783 = vadd.f32 %v730, %v759
          %v784 = vadd.f32 %v731, %v760
          %786 = vset.pattern.permute.xlu0 0
          %787 = vperm.xlu0 %786, %v285
          %v788 = vpop.permute.xlu0 %787
          %v790 = vmul.f32 %v788, %v601
          %v791 = vmul.f32 %v788, %v602
          %v792 = vmul.f32 %v788, %v603
          %v793 = vmul.f32 %v788, %v604
          %v794 = vmul.f32 %v788, %v605
          %v795 = vmul.f32 %v788, %v606
          %v796 = vmul.f32 %v788, %v607
          %v797 = vmul.f32 %v788, %v608
          %v798 = vmul.f32 %v788, %v609
          %v799 = vmul.f32 %v788, %v610
          %v800 = vmul.f32 %v788, %v611
          %v801 = vmul.f32 %v788, %v612
          %v802 = vmul.f32 %v788, %v613
          %v803 = vmul.f32 %v788, %v614
          %v804 = vmul.f32 %v788, %v615
          %v805 = vmul.f32 %v788, %v616
          %v806 = vmul.f32 %v788, %v617
          %v807 = vmul.f32 %v788, %v618
          %v808 = vmul.f32 %v788, %v619
          %v809 = vmul.f32 %v788, %v620
          %v810 = vmul.f32 %v788, %v621
          %v811 = vmul.f32 %v788, %v622
          %v812 = vmul.f32 %v788, %v623
          %v813 = vmul.f32 %v788, %v624
          %v814 = vadd.f32 %v761, %v790
          %v815 = vadd.f32 %v762, %v791
          %v816 = vadd.f32 %v763, %v792
          %v817 = vadd.f32 %v764, %v793
          %v818 = vadd.f32 %v765, %v794
          %v819 = vadd.f32 %v766, %v795
          %v820 = vadd.f32 %v767, %v796
          %v821 = vadd.f32 %v768, %v797
          %v822 = vadd.f32 %v769, %v798
          %v823 = vadd.f32 %v770, %v799
          %v824 = vadd.f32 %v771, %v800
          %v825 = vadd.f32 %v772, %v801
          %v826 = vadd.f32 %v773, %v802
          %v827 = vadd.f32 %v774, %v803
          %v828 = vadd.f32 %v775, %v804
          %v829 = vadd.f32 %v776, %v805
          %v830 = vadd.f32 %v777, %v806
          %v831 = vadd.f32 %v778, %v807
          %v832 = vadd.f32 %v779, %v808
          %v833 = vadd.f32 %v780, %v809
          %v834 = vadd.f32 %v781, %v810
          %v835 = vadd.f32 %v782, %v811
          %v836 = vadd.f32 %v783, %v812
          %v837 = vadd.f32 %v784, %v813
          %839 = vset.pattern.permute.xlu0 0
          %840 = vperm.xlu0 %839, %v286
          %v841 = vpop.permute.xlu0 %840
          %v843 = vmul.f32 %v841, %v602
          %v844 = vmul.f32 %v841, %v603
          %v845 = vmul.f32 %v841, %v604
          %v846 = vmul.f32 %v841, %v605
          %v847 = vmul.f32 %v841, %v606
          %v848 = vmul.f32 %v841, %v607
          %v849 = vmul.f32 %v841, %v608
          %v850 = vmul.f32 %v841, %v609
          %v851 = vmul.f32 %v841, %v610
          %v852 = vmul.f32 %v841, %v611
          %v853 = vmul.f32 %v841, %v612
          %v854 = vmul.f32 %v841, %v613
          %v855 = vmul.f32 %v841, %v614
          %v856 = vmul.f32 %v841, %v615
          %v857 = vmul.f32 %v841, %v616
          %v858 = vmul.f32 %v841, %v617
          %v859 = vmul.f32 %v841, %v618
          %v860 = vmul.f32 %v841, %v619
          %v861 = vmul.f32 %v841, %v620
          %v862 = vmul.f32 %v841, %v621
          %v863 = vmul.f32 %v841, %v622
          %v864 = vmul.f32 %v841, %v623
          %v865 = vmul.f32 %v841, %v624
          %v866 = vmul.f32 %v841, %v625
          %v867 = vadd.f32 %v814, %v843
          %v868 = vadd.f32 %v815, %v844
          %v869 = vadd.f32 %v816, %v845
          %v870 = vadd.f32 %v817, %v846
          %v871 = vadd.f32 %v818, %v847
          %v872 = vadd.f32 %v819, %v848
          %v873 = vadd.f32 %v820, %v849
          %v874 = vadd.f32 %v821, %v850
          %v875 = vadd.f32 %v822, %v851
          %v876 = vadd.f32 %v823, %v852
          %v877 = vadd.f32 %v824, %v853
          %v878 = vadd.f32 %v825, %v854
          %v879 = vadd.f32 %v826, %v855
          %v880 = vadd.f32 %v827, %v856
          %v881 = vadd.f32 %v828, %v857
          %v882 = vadd.f32 %v829, %v858
          %v883 = vadd.f32 %v830, %v859
          %v884 = vadd.f32 %v831, %v860
          %v885 = vadd.f32 %v832, %v861
          %v886 = vadd.f32 %v833, %v862
          %v887 = vadd.f32 %v834, %v863
          %v888 = vadd.f32 %v835, %v864
          %v889 = vadd.f32 %v836, %v865
          %v890 = vadd.f32 %v837, %v866
          %s891 = sadd.s32 %s321, 2
          %s892 = smul.u32 %s891, 28
          %s893 = smul.addr %s892, 8
          %s894 = scalar_lea.vmem %s276, %s893
          %v895 = vld [vmem:[%s894] sm:$0xff]
          %v896 = vld [vmem:[%s894 + $0x8] sm:$0xff]
          %v897 = vld [vmem:[%s894 + $0x10] sm:$0xff]
          %v898 = vld [vmem:[%s894 + $0x18] sm:$0xff]
          %v899 = vld [vmem:[%s894 + $0x20] sm:$0xff]
          %v900 = vld [vmem:[%s894 + $0x28] sm:$0xff]
          %v901 = vld [vmem:[%s894 + $0x30] sm:$0xff]
          %v902 = vld [vmem:[%s894 + $0x38] sm:$0xff]
          %v903 = vld [vmem:[%s894 + $0x40] sm:$0xff]
          %v904 = vld [vmem:[%s894 + $0x48] sm:$0xff]
          %v905 = vld [vmem:[%s894 + $0x50] sm:$0xff]
          %v906 = vld [vmem:[%s894 + $0x58] sm:$0xff]
          %v907 = vld [vmem:[%s894 + $0x60] sm:$0xff]
          %v908 = vld [vmem:[%s894 + $0x68] sm:$0xff]
          %v909 = vld [vmem:[%s894 + $0x70] sm:$0xff]
          %v910 = vld [vmem:[%s894 + $0x78] sm:$0xff]
          %v911 = vld [vmem:[%s894 + $0x80] sm:$0xff]
          %v912 = vld [vmem:[%s894 + $0x88] sm:$0xff]
          %v913 = vld [vmem:[%s894 + $0x90] sm:$0xff]
          %v914 = vld [vmem:[%s894 + $0x98] sm:$0xff]
          %v915 = vld [vmem:[%s894 + $0xa0] sm:$0xff]
          %v916 = vld [vmem:[%s894 + $0xa8] sm:$0xff]
          %v917 = vld [vmem:[%s894 + $0xb0] sm:$0xff]
          %v918 = vld [vmem:[%s894 + $0xb8] sm:$0xff]
          %v919 = vld [vmem:[%s894 + $0xc0] sm:$0xff]
          %v920 = vld [vmem:[%s894 + $0xc8] sm:$0xff]
          %v921 = vld [vmem:[%s894 + $0xd0] sm:$0xff]
          %v922 = vld [vmem:[%s894 + $0xd8] sm:$0xff]
          %924 = vset.pattern.permute.xlu0 0
          %925 = vperm.xlu0 %924, %v287
          %v926 = vpop.permute.xlu0 %925
          %v928 = vmul.f32 %v926, %v895
          %v929 = vmul.f32 %v926, %v896
          %v930 = vmul.f32 %v926, %v897
          %v931 = vmul.f32 %v926, %v898
          %v932 = vmul.f32 %v926, %v899
          %v933 = vmul.f32 %v926, %v900
          %v934 = vmul.f32 %v926, %v901
          %v935 = vmul.f32 %v926, %v902
          %v936 = vmul.f32 %v926, %v903
          %v937 = vmul.f32 %v926, %v904
          %v938 = vmul.f32 %v926, %v905
          %v939 = vmul.f32 %v926, %v906
          %v940 = vmul.f32 %v926, %v907
          %v941 = vmul.f32 %v926, %v908
          %v942 = vmul.f32 %v926, %v909
          %v943 = vmul.f32 %v926, %v910
          %v944 = vmul.f32 %v926, %v911
          %v945 = vmul.f32 %v926, %v912
          %v946 = vmul.f32 %v926, %v913
          %v947 = vmul.f32 %v926, %v914
          %v948 = vmul.f32 %v926, %v915
          %v949 = vmul.f32 %v926, %v916
          %v950 = vmul.f32 %v926, %v917
          %v951 = vmul.f32 %v926, %v918
          %v952 = vadd.f32 %v867, %v928
          %v953 = vadd.f32 %v868, %v929
          %v954 = vadd.f32 %v869, %v930
          %v955 = vadd.f32 %v870, %v931
          %v956 = vadd.f32 %v871, %v932
          %v957 = vadd.f32 %v872, %v933
          %v958 = vadd.f32 %v873, %v934
          %v959 = vadd.f32 %v874, %v935
          %v960 = vadd.f32 %v875, %v936
          %v961 = vadd.f32 %v876, %v937
          %v962 = vadd.f32 %v877, %v938
          %v963 = vadd.f32 %v878, %v939
          %v964 = vadd.f32 %v879, %v940
          %v965 = vadd.f32 %v880, %v941
          %v966 = vadd.f32 %v881, %v942
          %v967 = vadd.f32 %v882, %v943
          %v968 = vadd.f32 %v883, %v944
          %v969 = vadd.f32 %v884, %v945
          %v970 = vadd.f32 %v885, %v946
          %v971 = vadd.f32 %v886, %v947
          %v972 = vadd.f32 %v887, %v948
          %v973 = vadd.f32 %v888, %v949
          %v974 = vadd.f32 %v889, %v950
          %v975 = vadd.f32 %v890, %v951
          %977 = vset.pattern.permute.xlu0 0
          %978 = vperm.xlu0 %977, %v288
          %v979 = vpop.permute.xlu0 %978
          %v981 = vmul.f32 %v979, %v896
          %v982 = vmul.f32 %v979, %v897
          %v983 = vmul.f32 %v979, %v898
          %v984 = vmul.f32 %v979, %v899
          %v985 = vmul.f32 %v979, %v900
          %v986 = vmul.f32 %v979, %v901
          %v987 = vmul.f32 %v979, %v902
          %v988 = vmul.f32 %v979, %v903
          %v989 = vmul.f32 %v979, %v904
          %v990 = vmul.f32 %v979, %v905
          %v991 = vmul.f32 %v979, %v906
          %v992 = vmul.f32 %v979, %v907
          %v993 = vmul.f32 %v979, %v908
          %v994 = vmul.f32 %v979, %v909
          %v995 = vmul.f32 %v979, %v910
          %v996 = vmul.f32 %v979, %v911
          %v997 = vmul.f32 %v979, %v912
          %v998 = vmul.f32 %v979, %v913
          %v999 = vmul.f32 %v979, %v914
          %v1000 = vmul.f32 %v979, %v915
          %v1001 = vmul.f32 %v979, %v916
          %v1002 = vmul.f32 %v979, %v917
          %v1003 = vmul.f32 %v979, %v918
          %v1004 = vmul.f32 %v979, %v919
          %v1005 = vadd.f32 %v952, %v981
          %v1006 = vadd.f32 %v953, %v982
          %v1007 = vadd.f32 %v954, %v983
          %v1008 = vadd.f32 %v955, %v984
          %v1009 = vadd.f32 %v956, %v985
          %v1010 = vadd.f32 %v957, %v986
          %v1011 = vadd.f32 %v958, %v987
          %v1012 = vadd.f32 %v959, %v988
          %v1013 = vadd.f32 %v960, %v989
          %v1014 = vadd.f32 %v961, %v990
          %v1015 = vadd.f32 %v962, %v991
          %v1016 = vadd.f32 %v963, %v992
          %v1017 = vadd.f32 %v964, %v993
          %v1018 = vadd.f32 %v965, %v994
          %v1019 = vadd.f32 %v966, %v995
          %v1020 = vadd.f32 %v967, %v996
          %v1021 = vadd.f32 %v968, %v997
          %v1022 = vadd.f32 %v969, %v998
          %v1023 = vadd.f32 %v970, %v999
          %v1024 = vadd.f32 %v971, %v1000
          %v1025 = vadd.f32 %v972, %v1001
          %v1026 = vadd.f32 %v973, %v1002
          %v1027 = vadd.f32 %v974, %v1003
          %v1028 = vadd.f32 %v975, %v1004
          %1030 = vset.pattern.permute.xlu0 0
          %1031 = vperm.xlu0 %1030, %v289
          %v1032 = vpop.permute.xlu0 %1031
          %v1034 = vmul.f32 %v1032, %v897
          %v1035 = vmul.f32 %v1032, %v898
          %v1036 = vmul.f32 %v1032, %v899
          %v1037 = vmul.f32 %v1032, %v900
          %v1038 = vmul.f32 %v1032, %v901
          %v1039 = vmul.f32 %v1032, %v902
          %v1040 = vmul.f32 %v1032, %v903
          %v1041 = vmul.f32 %v1032, %v904
          %v1042 = vmul.f32 %v1032, %v905
          %v1043 = vmul.f32 %v1032, %v906
          %v1044 = vmul.f32 %v1032, %v907
          %v1045 = vmul.f32 %v1032, %v908
          %v1046 = vmul.f32 %v1032, %v909
          %v1047 = vmul.f32 %v1032, %v910
          %v1048 = vmul.f32 %v1032, %v911
          %v1049 = vmul.f32 %v1032, %v912
          %v1050 = vmul.f32 %v1032, %v913
          %v1051 = vmul.f32 %v1032, %v914
          %v1052 = vmul.f32 %v1032, %v915
          %v1053 = vmul.f32 %v1032, %v916
          %v1054 = vmul.f32 %v1032, %v917
          %v1055 = vmul.f32 %v1032, %v918
          %v1056 = vmul.f32 %v1032, %v919
          %v1057 = vmul.f32 %v1032, %v920
          %v1058 = vadd.f32 %v1005, %v1034
          %v1059 = vadd.f32 %v1006, %v1035
          %v1060 = vadd.f32 %v1007, %v1036
          %v1061 = vadd.f32 %v1008, %v1037
          %v1062 = vadd.f32 %v1009, %v1038
          %v1063 = vadd.f32 %v1010, %v1039
          %v1064 = vadd.f32 %v1011, %v1040
          %v1065 = vadd.f32 %v1012, %v1041
          %v1066 = vadd.f32 %v1013, %v1042
          %v1067 = vadd.f32 %v1014, %v1043
          %v1068 = vadd.f32 %v1015, %v1044
          %v1069 = vadd.f32 %v1016, %v1045
          %v1070 = vadd.f32 %v1017, %v1046
          %v1071 = vadd.f32 %v1018, %v1047
          %v1072 = vadd.f32 %v1019, %v1048
          %v1073 = vadd.f32 %v1020, %v1049
          %v1074 = vadd.f32 %v1021, %v1050
          %v1075 = vadd.f32 %v1022, %v1051
          %v1076 = vadd.f32 %v1023, %v1052
          %v1077 = vadd.f32 %v1024, %v1053
          %v1078 = vadd.f32 %v1025, %v1054
          %v1079 = vadd.f32 %v1026, %v1055
          %v1080 = vadd.f32 %v1027, %v1056
          %v1081 = vadd.f32 %v1028, %v1057
          %1083 = vset.pattern.permute.xlu0 0
          %1084 = vperm.xlu0 %1083, %v290
          %v1085 = vpop.permute.xlu0 %1084
          %v1087 = vmul.f32 %v1085, %v898
          %v1088 = vmul.f32 %v1085, %v899
          %v1089 = vmul.f32 %v1085, %v900
          %v1090 = vmul.f32 %v1085, %v901
          %v1091 = vmul.f32 %v1085, %v902
          %v1092 = vmul.f32 %v1085, %v903
          %v1093 = vmul.f32 %v1085, %v904
          %v1094 = vmul.f32 %v1085, %v905
          %v1095 = vmul.f32 %v1085, %v906
          %v1096 = vmul.f32 %v1085, %v907
          %v1097 = vmul.f32 %v1085, %v908
          %v1098 = vmul.f32 %v1085, %v909
          %v1099 = vmul.f32 %v1085, %v910
          %v1100 = vmul.f32 %v1085, %v911
          %v1101 = vmul.f32 %v1085, %v912
          %v1102 = vmul.f32 %v1085, %v913
          %v1103 = vmul.f32 %v1085, %v914
          %v1104 = vmul.f32 %v1085, %v915
          %v1105 = vmul.f32 %v1085, %v916
          %v1106 = vmul.f32 %v1085, %v917
          %v1107 = vmul.f32 %v1085, %v918
          %v1108 = vmul.f32 %v1085, %v919
          %v1109 = vmul.f32 %v1085, %v920
          %v1110 = vmul.f32 %v1085, %v921
          %v1111 = vadd.f32 %v1058, %v1087
          %v1112 = vadd.f32 %v1059, %v1088
          %v1113 = vadd.f32 %v1060, %v1089
          %v1114 = vadd.f32 %v1061, %v1090
          %v1115 = vadd.f32 %v1062, %v1091
          %v1116 = vadd.f32 %v1063, %v1092
          %v1117 = vadd.f32 %v1064, %v1093
          %v1118 = vadd.f32 %v1065, %v1094
          %v1119 = vadd.f32 %v1066, %v1095
          %v1120 = vadd.f32 %v1067, %v1096
          %v1121 = vadd.f32 %v1068, %v1097
          %v1122 = vadd.f32 %v1069, %v1098
          %v1123 = vadd.f32 %v1070, %v1099
          %v1124 = vadd.f32 %v1071, %v1100
          %v1125 = vadd.f32 %v1072, %v1101
          %v1126 = vadd.f32 %v1073, %v1102
          %v1127 = vadd.f32 %v1074, %v1103
          %v1128 = vadd.f32 %v1075, %v1104
          %v1129 = vadd.f32 %v1076, %v1105
          %v1130 = vadd.f32 %v1077, %v1106
          %v1131 = vadd.f32 %v1078, %v1107
          %v1132 = vadd.f32 %v1079, %v1108
          %v1133 = vadd.f32 %v1080, %v1109
          %v1134 = vadd.f32 %v1081, %v1110
          %1136 = vset.pattern.permute.xlu0 0
          %1137 = vperm.xlu0 %1136, %v291
          %v1138 = vpop.permute.xlu0 %1137
          %v1140 = vmul.f32 %v1138, %v899
          %v1141 = vmul.f32 %v1138, %v900
          %v1142 = vmul.f32 %v1138, %v901
          %v1143 = vmul.f32 %v1138, %v902
          %v1144 = vmul.f32 %v1138, %v903
          %v1145 = vmul.f32 %v1138, %v904
          %v1146 = vmul.f32 %v1138, %v905
          %v1147 = vmul.f32 %v1138, %v906
          %v1148 = vmul.f32 %v1138, %v907
          %v1149 = vmul.f32 %v1138, %v908
          %v1150 = vmul.f32 %v1138, %v909
          %v1151 = vmul.f32 %v1138, %v910
          %v1152 = vmul.f32 %v1138, %v911
          %v1153 = vmul.f32 %v1138, %v912
          %v1154 = vmul.f32 %v1138, %v913
          %v1155 = vmul.f32 %v1138, %v914
          %v1156 = vmul.f32 %v1138, %v915
          %v1157 = vmul.f32 %v1138, %v916
          %v1158 = vmul.f32 %v1138, %v917
          %v1159 = vmul.f32 %v1138, %v918
          %v1160 = vmul.f32 %v1138, %v919
          %v1161 = vmul.f32 %v1138, %v920
          %v1162 = vmul.f32 %v1138, %v921
          %v1163 = vmul.f32 %v1138, %v922
          %v1164 = vadd.f32 %v1111, %v1140
          %v1165 = vadd.f32 %v1112, %v1141
          %v1166 = vadd.f32 %v1113, %v1142
          %v1167 = vadd.f32 %v1114, %v1143
          %v1168 = vadd.f32 %v1115, %v1144
          %v1169 = vadd.f32 %v1116, %v1145
          %v1170 = vadd.f32 %v1117, %v1146
          %v1171 = vadd.f32 %v1118, %v1147
          %v1172 = vadd.f32 %v1119, %v1148
          %v1173 = vadd.f32 %v1120, %v1149
          %v1174 = vadd.f32 %v1121, %v1150
          %v1175 = vadd.f32 %v1122, %v1151
          %v1176 = vadd.f32 %v1123, %v1152
          %v1177 = vadd.f32 %v1124, %v1153
          %v1178 = vadd.f32 %v1125, %v1154
          %v1179 = vadd.f32 %v1126, %v1155
          %v1180 = vadd.f32 %v1127, %v1156
          %v1181 = vadd.f32 %v1128, %v1157
          %v1182 = vadd.f32 %v1129, %v1158
          %v1183 = vadd.f32 %v1130, %v1159
          %v1184 = vadd.f32 %v1131, %v1160
          %v1185 = vadd.f32 %v1132, %v1161
          %v1186 = vadd.f32 %v1133, %v1162
          %v1187 = vadd.f32 %v1134, %v1163
          %s1188 = sadd.s32 %s321, 3
          %s1189 = smul.u32 %s1188, 28
          %s1190 = smul.addr %s1189, 8
          %s1191 = scalar_lea.vmem %s276, %s1190
          %v1192 = vld [vmem:[%s1191] sm:$0xff]
          %v1193 = vld [vmem:[%s1191 + $0x8] sm:$0xff]
          %v1194 = vld [vmem:[%s1191 + $0x10] sm:$0xff]
          %v1195 = vld [vmem:[%s1191 + $0x18] sm:$0xff]
          %v1196 = vld [vmem:[%s1191 + $0x20] sm:$0xff]
          %v1197 = vld [vmem:[%s1191 + $0x28] sm:$0xff]
          %v1198 = vld [vmem:[%s1191 + $0x30] sm:$0xff]
          %v1199 = vld [vmem:[%s1191 + $0x38] sm:$0xff]
          %v1200 = vld [vmem:[%s1191 + $0x40] sm:$0xff]
          %v1201 = vld [vmem:[%s1191 + $0x48] sm:$0xff]
          %v1202 = vld [vmem:[%s1191 + $0x50] sm:$0xff]
          %v1203 = vld [vmem:[%s1191 + $0x58] sm:$0xff]
          %v1204 = vld [vmem:[%s1191 + $0x60] sm:$0xff]
          %v1205 = vld [vmem:[%s1191 + $0x68] sm:$0xff]
          %v1206 = vld [vmem:[%s1191 + $0x70] sm:$0xff]
          %v1207 = vld [vmem:[%s1191 + $0x78] sm:$0xff]
          %v1208 = vld [vmem:[%s1191 + $0x80] sm:$0xff]
          %v1209 = vld [vmem:[%s1191 + $0x88] sm:$0xff]
          %v1210 = vld [vmem:[%s1191 + $0x90] sm:$0xff]
          %v1211 = vld [vmem:[%s1191 + $0x98] sm:$0xff]
          %v1212 = vld [vmem:[%s1191 + $0xa0] sm:$0xff]
          %v1213 = vld [vmem:[%s1191 + $0xa8] sm:$0xff]
          %v1214 = vld [vmem:[%s1191 + $0xb0] sm:$0xff]
          %v1215 = vld [vmem:[%s1191 + $0xb8] sm:$0xff]
          %v1216 = vld [vmem:[%s1191 + $0xc0] sm:$0xff]
          %v1217 = vld [vmem:[%s1191 + $0xc8] sm:$0xff]
          %v1218 = vld [vmem:[%s1191 + $0xd0] sm:$0xff]
          %v1219 = vld [vmem:[%s1191 + $0xd8] sm:$0xff]
          %1221 = vset.pattern.permute.xlu0 0
          %1222 = vperm.xlu0 %1221, %v292
          %v1223 = vpop.permute.xlu0 %1222
          %v1225 = vmul.f32 %v1223, %v1192
          %v1226 = vmul.f32 %v1223, %v1193
          %v1227 = vmul.f32 %v1223, %v1194
          %v1228 = vmul.f32 %v1223, %v1195
          %v1229 = vmul.f32 %v1223, %v1196
          %v1230 = vmul.f32 %v1223, %v1197
          %v1231 = vmul.f32 %v1223, %v1198
          %v1232 = vmul.f32 %v1223, %v1199
          %v1233 = vmul.f32 %v1223, %v1200
          %v1234 = vmul.f32 %v1223, %v1201
          %v1235 = vmul.f32 %v1223, %v1202
          %v1236 = vmul.f32 %v1223, %v1203
          %v1237 = vmul.f32 %v1223, %v1204
          %v1238 = vmul.f32 %v1223, %v1205
          %v1239 = vmul.f32 %v1223, %v1206
          %v1240 = vmul.f32 %v1223, %v1207
          %v1241 = vmul.f32 %v1223, %v1208
          %v1242 = vmul.f32 %v1223, %v1209
          %v1243 = vmul.f32 %v1223, %v1210
          %v1244 = vmul.f32 %v1223, %v1211
          %v1245 = vmul.f32 %v1223, %v1212
          %v1246 = vmul.f32 %v1223, %v1213
          %v1247 = vmul.f32 %v1223, %v1214
          %v1248 = vmul.f32 %v1223, %v1215
          %v1249 = vadd.f32 %v1164, %v1225
          %v1250 = vadd.f32 %v1165, %v1226
          %v1251 = vadd.f32 %v1166, %v1227
          %v1252 = vadd.f32 %v1167, %v1228
          %v1253 = vadd.f32 %v1168, %v1229
          %v1254 = vadd.f32 %v1169, %v1230
          %v1255 = vadd.f32 %v1170, %v1231
          %v1256 = vadd.f32 %v1171, %v1232
          %v1257 = vadd.f32 %v1172, %v1233
          %v1258 = vadd.f32 %v1173, %v1234
          %v1259 = vadd.f32 %v1174, %v1235
          %v1260 = vadd.f32 %v1175, %v1236
          %v1261 = vadd.f32 %v1176, %v1237
          %v1262 = vadd.f32 %v1177, %v1238
          %v1263 = vadd.f32 %v1178, %v1239
          %v1264 = vadd.f32 %v1179, %v1240
          %v1265 = vadd.f32 %v1180, %v1241
          %v1266 = vadd.f32 %v1181, %v1242
          %v1267 = vadd.f32 %v1182, %v1243
          %v1268 = vadd.f32 %v1183, %v1244
          %v1269 = vadd.f32 %v1184, %v1245
          %v1270 = vadd.f32 %v1185, %v1246
          %v1271 = vadd.f32 %v1186, %v1247
          %v1272 = vadd.f32 %v1187, %v1248
          %1274 = vset.pattern.permute.xlu0 0
          %1275 = vperm.xlu0 %1274, %v293
          %v1276 = vpop.permute.xlu0 %1275
          %v1278 = vmul.f32 %v1276, %v1193
          %v1279 = vmul.f32 %v1276, %v1194
          %v1280 = vmul.f32 %v1276, %v1195
          %v1281 = vmul.f32 %v1276, %v1196
          %v1282 = vmul.f32 %v1276, %v1197
          %v1283 = vmul.f32 %v1276, %v1198
          %v1284 = vmul.f32 %v1276, %v1199
          %v1285 = vmul.f32 %v1276, %v1200
          %v1286 = vmul.f32 %v1276, %v1201
          %v1287 = vmul.f32 %v1276, %v1202
          %v1288 = vmul.f32 %v1276, %v1203
          %v1289 = vmul.f32 %v1276, %v1204
          %v1290 = vmul.f32 %v1276, %v1205
          %v1291 = vmul.f32 %v1276, %v1206
          %v1292 = vmul.f32 %v1276, %v1207
          %v1293 = vmul.f32 %v1276, %v1208
          %v1294 = vmul.f32 %v1276, %v1209
          %v1295 = vmul.f32 %v1276, %v1210
          %v1296 = vmul.f32 %v1276, %v1211
          %v1297 = vmul.f32 %v1276, %v1212
          %v1298 = vmul.f32 %v1276, %v1213
          %v1299 = vmul.f32 %v1276, %v1214
          %v1300 = vmul.f32 %v1276, %v1215
          %v1301 = vmul.f32 %v1276, %v1216
          %v1302 = vadd.f32 %v1249, %v1278
          %v1303 = vadd.f32 %v1250, %v1279
          %v1304 = vadd.f32 %v1251, %v1280
          %v1305 = vadd.f32 %v1252, %v1281
          %v1306 = vadd.f32 %v1253, %v1282
          %v1307 = vadd.f32 %v1254, %v1283
          %v1308 = vadd.f32 %v1255, %v1284
          %v1309 = vadd.f32 %v1256, %v1285
          %v1310 = vadd.f32 %v1257, %v1286
          %v1311 = vadd.f32 %v1258, %v1287
          %v1312 = vadd.f32 %v1259, %v1288
          %v1313 = vadd.f32 %v1260, %v1289
          %v1314 = vadd.f32 %v1261, %v1290
          %v1315 = vadd.f32 %v1262, %v1291
          %v1316 = vadd.f32 %v1263, %v1292
          %v1317 = vadd.f32 %v1264, %v1293
          %v1318 = vadd.f32 %v1265, %v1294
          %v1319 = vadd.f32 %v1266, %v1295
          %v1320 = vadd.f32 %v1267, %v1296
          %v1321 = vadd.f32 %v1268, %v1297
          %v1322 = vadd.f32 %v1269, %v1298
          %v1323 = vadd.f32 %v1270, %v1299
          %v1324 = vadd.f32 %v1271, %v1300
          %v1325 = vadd.f32 %v1272, %v1301
          %1327 = vset.pattern.permute.xlu0 0
          %1328 = vperm.xlu0 %1327, %v294
          %v1329 = vpop.permute.xlu0 %1328
          %v1331 = vmul.f32 %v1329, %v1194
          %v1332 = vmul.f32 %v1329, %v1195
          %v1333 = vmul.f32 %v1329, %v1196
          %v1334 = vmul.f32 %v1329, %v1197
          %v1335 = vmul.f32 %v1329, %v1198
          %v1336 = vmul.f32 %v1329, %v1199
          %v1337 = vmul.f32 %v1329, %v1200
          %v1338 = vmul.f32 %v1329, %v1201
          %v1339 = vmul.f32 %v1329, %v1202
          %v1340 = vmul.f32 %v1329, %v1203
          %v1341 = vmul.f32 %v1329, %v1204
          %v1342 = vmul.f32 %v1329, %v1205
          %v1343 = vmul.f32 %v1329, %v1206
          %v1344 = vmul.f32 %v1329, %v1207
          %v1345 = vmul.f32 %v1329, %v1208
          %v1346 = vmul.f32 %v1329, %v1209
          %v1347 = vmul.f32 %v1329, %v1210
          %v1348 = vmul.f32 %v1329, %v1211
          %v1349 = vmul.f32 %v1329, %v1212
          %v1350 = vmul.f32 %v1329, %v1213
          %v1351 = vmul.f32 %v1329, %v1214
          %v1352 = vmul.f32 %v1329, %v1215
          %v1353 = vmul.f32 %v1329, %v1216
          %v1354 = vmul.f32 %v1329, %v1217
          %v1355 = vadd.f32 %v1302, %v1331
          %v1356 = vadd.f32 %v1303, %v1332
          %v1357 = vadd.f32 %v1304, %v1333
          %v1358 = vadd.f32 %v1305, %v1334
          %v1359 = vadd.f32 %v1306, %v1335
          %v1360 = vadd.f32 %v1307, %v1336
          %v1361 = vadd.f32 %v1308, %v1337
          %v1362 = vadd.f32 %v1309, %v1338
          %v1363 = vadd.f32 %v1310, %v1339
          %v1364 = vadd.f32 %v1311, %v1340
          %v1365 = vadd.f32 %v1312, %v1341
          %v1366 = vadd.f32 %v1313, %v1342
          %v1367 = vadd.f32 %v1314, %v1343
          %v1368 = vadd.f32 %v1315, %v1344
          %v1369 = vadd.f32 %v1316, %v1345
          %v1370 = vadd.f32 %v1317, %v1346
          %v1371 = vadd.f32 %v1318, %v1347
          %v1372 = vadd.f32 %v1319, %v1348
          %v1373 = vadd.f32 %v1320, %v1349
          %v1374 = vadd.f32 %v1321, %v1350
          %v1375 = vadd.f32 %v1322, %v1351
          %v1376 = vadd.f32 %v1323, %v1352
          %v1377 = vadd.f32 %v1324, %v1353
          %v1378 = vadd.f32 %v1325, %v1354
          %1380 = vset.pattern.permute.xlu0 0
          %1381 = vperm.xlu0 %1380, %v295
          %v1382 = vpop.permute.xlu0 %1381
          %v1384 = vmul.f32 %v1382, %v1195
          %v1385 = vmul.f32 %v1382, %v1196
          %v1386 = vmul.f32 %v1382, %v1197
          %v1387 = vmul.f32 %v1382, %v1198
          %v1388 = vmul.f32 %v1382, %v1199
          %v1389 = vmul.f32 %v1382, %v1200
          %v1390 = vmul.f32 %v1382, %v1201
          %v1391 = vmul.f32 %v1382, %v1202
          %v1392 = vmul.f32 %v1382, %v1203
          %v1393 = vmul.f32 %v1382, %v1204
          %v1394 = vmul.f32 %v1382, %v1205
          %v1395 = vmul.f32 %v1382, %v1206
          %v1396 = vmul.f32 %v1382, %v1207
          %v1397 = vmul.f32 %v1382, %v1208
          %v1398 = vmul.f32 %v1382, %v1209
          %v1399 = vmul.f32 %v1382, %v1210
          %v1400 = vmul.f32 %v1382, %v1211
          %v1401 = vmul.f32 %v1382, %v1212
          %v1402 = vmul.f32 %v1382, %v1213
          %v1403 = vmul.f32 %v1382, %v1214
          %v1404 = vmul.f32 %v1382, %v1215
          %v1405 = vmul.f32 %v1382, %v1216
          %v1406 = vmul.f32 %v1382, %v1217
          %v1407 = vmul.f32 %v1382, %v1218
          %v1408 = vadd.f32 %v1355, %v1384
          %v1409 = vadd.f32 %v1356, %v1385
          %v1410 = vadd.f32 %v1357, %v1386
          %v1411 = vadd.f32 %v1358, %v1387
          %v1412 = vadd.f32 %v1359, %v1388
          %v1413 = vadd.f32 %v1360, %v1389
          %v1414 = vadd.f32 %v1361, %v1390
          %v1415 = vadd.f32 %v1362, %v1391
          %v1416 = vadd.f32 %v1363, %v1392
          %v1417 = vadd.f32 %v1364, %v1393
          %v1418 = vadd.f32 %v1365, %v1394
          %v1419 = vadd.f32 %v1366, %v1395
          %v1420 = vadd.f32 %v1367, %v1396
          %v1421 = vadd.f32 %v1368, %v1397
          %v1422 = vadd.f32 %v1369, %v1398
          %v1423 = vadd.f32 %v1370, %v1399
          %v1424 = vadd.f32 %v1371, %v1400
          %v1425 = vadd.f32 %v1372, %v1401
          %v1426 = vadd.f32 %v1373, %v1402
          %v1427 = vadd.f32 %v1374, %v1403
          %v1428 = vadd.f32 %v1375, %v1404
          %v1429 = vadd.f32 %v1376, %v1405
          %v1430 = vadd.f32 %v1377, %v1406
          %v1431 = vadd.f32 %v1378, %v1407
          %1433 = vset.pattern.permute.xlu0 0
          %1434 = vperm.xlu0 %1433, %v296
          %v1435 = vpop.permute.xlu0 %1434
          %v1437 = vmul.f32 %v1435, %v1196
          %v1438 = vmul.f32 %v1435, %v1197
          %v1439 = vmul.f32 %v1435, %v1198
          %v1440 = vmul.f32 %v1435, %v1199
          %v1441 = vmul.f32 %v1435, %v1200
          %v1442 = vmul.f32 %v1435, %v1201
          %v1443 = vmul.f32 %v1435, %v1202
          %v1444 = vmul.f32 %v1435, %v1203
          %v1445 = vmul.f32 %v1435, %v1204
          %v1446 = vmul.f32 %v1435, %v1205
          %v1447 = vmul.f32 %v1435, %v1206
          %v1448 = vmul.f32 %v1435, %v1207
          %v1449 = vmul.f32 %v1435, %v1208
          %v1450 = vmul.f32 %v1435, %v1209
          %v1451 = vmul.f32 %v1435, %v1210
          %v1452 = vmul.f32 %v1435, %v1211
          %v1453 = vmul.f32 %v1435, %v1212
          %v1454 = vmul.f32 %v1435, %v1213
          %v1455 = vmul.f32 %v1435, %v1214
          %v1456 = vmul.f32 %v1435, %v1215
          %v1457 = vmul.f32 %v1435, %v1216
          %v1458 = vmul.f32 %v1435, %v1217
          %v1459 = vmul.f32 %v1435, %v1218
          %v1460 = vmul.f32 %v1435, %v1219
          %v1461 = vadd.f32 %v1408, %v1437
          %v1462 = vadd.f32 %v1409, %v1438
          %v1463 = vadd.f32 %v1410, %v1439
          %v1464 = vadd.f32 %v1411, %v1440
          %v1465 = vadd.f32 %v1412, %v1441
          %v1466 = vadd.f32 %v1413, %v1442
          %v1467 = vadd.f32 %v1414, %v1443
          %v1468 = vadd.f32 %v1415, %v1444
          %v1469 = vadd.f32 %v1416, %v1445
          %v1470 = vadd.f32 %v1417, %v1446
          %v1471 = vadd.f32 %v1418, %v1447
          %v1472 = vadd.f32 %v1419, %v1448
          %v1473 = vadd.f32 %v1420, %v1449
          %v1474 = vadd.f32 %v1421, %v1450
          %v1475 = vadd.f32 %v1422, %v1451
          %v1476 = vadd.f32 %v1423, %v1452
          %v1477 = vadd.f32 %v1424, %v1453
          %v1478 = vadd.f32 %v1425, %v1454
          %v1479 = vadd.f32 %v1426, %v1455
          %v1480 = vadd.f32 %v1427, %v1456
          %v1481 = vadd.f32 %v1428, %v1457
          %v1482 = vadd.f32 %v1429, %v1458
          %v1483 = vadd.f32 %v1430, %v1459
          %v1484 = vadd.f32 %v1431, %v1460
          %s1485 = sadd.s32 %s321, 4
          %s1486 = smul.u32 %s1485, 28
          %s1487 = smul.addr %s1486, 8
          %s1488 = scalar_lea.vmem %s276, %s1487
          %v1489 = vld [vmem:[%s1488] sm:$0xff]
          %v1490 = vld [vmem:[%s1488 + $0x8] sm:$0xff]
          %v1491 = vld [vmem:[%s1488 + $0x10] sm:$0xff]
          %v1492 = vld [vmem:[%s1488 + $0x18] sm:$0xff]
          %v1493 = vld [vmem:[%s1488 + $0x20] sm:$0xff]
          %v1494 = vld [vmem:[%s1488 + $0x28] sm:$0xff]
          %v1495 = vld [vmem:[%s1488 + $0x30] sm:$0xff]
          %v1496 = vld [vmem:[%s1488 + $0x38] sm:$0xff]
          %v1497 = vld [vmem:[%s1488 + $0x40] sm:$0xff]
          %v1498 = vld [vmem:[%s1488 + $0x48] sm:$0xff]
          %v1499 = vld [vmem:[%s1488 + $0x50] sm:$0xff]
          %v1500 = vld [vmem:[%s1488 + $0x58] sm:$0xff]
          %v1501 = vld [vmem:[%s1488 + $0x60] sm:$0xff]
          %v1502 = vld [vmem:[%s1488 + $0x68] sm:$0xff]
          %v1503 = vld [vmem:[%s1488 + $0x70] sm:$0xff]
          %v1504 = vld [vmem:[%s1488 + $0x78] sm:$0xff]
          %v1505 = vld [vmem:[%s1488 + $0x80] sm:$0xff]
          %v1506 = vld [vmem:[%s1488 + $0x88] sm:$0xff]
          %v1507 = vld [vmem:[%s1488 + $0x90] sm:$0xff]
          %v1508 = vld [vmem:[%s1488 + $0x98] sm:$0xff]
          %v1509 = vld [vmem:[%s1488 + $0xa0] sm:$0xff]
          %v1510 = vld [vmem:[%s1488 + $0xa8] sm:$0xff]
          %v1511 = vld [vmem:[%s1488 + $0xb0] sm:$0xff]
          %v1512 = vld [vmem:[%s1488 + $0xb8] sm:$0xff]
          %v1513 = vld [vmem:[%s1488 + $0xc0] sm:$0xff]
          %v1514 = vld [vmem:[%s1488 + $0xc8] sm:$0xff]
          %v1515 = vld [vmem:[%s1488 + $0xd0] sm:$0xff]
          %v1516 = vld [vmem:[%s1488 + $0xd8] sm:$0xff]
          %1518 = vset.pattern.permute.xlu0 0
          %1519 = vperm.xlu0 %1518, %v297
          %v1520 = vpop.permute.xlu0 %1519
          %v1522 = vmul.f32 %v1520, %v1489
          %v1523 = vmul.f32 %v1520, %v1490
          %v1524 = vmul.f32 %v1520, %v1491
          %v1525 = vmul.f32 %v1520, %v1492
          %v1526 = vmul.f32 %v1520, %v1493
          %v1527 = vmul.f32 %v1520, %v1494
          %v1528 = vmul.f32 %v1520, %v1495
          %v1529 = vmul.f32 %v1520, %v1496
          %v1530 = vmul.f32 %v1520, %v1497
          %v1531 = vmul.f32 %v1520, %v1498
          %v1532 = vmul.f32 %v1520, %v1499
          %v1533 = vmul.f32 %v1520, %v1500
          %v1534 = vmul.f32 %v1520, %v1501
          %v1535 = vmul.f32 %v1520, %v1502
          %v1536 = vmul.f32 %v1520, %v1503
          %v1537 = vmul.f32 %v1520, %v1504
          %v1538 = vmul.f32 %v1520, %v1505
          %v1539 = vmul.f32 %v1520, %v1506
          %v1540 = vmul.f32 %v1520, %v1507
          %v1541 = vmul.f32 %v1520, %v1508
          %v1542 = vmul.f32 %v1520, %v1509
          %v1543 = vmul.f32 %v1520, %v1510
          %v1544 = vmul.f32 %v1520, %v1511
          %v1545 = vmul.f32 %v1520, %v1512
          %v1546 = vadd.f32 %v1461, %v1522
          %v1547 = vadd.f32 %v1462, %v1523
          %v1548 = vadd.f32 %v1463, %v1524
          %v1549 = vadd.f32 %v1464, %v1525
          %v1550 = vadd.f32 %v1465, %v1526
          %v1551 = vadd.f32 %v1466, %v1527
          %v1552 = vadd.f32 %v1467, %v1528
          %v1553 = vadd.f32 %v1468, %v1529
          %v1554 = vadd.f32 %v1469, %v1530
          %v1555 = vadd.f32 %v1470, %v1531
          %v1556 = vadd.f32 %v1471, %v1532
          %v1557 = vadd.f32 %v1472, %v1533
          %v1558 = vadd.f32 %v1473, %v1534
          %v1559 = vadd.f32 %v1474, %v1535
          %v1560 = vadd.f32 %v1475, %v1536
          %v1561 = vadd.f32 %v1476, %v1537
          %v1562 = vadd.f32 %v1477, %v1538
          %v1563 = vadd.f32 %v1478, %v1539
          %v1564 = vadd.f32 %v1479, %v1540
          %v1565 = vadd.f32 %v1480, %v1541
          %v1566 = vadd.f32 %v1481, %v1542
          %v1567 = vadd.f32 %v1482, %v1543
          %v1568 = vadd.f32 %v1483, %v1544
          %v1569 = vadd.f32 %v1484, %v1545
          %1571 = vset.pattern.permute.xlu0 0
          %1572 = vperm.xlu0 %1571, %v298
          %v1573 = vpop.permute.xlu0 %1572
          %v1575 = vmul.f32 %v1573, %v1490
          %v1576 = vmul.f32 %v1573, %v1491
          %v1577 = vmul.f32 %v1573, %v1492
          %v1578 = vmul.f32 %v1573, %v1493
          %v1579 = vmul.f32 %v1573, %v1494
          %v1580 = vmul.f32 %v1573, %v1495
          %v1581 = vmul.f32 %v1573, %v1496
          %v1582 = vmul.f32 %v1573, %v1497
          %v1583 = vmul.f32 %v1573, %v1498
          %v1584 = vmul.f32 %v1573, %v1499
          %v1585 = vmul.f32 %v1573, %v1500
          %v1586 = vmul.f32 %v1573, %v1501
          %v1587 = vmul.f32 %v1573, %v1502
          %v1588 = vmul.f32 %v1573, %v1503
          %v1589 = vmul.f32 %v1573, %v1504
          %v1590 = vmul.f32 %v1573, %v1505
          %v1591 = vmul.f32 %v1573, %v1506
          %v1592 = vmul.f32 %v1573, %v1507
          %v1593 = vmul.f32 %v1573, %v1508
          %v1594 = vmul.f32 %v1573, %v1509
          %v1595 = vmul.f32 %v1573, %v1510
          %v1596 = vmul.f32 %v1573, %v1511
          %v1597 = vmul.f32 %v1573, %v1512
          %v1598 = vmul.f32 %v1573, %v1513
          %v1599 = vadd.f32 %v1546, %v1575
          %v1600 = vadd.f32 %v1547, %v1576
          %v1601 = vadd.f32 %v1548, %v1577
          %v1602 = vadd.f32 %v1549, %v1578
          %v1603 = vadd.f32 %v1550, %v1579
          %v1604 = vadd.f32 %v1551, %v1580
          %v1605 = vadd.f32 %v1552, %v1581
          %v1606 = vadd.f32 %v1553, %v1582
          %v1607 = vadd.f32 %v1554, %v1583
          %v1608 = vadd.f32 %v1555, %v1584
          %v1609 = vadd.f32 %v1556, %v1585
          %v1610 = vadd.f32 %v1557, %v1586
          %v1611 = vadd.f32 %v1558, %v1587
          %v1612 = vadd.f32 %v1559, %v1588
          %v1613 = vadd.f32 %v1560, %v1589
          %v1614 = vadd.f32 %v1561, %v1590
          %v1615 = vadd.f32 %v1562, %v1591
          %v1616 = vadd.f32 %v1563, %v1592
          %v1617 = vadd.f32 %v1564, %v1593
          %v1618 = vadd.f32 %v1565, %v1594
          %v1619 = vadd.f32 %v1566, %v1595
          %v1620 = vadd.f32 %v1567, %v1596
          %v1621 = vadd.f32 %v1568, %v1597
          %v1622 = vadd.f32 %v1569, %v1598
          %1624 = vset.pattern.permute.xlu0 0
          %1625 = vperm.xlu0 %1624, %v299
          %v1626 = vpop.permute.xlu0 %1625
          %v1628 = vmul.f32 %v1626, %v1491
          %v1629 = vmul.f32 %v1626, %v1492
          %v1630 = vmul.f32 %v1626, %v1493
          %v1631 = vmul.f32 %v1626, %v1494
          %v1632 = vmul.f32 %v1626, %v1495
          %v1633 = vmul.f32 %v1626, %v1496
          %v1634 = vmul.f32 %v1626, %v1497
          %v1635 = vmul.f32 %v1626, %v1498
          %v1636 = vmul.f32 %v1626, %v1499
          %v1637 = vmul.f32 %v1626, %v1500
          %v1638 = vmul.f32 %v1626, %v1501
          %v1639 = vmul.f32 %v1626, %v1502
          %v1640 = vmul.f32 %v1626, %v1503
          %v1641 = vmul.f32 %v1626, %v1504
          %v1642 = vmul.f32 %v1626, %v1505
          %v1643 = vmul.f32 %v1626, %v1506
          %v1644 = vmul.f32 %v1626, %v1507
          %v1645 = vmul.f32 %v1626, %v1508
          %v1646 = vmul.f32 %v1626, %v1509
          %v1647 = vmul.f32 %v1626, %v1510
          %v1648 = vmul.f32 %v1626, %v1511
          %v1649 = vmul.f32 %v1626, %v1512
          %v1650 = vmul.f32 %v1626, %v1513
          %v1651 = vmul.f32 %v1626, %v1514
          %v1652 = vadd.f32 %v1599, %v1628
          %v1653 = vadd.f32 %v1600, %v1629
          %v1654 = vadd.f32 %v1601, %v1630
          %v1655 = vadd.f32 %v1602, %v1631
          %v1656 = vadd.f32 %v1603, %v1632
          %v1657 = vadd.f32 %v1604, %v1633
          %v1658 = vadd.f32 %v1605, %v1634
          %v1659 = vadd.f32 %v1606, %v1635
          %v1660 = vadd.f32 %v1607, %v1636
          %v1661 = vadd.f32 %v1608, %v1637
          %v1662 = vadd.f32 %v1609, %v1638
          %v1663 = vadd.f32 %v1610, %v1639
          %v1664 = vadd.f32 %v1611, %v1640
          %v1665 = vadd.f32 %v1612, %v1641
          %v1666 = vadd.f32 %v1613, %v1642
          %v1667 = vadd.f32 %v1614, %v1643
          %v1668 = vadd.f32 %v1615, %v1644
          %v1669 = vadd.f32 %v1616, %v1645
          %v1670 = vadd.f32 %v1617, %v1646
          %v1671 = vadd.f32 %v1618, %v1647
          %v1672 = vadd.f32 %v1619, %v1648
          %v1673 = vadd.f32 %v1620, %v1649
          %v1674 = vadd.f32 %v1621, %v1650
          %v1675 = vadd.f32 %v1622, %v1651
          %1677 = vset.pattern.permute.xlu0 0
          %1678 = vperm.xlu0 %1677, %v300
          %v1679 = vpop.permute.xlu0 %1678
          %v1681 = vmul.f32 %v1679, %v1492
          %v1682 = vmul.f32 %v1679, %v1493
          %v1683 = vmul.f32 %v1679, %v1494
          %v1684 = vmul.f32 %v1679, %v1495
          %v1685 = vmul.f32 %v1679, %v1496
          %v1686 = vmul.f32 %v1679, %v1497
          %v1687 = vmul.f32 %v1679, %v1498
          %v1688 = vmul.f32 %v1679, %v1499
          %v1689 = vmul.f32 %v1679, %v1500
          %v1690 = vmul.f32 %v1679, %v1501
          %v1691 = vmul.f32 %v1679, %v1502
          %v1692 = vmul.f32 %v1679, %v1503
          %v1693 = vmul.f32 %v1679, %v1504
          %v1694 = vmul.f32 %v1679, %v1505
          %v1695 = vmul.f32 %v1679, %v1506
          %v1696 = vmul.f32 %v1679, %v1507
          %v1697 = vmul.f32 %v1679, %v1508
          %v1698 = vmul.f32 %v1679, %v1509
          %v1699 = vmul.f32 %v1679, %v1510
          %v1700 = vmul.f32 %v1679, %v1511
          %v1701 = vmul.f32 %v1679, %v1512
          %v1702 = vmul.f32 %v1679, %v1513
          %v1703 = vmul.f32 %v1679, %v1514
          %v1704 = vmul.f32 %v1679, %v1515
          %v1705 = vadd.f32 %v1652, %v1681
          %v1706 = vadd.f32 %v1653, %v1682
          %v1707 = vadd.f32 %v1654, %v1683
          %v1708 = vadd.f32 %v1655, %v1684
          %v1709 = vadd.f32 %v1656, %v1685
          %v1710 = vadd.f32 %v1657, %v1686
          %v1711 = vadd.f32 %v1658, %v1687
          %v1712 = vadd.f32 %v1659, %v1688
          %v1713 = vadd.f32 %v1660, %v1689
          %v1714 = vadd.f32 %v1661, %v1690
          %v1715 = vadd.f32 %v1662, %v1691
          %v1716 = vadd.f32 %v1663, %v1692
          %v1717 = vadd.f32 %v1664, %v1693
          %v1718 = vadd.f32 %v1665, %v1694
          %v1719 = vadd.f32 %v1666, %v1695
          %v1720 = vadd.f32 %v1667, %v1696
          %v1721 = vadd.f32 %v1668, %v1697
          %v1722 = vadd.f32 %v1669, %v1698
          %v1723 = vadd.f32 %v1670, %v1699
          %v1724 = vadd.f32 %v1671, %v1700
          %v1725 = vadd.f32 %v1672, %v1701
          %v1726 = vadd.f32 %v1673, %v1702
          %v1727 = vadd.f32 %v1674, %v1703
          %v1728 = vadd.f32 %v1675, %v1704
          %1730 = vset.pattern.permute.xlu0 0
          %1731 = vperm.xlu0 %1730, %v301
          %v1732 = vpop.permute.xlu0 %1731
          %v1734 = vmul.f32 %v1732, %v1493
          %v1735 = vmul.f32 %v1732, %v1494
          %v1736 = vmul.f32 %v1732, %v1495
          %v1737 = vmul.f32 %v1732, %v1496
          %v1738 = vmul.f32 %v1732, %v1497
          %v1739 = vmul.f32 %v1732, %v1498
          %v1740 = vmul.f32 %v1732, %v1499
          %v1741 = vmul.f32 %v1732, %v1500
          %v1742 = vmul.f32 %v1732, %v1501
          %v1743 = vmul.f32 %v1732, %v1502
          %v1744 = vmul.f32 %v1732, %v1503
          %v1745 = vmul.f32 %v1732, %v1504
          %v1746 = vmul.f32 %v1732, %v1505
          %v1747 = vmul.f32 %v1732, %v1506
          %v1748 = vmul.f32 %v1732, %v1507
          %v1749 = vmul.f32 %v1732, %v1508
          %v1750 = vmul.f32 %v1732, %v1509
          %v1751 = vmul.f32 %v1732, %v1510
          %v1752 = vmul.f32 %v1732, %v1511
          %v1753 = vmul.f32 %v1732, %v1512
          %v1754 = vmul.f32 %v1732, %v1513
          %v1755 = vmul.f32 %v1732, %v1514
          %v1756 = vmul.f32 %v1732, %v1515
          %v1757 = vmul.f32 %v1732, %v1516
          %v1758 = vadd.f32 %v1705, %v1734
          %v1759 = vadd.f32 %v1706, %v1735
          %v1760 = vadd.f32 %v1707, %v1736
          %v1761 = vadd.f32 %v1708, %v1737
          %v1762 = vadd.f32 %v1709, %v1738
          %v1763 = vadd.f32 %v1710, %v1739
          %v1764 = vadd.f32 %v1711, %v1740
          %v1765 = vadd.f32 %v1712, %v1741
          %v1766 = vadd.f32 %v1713, %v1742
          %v1767 = vadd.f32 %v1714, %v1743
          %v1768 = vadd.f32 %v1715, %v1744
          %v1769 = vadd.f32 %v1716, %v1745
          %v1770 = vadd.f32 %v1717, %v1746
          %v1771 = vadd.f32 %v1718, %v1747
          %v1772 = vadd.f32 %v1719, %v1748
          %v1773 = vadd.f32 %v1720, %v1749
          %v1774 = vadd.f32 %v1721, %v1750
          %v1775 = vadd.f32 %v1722, %v1751
          %v1776 = vadd.f32 %v1723, %v1752
          %v1777 = vadd.f32 %v1724, %v1753
          %v1778 = vadd.f32 %v1725, %v1754
          %v1779 = vadd.f32 %v1726, %v1755
          %v1780 = vadd.f32 %v1727, %v1756
          %v1781 = vadd.f32 %v1728, %v1757
          %1783 = vset.pattern.permute.xlu0 0
          %1784 = vperm.xlu0 %1783, %v302
          %v1785 = vpop.permute.xlu0 %1784
          %v1787 = vadd.f32 %v1758, %v1785
          %v1788 = vadd.f32 %v1759, %v1785
          %v1789 = vadd.f32 %v1760, %v1785
          %v1790 = vadd.f32 %v1761, %v1785
          %v1791 = vadd.f32 %v1762, %v1785
          %v1792 = vadd.f32 %v1763, %v1785
          %v1793 = vadd.f32 %v1764, %v1785
          %v1794 = vadd.f32 %v1765, %v1785
          %v1795 = vadd.f32 %v1766, %v1785
          %v1796 = vadd.f32 %v1767, %v1785
          %v1797 = vadd.f32 %v1768, %v1785
          %v1798 = vadd.f32 %v1769, %v1785
          %v1799 = vadd.f32 %v1770, %v1785
          %v1800 = vadd.f32 %v1771, %v1785
          %v1801 = vadd.f32 %v1772, %v1785
          %v1802 = vadd.f32 %v1773, %v1785
          %v1803 = vadd.f32 %v1774, %v1785
          %v1804 = vadd.f32 %v1775, %v1785
          %v1805 = vadd.f32 %v1776, %v1785
          %v1806 = vadd.f32 %v1777, %v1785
          %v1807 = vadd.f32 %v1778, %v1785
          %v1808 = vadd.f32 %v1779, %v1785
          %v1809 = vadd.f32 %v1780, %v1785
          %v1810 = vadd.f32 %v1781, %v1785
          %v1811 = vmax.f32 %v1787, 0.0
          %v1812 = vmax.f32 %v1788, 0.0
          %v1813 = vmax.f32 %v1789, 0.0
          %v1814 = vmax.f32 %v1790, 0.0
          %v1815 = vmax.f32 %v1791, 0.0
          %v1816 = vmax.f32 %v1792, 0.0
          %v1817 = vmax.f32 %v1793, 0.0
          %v1818 = vmax.f32 %v1794, 0.0
          %v1819 = vmax.f32 %v1795, 0.0
          %v1820 = vmax.f32 %v1796, 0.0
          %v1821 = vmax.f32 %v1797, 0.0
          %v1822 = vmax.f32 %v1798, 0.0
          %v1823 = vmax.f32 %v1799, 0.0
          %v1824 = vmax.f32 %v1800, 0.0
          %v1825 = vmax.f32 %v1801, 0.0
          %v1826 = vmax.f32 %v1802, 0.0
          %v1827 = vmax.f32 %v1803, 0.0
          %v1828 = vmax.f32 %v1804, 0.0
          %v1829 = vmax.f32 %v1805, 0.0
          %v1830 = vmax.f32 %v1806, 0.0
          %v1831 = vmax.f32 %v1807, 0.0
          %v1832 = vmax.f32 %v1808, 0.0
          %v1833 = vmax.f32 %v1809, 0.0
          %v1834 = vmax.f32 %v1810, 0.0
          %v1835 = vmul.f32 %v356, %v598
          %v1836 = vmul.f32 %v356, %v599
          %v1837 = vmul.f32 %v356, %v600
          %v1838 = vmul.f32 %v356, %v601
          %v1839 = vmul.f32 %v356, %v602
          %v1840 = vmul.f32 %v356, %v603
          %v1841 = vmul.f32 %v356, %v604
          %v1842 = vmul.f32 %v356, %v605
          %v1843 = vmul.f32 %v356, %v606
          %v1844 = vmul.f32 %v356, %v607
          %v1845 = vmul.f32 %v356, %v608
          %v1846 = vmul.f32 %v356, %v609
          %v1847 = vmul.f32 %v356, %v610
          %v1848 = vmul.f32 %v356, %v611
          %v1849 = vmul.f32 %v356, %v612
          %v1850 = vmul.f32 %v356, %v613
          %v1851 = vmul.f32 %v356, %v614
          %v1852 = vmul.f32 %v356, %v615
          %v1853 = vmul.f32 %v356, %v616
          %v1854 = vmul.f32 %v356, %v617
          %v1855 = vmul.f32 %v356, %v618
          %v1856 = vmul.f32 %v356, %v619
          %v1857 = vmul.f32 %v356, %v620
          %v1858 = vmul.f32 %v356, %v621
          %v1859 = vmul.f32 %v385, %v599
          %v1860 = vmul.f32 %v385, %v600
          %v1861 = vmul.f32 %v385, %v601
          %v1862 = vmul.f32 %v385, %v602
          %v1863 = vmul.f32 %v385, %v603
          %v1864 = vmul.f32 %v385, %v604
          %v1865 = vmul.f32 %v385, %v605
          %v1866 = vmul.f32 %v385, %v606
          %v1867 = vmul.f32 %v385, %v607
          %v1868 = vmul.f32 %v385, %v608
          %v1869 = vmul.f32 %v385, %v609
          %v1870 = vmul.f32 %v385, %v610
          %v1871 = vmul.f32 %v385, %v611
          %v1872 = vmul.f32 %v385, %v612
          %v1873 = vmul.f32 %v385, %v613
          %v1874 = vmul.f32 %v385, %v614
          %v1875 = vmul.f32 %v385, %v615
          %v1876 = vmul.f32 %v385, %v616
          %v1877 = vmul.f32 %v385, %v617
          %v1878 = vmul.f32 %v385, %v618
          %v1879 = vmul.f32 %v385, %v619
          %v1880 = vmul.f32 %v385, %v620
          %v1881 = vmul.f32 %v385, %v621
          %v1882 = vmul.f32 %v385, %v622
          %v1883 = vadd.f32 %v1835, %v1859
          %v1884 = vadd.f32 %v1836, %v1860
          %v1885 = vadd.f32 %v1837, %v1861
          %v1886 = vadd.f32 %v1838, %v1862
          %v1887 = vadd.f32 %v1839, %v1863
          %v1888 = vadd.f32 %v1840, %v1864
          %v1889 = vadd.f32 %v1841, %v1865
          %v1890 = vadd.f32 %v1842, %v1866
          %v1891 = vadd.f32 %v1843, %v1867
          %v1892 = vadd.f32 %v1844, %v1868
          %v1893 = vadd.f32 %v1845, %v1869
          %v1894 = vadd.f32 %v1846, %v1870
          %v1895 = vadd.f32 %v1847, %v1871
          %v1896 = vadd.f32 %v1848, %v1872
          %v1897 = vadd.f32 %v1849, %v1873
          %v1898 = vadd.f32 %v1850, %v1874
          %v1899 = vadd.f32 %v1851, %v1875
          %v1900 = vadd.f32 %v1852, %v1876
          %v1901 = vadd.f32 %v1853, %v1877
          %v1902 = vadd.f32 %v1854, %v1878
          %v1903 = vadd.f32 %v1855, %v1879
          %v1904 = vadd.f32 %v1856, %v1880
          %v1905 = vadd.f32 %v1857, %v1881
          %v1906 = vadd.f32 %v1858, %v1882
          %v1907 = vmul.f32 %v438, %v600
          %v1908 = vmul.f32 %v438, %v601
          %v1909 = vmul.f32 %v438, %v602
          %v1910 = vmul.f32 %v438, %v603
          %v1911 = vmul.f32 %v438, %v604
          %v1912 = vmul.f32 %v438, %v605
          %v1913 = vmul.f32 %v438, %v606
          %v1914 = vmul.f32 %v438, %v607
          %v1915 = vmul.f32 %v438, %v608
          %v1916 = vmul.f32 %v438, %v609
          %v1917 = vmul.f32 %v438, %v610
          %v1918 = vmul.f32 %v438, %v611
          %v1919 = vmul.f32 %v438, %v612
          %v1920 = vmul.f32 %v438, %v613
          %v1921 = vmul.f32 %v438, %v614
          %v1922 = vmul.f32 %v438, %v615
          %v1923 = vmul.f32 %v438, %v616
          %v1924 = vmul.f32 %v438, %v617
          %v1925 = vmul.f32 %v438, %v618
          %v1926 = vmul.f32 %v438, %v619
          %v1927 = vmul.f32 %v438, %v620
          %v1928 = vmul.f32 %v438, %v621
          %v1929 = vmul.f32 %v438, %v622
          %v1930 = vmul.f32 %v438, %v623
          %v1931 = vadd.f32 %v1883, %v1907
          %v1932 = vadd.f32 %v1884, %v1908
          %v1933 = vadd.f32 %v1885, %v1909
          %v1934 = vadd.f32 %v1886, %v1910
          %v1935 = vadd.f32 %v1887, %v1911
          %v1936 = vadd.f32 %v1888, %v1912
          %v1937 = vadd.f32 %v1889, %v1913
          %v1938 = vadd.f32 %v1890, %v1914
          %v1939 = vadd.f32 %v1891, %v1915
          %v1940 = vadd.f32 %v1892, %v1916
          %v1941 = vadd.f32 %v1893, %v1917
          %v1942 = vadd.f32 %v1894, %v1918
          %v1943 = vadd.f32 %v1895, %v1919
          %v1944 = vadd.f32 %v1896, %v1920
          %v1945 = vadd.f32 %v1897, %v1921
          %v1946 = vadd.f32 %v1898, %v1922
          %v1947 = vadd.f32 %v1899, %v1923
          %v1948 = vadd.f32 %v1900, %v1924
          %v1949 = vadd.f32 %v1901, %v1925
          %v1950 = vadd.f32 %v1902, %v1926
          %v1951 = vadd.f32 %v1903, %v1927
          %v1952 = vadd.f32 %v1904, %v1928
          %v1953 = vadd.f32 %v1905, %v1929
          %v1954 = vadd.f32 %v1906, %v1930
          %v1955 = vmul.f32 %v491, %v601
          %v1956 = vmul.f32 %v491, %v602
          %v1957 = vmul.f32 %v491, %v603
          %v1958 = vmul.f32 %v491, %v604
          %v1959 = vmul.f32 %v491, %v605
          %v1960 = vmul.f32 %v491, %v606
          %v1961 = vmul.f32 %v491, %v607
          %v1962 = vmul.f32 %v491, %v608
          %v1963 = vmul.f32 %v491, %v609
          %v1964 = vmul.f32 %v491, %v610
          %v1965 = vmul.f32 %v491, %v611
          %v1966 = vmul.f32 %v491, %v612
          %v1967 = vmul.f32 %v491, %v613
          %v1968 = vmul.f32 %v491, %v614
          %v1969 = vmul.f32 %v491, %v615
          %v1970 = vmul.f32 %v491, %v616
          %v1971 = vmul.f32 %v491, %v617
          %v1972 = vmul.f32 %v491, %v618
          %v1973 = vmul.f32 %v491, %v619
          %v1974 = vmul.f32 %v491, %v620
          %v1975 = vmul.f32 %v491, %v621
          %v1976 = vmul.f32 %v491, %v622
          %v1977 = vmul.f32 %v491, %v623
          %v1978 = vmul.f32 %v491, %v624
          %v1979 = vadd.f32 %v1931, %v1955
          %v1980 = vadd.f32 %v1932, %v1956
          %v1981 = vadd.f32 %v1933, %v1957
          %v1982 = vadd.f32 %v1934, %v1958
          %v1983 = vadd.f32 %v1935, %v1959
          %v1984 = vadd.f32 %v1936, %v1960
          %v1985 = vadd.f32 %v1937, %v1961
          %v1986 = vadd.f32 %v1938, %v1962
          %v1987 = vadd.f32 %v1939, %v1963
          %v1988 = vadd.f32 %v1940, %v1964
          %v1989 = vadd.f32 %v1941, %v1965
          %v1990 = vadd.f32 %v1942, %v1966
          %v1991 = vadd.f32 %v1943, %v1967
          %v1992 = vadd.f32 %v1944, %v1968
          %v1993 = vadd.f32 %v1945, %v1969
          %v1994 = vadd.f32 %v1946, %v1970
          %v1995 = vadd.f32 %v1947, %v1971
          %v1996 = vadd.f32 %v1948, %v1972
          %v1997 = vadd.f32 %v1949, %v1973
          %v1998 = vadd.f32 %v1950, %v1974
          %v1999 = vadd.f32 %v1951, %v1975
          %v2000 = vadd.f32 %v1952, %v1976
          %v2001 = vadd.f32 %v1953, %v1977
          %v2002 = vadd.f32 %v1954, %v1978
          %v2003 = vmul.f32 %v544, %v602
          %v2004 = vmul.f32 %v544, %v603
          %v2005 = vmul.f32 %v544, %v604
          %v2006 = vmul.f32 %v544, %v605
          %v2007 = vmul.f32 %v544, %v606
          %v2008 = vmul.f32 %v544, %v607
          %v2009 = vmul.f32 %v544, %v608
          %v2010 = vmul.f32 %v544, %v609
          %v2011 = vmul.f32 %v544, %v610
          %v2012 = vmul.f32 %v544, %v611
          %v2013 = vmul.f32 %v544, %v612
          %v2014 = vmul.f32 %v544, %v613
          %v2015 = vmul.f32 %v544, %v614
          %v2016 = vmul.f32 %v544, %v615
          %v2017 = vmul.f32 %v544, %v616
          %v2018 = vmul.f32 %v544, %v617
          %v2019 = vmul.f32 %v544, %v618
          %v2020 = vmul.f32 %v544, %v619
          %v2021 = vmul.f32 %v544, %v620
          %v2022 = vmul.f32 %v544, %v621
          %v2023 = vmul.f32 %v544, %v622
          %v2024 = vmul.f32 %v544, %v623
          %v2025 = vmul.f32 %v544, %v624
          %v2026 = vmul.f32 %v544, %v625
          %v2027 = vadd.f32 %v1979, %v2003
          %v2028 = vadd.f32 %v1980, %v2004
          %v2029 = vadd.f32 %v1981, %v2005
          %v2030 = vadd.f32 %v1982, %v2006
          %v2031 = vadd.f32 %v1983, %v2007
          %v2032 = vadd.f32 %v1984, %v2008
          %v2033 = vadd.f32 %v1985, %v2009
          %v2034 = vadd.f32 %v1986, %v2010
          %v2035 = vadd.f32 %v1987, %v2011
          %v2036 = vadd.f32 %v1988, %v2012
          %v2037 = vadd.f32 %v1989, %v2013
          %v2038 = vadd.f32 %v1990, %v2014
          %v2039 = vadd.f32 %v1991, %v2015
          %v2040 = vadd.f32 %v1992, %v2016
          %v2041 = vadd.f32 %v1993, %v2017
          %v2042 = vadd.f32 %v1994, %v2018
          %v2043 = vadd.f32 %v1995, %v2019
          %v2044 = vadd.f32 %v1996, %v2020
          %v2045 = vadd.f32 %v1997, %v2021
          %v2046 = vadd.f32 %v1998, %v2022
          %v2047 = vadd.f32 %v1999, %v2023
          %v2048 = vadd.f32 %v2000, %v2024
          %v2049 = vadd.f32 %v2001, %v2025
          %v2050 = vadd.f32 %v2002, %v2026
          %v2051 = vmul.f32 %v629, %v895
          %v2052 = vmul.f32 %v629, %v896
          %v2053 = vmul.f32 %v629, %v897
          %v2054 = vmul.f32 %v629, %v898
          %v2055 = vmul.f32 %v629, %v899
          %v2056 = vmul.f32 %v629, %v900
          %v2057 = vmul.f32 %v629, %v901
          %v2058 = vmul.f32 %v629, %v902
          %v2059 = vmul.f32 %v629, %v903
          %v2060 = vmul.f32 %v629, %v904
          %v2061 = vmul.f32 %v629, %v905
          %v2062 = vmul.f32 %v629, %v906
          %v2063 = vmul.f32 %v629, %v907
          %v2064 = vmul.f32 %v629, %v908
          %v2065 = vmul.f32 %v629, %v909
          %v2066 = vmul.f32 %v629, %v910
          %v2067 = vmul.f32 %v629, %v911
          %v2068 = vmul.f32 %v629, %v912
          %v2069 = vmul.f32 %v629, %v913
          %v2070 = vmul.f32 %v629, %v914
          %v2071 = vmul.f32 %v629, %v915
          %v2072 = vmul.f32 %v629, %v916
          %v2073 = vmul.f32 %v629, %v917
          %v2074 = vmul.f32 %v629, %v918
          %v2075 = vadd.f32 %v2027, %v2051
          %v2076 = vadd.f32 %v2028, %v2052
          %v2077 = vadd.f32 %v2029, %v2053
          %v2078 = vadd.f32 %v2030, %v2054
          %v2079 = vadd.f32 %v2031, %v2055
          %v2080 = vadd.f32 %v2032, %v2056
          %v2081 = vadd.f32 %v2033, %v2057
          %v2082 = vadd.f32 %v2034, %v2058
          %v2083 = vadd.f32 %v2035, %v2059
          %v2084 = vadd.f32 %v2036, %v2060
          %v2085 = vadd.f32 %v2037, %v2061
          %v2086 = vadd.f32 %v2038, %v2062
          %v2087 = vadd.f32 %v2039, %v2063
          %v2088 = vadd.f32 %v2040, %v2064
          %v2089 = vadd.f32 %v2041, %v2065
          %v2090 = vadd.f32 %v2042, %v2066
          %v2091 = vadd.f32 %v2043, %v2067
          %v2092 = vadd.f32 %v2044, %v2068
          %v2093 = vadd.f32 %v2045, %v2069
          %v2094 = vadd.f32 %v2046, %v2070
          %v2095 = vadd.f32 %v2047, %v2071
          %v2096 = vadd.f32 %v2048, %v2072
          %v2097 = vadd.f32 %v2049, %v2073
          %v2098 = vadd.f32 %v2050, %v2074
          %v2099 = vmul.f32 %v682, %v896
          %v2100 = vmul.f32 %v682, %v897
          %v2101 = vmul.f32 %v682, %v898
          %v2102 = vmul.f32 %v682, %v899
          %v2103 = vmul.f32 %v682, %v900
          %v2104 = vmul.f32 %v682, %v901
          %v2105 = vmul.f32 %v682, %v902
          %v2106 = vmul.f32 %v682, %v903
          %v2107 = vmul.f32 %v682, %v904
          %v2108 = vmul.f32 %v682, %v905
          %v2109 = vmul.f32 %v682, %v906
          %v2110 = vmul.f32 %v682, %v907
          %v2111 = vmul.f32 %v682, %v908
          %v2112 = vmul.f32 %v682, %v909
          %v2113 = vmul.f32 %v682, %v910
          %v2114 = vmul.f32 %v682, %v911
          %v2115 = vmul.f32 %v682, %v912
          %v2116 = vmul.f32 %v682, %v913
          %v2117 = vmul.f32 %v682, %v914
          %v2118 = vmul.f32 %v682, %v915
          %v2119 = vmul.f32 %v682, %v916
          %v2120 = vmul.f32 %v682, %v917
          %v2121 = vmul.f32 %v682, %v918
          %v2122 = vmul.f32 %v682, %v919
          %v2123 = vadd.f32 %v2075, %v2099
          %v2124 = vadd.f32 %v2076, %v2100
          %v2125 = vadd.f32 %v2077, %v2101
          %v2126 = vadd.f32 %v2078, %v2102
          %v2127 = vadd.f32 %v2079, %v2103
          %v2128 = vadd.f32 %v2080, %v2104
          %v2129 = vadd.f32 %v2081, %v2105
          %v2130 = vadd.f32 %v2082, %v2106
          %v2131 = vadd.f32 %v2083, %v2107
          %v2132 = vadd.f32 %v2084, %v2108
          %v2133 = vadd.f32 %v2085, %v2109
          %v2134 = vadd.f32 %v2086, %v2110
          %v2135 = vadd.f32 %v2087, %v2111
          %v2136 = vadd.f32 %v2088, %v2112
          %v2137 = vadd.f32 %v2089, %v2113
          %v2138 = vadd.f32 %v2090, %v2114
          %v2139 = vadd.f32 %v2091, %v2115
          %v2140 = vadd.f32 %v2092, %v2116
          %v2141 = vadd.f32 %v2093, %v2117
          %v2142 = vadd.f32 %v2094, %v2118
          %v2143 = vadd.f32 %v2095, %v2119
          %v2144 = vadd.f32 %v2096, %v2120
          %v2145 = vadd.f32 %v2097, %v2121
          %v2146 = vadd.f32 %v2098, %v2122
          %v2147 = vmul.f32 %v735, %v897
          %v2148 = vmul.f32 %v735, %v898
          %v2149 = vmul.f32 %v735, %v899
          %v2150 = vmul.f32 %v735, %v900
          %v2151 = vmul.f32 %v735, %v901
          %v2152 = vmul.f32 %v735, %v902
          %v2153 = vmul.f32 %v735, %v903
          %v2154 = vmul.f32 %v735, %v904
          %v2155 = vmul.f32 %v735, %v905
          %v2156 = vmul.f32 %v735, %v906
          %v2157 = vmul.f32 %v735, %v907
          %v2158 = vmul.f32 %v735, %v908
          %v2159 = vmul.f32 %v735, %v909
          %v2160 = vmul.f32 %v735, %v910
          %v2161 = vmul.f32 %v735, %v911
          %v2162 = vmul.f32 %v735, %v912
          %v2163 = vmul.f32 %v735, %v913
          %v2164 = vmul.f32 %v735, %v914
          %v2165 = vmul.f32 %v735, %v915
          %v2166 = vmul.f32 %v735, %v916
          %v2167 = vmul.f32 %v735, %v917
          %v2168 = vmul.f32 %v735, %v918
          %v2169 = vmul.f32 %v735, %v919
          %v2170 = vmul.f32 %v735, %v920
          %v2171 = vadd.f32 %v2123, %v2147
          %v2172 = vadd.f32 %v2124, %v2148
          %v2173 = vadd.f32 %v2125, %v2149
          %v2174 = vadd.f32 %v2126, %v2150
          %v2175 = vadd.f32 %v2127, %v2151
          %v2176 = vadd.f32 %v2128, %v2152
          %v2177 = vadd.f32 %v2129, %v2153
          %v2178 = vadd.f32 %v2130, %v2154
          %v2179 = vadd.f32 %v2131, %v2155
          %v2180 = vadd.f32 %v2132, %v2156
          %v2181 = vadd.f32 %v2133, %v2157
          %v2182 = vadd.f32 %v2134, %v2158
          %v2183 = vadd.f32 %v2135, %v2159
          %v2184 = vadd.f32 %v2136, %v2160
          %v2185 = vadd.f32 %v2137, %v2161
          %v2186 = vadd.f32 %v2138, %v2162
          %v2187 = vadd.f32 %v2139, %v2163
          %v2188 = vadd.f32 %v2140, %v2164
          %v2189 = vadd.f32 %v2141, %v2165
          %v2190 = vadd.f32 %v2142, %v2166
          %v2191 = vadd.f32 %v2143, %v2167
          %v2192 = vadd.f32 %v2144, %v2168
          %v2193 = vadd.f32 %v2145, %v2169
          %v2194 = vadd.f32 %v2146, %v2170
          %v2195 = vmul.f32 %v788, %v898
          %v2196 = vmul.f32 %v788, %v899
          %v2197 = vmul.f32 %v788, %v900
          %v2198 = vmul.f32 %v788, %v901
          %v2199 = vmul.f32 %v788, %v902
          %v2200 = vmul.f32 %v788, %v903
          %v2201 = vmul.f32 %v788, %v904
          %v2202 = vmul.f32 %v788, %v905
          %v2203 = vmul.f32 %v788, %v906
          %v2204 = vmul.f32 %v788, %v907
          %v2205 = vmul.f32 %v788, %v908
          %v2206 = vmul.f32 %v788, %v909
          %v2207 = vmul.f32 %v788, %v910
          %v2208 = vmul.f32 %v788, %v911
          %v2209 = vmul.f32 %v788, %v912
          %v2210 = vmul.f32 %v788, %v913
          %v2211 = vmul.f32 %v788, %v914
          %v2212 = vmul.f32 %v788, %v915
          %v2213 = vmul.f32 %v788, %v916
          %v2214 = vmul.f32 %v788, %v917
          %v2215 = vmul.f32 %v788, %v918
          %v2216 = vmul.f32 %v788, %v919
          %v2217 = vmul.f32 %v788, %v920
          %v2218 = vmul.f32 %v788, %v921
          %v2219 = vadd.f32 %v2171, %v2195
          %v2220 = vadd.f32 %v2172, %v2196
          %v2221 = vadd.f32 %v2173, %v2197
          %v2222 = vadd.f32 %v2174, %v2198
          %v2223 = vadd.f32 %v2175, %v2199
          %v2224 = vadd.f32 %v2176, %v2200
          %v2225 = vadd.f32 %v2177, %v2201
          %v2226 = vadd.f32 %v2178, %v2202
          %v2227 = vadd.f32 %v2179, %v2203
          %v2228 = vadd.f32 %v2180, %v2204
          %v2229 = vadd.f32 %v2181, %v2205
          %v2230 = vadd.f32 %v2182, %v2206
          %v2231 = vadd.f32 %v2183, %v2207
          %v2232 = vadd.f32 %v2184, %v2208
          %v2233 = vadd.f32 %v2185, %v2209
          %v2234 = vadd.f32 %v2186, %v2210
          %v2235 = vadd.f32 %v2187, %v2211
          %v2236 = vadd.f32 %v2188, %v2212
          %v2237 = vadd.f32 %v2189, %v2213
          %v2238 = vadd.f32 %v2190, %v2214
          %v2239 = vadd.f32 %v2191, %v2215
          %v2240 = vadd.f32 %v2192, %v2216
          %v2241 = vadd.f32 %v2193, %v2217
          %v2242 = vadd.f32 %v2194, %v2218
          %v2243 = vmul.f32 %v841, %v899
          %v2244 = vmul.f32 %v841, %v900
          %v2245 = vmul.f32 %v841, %v901
          %v2246 = vmul.f32 %v841, %v902
          %v2247 = vmul.f32 %v841, %v903
          %v2248 = vmul.f32 %v841, %v904
          %v2249 = vmul.f32 %v841, %v905
          %v2250 = vmul.f32 %v841, %v906
          %v2251 = vmul.f32 %v841, %v907
          %v2252 = vmul.f32 %v841, %v908
          %v2253 = vmul.f32 %v841, %v909
          %v2254 = vmul.f32 %v841, %v910
          %v2255 = vmul.f32 %v841, %v911
          %v2256 = vmul.f32 %v841, %v912
          %v2257 = vmul.f32 %v841, %v913
          %v2258 = vmul.f32 %v841, %v914
          %v2259 = vmul.f32 %v841, %v915
          %v2260 = vmul.f32 %v841, %v916
          %v2261 = vmul.f32 %v841, %v917
          %v2262 = vmul.f32 %v841, %v918
          %v2263 = vmul.f32 %v841, %v919
          %v2264 = vmul.f32 %v841, %v920
          %v2265 = vmul.f32 %v841, %v921
          %v2266 = vmul.f32 %v841, %v922
          %v2267 = vadd.f32 %v2219, %v2243
          %v2268 = vadd.f32 %v2220, %v2244
          %v2269 = vadd.f32 %v2221, %v2245
          %v2270 = vadd.f32 %v2222, %v2246
          %v2271 = vadd.f32 %v2223, %v2247
          %v2272 = vadd.f32 %v2224, %v2248
          %v2273 = vadd.f32 %v2225, %v2249
          %v2274 = vadd.f32 %v2226, %v2250
          %v2275 = vadd.f32 %v2227, %v2251
          %v2276 = vadd.f32 %v2228, %v2252
          %v2277 = vadd.f32 %v2229, %v2253
          %v2278 = vadd.f32 %v2230, %v2254
          %v2279 = vadd.f32 %v2231, %v2255
          %v2280 = vadd.f32 %v2232, %v2256
          %v2281 = vadd.f32 %v2233, %v2257
          %v2282 = vadd.f32 %v2234, %v2258
          %v2283 = vadd.f32 %v2235, %v2259
          %v2284 = vadd.f32 %v2236, %v2260
          %v2285 = vadd.f32 %v2237, %v2261
          %v2286 = vadd.f32 %v2238, %v2262
          %v2287 = vadd.f32 %v2239, %v2263
          %v2288 = vadd.f32 %v2240, %v2264
          %v2289 = vadd.f32 %v2241, %v2265
          %v2290 = vadd.f32 %v2242, %v2266
          %v2291 = vmul.f32 %v926, %v1192
          %v2292 = vmul.f32 %v926, %v1193
          %v2293 = vmul.f32 %v926, %v1194
          %v2294 = vmul.f32 %v926, %v1195
          %v2295 = vmul.f32 %v926, %v1196
          %v2296 = vmul.f32 %v926, %v1197
          %v2297 = vmul.f32 %v926, %v1198
          %v2298 = vmul.f32 %v926, %v1199
          %v2299 = vmul.f32 %v926, %v1200
          %v2300 = vmul.f32 %v926, %v1201
          %v2301 = vmul.f32 %v926, %v1202
          %v2302 = vmul.f32 %v926, %v1203
          %v2303 = vmul.f32 %v926, %v1204
          %v2304 = vmul.f32 %v926, %v1205
          %v2305 = vmul.f32 %v926, %v1206
          %v2306 = vmul.f32 %v926, %v1207
          %v2307 = vmul.f32 %v926, %v1208
          %v2308 = vmul.f32 %v926, %v1209
          %v2309 = vmul.f32 %v926, %v1210
          %v2310 = vmul.f32 %v926, %v1211
          %v2311 = vmul.f32 %v926, %v1212
          %v2312 = vmul.f32 %v926, %v1213
          %v2313 = vmul.f32 %v926, %v1214
          %v2314 = vmul.f32 %v926, %v1215
          %v2315 = vadd.f32 %v2267, %v2291
          %v2316 = vadd.f32 %v2268, %v2292
          %v2317 = vadd.f32 %v2269, %v2293
          %v2318 = vadd.f32 %v2270, %v2294
          %v2319 = vadd.f32 %v2271, %v2295
          %v2320 = vadd.f32 %v2272, %v2296
          %v2321 = vadd.f32 %v2273, %v2297
          %v2322 = vadd.f32 %v2274, %v2298
          %v2323 = vadd.f32 %v2275, %v2299
          %v2324 = vadd.f32 %v2276, %v2300
          %v2325 = vadd.f32 %v2277, %v2301
          %v2326 = vadd.f32 %v2278, %v2302
          %v2327 = vadd.f32 %v2279, %v2303
          %v2328 = vadd.f32 %v2280, %v2304
          %v2329 = vadd.f32 %v2281, %v2305
          %v2330 = vadd.f32 %v2282, %v2306
          %v2331 = vadd.f32 %v2283, %v2307
          %v2332 = vadd.f32 %v2284, %v2308
          %v2333 = vadd.f32 %v2285, %v2309
          %v2334 = vadd.f32 %v2286, %v2310
          %v2335 = vadd.f32 %v2287, %v2311
          %v2336 = vadd.f32 %v2288, %v2312
          %v2337 = vadd.f32 %v2289, %v2313
          %v2338 = vadd.f32 %v2290, %v2314
          %v2339 = vmul.f32 %v979, %v1193
          %v2340 = vmul.f32 %v979, %v1194
          %v2341 = vmul.f32 %v979, %v1195
          %v2342 = vmul.f32 %v979, %v1196
          %v2343 = vmul.f32 %v979, %v1197
          %v2344 = vmul.f32 %v979, %v1198
          %v2345 = vmul.f32 %v979, %v1199
          %v2346 = vmul.f32 %v979, %v1200
          %v2347 = vmul.f32 %v979, %v1201
          %v2348 = vmul.f32 %v979, %v1202
          %v2349 = vmul.f32 %v979, %v1203
          %v2350 = vmul.f32 %v979, %v1204
          %v2351 = vmul.f32 %v979, %v1205
          %v2352 = vmul.f32 %v979, %v1206
          %v2353 = vmul.f32 %v979, %v1207
          %v2354 = vmul.f32 %v979, %v1208
          %v2355 = vmul.f32 %v979, %v1209
          %v2356 = vmul.f32 %v979, %v1210
          %v2357 = vmul.f32 %v979, %v1211
          %v2358 = vmul.f32 %v979, %v1212
          %v2359 = vmul.f32 %v979, %v1213
          %v2360 = vmul.f32 %v979, %v1214
          %v2361 = vmul.f32 %v979, %v1215
          %v2362 = vmul.f32 %v979, %v1216
          %v2363 = vadd.f32 %v2315, %v2339
          %v2364 = vadd.f32 %v2316, %v2340
          %v2365 = vadd.f32 %v2317, %v2341
          %v2366 = vadd.f32 %v2318, %v2342
          %v2367 = vadd.f32 %v2319, %v2343
          %v2368 = vadd.f32 %v2320, %v2344
          %v2369 = vadd.f32 %v2321, %v2345
          %v2370 = vadd.f32 %v2322, %v2346
          %v2371 = vadd.f32 %v2323, %v2347
          %v2372 = vadd.f32 %v2324, %v2348
          %v2373 = vadd.f32 %v2325, %v2349
          %v2374 = vadd.f32 %v2326, %v2350
          %v2375 = vadd.f32 %v2327, %v2351
          %v2376 = vadd.f32 %v2328, %v2352
          %v2377 = vadd.f32 %v2329, %v2353
          %v2378 = vadd.f32 %v2330, %v2354
          %v2379 = vadd.f32 %v2331, %v2355
          %v2380 = vadd.f32 %v2332, %v2356
          %v2381 = vadd.f32 %v2333, %v2357
          %v2382 = vadd.f32 %v2334, %v2358
          %v2383 = vadd.f32 %v2335, %v2359
          %v2384 = vadd.f32 %v2336, %v2360
          %v2385 = vadd.f32 %v2337, %v2361
          %v2386 = vadd.f32 %v2338, %v2362
          %v2387 = vmul.f32 %v1032, %v1194
          %v2388 = vmul.f32 %v1032, %v1195
          %v2389 = vmul.f32 %v1032, %v1196
          %v2390 = vmul.f32 %v1032, %v1197
          %v2391 = vmul.f32 %v1032, %v1198
          %v2392 = vmul.f32 %v1032, %v1199
          %v2393 = vmul.f32 %v1032, %v1200
          %v2394 = vmul.f32 %v1032, %v1201
          %v2395 = vmul.f32 %v1032, %v1202
          %v2396 = vmul.f32 %v1032, %v1203
          %v2397 = vmul.f32 %v1032, %v1204
          %v2398 = vmul.f32 %v1032, %v1205
          %v2399 = vmul.f32 %v1032, %v1206
          %v2400 = vmul.f32 %v1032, %v1207
          %v2401 = vmul.f32 %v1032, %v1208
          %v2402 = vmul.f32 %v1032, %v1209
          %v2403 = vmul.f32 %v1032, %v1210
          %v2404 = vmul.f32 %v1032, %v1211
          %v2405 = vmul.f32 %v1032, %v1212
          %v2406 = vmul.f32 %v1032, %v1213
          %v2407 = vmul.f32 %v1032, %v1214
          %v2408 = vmul.f32 %v1032, %v1215
          %v2409 = vmul.f32 %v1032, %v1216
          %v2410 = vmul.f32 %v1032, %v1217
          %v2411 = vadd.f32 %v2363, %v2387
          %v2412 = vadd.f32 %v2364, %v2388
          %v2413 = vadd.f32 %v2365, %v2389
          %v2414 = vadd.f32 %v2366, %v2390
          %v2415 = vadd.f32 %v2367, %v2391
          %v2416 = vadd.f32 %v2368, %v2392
          %v2417 = vadd.f32 %v2369, %v2393
          %v2418 = vadd.f32 %v2370, %v2394
          %v2419 = vadd.f32 %v2371, %v2395
          %v2420 = vadd.f32 %v2372, %v2396
          %v2421 = vadd.f32 %v2373, %v2397
          %v2422 = vadd.f32 %v2374, %v2398
          %v2423 = vadd.f32 %v2375, %v2399
          %v2424 = vadd.f32 %v2376, %v2400
          %v2425 = vadd.f32 %v2377, %v2401
          %v2426 = vadd.f32 %v2378, %v2402
          %v2427 = vadd.f32 %v2379, %v2403
          %v2428 = vadd.f32 %v2380, %v2404
          %v2429 = vadd.f32 %v2381, %v2405
          %v2430 = vadd.f32 %v2382, %v2406
          %v2431 = vadd.f32 %v2383, %v2407
          %v2432 = vadd.f32 %v2384, %v2408
          %v2433 = vadd.f32 %v2385, %v2409
          %v2434 = vadd.f32 %v2386, %v2410
          %v2435 = vmul.f32 %v1085, %v1195
          %v2436 = vmul.f32 %v1085, %v1196
          %v2437 = vmul.f32 %v1085, %v1197
          %v2438 = vmul.f32 %v1085, %v1198
          %v2439 = vmul.f32 %v1085, %v1199
          %v2440 = vmul.f32 %v1085, %v1200
          %v2441 = vmul.f32 %v1085, %v1201
          %v2442 = vmul.f32 %v1085, %v1202
          %v2443 = vmul.f32 %v1085, %v1203
          %v2444 = vmul.f32 %v1085, %v1204
          %v2445 = vmul.f32 %v1085, %v1205
          %v2446 = vmul.f32 %v1085, %v1206
          %v2447 = vmul.f32 %v1085, %v1207
          %v2448 = vmul.f32 %v1085, %v1208
          %v2449 = vmul.f32 %v1085, %v1209
          %v2450 = vmul.f32 %v1085, %v1210
          %v2451 = vmul.f32 %v1085, %v1211
          %v2452 = vmul.f32 %v1085, %v1212
          %v2453 = vmul.f32 %v1085, %v1213
          %v2454 = vmul.f32 %v1085, %v1214
          %v2455 = vmul.f32 %v1085, %v1215
          %v2456 = vmul.f32 %v1085, %v1216
          %v2457 = vmul.f32 %v1085, %v1217
          %v2458 = vmul.f32 %v1085, %v1218
          %v2459 = vadd.f32 %v2411, %v2435
          %v2460 = vadd.f32 %v2412, %v2436
          %v2461 = vadd.f32 %v2413, %v2437
          %v2462 = vadd.f32 %v2414, %v2438
          %v2463 = vadd.f32 %v2415, %v2439
          %v2464 = vadd.f32 %v2416, %v2440
          %v2465 = vadd.f32 %v2417, %v2441
          %v2466 = vadd.f32 %v2418, %v2442
          %v2467 = vadd.f32 %v2419, %v2443
          %v2468 = vadd.f32 %v2420, %v2444
          %v2469 = vadd.f32 %v2421, %v2445
          %v2470 = vadd.f32 %v2422, %v2446
          %v2471 = vadd.f32 %v2423, %v2447
          %v2472 = vadd.f32 %v2424, %v2448
          %v2473 = vadd.f32 %v2425, %v2449
          %v2474 = vadd.f32 %v2426, %v2450
          %v2475 = vadd.f32 %v2427, %v2451
          %v2476 = vadd.f32 %v2428, %v2452
          %v2477 = vadd.f32 %v2429, %v2453
          %v2478 = vadd.f32 %v2430, %v2454
          %v2479 = vadd.f32 %v2431, %v2455
          %v2480 = vadd.f32 %v2432, %v2456
          %v2481 = vadd.f32 %v2433, %v2457
          %v2482 = vadd.f32 %v2434, %v2458
          %v2483 = vmul.f32 %v1138, %v1196
          %v2484 = vmul.f32 %v1138, %v1197
          %v2485 = vmul.f32 %v1138, %v1198
          %v2486 = vmul.f32 %v1138, %v1199
          %v2487 = vmul.f32 %v1138, %v1200
          %v2488 = vmul.f32 %v1138, %v1201
          %v2489 = vmul.f32 %v1138, %v1202
          %v2490 = vmul.f32 %v1138, %v1203
          %v2491 = vmul.f32 %v1138, %v1204
          %v2492 = vmul.f32 %v1138, %v1205
          %v2493 = vmul.f32 %v1138, %v1206
          %v2494 = vmul.f32 %v1138, %v1207
          %v2495 = vmul.f32 %v1138, %v1208
          %v2496 = vmul.f32 %v1138, %v1209
          %v2497 = vmul.f32 %v1138, %v1210
          %v2498 = vmul.f32 %v1138, %v1211
          %v2499 = vmul.f32 %v1138, %v1212
          %v2500 = vmul.f32 %v1138, %v1213
          %v2501 = vmul.f32 %v1138, %v1214
          %v2502 = vmul.f32 %v1138, %v1215
          %v2503 = vmul.f32 %v1138, %v1216
          %v2504 = vmul.f32 %v1138, %v1217
          %v2505 = vmul.f32 %v1138, %v1218
          %v2506 = vmul.f32 %v1138, %v1219
          %v2507 = vadd.f32 %v2459, %v2483
          %v2508 = vadd.f32 %v2460, %v2484
          %v2509 = vadd.f32 %v2461, %v2485
          %v2510 = vadd.f32 %v2462, %v2486
          %v2511 = vadd.f32 %v2463, %v2487
          %v2512 = vadd.f32 %v2464, %v2488
          %v2513 = vadd.f32 %v2465, %v2489
          %v2514 = vadd.f32 %v2466, %v2490
          %v2515 = vadd.f32 %v2467, %v2491
          %v2516 = vadd.f32 %v2468, %v2492
          %v2517 = vadd.f32 %v2469, %v2493
          %v2518 = vadd.f32 %v2470, %v2494
          %v2519 = vadd.f32 %v2471, %v2495
          %v2520 = vadd.f32 %v2472, %v2496
          %v2521 = vadd.f32 %v2473, %v2497
          %v2522 = vadd.f32 %v2474, %v2498
          %v2523 = vadd.f32 %v2475, %v2499
          %v2524 = vadd.f32 %v2476, %v2500
          %v2525 = vadd.f32 %v2477, %v2501
          %v2526 = vadd.f32 %v2478, %v2502
          %v2527 = vadd.f32 %v2479, %v2503
          %v2528 = vadd.f32 %v2480, %v2504
          %v2529 = vadd.f32 %v2481, %v2505
          %v2530 = vadd.f32 %v2482, %v2506
          %v2531 = vmul.f32 %v1223, %v1489
          %v2532 = vmul.f32 %v1223, %v1490
          %v2533 = vmul.f32 %v1223, %v1491
          %v2534 = vmul.f32 %v1223, %v1492
          %v2535 = vmul.f32 %v1223, %v1493
          %v2536 = vmul.f32 %v1223, %v1494
          %v2537 = vmul.f32 %v1223, %v1495
          %v2538 = vmul.f32 %v1223, %v1496
          %v2539 = vmul.f32 %v1223, %v1497
          %v2540 = vmul.f32 %v1223, %v1498
          %v2541 = vmul.f32 %v1223, %v1499
          %v2542 = vmul.f32 %v1223, %v1500
          %v2543 = vmul.f32 %v1223, %v1501
          %v2544 = vmul.f32 %v1223, %v1502
          %v2545 = vmul.f32 %v1223, %v1503
          %v2546 = vmul.f32 %v1223, %v1504
          %v2547 = vmul.f32 %v1223, %v1505
          %v2548 = vmul.f32 %v1223, %v1506
          %v2549 = vmul.f32 %v1223, %v1507
          %v2550 = vmul.f32 %v1223, %v1508
          %v2551 = vmul.f32 %v1223, %v1509
          %v2552 = vmul.f32 %v1223, %v1510
          %v2553 = vmul.f32 %v1223, %v1511
          %v2554 = vmul.f32 %v1223, %v1512
          %v2555 = vadd.f32 %v2507, %v2531
          %v2556 = vadd.f32 %v2508, %v2532
          %v2557 = vadd.f32 %v2509, %v2533
          %v2558 = vadd.f32 %v2510, %v2534
          %v2559 = vadd.f32 %v2511, %v2535
          %v2560 = vadd.f32 %v2512, %v2536
          %v2561 = vadd.f32 %v2513, %v2537
          %v2562 = vadd.f32 %v2514, %v2538
          %v2563 = vadd.f32 %v2515, %v2539
          %v2564 = vadd.f32 %v2516, %v2540
          %v2565 = vadd.f32 %v2517, %v2541
          %v2566 = vadd.f32 %v2518, %v2542
          %v2567 = vadd.f32 %v2519, %v2543
          %v2568 = vadd.f32 %v2520, %v2544
          %v2569 = vadd.f32 %v2521, %v2545
          %v2570 = vadd.f32 %v2522, %v2546
          %v2571 = vadd.f32 %v2523, %v2547
          %v2572 = vadd.f32 %v2524, %v2548
          %v2573 = vadd.f32 %v2525, %v2549
          %v2574 = vadd.f32 %v2526, %v2550
          %v2575 = vadd.f32 %v2527, %v2551
          %v2576 = vadd.f32 %v2528, %v2552
          %v2577 = vadd.f32 %v2529, %v2553
          %v2578 = vadd.f32 %v2530, %v2554
          %v2579 = vmul.f32 %v1276, %v1490
          %v2580 = vmul.f32 %v1276, %v1491
          %v2581 = vmul.f32 %v1276, %v1492
          %v2582 = vmul.f32 %v1276, %v1493
          %v2583 = vmul.f32 %v1276, %v1494
          %v2584 = vmul.f32 %v1276, %v1495
          %v2585 = vmul.f32 %v1276, %v1496
          %v2586 = vmul.f32 %v1276, %v1497
          %v2587 = vmul.f32 %v1276, %v1498
          %v2588 = vmul.f32 %v1276, %v1499
          %v2589 = vmul.f32 %v1276, %v1500
          %v2590 = vmul.f32 %v1276, %v1501
          %v2591 = vmul.f32 %v1276, %v1502
          %v2592 = vmul.f32 %v1276, %v1503
          %v2593 = vmul.f32 %v1276, %v1504
          %v2594 = vmul.f32 %v1276, %v1505
          %v2595 = vmul.f32 %v1276, %v1506
          %v2596 = vmul.f32 %v1276, %v1507
          %v2597 = vmul.f32 %v1276, %v1508
          %v2598 = vmul.f32 %v1276, %v1509
          %v2599 = vmul.f32 %v1276, %v1510
          %v2600 = vmul.f32 %v1276, %v1511
          %v2601 = vmul.f32 %v1276, %v1512
          %v2602 = vmul.f32 %v1276, %v1513
          %v2603 = vadd.f32 %v2555, %v2579
          %v2604 = vadd.f32 %v2556, %v2580
          %v2605 = vadd.f32 %v2557, %v2581
          %v2606 = vadd.f32 %v2558, %v2582
          %v2607 = vadd.f32 %v2559, %v2583
          %v2608 = vadd.f32 %v2560, %v2584
          %v2609 = vadd.f32 %v2561, %v2585
          %v2610 = vadd.f32 %v2562, %v2586
          %v2611 = vadd.f32 %v2563, %v2587
          %v2612 = vadd.f32 %v2564, %v2588
          %v2613 = vadd.f32 %v2565, %v2589
          %v2614 = vadd.f32 %v2566, %v2590
          %v2615 = vadd.f32 %v2567, %v2591
          %v2616 = vadd.f32 %v2568, %v2592
          %v2617 = vadd.f32 %v2569, %v2593
          %v2618 = vadd.f32 %v2570, %v2594
          %v2619 = vadd.f32 %v2571, %v2595
          %v2620 = vadd.f32 %v2572, %v2596
          %v2621 = vadd.f32 %v2573, %v2597
          %v2622 = vadd.f32 %v2574, %v2598
          %v2623 = vadd.f32 %v2575, %v2599
          %v2624 = vadd.f32 %v2576, %v2600
          %v2625 = vadd.f32 %v2577, %v2601
          %v2626 = vadd.f32 %v2578, %v2602
          %v2627 = vmul.f32 %v1329, %v1491
          %v2628 = vmul.f32 %v1329, %v1492
          %v2629 = vmul.f32 %v1329, %v1493
          %v2630 = vmul.f32 %v1329, %v1494
          %v2631 = vmul.f32 %v1329, %v1495
          %v2632 = vmul.f32 %v1329, %v1496
          %v2633 = vmul.f32 %v1329, %v1497
          %v2634 = vmul.f32 %v1329, %v1498
          %v2635 = vmul.f32 %v1329, %v1499
          %v2636 = vmul.f32 %v1329, %v1500
          %v2637 = vmul.f32 %v1329, %v1501
          %v2638 = vmul.f32 %v1329, %v1502
          %v2639 = vmul.f32 %v1329, %v1503
          %v2640 = vmul.f32 %v1329, %v1504
          %v2641 = vmul.f32 %v1329, %v1505
          %v2642 = vmul.f32 %v1329, %v1506
          %v2643 = vmul.f32 %v1329, %v1507
          %v2644 = vmul.f32 %v1329, %v1508
          %v2645 = vmul.f32 %v1329, %v1509
          %v2646 = vmul.f32 %v1329, %v1510
          %v2647 = vmul.f32 %v1329, %v1511
          %v2648 = vmul.f32 %v1329, %v1512
          %v2649 = vmul.f32 %v1329, %v1513
          %v2650 = vmul.f32 %v1329, %v1514
          %v2651 = vadd.f32 %v2603, %v2627
          %v2652 = vadd.f32 %v2604, %v2628
          %v2653 = vadd.f32 %v2605, %v2629
          %v2654 = vadd.f32 %v2606, %v2630
          %v2655 = vadd.f32 %v2607, %v2631
          %v2656 = vadd.f32 %v2608, %v2632
          %v2657 = vadd.f32 %v2609, %v2633
          %v2658 = vadd.f32 %v2610, %v2634
          %v2659 = vadd.f32 %v2611, %v2635
          %v2660 = vadd.f32 %v2612, %v2636
          %v2661 = vadd.f32 %v2613, %v2637
          %v2662 = vadd.f32 %v2614, %v2638
          %v2663 = vadd.f32 %v2615, %v2639
          %v2664 = vadd.f32 %v2616, %v2640
          %v2665 = vadd.f32 %v2617, %v2641
          %v2666 = vadd.f32 %v2618, %v2642
          %v2667 = vadd.f32 %v2619, %v2643
          %v2668 = vadd.f32 %v2620, %v2644
          %v2669 = vadd.f32 %v2621, %v2645
          %v2670 = vadd.f32 %v2622, %v2646
          %v2671 = vadd.f32 %v2623, %v2647
          %v2672 = vadd.f32 %v2624, %v2648
          %v2673 = vadd.f32 %v2625, %v2649
          %v2674 = vadd.f32 %v2626, %v2650
          %v2675 = vmul.f32 %v1382, %v1492
          %v2676 = vmul.f32 %v1382, %v1493
          %v2677 = vmul.f32 %v1382, %v1494
          %v2678 = vmul.f32 %v1382, %v1495
          %v2679 = vmul.f32 %v1382, %v1496
          %v2680 = vmul.f32 %v1382, %v1497
          %v2681 = vmul.f32 %v1382, %v1498
          %v2682 = vmul.f32 %v1382, %v1499
          %v2683 = vmul.f32 %v1382, %v1500
          %v2684 = vmul.f32 %v1382, %v1501
          %v2685 = vmul.f32 %v1382, %v1502
          %v2686 = vmul.f32 %v1382, %v1503
          %v2687 = vmul.f32 %v1382, %v1504
          %v2688 = vmul.f32 %v1382, %v1505
          %v2689 = vmul.f32 %v1382, %v1506
          %v2690 = vmul.f32 %v1382, %v1507
          %v2691 = vmul.f32 %v1382, %v1508
          %v2692 = vmul.f32 %v1382, %v1509
          %v2693 = vmul.f32 %v1382, %v1510
          %v2694 = vmul.f32 %v1382, %v1511
          %v2695 = vmul.f32 %v1382, %v1512
          %v2696 = vmul.f32 %v1382, %v1513
          %v2697 = vmul.f32 %v1382, %v1514
          %v2698 = vmul.f32 %v1382, %v1515
          %v2699 = vadd.f32 %v2651, %v2675
          %v2700 = vadd.f32 %v2652, %v2676
          %v2701 = vadd.f32 %v2653, %v2677
          %v2702 = vadd.f32 %v2654, %v2678
          %v2703 = vadd.f32 %v2655, %v2679
          %v2704 = vadd.f32 %v2656, %v2680
          %v2705 = vadd.f32 %v2657, %v2681
          %v2706 = vadd.f32 %v2658, %v2682
          %v2707 = vadd.f32 %v2659, %v2683
          %v2708 = vadd.f32 %v2660, %v2684
          %v2709 = vadd.f32 %v2661, %v2685
          %v2710 = vadd.f32 %v2662, %v2686
          %v2711 = vadd.f32 %v2663, %v2687
          %v2712 = vadd.f32 %v2664, %v2688
          %v2713 = vadd.f32 %v2665, %v2689
          %v2714 = vadd.f32 %v2666, %v2690
          %v2715 = vadd.f32 %v2667, %v2691
          %v2716 = vadd.f32 %v2668, %v2692
          %v2717 = vadd.f32 %v2669, %v2693
          %v2718 = vadd.f32 %v2670, %v2694
          %v2719 = vadd.f32 %v2671, %v2695
          %v2720 = vadd.f32 %v2672, %v2696
          %v2721 = vadd.f32 %v2673, %v2697
          %v2722 = vadd.f32 %v2674, %v2698
          %v2723 = vmul.f32 %v1435, %v1493
          %v2724 = vmul.f32 %v1435, %v1494
          %v2725 = vmul.f32 %v1435, %v1495
          %v2726 = vmul.f32 %v1435, %v1496
          %v2727 = vmul.f32 %v1435, %v1497
          %v2728 = vmul.f32 %v1435, %v1498
          %v2729 = vmul.f32 %v1435, %v1499
          %v2730 = vmul.f32 %v1435, %v1500
          %v2731 = vmul.f32 %v1435, %v1501
          %v2732 = vmul.f32 %v1435, %v1502
          %v2733 = vmul.f32 %v1435, %v1503
          %v2734 = vmul.f32 %v1435, %v1504
          %v2735 = vmul.f32 %v1435, %v1505
          %v2736 = vmul.f32 %v1435, %v1506
          %v2737 = vmul.f32 %v1435, %v1507
          %v2738 = vmul.f32 %v1435, %v1508
          %v2739 = vmul.f32 %v1435, %v1509
          %v2740 = vmul.f32 %v1435, %v1510
          %v2741 = vmul.f32 %v1435, %v1511
          %v2742 = vmul.f32 %v1435, %v1512
          %v2743 = vmul.f32 %v1435, %v1513
          %v2744 = vmul.f32 %v1435, %v1514
          %v2745 = vmul.f32 %v1435, %v1515
          %v2746 = vmul.f32 %v1435, %v1516
          %v2747 = vadd.f32 %v2699, %v2723
          %v2748 = vadd.f32 %v2700, %v2724
          %v2749 = vadd.f32 %v2701, %v2725
          %v2750 = vadd.f32 %v2702, %v2726
          %v2751 = vadd.f32 %v2703, %v2727
          %v2752 = vadd.f32 %v2704, %v2728
          %v2753 = vadd.f32 %v2705, %v2729
          %v2754 = vadd.f32 %v2706, %v2730
          %v2755 = vadd.f32 %v2707, %v2731
          %v2756 = vadd.f32 %v2708, %v2732
          %v2757 = vadd.f32 %v2709, %v2733
          %v2758 = vadd.f32 %v2710, %v2734
          %v2759 = vadd.f32 %v2711, %v2735
          %v2760 = vadd.f32 %v2712, %v2736
          %v2761 = vadd.f32 %v2713, %v2737
          %v2762 = vadd.f32 %v2714, %v2738
          %v2763 = vadd.f32 %v2715, %v2739
          %v2764 = vadd.f32 %v2716, %v2740
          %v2765 = vadd.f32 %v2717, %v2741
          %v2766 = vadd.f32 %v2718, %v2742
          %v2767 = vadd.f32 %v2719, %v2743
          %v2768 = vadd.f32 %v2720, %v2744
          %v2769 = vadd.f32 %v2721, %v2745
          %v2770 = vadd.f32 %v2722, %v2746
          %s2771 = sadd.s32 %s321, 5
          %s2772 = smul.u32 %s2771, 28
          %s2773 = smul.addr %s2772, 8
          %s2774 = scalar_lea.vmem %s276, %s2773
          %v2775 = vld [vmem:[%s2774] sm:$0xff]
          %v2776 = vld [vmem:[%s2774 + $0x8] sm:$0xff]
          %v2777 = vld [vmem:[%s2774 + $0x10] sm:$0xff]
          %v2778 = vld [vmem:[%s2774 + $0x18] sm:$0xff]
          %v2779 = vld [vmem:[%s2774 + $0x20] sm:$0xff]
          %v2780 = vld [vmem:[%s2774 + $0x28] sm:$0xff]
          %v2781 = vld [vmem:[%s2774 + $0x30] sm:$0xff]
          %v2782 = vld [vmem:[%s2774 + $0x38] sm:$0xff]
          %v2783 = vld [vmem:[%s2774 + $0x40] sm:$0xff]
          %v2784 = vld [vmem:[%s2774 + $0x48] sm:$0xff]
          %v2785 = vld [vmem:[%s2774 + $0x50] sm:$0xff]
          %v2786 = vld [vmem:[%s2774 + $0x58] sm:$0xff]
          %v2787 = vld [vmem:[%s2774 + $0x60] sm:$0xff]
          %v2788 = vld [vmem:[%s2774 + $0x68] sm:$0xff]
          %v2789 = vld [vmem:[%s2774 + $0x70] sm:$0xff]
          %v2790 = vld [vmem:[%s2774 + $0x78] sm:$0xff]
          %v2791 = vld [vmem:[%s2774 + $0x80] sm:$0xff]
          %v2792 = vld [vmem:[%s2774 + $0x88] sm:$0xff]
          %v2793 = vld [vmem:[%s2774 + $0x90] sm:$0xff]
          %v2794 = vld [vmem:[%s2774 + $0x98] sm:$0xff]
          %v2795 = vld [vmem:[%s2774 + $0xa0] sm:$0xff]
          %v2796 = vld [vmem:[%s2774 + $0xa8] sm:$0xff]
          %v2797 = vld [vmem:[%s2774 + $0xb0] sm:$0xff]
          %v2798 = vld [vmem:[%s2774 + $0xb8] sm:$0xff]
          %v2799 = vld [vmem:[%s2774 + $0xc0] sm:$0xff]
          %v2800 = vld [vmem:[%s2774 + $0xc8] sm:$0xff]
          %v2801 = vld [vmem:[%s2774 + $0xd0] sm:$0xff]
          %v2802 = vld [vmem:[%s2774 + $0xd8] sm:$0xff]
          %v2803 = vmul.f32 %v1520, %v2775
          %v2804 = vmul.f32 %v1520, %v2776
          %v2805 = vmul.f32 %v1520, %v2777
          %v2806 = vmul.f32 %v1520, %v2778
          %v2807 = vmul.f32 %v1520, %v2779
          %v2808 = vmul.f32 %v1520, %v2780
          %v2809 = vmul.f32 %v1520, %v2781
          %v2810 = vmul.f32 %v1520, %v2782
          %v2811 = vmul.f32 %v1520, %v2783
          %v2812 = vmul.f32 %v1520, %v2784
          %v2813 = vmul.f32 %v1520, %v2785
          %v2814 = vmul.f32 %v1520, %v2786
          %v2815 = vmul.f32 %v1520, %v2787
          %v2816 = vmul.f32 %v1520, %v2788
          %v2817 = vmul.f32 %v1520, %v2789
          %v2818 = vmul.f32 %v1520, %v2790
          %v2819 = vmul.f32 %v1520, %v2791
          %v2820 = vmul.f32 %v1520, %v2792
          %v2821 = vmul.f32 %v1520, %v2793
          %v2822 = vmul.f32 %v1520, %v2794
          %v2823 = vmul.f32 %v1520, %v2795
          %v2824 = vmul.f32 %v1520, %v2796
          %v2825 = vmul.f32 %v1520, %v2797
          %v2826 = vmul.f32 %v1520, %v2798
          %v2827 = vadd.f32 %v2747, %v2803
          %v2828 = vadd.f32 %v2748, %v2804
          %v2829 = vadd.f32 %v2749, %v2805
          %v2830 = vadd.f32 %v2750, %v2806
          %v2831 = vadd.f32 %v2751, %v2807
          %v2832 = vadd.f32 %v2752, %v2808
          %v2833 = vadd.f32 %v2753, %v2809
          %v2834 = vadd.f32 %v2754, %v2810
          %v2835 = vadd.f32 %v2755, %v2811
          %v2836 = vadd.f32 %v2756, %v2812
          %v2837 = vadd.f32 %v2757, %v2813
          %v2838 = vadd.f32 %v2758, %v2814
          %v2839 = vadd.f32 %v2759, %v2815
          %v2840 = vadd.f32 %v2760, %v2816
          %v2841 = vadd.f32 %v2761, %v2817
          %v2842 = vadd.f32 %v2762, %v2818
          %v2843 = vadd.f32 %v2763, %v2819
          %v2844 = vadd.f32 %v2764, %v2820
          %v2845 = vadd.f32 %v2765, %v2821
          %v2846 = vadd.f32 %v2766, %v2822
          %v2847 = vadd.f32 %v2767, %v2823
          %v2848 = vadd.f32 %v2768, %v2824
          %v2849 = vadd.f32 %v2769, %v2825
          %v2850 = vadd.f32 %v2770, %v2826
          %v2851 = vmul.f32 %v1573, %v2776
          %v2852 = vmul.f32 %v1573, %v2777
          %v2853 = vmul.f32 %v1573, %v2778
          %v2854 = vmul.f32 %v1573, %v2779
          %v2855 = vmul.f32 %v1573, %v2780
          %v2856 = vmul.f32 %v1573, %v2781
          %v2857 = vmul.f32 %v1573, %v2782
          %v2858 = vmul.f32 %v1573, %v2783
          %v2859 = vmul.f32 %v1573, %v2784
          %v2860 = vmul.f32 %v1573, %v2785
          %v2861 = vmul.f32 %v1573, %v2786
          %v2862 = vmul.f32 %v1573, %v2787
          %v2863 = vmul.f32 %v1573, %v2788
          %v2864 = vmul.f32 %v1573, %v2789
          %v2865 = vmul.f32 %v1573, %v2790
          %v2866 = vmul.f32 %v1573, %v2791
          %v2867 = vmul.f32 %v1573, %v2792
          %v2868 = vmul.f32 %v1573, %v2793
          %v2869 = vmul.f32 %v1573, %v2794
          %v2870 = vmul.f32 %v1573, %v2795
          %v2871 = vmul.f32 %v1573, %v2796
          %v2872 = vmul.f32 %v1573, %v2797
          %v2873 = vmul.f32 %v1573, %v2798
          %v2874 = vmul.f32 %v1573, %v2799
          %v2875 = vadd.f32 %v2827, %v2851
          %v2876 = vadd.f32 %v2828, %v2852
          %v2877 = vadd.f32 %v2829, %v2853
          %v2878 = vadd.f32 %v2830, %v2854
          %v2879 = vadd.f32 %v2831, %v2855
          %v2880 = vadd.f32 %v2832, %v2856
          %v2881 = vadd.f32 %v2833, %v2857
          %v2882 = vadd.f32 %v2834, %v2858
          %v2883 = vadd.f32 %v2835, %v2859
          %v2884 = vadd.f32 %v2836, %v2860
          %v2885 = vadd.f32 %v2837, %v2861
          %v2886 = vadd.f32 %v2838, %v2862
          %v2887 = vadd.f32 %v2839, %v2863
          %v2888 = vadd.f32 %v2840, %v2864
          %v2889 = vadd.f32 %v2841, %v2865
          %v2890 = vadd.f32 %v2842, %v2866
          %v2891 = vadd.f32 %v2843, %v2867
          %v2892 = vadd.f32 %v2844, %v2868
          %v2893 = vadd.f32 %v2845, %v2869
          %v2894 = vadd.f32 %v2846, %v2870
          %v2895 = vadd.f32 %v2847, %v2871
          %v2896 = vadd.f32 %v2848, %v2872
          %v2897 = vadd.f32 %v2849, %v2873
          %v2898 = vadd.f32 %v2850, %v2874
          %v2899 = vmul.f32 %v1626, %v2777
          %v2900 = vmul.f32 %v1626, %v2778
          %v2901 = vmul.f32 %v1626, %v2779
          %v2902 = vmul.f32 %v1626, %v2780
          %v2903 = vmul.f32 %v1626, %v2781
          %v2904 = vmul.f32 %v1626, %v2782
          %v2905 = vmul.f32 %v1626, %v2783
          %v2906 = vmul.f32 %v1626, %v2784
          %v2907 = vmul.f32 %v1626, %v2785
          %v2908 = vmul.f32 %v1626, %v2786
          %v2909 = vmul.f32 %v1626, %v2787
          %v2910 = vmul.f32 %v1626, %v2788
          %v2911 = vmul.f32 %v1626, %v2789
          %v2912 = vmul.f32 %v1626, %v2790
          %v2913 = vmul.f32 %v1626, %v2791
          %v2914 = vmul.f32 %v1626, %v2792
          %v2915 = vmul.f32 %v1626, %v2793
          %v2916 = vmul.f32 %v1626, %v2794
          %v2917 = vmul.f32 %v1626, %v2795
          %v2918 = vmul.f32 %v1626, %v2796
          %v2919 = vmul.f32 %v1626, %v2797
          %v2920 = vmul.f32 %v1626, %v2798
          %v2921 = vmul.f32 %v1626, %v2799
          %v2922 = vmul.f32 %v1626, %v2800
          %v2923 = vadd.f32 %v2875, %v2899
          %v2924 = vadd.f32 %v2876, %v2900
          %v2925 = vadd.f32 %v2877, %v2901
          %v2926 = vadd.f32 %v2878, %v2902
          %v2927 = vadd.f32 %v2879, %v2903
          %v2928 = vadd.f32 %v2880, %v2904
          %v2929 = vadd.f32 %v2881, %v2905
          %v2930 = vadd.f32 %v2882, %v2906
          %v2931 = vadd.f32 %v2883, %v2907
          %v2932 = vadd.f32 %v2884, %v2908
          %v2933 = vadd.f32 %v2885, %v2909
          %v2934 = vadd.f32 %v2886, %v2910
          %v2935 = vadd.f32 %v2887, %v2911
          %v2936 = vadd.f32 %v2888, %v2912
          %v2937 = vadd.f32 %v2889, %v2913
          %v2938 = vadd.f32 %v2890, %v2914
          %v2939 = vadd.f32 %v2891, %v2915
          %v2940 = vadd.f32 %v2892, %v2916
          %v2941 = vadd.f32 %v2893, %v2917
          %v2942 = vadd.f32 %v2894, %v2918
          %v2943 = vadd.f32 %v2895, %v2919
          %v2944 = vadd.f32 %v2896, %v2920
          %v2945 = vadd.f32 %v2897, %v2921
          %v2946 = vadd.f32 %v2898, %v2922
          %v2947 = vmul.f32 %v1679, %v2778
          %v2948 = vmul.f32 %v1679, %v2779
          %v2949 = vmul.f32 %v1679, %v2780
          %v2950 = vmul.f32 %v1679, %v2781
          %v2951 = vmul.f32 %v1679, %v2782
          %v2952 = vmul.f32 %v1679, %v2783
          %v2953 = vmul.f32 %v1679, %v2784
          %v2954 = vmul.f32 %v1679, %v2785
          %v2955 = vmul.f32 %v1679, %v2786
          %v2956 = vmul.f32 %v1679, %v2787
          %v2957 = vmul.f32 %v1679, %v2788
          %v2958 = vmul.f32 %v1679, %v2789
          %v2959 = vmul.f32 %v1679, %v2790
          %v2960 = vmul.f32 %v1679, %v2791
          %v2961 = vmul.f32 %v1679, %v2792
          %v2962 = vmul.f32 %v1679, %v2793
          %v2963 = vmul.f32 %v1679, %v2794
          %v2964 = vmul.f32 %v1679, %v2795
          %v2965 = vmul.f32 %v1679, %v2796
          %v2966 = vmul.f32 %v1679, %v2797
          %v2967 = vmul.f32 %v1679, %v2798
          %v2968 = vmul.f32 %v1679, %v2799
          %v2969 = vmul.f32 %v1679, %v2800
          %v2970 = vmul.f32 %v1679, %v2801
          %v2971 = vadd.f32 %v2923, %v2947
          %v2972 = vadd.f32 %v2924, %v2948
          %v2973 = vadd.f32 %v2925, %v2949
          %v2974 = vadd.f32 %v2926, %v2950
          %v2975 = vadd.f32 %v2927, %v2951
          %v2976 = vadd.f32 %v2928, %v2952
          %v2977 = vadd.f32 %v2929, %v2953
          %v2978 = vadd.f32 %v2930, %v2954
          %v2979 = vadd.f32 %v2931, %v2955
          %v2980 = vadd.f32 %v2932, %v2956
          %v2981 = vadd.f32 %v2933, %v2957
          %v2982 = vadd.f32 %v2934, %v2958
          %v2983 = vadd.f32 %v2935, %v2959
          %v2984 = vadd.f32 %v2936, %v2960
          %v2985 = vadd.f32 %v2937, %v2961
          %v2986 = vadd.f32 %v2938, %v2962
          %v2987 = vadd.f32 %v2939, %v2963
          %v2988 = vadd.f32 %v2940, %v2964
          %v2989 = vadd.f32 %v2941, %v2965
          %v2990 = vadd.f32 %v2942, %v2966
          %v2991 = vadd.f32 %v2943, %v2967
          %v2992 = vadd.f32 %v2944, %v2968
          %v2993 = vadd.f32 %v2945, %v2969
          %v2994 = vadd.f32 %v2946, %v2970
          %v2995 = vmul.f32 %v1732, %v2779
          %v2996 = vmul.f32 %v1732, %v2780
          %v2997 = vmul.f32 %v1732, %v2781
          %v2998 = vmul.f32 %v1732, %v2782
          %v2999 = vmul.f32 %v1732, %v2783
          %v3000 = vmul.f32 %v1732, %v2784
          %v3001 = vmul.f32 %v1732, %v2785
          %v3002 = vmul.f32 %v1732, %v2786
          %v3003 = vmul.f32 %v1732, %v2787
          %v3004 = vmul.f32 %v1732, %v2788
          %v3005 = vmul.f32 %v1732, %v2789
          %v3006 = vmul.f32 %v1732, %v2790
          %v3007 = vmul.f32 %v1732, %v2791
          %v3008 = vmul.f32 %v1732, %v2792
          %v3009 = vmul.f32 %v1732, %v2793
          %v3010 = vmul.f32 %v1732, %v2794
          %v3011 = vmul.f32 %v1732, %v2795
          %v3012 = vmul.f32 %v1732, %v2796
          %v3013 = vmul.f32 %v1732, %v2797
          %v3014 = vmul.f32 %v1732, %v2798
          %v3015 = vmul.f32 %v1732, %v2799
          %v3016 = vmul.f32 %v1732, %v2800
          %v3017 = vmul.f32 %v1732, %v2801
          %v3018 = vmul.f32 %v1732, %v2802
          %v3019 = vadd.f32 %v2971, %v2995
          %v3020 = vadd.f32 %v2972, %v2996
          %v3021 = vadd.f32 %v2973, %v2997
          %v3022 = vadd.f32 %v2974, %v2998
          %v3023 = vadd.f32 %v2975, %v2999
          %v3024 = vadd.f32 %v2976, %v3000
          %v3025 = vadd.f32 %v2977, %v3001
          %v3026 = vadd.f32 %v2978, %v3002
          %v3027 = vadd.f32 %v2979, %v3003
          %v3028 = vadd.f32 %v2980, %v3004
          %v3029 = vadd.f32 %v2981, %v3005
          %v3030 = vadd.f32 %v2982, %v3006
          %v3031 = vadd.f32 %v2983, %v3007
          %v3032 = vadd.f32 %v2984, %v3008
          %v3033 = vadd.f32 %v2985, %v3009
          %v3034 = vadd.f32 %v2986, %v3010
          %v3035 = vadd.f32 %v2987, %v3011
          %v3036 = vadd.f32 %v2988, %v3012
          %v3037 = vadd.f32 %v2989, %v3013
          %v3038 = vadd.f32 %v2990, %v3014
          %v3039 = vadd.f32 %v2991, %v3015
          %v3040 = vadd.f32 %v2992, %v3016
          %v3041 = vadd.f32 %v2993, %v3017
          %v3042 = vadd.f32 %v2994, %v3018
          %v3043 = vadd.f32 %v3019, %v1785
          %v3044 = vadd.f32 %v3020, %v1785
          %v3045 = vadd.f32 %v3021, %v1785
          %v3046 = vadd.f32 %v3022, %v1785
          %v3047 = vadd.f32 %v3023, %v1785
          %v3048 = vadd.f32 %v3024, %v1785
          %v3049 = vadd.f32 %v3025, %v1785
          %v3050 = vadd.f32 %v3026, %v1785
          %v3051 = vadd.f32 %v3027, %v1785
          %v3052 = vadd.f32 %v3028, %v1785
          %v3053 = vadd.f32 %v3029, %v1785
          %v3054 = vadd.f32 %v3030, %v1785
          %v3055 = vadd.f32 %v3031, %v1785
          %v3056 = vadd.f32 %v3032, %v1785
          %v3057 = vadd.f32 %v3033, %v1785
          %v3058 = vadd.f32 %v3034, %v1785
          %v3059 = vadd.f32 %v3035, %v1785
          %v3060 = vadd.f32 %v3036, %v1785
          %v3061 = vadd.f32 %v3037, %v1785
          %v3062 = vadd.f32 %v3038, %v1785
          %v3063 = vadd.f32 %v3039, %v1785
          %v3064 = vadd.f32 %v3040, %v1785
          %v3065 = vadd.f32 %v3041, %v1785
          %v3066 = vadd.f32 %v3042, %v1785
          %v3067 = vmax.f32 %v3043, 0.0
          %v3068 = vmax.f32 %v3044, 0.0
          %v3069 = vmax.f32 %v3045, 0.0
          %v3070 = vmax.f32 %v3046, 0.0
          %v3071 = vmax.f32 %v3047, 0.0
          %v3072 = vmax.f32 %v3048, 0.0
          %v3073 = vmax.f32 %v3049, 0.0
          %v3074 = vmax.f32 %v3050, 0.0
          %v3075 = vmax.f32 %v3051, 0.0
          %v3076 = vmax.f32 %v3052, 0.0
          %v3077 = vmax.f32 %v3053, 0.0
          %v3078 = vmax.f32 %v3054, 0.0
          %v3079 = vmax.f32 %v3055, 0.0
          %v3080 = vmax.f32 %v3056, 0.0
          %v3081 = vmax.f32 %v3057, 0.0
          %v3082 = vmax.f32 %v3058, 0.0
          %v3083 = vmax.f32 %v3059, 0.0
          %v3084 = vmax.f32 %v3060, 0.0
          %v3085 = vmax.f32 %v3061, 0.0
          %v3086 = vmax.f32 %v3062, 0.0
          %v3087 = vmax.f32 %v3063, 0.0
          %v3088 = vmax.f32 %v3064, 0.0
          %v3089 = vmax.f32 %v3065, 0.0
          %v3090 = vmax.f32 %v3066, 0.0
          %v3091 = vmax.f32 %v1811, %v3067
          %v3092 = vmax.f32 %v1812, %v3068
          %v3093 = vmax.f32 %v1813, %v3069
          %v3094 = vmax.f32 %v1814, %v3070
          %v3095 = vmax.f32 %v1815, %v3071
          %v3096 = vmax.f32 %v1816, %v3072
          %v3097 = vmax.f32 %v1817, %v3073
          %v3098 = vmax.f32 %v1818, %v3074
          %v3099 = vmax.f32 %v1819, %v3075
          %v3100 = vmax.f32 %v1820, %v3076
          %v3101 = vmax.f32 %v1821, %v3077
          %v3102 = vmax.f32 %v1822, %v3078
          %v3103 = vmax.f32 %v1823, %v3079
          %v3104 = vmax.f32 %v1824, %v3080
          %v3105 = vmax.f32 %v1825, %v3081
          %v3106 = vmax.f32 %v1826, %v3082
          %v3107 = vmax.f32 %v1827, %v3083
          %v3108 = vmax.f32 %v1828, %v3084
          %v3109 = vmax.f32 %v1829, %v3085
          %v3110 = vmax.f32 %v1830, %v3086
          %v3111 = vmax.f32 %v1831, %v3087
          %v3112 = vmax.f32 %v1832, %v3088
          %v3113 = vmax.f32 %v1833, %v3089
          %v3114 = vmax.f32 %v1834, %v3090
          %v3115 = vmax.f32 %v3091, %v3092
          %v3116 = vmax.f32 %v3093, %v3094
          %v3117 = vmax.f32 %v3095, %v3096
          %v3118 = vmax.f32 %v3097, %v3098
          %v3119 = vmax.f32 %v3099, %v3100
          %v3120 = vmax.f32 %v3101, %v3102
          %v3121 = vmax.f32 %v3103, %v3104
          %v3122 = vmax.f32 %v3105, %v3106
          %v3123 = vmax.f32 %v3107, %v3108
          %v3124 = vmax.f32 %v3109, %v3110
          %v3125 = vmax.f32 %v3111, %v3112
          %v3126 = vmax.f32 %v3113, %v3114
          %s3127 = smul.u32 %s316, 12
          %s3128 = smul.addr %s3127, 8
          %s3129 = scalar_lea.vmem [#allocation2], %s3128
          %3130 = vst [vmem:[%s3129] sm:$0xff] %v3115
          %3131 = vst [vmem:[%s3129 + $0x8] sm:$0xff] %v3116
          %3132 = vst [vmem:[%s3129 + $0x10] sm:$0xff] %v3117
          %3133 = vst [vmem:[%s3129 + $0x18] sm:$0xff] %v3118
          %3134 = vst [vmem:[%s3129 + $0x20] sm:$0xff] %v3119
          %3135 = vst [vmem:[%s3129 + $0x28] sm:$0xff] %v3120
          %3136 = vst [vmem:[%s3129 + $0x30] sm:$0xff] %v3121
          %3137 = vst [vmem:[%s3129 + $0x38] sm:$0xff] %v3122
          %3138 = vst [vmem:[%s3129 + $0x40] sm:$0xff] %v3123
          %3139 = vst [vmem:[%s3129 + $0x48] sm:$0xff] %v3124
          %3140 = vst [vmem:[%s3129 + $0x50] sm:$0xff] %v3125
          %3141 = vst [vmem:[%s3129 + $0x58] sm:$0xff] %v3126
        $region53: #{net_forward.1} parent=47 // loop_footer
          %s320 = sadd.s32 1, %s316
        $region54: #{net_forward.1} parent=47 // loop_footer_branch
          %315 = sbr.rel target = $region50
        $region55: #{net_forward.1} parent=47 // loop_exit
          _
        %v3142 = vld [vmem:[#allocation2] sm:$0xff]
        %v3143 = vld [vmem:[#allocation2 + $0x8] sm:$0xff]
        %v3144 = vld [vmem:[#allocation2 + $0x10] sm:$0xff]
        %v3145 = vld [vmem:[#allocation2 + $0x18] sm:$0xff]
        %v3146 = vld [vmem:[#allocation2 + $0x20] sm:$0xff]
        %v3147 = vld [vmem:[#allocation2 + $0x28] sm:$0xff]
        %v3148 = vld [vmem:[#allocation2 + $0x30] sm:$0xff]
        %v3149 = vld [vmem:[#allocation2 + $0x38] sm:$0xff]
        %v3150 = vld [vmem:[#allocation2 + $0x40] sm:$0xff]
        %v3151 = vld [vmem:[#allocation2 + $0x48] sm:$0xff]
        %v3152 = vld [vmem:[#allocation2 + $0x50] sm:$0xff]
        %v3153 = vld [vmem:[#allocation2 + $0x58] sm:$0xff]
        %s3154 = scalar_lea.vmem [#allocation2], 96
        %v3155 = vld [vmem:[%s3154] sm:$0xff]
        %v3156 = vld [vmem:[%s3154 + $0x8] sm:$0xff]
        %v3157 = vld [vmem:[%s3154 + $0x10] sm:$0xff]
        %v3158 = vld [vmem:[%s3154 + $0x18] sm:$0xff]
        %v3159 = vld [vmem:[%s3154 + $0x20] sm:$0xff]
        %v3160 = vld [vmem:[%s3154 + $0x28] sm:$0xff]
        %v3161 = vld [vmem:[%s3154 + $0x30] sm:$0xff]
        %v3162 = vld [vmem:[%s3154 + $0x38] sm:$0xff]
        %v3163 = vld [vmem:[%s3154 + $0x40] sm:$0xff]
        %v3164 = vld [vmem:[%s3154 + $0x48] sm:$0xff]
        %v3165 = vld [vmem:[%s3154 + $0x50] sm:$0xff]
        %v3166 = vld [vmem:[%s3154 + $0x58] sm:$0xff]
        %s3167 = scalar_lea.vmem [#allocation2], 192
        %v3168 = vld [vmem:[%s3167] sm:$0xff]
        %v3169 = vld [vmem:[%s3167 + $0x8] sm:$0xff]
        %v3170 = vld [vmem:[%s3167 + $0x10] sm:$0xff]
        %v3171 = vld [vmem:[%s3167 + $0x18] sm:$0xff]
        %v3172 = vld [vmem:[%s3167 + $0x20] sm:$0xff]
        %v3173 = vld [vmem:[%s3167 + $0x28] sm:$0xff]
        %v3174 = vld [vmem:[%s3167 + $0x30] sm:$0xff]
        %v3175 = vld [vmem:[%s3167 + $0x38] sm:$0xff]
        %v3176 = vld [vmem:[%s3167 + $0x40] sm:$0xff]
        %v3177 = vld [vmem:[%s3167 + $0x48] sm:$0xff]
        %v3178 = vld [vmem:[%s3167 + $0x50] sm:$0xff]
        %v3179 = vld [vmem:[%s3167 + $0x58] sm:$0xff]
        %s3180 = scalar_lea.vmem [#allocation2], 288
        %v3181 = vld [vmem:[%s3180] sm:$0xff]
        %v3182 = vld [vmem:[%s3180 + $0x8] sm:$0xff]
        %v3183 = vld [vmem:[%s3180 + $0x10] sm:$0xff]
        %v3184 = vld [vmem:[%s3180 + $0x18] sm:$0xff]
        %v3185 = vld [vmem:[%s3180 + $0x20] sm:$0xff]
        %v3186 = vld [vmem:[%s3180 + $0x28] sm:$0xff]
        %v3187 = vld [vmem:[%s3180 + $0x30] sm:$0xff]
        %v3188 = vld [vmem:[%s3180 + $0x38] sm:$0xff]
        %v3189 = vld [vmem:[%s3180 + $0x40] sm:$0xff]
        %v3190 = vld [vmem:[%s3180 + $0x48] sm:$0xff]
        %v3191 = vld [vmem:[%s3180 + $0x50] sm:$0xff]
        %v3192 = vld [vmem:[%s3180 + $0x58] sm:$0xff]
        %s3193 = scalar_lea.vmem [#allocation2], 384
        %v3194 = vld [vmem:[%s3193] sm:$0xff]
        %v3195 = vld [vmem:[%s3193 + $0x8] sm:$0xff]
        %v3196 = vld [vmem:[%s3193 + $0x10] sm:$0xff]
        %v3197 = vld [vmem:[%s3193 + $0x18] sm:$0xff]
        %v3198 = vld [vmem:[%s3193 + $0x20] sm:$0xff]
        %v3199 = vld [vmem:[%s3193 + $0x28] sm:$0xff]
        %v3200 = vld [vmem:[%s3193 + $0x30] sm:$0xff]
        %v3201 = vld [vmem:[%s3193 + $0x38] sm:$0xff]
        %v3202 = vld [vmem:[%s3193 + $0x40] sm:$0xff]
        %v3203 = vld [vmem:[%s3193 + $0x48] sm:$0xff]
        %v3204 = vld [vmem:[%s3193 + $0x50] sm:$0xff]
        %v3205 = vld [vmem:[%s3193 + $0x58] sm:$0xff]
        %3207 = vset.pattern.permute.xlu0 0
        %3208 = vperm.xlu0 %3207, %v311
        %v3209 = vpop.permute.xlu0 %3208
        %3212 = vset.pattern.permute.xlu0 0
        %3213 = vperm.xlu0 %3212, %v312
        %v3214 = vpop.permute.xlu0 %3213
        %3217 = vset.pattern.permute.xlu0 0
        %3218 = vperm.xlu0 %3217, %v313
        %v3219 = vpop.permute.xlu0 %3218
        %3222 = vset.pattern.permute.xlu0 0
        %3223 = vperm.xlu0 %3222, %v314
        %v3224 = vpop.permute.xlu0 %3223
        %vm3226 = vcmask 588800
        %v3228 = vsel %vm3226, %v304, 0
        %v3231 = vsel %vm3226, %v306, 0
        %v3234 = vsel %vm3226, %v308, 0
        %v3237 = vsel %vm3226, %v310, 0
        %3239 = vmatpush.msra.mxu0 %v3181
        %3240 = vmatpush.msra.mxu0 %v3172
        %3241 = vmatpush.msra.mxu0 %v3171
        %3242 = vmatpush.msra.mxu0 %v3170
        %3243 = vmatpush.msra.mxu0 %v3169
        %3244 = vmatpush.msra.mxu0 %v3168
        %3245 = vmatpush.msra.mxu0 %v3159
        %3246 = vmatpush.msra.mxu0 %v3158
        %3247 = vmatpush.msra.mxu0 %v3157
        %3248 = vmatpush.msra.mxu0 %v3156
        %3249 = vmatpush.msra.mxu0 %v3155
        %3250 = vmatpush.msra.mxu0 %v3146
        %3251 = vmatpush.msra.mxu0 %v3145
        %3252 = vmatpush.msra.mxu0 %v3144
        %3253 = vmatpush.msra.mxu0 %v3143
        %3254 = vmatpush.msra.mxu0 %v3142
        %3255 = vmatmul.f32.gmra.mxu0 %v303
        %v3256 = vpop.f32.mrf.mxu0
        %v3257 = vadd.f32 %v3209, %v3256
        %3258 = vmatmul.f32.gmra.mxu0 %v305
        %v3259 = vpop.f32.mrf.mxu0
        %v3260 = vadd.f32 %v3214, %v3259
        %3261 = vmatmul.f32.gmra.mxu0 %v307
        %v3262 = vpop.f32.mrf.mxu0
        %v3263 = vadd.f32 %v3219, %v3262
        %3264 = vmatmul.f32.gmra.mxu0 %v309
        %v3265 = vpop.f32.mrf.mxu0
        %v3266 = vadd.f32 %v3224, %v3265
        %3267 = vdwg.mxu0
        %3268 = vmatpush.msra.mxu0 0.0
        %3269 = vmatpush.msra.mxu0 0.0
        %3270 = vmatpush.msra.mxu0 0.0
        %3271 = vmatpush.msra.mxu0 0.0
        %3272 = vmatpush.msra.mxu0 0.0
        %3273 = vmatpush.msra.mxu0 0.0
        %3274 = vmatpush.msra.mxu0 0.0
        %3275 = vmatpush.msra.mxu0 %v3198
        %3276 = vmatpush.msra.mxu0 %v3197
        %3277 = vmatpush.msra.mxu0 %v3196
        %3278 = vmatpush.msra.mxu0 %v3195
        %3279 = vmatpush.msra.mxu0 %v3194
        %3280 = vmatpush.msra.mxu0 %v3185
        %3281 = vmatpush.msra.mxu0 %v3184
        %3282 = vmatpush.msra.mxu0 %v3183
        %3283 = vmatpush.msra.mxu0 %v3182
        %3284 = vmatmul.f32.gmra.mxu0 %v3228
        %v3285 = vpop.f32.mrf.mxu0
        %v3286 = vadd.f32 %v3257, %v3285
        %3287 = vmatmul.f32.gmra.mxu0 %v3231
        %v3288 = vpop.f32.mrf.mxu0
        %v3289 = vadd.f32 %v3260, %v3288
        %3290 = vmatmul.f32.gmra.mxu0 %v3234
        %v3291 = vpop.f32.mrf.mxu0
        %v3292 = vadd.f32 %v3263, %v3291
        %3293 = vmatmul.f32.gmra.mxu0 %v3237
        %v3294 = vpop.f32.mrf.mxu0
        %v3295 = vadd.f32 %v3266, %v3294
        %3296 = vdwg.mxu0
        %3297 = vmatpush.msra.mxu0 %v3182
        %3298 = vmatpush.msra.mxu0 %v3173
        %3299 = vmatpush.msra.mxu0 %v3172
        %3300 = vmatpush.msra.mxu0 %v3171
        %3301 = vmatpush.msra.mxu0 %v3170
        %3302 = vmatpush.msra.mxu0 %v3169
        %3303 = vmatpush.msra.mxu0 %v3160
        %3304 = vmatpush.msra.mxu0 %v3159
        %3305 = vmatpush.msra.mxu0 %v3158
        %3306 = vmatpush.msra.mxu0 %v3157
        %3307 = vmatpush.msra.mxu0 %v3156
        %3308 = vmatpush.msra.mxu0 %v3147
        %3309 = vmatpush.msra.mxu0 %v3146
        %3310 = vmatpush.msra.mxu0 %v3145
        %3311 = vmatpush.msra.mxu0 %v3144
        %3312 = vmatpush.msra.mxu0 %v3143
        %3313 = vmatmul.f32.gmra.mxu0 %v303
        %v3314 = vpop.f32.mrf.mxu0
        %v3315 = vadd.f32 %v3209, %v3314
        %3316 = vmatmul.f32.gmra.mxu0 %v305
        %v3317 = vpop.f32.mrf.mxu0
        %v3318 = vadd.f32 %v3214, %v3317
        %3319 = vmatmul.f32.gmra.mxu0 %v307
        %v3320 = vpop.f32.mrf.mxu0
        %v3321 = vadd.f32 %v3219, %v3320
        %3322 = vmatmul.f32.gmra.mxu0 %v309
        %v3323 = vpop.f32.mrf.mxu0
        %v3324 = vadd.f32 %v3224, %v3323
        %3325 = vdwg.mxu0
        %3326 = vmatpush.msra.mxu0 0.0
        %3327 = vmatpush.msra.mxu0 0.0
        %3328 = vmatpush.msra.mxu0 0.0
        %3329 = vmatpush.msra.mxu0 0.0
        %3330 = vmatpush.msra.mxu0 0.0
        %3331 = vmatpush.msra.mxu0 0.0
        %3332 = vmatpush.msra.mxu0 0.0
        %3333 = vmatpush.msra.mxu0 %v3199
        %3334 = vmatpush.msra.mxu0 %v3198
        %3335 = vmatpush.msra.mxu0 %v3197
        %3336 = vmatpush.msra.mxu0 %v3196
        %3337 = vmatpush.msra.mxu0 %v3195
        %3338 = vmatpush.msra.mxu0 %v3186
        %3339 = vmatpush.msra.mxu0 %v3185
        %3340 = vmatpush.msra.mxu0 %v3184
        %3341 = vmatpush.msra.mxu0 %v3183
        %3342 = vmatmul.f32.gmra.mxu0 %v3228
        %v3343 = vpop.f32.mrf.mxu0
        %v3344 = vadd.f32 %v3315, %v3343
        %3345 = vmatmul.f32.gmra.mxu0 %v3231
        %v3346 = vpop.f32.mrf.mxu0
        %v3347 = vadd.f32 %v3318, %v3346
        %3348 = vmatmul.f32.gmra.mxu0 %v3234
        %v3349 = vpop.f32.mrf.mxu0
        %v3350 = vadd.f32 %v3321, %v3349
        %3351 = vmatmul.f32.gmra.mxu0 %v3237
        %v3352 = vpop.f32.mrf.mxu0
        %v3353 = vadd.f32 %v3324, %v3352
        %3354 = vdwg.mxu0
        %3355 = vmatpush.msra.mxu0 %v3183
        %3356 = vmatpush.msra.mxu0 %v3174
        %3357 = vmatpush.msra.mxu0 %v3173
        %3358 = vmatpush.msra.mxu0 %v3172
        %3359 = vmatpush.msra.mxu0 %v3171
        %3360 = vmatpush.msra.mxu0 %v3170
        %3361 = vmatpush.msra.mxu0 %v3161
        %3362 = vmatpush.msra.mxu0 %v3160
        %3363 = vmatpush.msra.mxu0 %v3159
        %3364 = vmatpush.msra.mxu0 %v3158
        %3365 = vmatpush.msra.mxu0 %v3157
        %3366 = vmatpush.msra.mxu0 %v3148
        %3367 = vmatpush.msra.mxu0 %v3147
        %3368 = vmatpush.msra.mxu0 %v3146
        %3369 = vmatpush.msra.mxu0 %v3145
        %3370 = vmatpush.msra.mxu0 %v3144
        %3371 = vmatmul.f32.gmra.mxu0 %v303
        %v3372 = vpop.f32.mrf.mxu0
        %v3373 = vadd.f32 %v3209, %v3372
        %3374 = vmatmul.f32.gmra.mxu0 %v305
        %v3375 = vpop.f32.mrf.mxu0
        %v3376 = vadd.f32 %v3214, %v3375
        %3377 = vmatmul.f32.gmra.mxu0 %v307
        %v3378 = vpop.f32.mrf.mxu0
        %v3379 = vadd.f32 %v3219, %v3378
        %3380 = vmatmul.f32.gmra.mxu0 %v309
        %v3381 = vpop.f32.mrf.mxu0
        %v3382 = vadd.f32 %v3224, %v3381
        %3383 = vdwg.mxu0
        %3384 = vmatpush.msra.mxu0 0.0
        %3385 = vmatpush.msra.mxu0 0.0
        %3386 = vmatpush.msra.mxu0 0.0
        %3387 = vmatpush.msra.mxu0 0.0
        %3388 = vmatpush.msra.mxu0 0.0
        %3389 = vmatpush.msra.mxu0 0.0
        %3390 = vmatpush.msra.mxu0 0.0
        %3391 = vmatpush.msra.mxu0 %v3200
        %3392 = vmatpush.msra.mxu0 %v3199
        %3393 = vmatpush.msra.mxu0 %v3198
        %3394 = vmatpush.msra.mxu0 %v3197
        %3395 = vmatpush.msra.mxu0 %v3196
        %3396 = vmatpush.msra.mxu0 %v3187
        %3397 = vmatpush.msra.mxu0 %v3186
        %3398 = vmatpush.msra.mxu0 %v3185
        %3399 = vmatpush.msra.mxu0 %v3184
        %3400 = vmatmul.f32.gmra.mxu0 %v3228
        %v3401 = vpop.f32.mrf.mxu0
        %v3402 = vadd.f32 %v3373, %v3401
        %3403 = vmatmul.f32.gmra.mxu0 %v3231
        %v3404 = vpop.f32.mrf.mxu0
        %v3405 = vadd.f32 %v3376, %v3404
        %3406 = vmatmul.f32.gmra.mxu0 %v3234
        %v3407 = vpop.f32.mrf.mxu0
        %v3408 = vadd.f32 %v3379, %v3407
        %3409 = vmatmul.f32.gmra.mxu0 %v3237
        %v3410 = vpop.f32.mrf.mxu0
        %v3411 = vadd.f32 %v3382, %v3410
        %3412 = vdwg.mxu0
        %3413 = vmatpush.msra.mxu0 %v3184
        %3414 = vmatpush.msra.mxu0 %v3175
        %3415 = vmatpush.msra.mxu0 %v3174
        %3416 = vmatpush.msra.mxu0 %v3173
        %3417 = vmatpush.msra.mxu0 %v3172
        %3418 = vmatpush.msra.mxu0 %v3171
        %3419 = vmatpush.msra.mxu0 %v3162
        %3420 = vmatpush.msra.mxu0 %v3161
        %3421 = vmatpush.msra.mxu0 %v3160
        %3422 = vmatpush.msra.mxu0 %v3159
        %3423 = vmatpush.msra.mxu0 %v3158
        %3424 = vmatpush.msra.mxu0 %v3149
        %3425 = vmatpush.msra.mxu0 %v3148
        %3426 = vmatpush.msra.mxu0 %v3147
        %3427 = vmatpush.msra.mxu0 %v3146
        %3428 = vmatpush.msra.mxu0 %v3145
        %3429 = vmatmul.f32.gmra.mxu0 %v303
        %v3430 = vpop.f32.mrf.mxu0
        %v3431 = vadd.f32 %v3209, %v3430
        %3432 = vmatmul.f32.gmra.mxu0 %v305
        %v3433 = vpop.f32.mrf.mxu0
        %v3434 = vadd.f32 %v3214, %v3433
        %3435 = vmatmul.f32.gmra.mxu0 %v307
        %v3436 = vpop.f32.mrf.mxu0
        %v3437 = vadd.f32 %v3219, %v3436
        %3438 = vmatmul.f32.gmra.mxu0 %v309
        %v3439 = vpop.f32.mrf.mxu0
        %v3440 = vadd.f32 %v3224, %v3439
        %3441 = vdwg.mxu0
        %3442 = vmatpush.msra.mxu0 0.0
        %3443 = vmatpush.msra.mxu0 0.0
        %3444 = vmatpush.msra.mxu0 0.0
        %3445 = vmatpush.msra.mxu0 0.0
        %3446 = vmatpush.msra.mxu0 0.0
        %3447 = vmatpush.msra.mxu0 0.0
        %3448 = vmatpush.msra.mxu0 0.0
        %3449 = vmatpush.msra.mxu0 %v3201
        %3450 = vmatpush.msra.mxu0 %v3200
        %3451 = vmatpush.msra.mxu0 %v3199
        %3452 = vmatpush.msra.mxu0 %v3198
        %3453 = vmatpush.msra.mxu0 %v3197
        %3454 = vmatpush.msra.mxu0 %v3188
        %3455 = vmatpush.msra.mxu0 %v3187
        %3456 = vmatpush.msra.mxu0 %v3186
        %3457 = vmatpush.msra.mxu0 %v3185
        %3458 = vmatmul.f32.gmra.mxu0 %v3228
        %v3459 = vpop.f32.mrf.mxu0
        %v3460 = vadd.f32 %v3431, %v3459
        %3461 = vmatmul.f32.gmra.mxu0 %v3231
        %v3462 = vpop.f32.mrf.mxu0
        %v3463 = vadd.f32 %v3434, %v3462
        %3464 = vmatmul.f32.gmra.mxu0 %v3234
        %v3465 = vpop.f32.mrf.mxu0
        %v3466 = vadd.f32 %v3437, %v3465
        %3467 = vmatmul.f32.gmra.mxu0 %v3237
        %v3468 = vpop.f32.mrf.mxu0
        %v3469 = vadd.f32 %v3440, %v3468
        %3470 = vdwg.mxu0
        %3471 = vmatpush.msra.mxu0 %v3185
        %3472 = vmatpush.msra.mxu0 %v3176
        %3473 = vmatpush.msra.mxu0 %v3175
        %3474 = vmatpush.msra.mxu0 %v3174
        %3475 = vmatpush.msra.mxu0 %v3173
        %3476 = vmatpush.msra.mxu0 %v3172
        %3477 = vmatpush.msra.mxu0 %v3163
        %3478 = vmatpush.msra.mxu0 %v3162
        %3479 = vmatpush.msra.mxu0 %v3161
        %3480 = vmatpush.msra.mxu0 %v3160
        %3481 = vmatpush.msra.mxu0 %v3159
        %3482 = vmatpush.msra.mxu0 %v3150
        %3483 = vmatpush.msra.mxu0 %v3149
        %3484 = vmatpush.msra.mxu0 %v3148
        %3485 = vmatpush.msra.mxu0 %v3147
        %3486 = vmatpush.msra.mxu0 %v3146
        %3487 = vmatmul.f32.gmra.mxu0 %v303
        %v3488 = vpop.f32.mrf.mxu0
        %v3489 = vadd.f32 %v3209, %v3488
        %3490 = vmatmul.f32.gmra.mxu0 %v305
        %v3491 = vpop.f32.mrf.mxu0
        %v3492 = vadd.f32 %v3214, %v3491
        %3493 = vmatmul.f32.gmra.mxu0 %v307
        %v3494 = vpop.f32.mrf.mxu0
        %v3495 = vadd.f32 %v3219, %v3494
        %3496 = vmatmul.f32.gmra.mxu0 %v309
        %v3497 = vpop.f32.mrf.mxu0
        %v3498 = vadd.f32 %v3224, %v3497
        %3499 = vdwg.mxu0
        %3500 = vmatpush.msra.mxu0 0.0
        %3501 = vmatpush.msra.mxu0 0.0
        %3502 = vmatpush.msra.mxu0 0.0
        %3503 = vmatpush.msra.mxu0 0.0
        %3504 = vmatpush.msra.mxu0 0.0
        %3505 = vmatpush.msra.mxu0 0.0
        %3506 = vmatpush.msra.mxu0 0.0
        %3507 = vmatpush.msra.mxu0 %v3202
        %3508 = vmatpush.msra.mxu0 %v3201
        %3509 = vmatpush.msra.mxu0 %v3200
        %3510 = vmatpush.msra.mxu0 %v3199
        %3511 = vmatpush.msra.mxu0 %v3198
        %3512 = vmatpush.msra.mxu0 %v3189
        %3513 = vmatpush.msra.mxu0 %v3188
        %3514 = vmatpush.msra.mxu0 %v3187
        %3515 = vmatpush.msra.mxu0 %v3186
        %3516 = vmatmul.f32.gmra.mxu0 %v3228
        %v3517 = vpop.f32.mrf.mxu0
        %v3518 = vadd.f32 %v3489, %v3517
        %3519 = vmatmul.f32.gmra.mxu0 %v3231
        %v3520 = vpop.f32.mrf.mxu0
        %v3521 = vadd.f32 %v3492, %v3520
        %3522 = vmatmul.f32.gmra.mxu0 %v3234
        %v3523 = vpop.f32.mrf.mxu0
        %v3524 = vadd.f32 %v3495, %v3523
        %3525 = vmatmul.f32.gmra.mxu0 %v3237
        %v3526 = vpop.f32.mrf.mxu0
        %v3527 = vadd.f32 %v3498, %v3526
        %3528 = vdwg.mxu0
        %3529 = vmatpush.msra.mxu0 %v3186
        %3530 = vmatpush.msra.mxu0 %v3177
        %3531 = vmatpush.msra.mxu0 %v3176
        %3532 = vmatpush.msra.mxu0 %v3175
        %3533 = vmatpush.msra.mxu0 %v3174
        %3534 = vmatpush.msra.mxu0 %v3173
        %3535 = vmatpush.msra.mxu0 %v3164
        %3536 = vmatpush.msra.mxu0 %v3163
        %3537 = vmatpush.msra.mxu0 %v3162
        %3538 = vmatpush.msra.mxu0 %v3161
        %3539 = vmatpush.msra.mxu0 %v3160
        %3540 = vmatpush.msra.mxu0 %v3151
        %3541 = vmatpush.msra.mxu0 %v3150
        %3542 = vmatpush.msra.mxu0 %v3149
        %3543 = vmatpush.msra.mxu0 %v3148
        %3544 = vmatpush.msra.mxu0 %v3147
        %3545 = vmatmul.f32.gmra.mxu0 %v303
        %v3546 = vpop.f32.mrf.mxu0
        %v3547 = vadd.f32 %v3209, %v3546
        %3548 = vmatmul.f32.gmra.mxu0 %v305
        %v3549 = vpop.f32.mrf.mxu0
        %v3550 = vadd.f32 %v3214, %v3549
        %3551 = vmatmul.f32.gmra.mxu0 %v307
        %v3552 = vpop.f32.mrf.mxu0
        %v3553 = vadd.f32 %v3219, %v3552
        %3554 = vmatmul.f32.gmra.mxu0 %v309
        %v3555 = vpop.f32.mrf.mxu0
        %v3556 = vadd.f32 %v3224, %v3555
        %3557 = vdwg.mxu0
        %3558 = vmatpush.msra.mxu0 0.0
        %3559 = vmatpush.msra.mxu0 0.0
        %3560 = vmatpush.msra.mxu0 0.0
        %3561 = vmatpush.msra.mxu0 0.0
        %3562 = vmatpush.msra.mxu0 0.0
        %3563 = vmatpush.msra.mxu0 0.0
        %3564 = vmatpush.msra.mxu0 0.0
        %3565 = vmatpush.msra.mxu0 %v3203
        %3566 = vmatpush.msra.mxu0 %v3202
        %3567 = vmatpush.msra.mxu0 %v3201
        %3568 = vmatpush.msra.mxu0 %v3200
        %3569 = vmatpush.msra.mxu0 %v3199
        %3570 = vmatpush.msra.mxu0 %v3190
        %3571 = vmatpush.msra.mxu0 %v3189
        %3572 = vmatpush.msra.mxu0 %v3188
        %3573 = vmatpush.msra.mxu0 %v3187
        %3574 = vmatmul.f32.gmra.mxu0 %v3228
        %v3575 = vpop.f32.mrf.mxu0
        %v3576 = vadd.f32 %v3547, %v3575
        %3577 = vmatmul.f32.gmra.mxu0 %v3231
        %v3578 = vpop.f32.mrf.mxu0
        %v3579 = vadd.f32 %v3550, %v3578
        %3580 = vmatmul.f32.gmra.mxu0 %v3234
        %v3581 = vpop.f32.mrf.mxu0
        %v3582 = vadd.f32 %v3553, %v3581
        %3583 = vmatmul.f32.gmra.mxu0 %v3237
        %v3584 = vpop.f32.mrf.mxu0
        %v3585 = vadd.f32 %v3556, %v3584
        %3586 = vdwg.mxu0
        %3587 = vmatpush.msra.mxu0 %v3187
        %3588 = vmatpush.msra.mxu0 %v3178
        %3589 = vmatpush.msra.mxu0 %v3177
        %3590 = vmatpush.msra.mxu0 %v3176
        %3591 = vmatpush.msra.mxu0 %v3175
        %3592 = vmatpush.msra.mxu0 %v3174
        %3593 = vmatpush.msra.mxu0 %v3165
        %3594 = vmatpush.msra.mxu0 %v3164
        %3595 = vmatpush.msra.mxu0 %v3163
        %3596 = vmatpush.msra.mxu0 %v3162
        %3597 = vmatpush.msra.mxu0 %v3161
        %3598 = vmatpush.msra.mxu0 %v3152
        %3599 = vmatpush.msra.mxu0 %v3151
        %3600 = vmatpush.msra.mxu0 %v3150
        %3601 = vmatpush.msra.mxu0 %v3149
        %3602 = vmatpush.msra.mxu0 %v3148
        %3603 = vmatmul.f32.gmra.mxu0 %v303
        %v3604 = vpop.f32.mrf.mxu0
        %v3605 = vadd.f32 %v3209, %v3604
        %3606 = vmatmul.f32.gmra.mxu0 %v305
        %v3607 = vpop.f32.mrf.mxu0
        %v3608 = vadd.f32 %v3214, %v3607
        %3609 = vmatmul.f32.gmra.mxu0 %v307
        %v3610 = vpop.f32.mrf.mxu0
        %v3611 = vadd.f32 %v3219, %v3610
        %3612 = vmatmul.f32.gmra.mxu0 %v309
        %v3613 = vpop.f32.mrf.mxu0
        %v3614 = vadd.f32 %v3224, %v3613
        %3615 = vdwg.mxu0
        %3616 = vmatpush.msra.mxu0 0.0
        %3617 = vmatpush.msra.mxu0 0.0
        %3618 = vmatpush.msra.mxu0 0.0
        %3619 = vmatpush.msra.mxu0 0.0
        %3620 = vmatpush.msra.mxu0 0.0
        %3621 = vmatpush.msra.mxu0 0.0
        %3622 = vmatpush.msra.mxu0 0.0
        %3623 = vmatpush.msra.mxu0 %v3204
        %3624 = vmatpush.msra.mxu0 %v3203
        %3625 = vmatpush.msra.mxu0 %v3202
        %3626 = vmatpush.msra.mxu0 %v3201
        %3627 = vmatpush.msra.mxu0 %v3200
        %3628 = vmatpush.msra.mxu0 %v3191
        %3629 = vmatpush.msra.mxu0 %v3190
        %3630 = vmatpush.msra.mxu0 %v3189
        %3631 = vmatpush.msra.mxu0 %v3188
        %3632 = vmatmul.f32.gmra.mxu0 %v3228
        %v3633 = vpop.f32.mrf.mxu0
        %v3634 = vadd.f32 %v3605, %v3633
        %3635 = vmatmul.f32.gmra.mxu0 %v3231
        %v3636 = vpop.f32.mrf.mxu0
        %v3637 = vadd.f32 %v3608, %v3636
        %3638 = vmatmul.f32.gmra.mxu0 %v3234
        %v3639 = vpop.f32.mrf.mxu0
        %v3640 = vadd.f32 %v3611, %v3639
        %3641 = vmatmul.f32.gmra.mxu0 %v3237
        %v3642 = vpop.f32.mrf.mxu0
        %v3643 = vadd.f32 %v3614, %v3642
        %3644 = vdwg.mxu0
        %3645 = vmatpush.msra.mxu0 %v3188
        %3646 = vmatpush.msra.mxu0 %v3179
        %3647 = vmatpush.msra.mxu0 %v3178
        %3648 = vmatpush.msra.mxu0 %v3177
        %3649 = vmatpush.msra.mxu0 %v3176
        %3650 = vmatpush.msra.mxu0 %v3175
        %3651 = vmatpush.msra.mxu0 %v3166
        %3652 = vmatpush.msra.mxu0 %v3165
        %3653 = vmatpush.msra.mxu0 %v3164
        %3654 = vmatpush.msra.mxu0 %v3163
        %3655 = vmatpush.msra.mxu0 %v3162
        %3656 = vmatpush.msra.mxu0 %v3153
        %3657 = vmatpush.msra.mxu0 %v3152
        %3658 = vmatpush.msra.mxu0 %v3151
        %3659 = vmatpush.msra.mxu0 %v3150
        %3660 = vmatpush.msra.mxu0 %v3149
        %3661 = vmatmul.f32.gmra.mxu0 %v303
        %v3662 = vpop.f32.mrf.mxu0
        %v3663 = vadd.f32 %v3209, %v3662
        %3664 = vmatmul.f32.gmra.mxu0 %v305
        %v3665 = vpop.f32.mrf.mxu0
        %v3666 = vadd.f32 %v3214, %v3665
        %3667 = vmatmul.f32.gmra.mxu0 %v307
        %v3668 = vpop.f32.mrf.mxu0
        %v3669 = vadd.f32 %v3219, %v3668
        %3670 = vmatmul.f32.gmra.mxu0 %v309
        %v3671 = vpop.f32.mrf.mxu0
        %v3672 = vadd.f32 %v3224, %v3671
        %3673 = vdwg.mxu0
        %3674 = vmatpush.msra.mxu0 0.0
        %3675 = vmatpush.msra.mxu0 0.0
        %3676 = vmatpush.msra.mxu0 0.0
        %3677 = vmatpush.msra.mxu0 0.0
        %3678 = vmatpush.msra.mxu0 0.0
        %3679 = vmatpush.msra.mxu0 0.0
        %3680 = vmatpush.msra.mxu0 0.0
        %3681 = vmatpush.msra.mxu0 %v3205
        %3682 = vmatpush.msra.mxu0 %v3204
        %3683 = vmatpush.msra.mxu0 %v3203
        %3684 = vmatpush.msra.mxu0 %v3202
        %3685 = vmatpush.msra.mxu0 %v3201
        %3686 = vmatpush.msra.mxu0 %v3192
        %3687 = vmatpush.msra.mxu0 %v3191
        %3688 = vmatpush.msra.mxu0 %v3190
        %3689 = vmatpush.msra.mxu0 %v3189
        %3690 = vmatmul.f32.gmra.mxu0 %v3228
        %v3691 = vpop.f32.mrf.mxu0
        %v3692 = vadd.f32 %v3663, %v3691
        %3693 = vmatmul.f32.gmra.mxu0 %v3231
        %v3694 = vpop.f32.mrf.mxu0
        %v3695 = vadd.f32 %v3666, %v3694
        %3696 = vmatmul.f32.gmra.mxu0 %v3234
        %v3697 = vpop.f32.mrf.mxu0
        %v3698 = vadd.f32 %v3669, %v3697
        %3699 = vmatmul.f32.gmra.mxu0 %v3237
        %v3700 = vpop.f32.mrf.mxu0
        %v3701 = vadd.f32 %v3672, %v3700
        %3702 = vdwg.mxu0
        %v3703 = vmax.f32 %v3286, 0.0
        %v3704 = vmax.f32 %v3344, 0.0
        %v3705 = vmax.f32 %v3402, 0.0
        %v3706 = vmax.f32 %v3460, 0.0
        %v3707 = vmax.f32 %v3518, 0.0
        %v3708 = vmax.f32 %v3576, 0.0
        %v3709 = vmax.f32 %v3634, 0.0
        %v3710 = vmax.f32 %v3692, 0.0
        %v3711 = vmax.f32 %v3289, 0.0
        %v3712 = vmax.f32 %v3347, 0.0
        %v3713 = vmax.f32 %v3405, 0.0
        %v3714 = vmax.f32 %v3463, 0.0
        %v3715 = vmax.f32 %v3521, 0.0
        %v3716 = vmax.f32 %v3579, 0.0
        %v3717 = vmax.f32 %v3637, 0.0
        %v3718 = vmax.f32 %v3695, 0.0
        %v3719 = vmax.f32 %v3292, 0.0
        %v3720 = vmax.f32 %v3350, 0.0
        %v3721 = vmax.f32 %v3408, 0.0
        %v3722 = vmax.f32 %v3466, 0.0
        %v3723 = vmax.f32 %v3524, 0.0
        %v3724 = vmax.f32 %v3582, 0.0
        %v3725 = vmax.f32 %v3640, 0.0
        %v3726 = vmax.f32 %v3698, 0.0
        %v3727 = vmax.f32 %v3295, 0.0
        %v3728 = vmax.f32 %v3353, 0.0
        %v3729 = vmax.f32 %v3411, 0.0
        %v3730 = vmax.f32 %v3469, 0.0
        %v3731 = vmax.f32 %v3527, 0.0
        %v3732 = vmax.f32 %v3585, 0.0
        %v3733 = vmax.f32 %v3643, 0.0
        %v3734 = vmax.f32 %v3701, 0.0
        %s3735 = scalar_lea.vmem [#allocation2], 480
        %v3736 = vld [vmem:[%s3735] sm:$0xff]
        %v3737 = vld [vmem:[%s3735 + $0x8] sm:$0xff]
        %v3738 = vld [vmem:[%s3735 + $0x10] sm:$0xff]
        %v3739 = vld [vmem:[%s3735 + $0x18] sm:$0xff]
        %v3740 = vld [vmem:[%s3735 + $0x20] sm:$0xff]
        %v3741 = vld [vmem:[%s3735 + $0x28] sm:$0xff]
        %v3742 = vld [vmem:[%s3735 + $0x30] sm:$0xff]
        %v3743 = vld [vmem:[%s3735 + $0x38] sm:$0xff]
        %v3744 = vld [vmem:[%s3735 + $0x40] sm:$0xff]
        %v3745 = vld [vmem:[%s3735 + $0x48] sm:$0xff]
        %v3746 = vld [vmem:[%s3735 + $0x50] sm:$0xff]
        %v3747 = vld [vmem:[%s3735 + $0x58] sm:$0xff]
        %3748 = vmatpush.msra.mxu0 %v3194
        %3749 = vmatpush.msra.mxu0 %v3185
        %3750 = vmatpush.msra.mxu0 %v3184
        %3751 = vmatpush.msra.mxu0 %v3183
        %3752 = vmatpush.msra.mxu0 %v3182
        %3753 = vmatpush.msra.mxu0 %v3181
        %3754 = vmatpush.msra.mxu0 %v3172
        %3755 = vmatpush.msra.mxu0 %v3171
        %3756 = vmatpush.msra.mxu0 %v3170
        %3757 = vmatpush.msra.mxu0 %v3169
        %3758 = vmatpush.msra.mxu0 %v3168
        %3759 = vmatpush.msra.mxu0 %v3159
        %3760 = vmatpush.msra.mxu0 %v3158
        %3761 = vmatpush.msra.mxu0 %v3157
        %3762 = vmatpush.msra.mxu0 %v3156
        %3763 = vmatpush.msra.mxu0 %v3155
        %3764 = vmatmul.f32.gmra.mxu0 %v303
        %v3765 = vpop.f32.mrf.mxu0
        %v3766 = vadd.f32 %v3209, %v3765
        %3767 = vmatmul.f32.gmra.mxu0 %v305
        %v3768 = vpop.f32.mrf.mxu0
        %v3769 = vadd.f32 %v3214, %v3768
        %3770 = vmatmul.f32.gmra.mxu0 %v307
        %v3771 = vpop.f32.mrf.mxu0
        %v3772 = vadd.f32 %v3219, %v3771
        %3773 = vmatmul.f32.gmra.mxu0 %v309
        %v3774 = vpop.f32.mrf.mxu0
        %v3775 = vadd.f32 %v3224, %v3774
        %3776 = vdwg.mxu0
        %3777 = vmatpush.msra.mxu0 0.0
        %3778 = vmatpush.msra.mxu0 0.0
        %3779 = vmatpush.msra.mxu0 0.0
        %3780 = vmatpush.msra.mxu0 0.0
        %3781 = vmatpush.msra.mxu0 0.0
        %3782 = vmatpush.msra.mxu0 0.0
        %3783 = vmatpush.msra.mxu0 0.0
        %3784 = vmatpush.msra.mxu0 %v3740
        %3785 = vmatpush.msra.mxu0 %v3739
        %3786 = vmatpush.msra.mxu0 %v3738
        %3787 = vmatpush.msra.mxu0 %v3737
        %3788 = vmatpush.msra.mxu0 %v3736
        %3789 = vmatpush.msra.mxu0 %v3198
        %3790 = vmatpush.msra.mxu0 %v3197
        %3791 = vmatpush.msra.mxu0 %v3196
        %3792 = vmatpush.msra.mxu0 %v3195
        %3793 = vmatmul.f32.gmra.mxu0 %v3228
        %v3794 = vpop.f32.mrf.mxu0
        %v3795 = vadd.f32 %v3766, %v3794
        %3796 = vmatmul.f32.gmra.mxu0 %v3231
        %v3797 = vpop.f32.mrf.mxu0
        %v3798 = vadd.f32 %v3769, %v3797
        %3799 = vmatmul.f32.gmra.mxu0 %v3234
        %v3800 = vpop.f32.mrf.mxu0
        %v3801 = vadd.f32 %v3772, %v3800
        %3802 = vmatmul.f32.gmra.mxu0 %v3237
        %v3803 = vpop.f32.mrf.mxu0
        %v3804 = vadd.f32 %v3775, %v3803
        %3805 = vdwg.mxu0
        %3806 = vmatpush.msra.mxu0 %v3195
        %3807 = vmatpush.msra.mxu0 %v3186
        %3808 = vmatpush.msra.mxu0 %v3185
        %3809 = vmatpush.msra.mxu0 %v3184
        %3810 = vmatpush.msra.mxu0 %v3183
        %3811 = vmatpush.msra.mxu0 %v3182
        %3812 = vmatpush.msra.mxu0 %v3173
        %3813 = vmatpush.msra.mxu0 %v3172
        %3814 = vmatpush.msra.mxu0 %v3171
        %3815 = vmatpush.msra.mxu0 %v3170
        %3816 = vmatpush.msra.mxu0 %v3169
        %3817 = vmatpush.msra.mxu0 %v3160
        %3818 = vmatpush.msra.mxu0 %v3159
        %3819 = vmatpush.msra.mxu0 %v3158
        %3820 = vmatpush.msra.mxu0 %v3157
        %3821 = vmatpush.msra.mxu0 %v3156
        %3822 = vmatmul.f32.gmra.mxu0 %v303
        %v3823 = vpop.f32.mrf.mxu0
        %v3824 = vadd.f32 %v3209, %v3823
        %3825 = vmatmul.f32.gmra.mxu0 %v305
        %v3826 = vpop.f32.mrf.mxu0
        %v3827 = vadd.f32 %v3214, %v3826
        %3828 = vmatmul.f32.gmra.mxu0 %v307
        %v3829 = vpop.f32.mrf.mxu0
        %v3830 = vadd.f32 %v3219, %v3829
        %3831 = vmatmul.f32.gmra.mxu0 %v309
        %v3832 = vpop.f32.mrf.mxu0
        %v3833 = vadd.f32 %v3224, %v3832
        %3834 = vdwg.mxu0
        %3835 = vmatpush.msra.mxu0 0.0
        %3836 = vmatpush.msra.mxu0 0.0
        %3837 = vmatpush.msra.mxu0 0.0
        %3838 = vmatpush.msra.mxu0 0.0
        %3839 = vmatpush.msra.mxu0 0.0
        %3840 = vmatpush.msra.mxu0 0.0
        %3841 = vmatpush.msra.mxu0 0.0
        %3842 = vmatpush.msra.mxu0 %v3741
        %3843 = vmatpush.msra.mxu0 %v3740
        %3844 = vmatpush.msra.mxu0 %v3739
        %3845 = vmatpush.msra.mxu0 %v3738
        %3846 = vmatpush.msra.mxu0 %v3737
        %3847 = vmatpush.msra.mxu0 %v3199
        %3848 = vmatpush.msra.mxu0 %v3198
        %3849 = vmatpush.msra.mxu0 %v3197
        %3850 = vmatpush.msra.mxu0 %v3196
        %3851 = vmatmul.f32.gmra.mxu0 %v3228
        %v3852 = vpop.f32.mrf.mxu0
        %v3853 = vadd.f32 %v3824, %v3852
        %3854 = vmatmul.f32.gmra.mxu0 %v3231
        %v3855 = vpop.f32.mrf.mxu0
        %v3856 = vadd.f32 %v3827, %v3855
        %3857 = vmatmul.f32.gmra.mxu0 %v3234
        %v3858 = vpop.f32.mrf.mxu0
        %v3859 = vadd.f32 %v3830, %v3858
        %3860 = vmatmul.f32.gmra.mxu0 %v3237
        %v3861 = vpop.f32.mrf.mxu0
        %v3862 = vadd.f32 %v3833, %v3861
        %3863 = vdwg.mxu0
        %3864 = vmatpush.msra.mxu0 %v3196
        %3865 = vmatpush.msra.mxu0 %v3187
        %3866 = vmatpush.msra.mxu0 %v3186
        %3867 = vmatpush.msra.mxu0 %v3185
        %3868 = vmatpush.msra.mxu0 %v3184
        %3869 = vmatpush.msra.mxu0 %v3183
        %3870 = vmatpush.msra.mxu0 %v3174
        %3871 = vmatpush.msra.mxu0 %v3173
        %3872 = vmatpush.msra.mxu0 %v3172
        %3873 = vmatpush.msra.mxu0 %v3171
        %3874 = vmatpush.msra.mxu0 %v3170
        %3875 = vmatpush.msra.mxu0 %v3161
        %3876 = vmatpush.msra.mxu0 %v3160
        %3877 = vmatpush.msra.mxu0 %v3159
        %3878 = vmatpush.msra.mxu0 %v3158
        %3879 = vmatpush.msra.mxu0 %v3157
        %3880 = vmatmul.f32.gmra.mxu0 %v303
        %v3881 = vpop.f32.mrf.mxu0
        %v3882 = vadd.f32 %v3209, %v3881
        %3883 = vmatmul.f32.gmra.mxu0 %v305
        %v3884 = vpop.f32.mrf.mxu0
        %v3885 = vadd.f32 %v3214, %v3884
        %3886 = vmatmul.f32.gmra.mxu0 %v307
        %v3887 = vpop.f32.mrf.mxu0
        %v3888 = vadd.f32 %v3219, %v3887
        %3889 = vmatmul.f32.gmra.mxu0 %v309
        %v3890 = vpop.f32.mrf.mxu0
        %v3891 = vadd.f32 %v3224, %v3890
        %3892 = vdwg.mxu0
        %3893 = vmatpush.msra.mxu0 0.0
        %3894 = vmatpush.msra.mxu0 0.0
        %3895 = vmatpush.msra.mxu0 0.0
        %3896 = vmatpush.msra.mxu0 0.0
        %3897 = vmatpush.msra.mxu0 0.0
        %3898 = vmatpush.msra.mxu0 0.0
        %3899 = vmatpush.msra.mxu0 0.0
        %3900 = vmatpush.msra.mxu0 %v3742
        %3901 = vmatpush.msra.mxu0 %v3741
        %3902 = vmatpush.msra.mxu0 %v3740
        %3903 = vmatpush.msra.mxu0 %v3739
        %3904 = vmatpush.msra.mxu0 %v3738
        %3905 = vmatpush.msra.mxu0 %v3200
        %3906 = vmatpush.msra.mxu0 %v3199
        %3907 = vmatpush.msra.mxu0 %v3198
        %3908 = vmatpush.msra.mxu0 %v3197
        %3909 = vmatmul.f32.gmra.mxu0 %v3228
        %v3910 = vpop.f32.mrf.mxu0
        %v3911 = vadd.f32 %v3882, %v3910
        %3912 = vmatmul.f32.gmra.mxu0 %v3231
        %v3913 = vpop.f32.mrf.mxu0
        %v3914 = vadd.f32 %v3885, %v3913
        %3915 = vmatmul.f32.gmra.mxu0 %v3234
        %v3916 = vpop.f32.mrf.mxu0
        %v3917 = vadd.f32 %v3888, %v3916
        %3918 = vmatmul.f32.gmra.mxu0 %v3237
        %v3919 = vpop.f32.mrf.mxu0
        %v3920 = vadd.f32 %v3891, %v3919
        %3921 = vdwg.mxu0
        %3922 = vmatpush.msra.mxu0 %v3197
        %3923 = vmatpush.msra.mxu0 %v3188
        %3924 = vmatpush.msra.mxu0 %v3187
        %3925 = vmatpush.msra.mxu0 %v3186
        %3926 = vmatpush.msra.mxu0 %v3185
        %3927 = vmatpush.msra.mxu0 %v3184
        %3928 = vmatpush.msra.mxu0 %v3175
        %3929 = vmatpush.msra.mxu0 %v3174
        %3930 = vmatpush.msra.mxu0 %v3173
        %3931 = vmatpush.msra.mxu0 %v3172
        %3932 = vmatpush.msra.mxu0 %v3171
        %3933 = vmatpush.msra.mxu0 %v3162
        %3934 = vmatpush.msra.mxu0 %v3161
        %3935 = vmatpush.msra.mxu0 %v3160
        %3936 = vmatpush.msra.mxu0 %v3159
        %3937 = vmatpush.msra.mxu0 %v3158
        %3938 = vmatmul.f32.gmra.mxu0 %v303
        %v3939 = vpop.f32.mrf.mxu0
        %v3940 = vadd.f32 %v3209, %v3939
        %3941 = vmatmul.f32.gmra.mxu0 %v305
        %v3942 = vpop.f32.mrf.mxu0
        %v3943 = vadd.f32 %v3214, %v3942
        %3944 = vmatmul.f32.gmra.mxu0 %v307
        %v3945 = vpop.f32.mrf.mxu0
        %v3946 = vadd.f32 %v3219, %v3945
        %3947 = vmatmul.f32.gmra.mxu0 %v309
        %v3948 = vpop.f32.mrf.mxu0
        %v3949 = vadd.f32 %v3224, %v3948
        %3950 = vdwg.mxu0
        %3951 = vmatpush.msra.mxu0 0.0
        %3952 = vmatpush.msra.mxu0 0.0
        %3953 = vmatpush.msra.mxu0 0.0
        %3954 = vmatpush.msra.mxu0 0.0
        %3955 = vmatpush.msra.mxu0 0.0
        %3956 = vmatpush.msra.mxu0 0.0
        %3957 = vmatpush.msra.mxu0 0.0
        %3958 = vmatpush.msra.mxu0 %v3743
        %3959 = vmatpush.msra.mxu0 %v3742
        %3960 = vmatpush.msra.mxu0 %v3741
        %3961 = vmatpush.msra.mxu0 %v3740
        %3962 = vmatpush.msra.mxu0 %v3739
        %3963 = vmatpush.msra.mxu0 %v3201
        %3964 = vmatpush.msra.mxu0 %v3200
        %3965 = vmatpush.msra.mxu0 %v3199
        %3966 = vmatpush.msra.mxu0 %v3198
        %3967 = vmatmul.f32.gmra.mxu0 %v3228
        %v3968 = vpop.f32.mrf.mxu0
        %v3969 = vadd.f32 %v3940, %v3968
        %3970 = vmatmul.f32.gmra.mxu0 %v3231
        %v3971 = vpop.f32.mrf.mxu0
        %v3972 = vadd.f32 %v3943, %v3971
        %3973 = vmatmul.f32.gmra.mxu0 %v3234
        %v3974 = vpop.f32.mrf.mxu0
        %v3975 = vadd.f32 %v3946, %v3974
        %3976 = vmatmul.f32.gmra.mxu0 %v3237
        %v3977 = vpop.f32.mrf.mxu0
        %v3978 = vadd.f32 %v3949, %v3977
        %3979 = vdwg.mxu0
        %3980 = vmatpush.msra.mxu0 %v3198
        %3981 = vmatpush.msra.mxu0 %v3189
        %3982 = vmatpush.msra.mxu0 %v3188
        %3983 = vmatpush.msra.mxu0 %v3187
        %3984 = vmatpush.msra.mxu0 %v3186
        %3985 = vmatpush.msra.mxu0 %v3185
        %3986 = vmatpush.msra.mxu0 %v3176
        %3987 = vmatpush.msra.mxu0 %v3175
        %3988 = vmatpush.msra.mxu0 %v3174
        %3989 = vmatpush.msra.mxu0 %v3173
        %3990 = vmatpush.msra.mxu0 %v3172
        %3991 = vmatpush.msra.mxu0 %v3163
        %3992 = vmatpush.msra.mxu0 %v3162
        %3993 = vmatpush.msra.mxu0 %v3161
        %3994 = vmatpush.msra.mxu0 %v3160
        %3995 = vmatpush.msra.mxu0 %v3159
        %3996 = vmatmul.f32.gmra.mxu0 %v303
        %v3997 = vpop.f32.mrf.mxu0
        %v3998 = vadd.f32 %v3209, %v3997
        %3999 = vmatmul.f32.gmra.mxu0 %v305
        %v4000 = vpop.f32.mrf.mxu0
        %v4001 = vadd.f32 %v3214, %v4000
        %4002 = vmatmul.f32.gmra.mxu0 %v307
        %v4003 = vpop.f32.mrf.mxu0
        %v4004 = vadd.f32 %v3219, %v4003
        %4005 = vmatmul.f32.gmra.mxu0 %v309
        %v4006 = vpop.f32.mrf.mxu0
        %v4007 = vadd.f32 %v3224, %v4006
        %4008 = vdwg.mxu0
        %4009 = vmatpush.msra.mxu0 0.0
        %4010 = vmatpush.msra.mxu0 0.0
        %4011 = vmatpush.msra.mxu0 0.0
        %4012 = vmatpush.msra.mxu0 0.0
        %4013 = vmatpush.msra.mxu0 0.0
        %4014 = vmatpush.msra.mxu0 0.0
        %4015 = vmatpush.msra.mxu0 0.0
        %4016 = vmatpush.msra.mxu0 %v3744
        %4017 = vmatpush.msra.mxu0 %v3743
        %4018 = vmatpush.msra.mxu0 %v3742
        %4019 = vmatpush.msra.mxu0 %v3741
        %4020 = vmatpush.msra.mxu0 %v3740
        %4021 = vmatpush.msra.mxu0 %v3202
        %4022 = vmatpush.msra.mxu0 %v3201
        %4023 = vmatpush.msra.mxu0 %v3200
        %4024 = vmatpush.msra.mxu0 %v3199
        %4025 = vmatmul.f32.gmra.mxu0 %v3228
        %v4026 = vpop.f32.mrf.mxu0
        %v4027 = vadd.f32 %v3998, %v4026
        %4028 = vmatmul.f32.gmra.mxu0 %v3231
        %v4029 = vpop.f32.mrf.mxu0
        %v4030 = vadd.f32 %v4001, %v4029
        %4031 = vmatmul.f32.gmra.mxu0 %v3234
        %v4032 = vpop.f32.mrf.mxu0
        %v4033 = vadd.f32 %v4004, %v4032
        %4034 = vmatmul.f32.gmra.mxu0 %v3237
        %v4035 = vpop.f32.mrf.mxu0
        %v4036 = vadd.f32 %v4007, %v4035
        %4037 = vdwg.mxu0
        %4038 = vmatpush.msra.mxu0 %v3199
        %4039 = vmatpush.msra.mxu0 %v3190
        %4040 = vmatpush.msra.mxu0 %v3189
        %4041 = vmatpush.msra.mxu0 %v3188
        %4042 = vmatpush.msra.mxu0 %v3187
        %4043 = vmatpush.msra.mxu0 %v3186
        %4044 = vmatpush.msra.mxu0 %v3177
        %4045 = vmatpush.msra.mxu0 %v3176
        %4046 = vmatpush.msra.mxu0 %v3175
        %4047 = vmatpush.msra.mxu0 %v3174
        %4048 = vmatpush.msra.mxu0 %v3173
        %4049 = vmatpush.msra.mxu0 %v3164
        %4050 = vmatpush.msra.mxu0 %v3163
        %4051 = vmatpush.msra.mxu0 %v3162
        %4052 = vmatpush.msra.mxu0 %v3161
        %4053 = vmatpush.msra.mxu0 %v3160
        %4054 = vmatmul.f32.gmra.mxu0 %v303
        %v4055 = vpop.f32.mrf.mxu0
        %v4056 = vadd.f32 %v3209, %v4055
        %4057 = vmatmul.f32.gmra.mxu0 %v305
        %v4058 = vpop.f32.mrf.mxu0
        %v4059 = vadd.f32 %v3214, %v4058
        %4060 = vmatmul.f32.gmra.mxu0 %v307
        %v4061 = vpop.f32.mrf.mxu0
        %v4062 = vadd.f32 %v3219, %v4061
        %4063 = vmatmul.f32.gmra.mxu0 %v309
        %v4064 = vpop.f32.mrf.mxu0
        %v4065 = vadd.f32 %v3224, %v4064
        %4066 = vdwg.mxu0
        %4067 = vmatpush.msra.mxu0 0.0
        %4068 = vmatpush.msra.mxu0 0.0
        %4069 = vmatpush.msra.mxu0 0.0
        %4070 = vmatpush.msra.mxu0 0.0
        %4071 = vmatpush.msra.mxu0 0.0
        %4072 = vmatpush.msra.mxu0 0.0
        %4073 = vmatpush.msra.mxu0 0.0
        %4074 = vmatpush.msra.mxu0 %v3745
        %4075 = vmatpush.msra.mxu0 %v3744
        %4076 = vmatpush.msra.mxu0 %v3743
        %4077 = vmatpush.msra.mxu0 %v3742
        %4078 = vmatpush.msra.mxu0 %v3741
        %4079 = vmatpush.msra.mxu0 %v3203
        %4080 = vmatpush.msra.mxu0 %v3202
        %4081 = vmatpush.msra.mxu0 %v3201
        %4082 = vmatpush.msra.mxu0 %v3200
        %4083 = vmatmul.f32.gmra.mxu0 %v3228
        %v4084 = vpop.f32.mrf.mxu0
        %v4085 = vadd.f32 %v4056, %v4084
        %4086 = vmatmul.f32.gmra.mxu0 %v3231
        %v4087 = vpop.f32.mrf.mxu0
        %v4088 = vadd.f32 %v4059, %v4087
        %4089 = vmatmul.f32.gmra.mxu0 %v3234
        %v4090 = vpop.f32.mrf.mxu0
        %v4091 = vadd.f32 %v4062, %v4090
        %4092 = vmatmul.f32.gmra.mxu0 %v3237
        %v4093 = vpop.f32.mrf.mxu0
        %v4094 = vadd.f32 %v4065, %v4093
        %4095 = vdwg.mxu0
        %4096 = vmatpush.msra.mxu0 %v3200
        %4097 = vmatpush.msra.mxu0 %v3191
        %4098 = vmatpush.msra.mxu0 %v3190
        %4099 = vmatpush.msra.mxu0 %v3189
        %4100 = vmatpush.msra.mxu0 %v3188
        %4101 = vmatpush.msra.mxu0 %v3187
        %4102 = vmatpush.msra.mxu0 %v3178
        %4103 = vmatpush.msra.mxu0 %v3177
        %4104 = vmatpush.msra.mxu0 %v3176
        %4105 = vmatpush.msra.mxu0 %v3175
        %4106 = vmatpush.msra.mxu0 %v3174
        %4107 = vmatpush.msra.mxu0 %v3165
        %4108 = vmatpush.msra.mxu0 %v3164
        %4109 = vmatpush.msra.mxu0 %v3163
        %4110 = vmatpush.msra.mxu0 %v3162
        %4111 = vmatpush.msra.mxu0 %v3161
        %4112 = vmatmul.f32.gmra.mxu0 %v303
        %v4113 = vpop.f32.mrf.mxu0
        %v4114 = vadd.f32 %v3209, %v4113
        %4115 = vmatmul.f32.gmra.mxu0 %v305
        %v4116 = vpop.f32.mrf.mxu0
        %v4117 = vadd.f32 %v3214, %v4116
        %4118 = vmatmul.f32.gmra.mxu0 %v307
        %v4119 = vpop.f32.mrf.mxu0
        %v4120 = vadd.f32 %v3219, %v4119
        %4121 = vmatmul.f32.gmra.mxu0 %v309
        %v4122 = vpop.f32.mrf.mxu0
        %v4123 = vadd.f32 %v3224, %v4122
        %4124 = vdwg.mxu0
        %4125 = vmatpush.msra.mxu0 0.0
        %4126 = vmatpush.msra.mxu0 0.0
        %4127 = vmatpush.msra.mxu0 0.0
        %4128 = vmatpush.msra.mxu0 0.0
        %4129 = vmatpush.msra.mxu0 0.0
        %4130 = vmatpush.msra.mxu0 0.0
        %4131 = vmatpush.msra.mxu0 0.0
        %4132 = vmatpush.msra.mxu0 %v3746
        %4133 = vmatpush.msra.mxu0 %v3745
        %4134 = vmatpush.msra.mxu0 %v3744
        %4135 = vmatpush.msra.mxu0 %v3743
        %4136 = vmatpush.msra.mxu0 %v3742
        %4137 = vmatpush.msra.mxu0 %v3204
        %4138 = vmatpush.msra.mxu0 %v3203
        %4139 = vmatpush.msra.mxu0 %v3202
        %4140 = vmatpush.msra.mxu0 %v3201
        %4141 = vmatmul.f32.gmra.mxu0 %v3228
        %v4142 = vpop.f32.mrf.mxu0
        %v4143 = vadd.f32 %v4114, %v4142
        %4144 = vmatmul.f32.gmra.mxu0 %v3231
        %v4145 = vpop.f32.mrf.mxu0
        %v4146 = vadd.f32 %v4117, %v4145
        %4147 = vmatmul.f32.gmra.mxu0 %v3234
        %v4148 = vpop.f32.mrf.mxu0
        %v4149 = vadd.f32 %v4120, %v4148
        %4150 = vmatmul.f32.gmra.mxu0 %v3237
        %v4151 = vpop.f32.mrf.mxu0
        %v4152 = vadd.f32 %v4123, %v4151
        %4153 = vdwg.mxu0
        %4154 = vmatpush.msra.mxu0 %v3201
        %4155 = vmatpush.msra.mxu0 %v3192
        %4156 = vmatpush.msra.mxu0 %v3191
        %4157 = vmatpush.msra.mxu0 %v3190
        %4158 = vmatpush.msra.mxu0 %v3189
        %4159 = vmatpush.msra.mxu0 %v3188
        %4160 = vmatpush.msra.mxu0 %v3179
        %4161 = vmatpush.msra.mxu0 %v3178
        %4162 = vmatpush.msra.mxu0 %v3177
        %4163 = vmatpush.msra.mxu0 %v3176
        %4164 = vmatpush.msra.mxu0 %v3175
        %4165 = vmatpush.msra.mxu0 %v3166
        %4166 = vmatpush.msra.mxu0 %v3165
        %4167 = vmatpush.msra.mxu0 %v3164
        %4168 = vmatpush.msra.mxu0 %v3163
        %4169 = vmatpush.msra.mxu0 %v3162
        %4170 = vmatmul.f32.gmra.mxu0 %v303
        %v4171 = vpop.f32.mrf.mxu0
        %v4172 = vadd.f32 %v3209, %v4171
        %4173 = vmatmul.f32.gmra.mxu0 %v305
        %v4174 = vpop.f32.mrf.mxu0
        %v4175 = vadd.f32 %v3214, %v4174
        %4176 = vmatmul.f32.gmra.mxu0 %v307
        %v4177 = vpop.f32.mrf.mxu0
        %v4178 = vadd.f32 %v3219, %v4177
        %4179 = vmatmul.f32.gmra.mxu0 %v309
        %v4180 = vpop.f32.mrf.mxu0
        %v4181 = vadd.f32 %v3224, %v4180
        %4182 = vdwg.mxu0
        %4183 = vmatpush.msra.mxu0 0.0
        %4184 = vmatpush.msra.mxu0 0.0
        %4185 = vmatpush.msra.mxu0 0.0
        %4186 = vmatpush.msra.mxu0 0.0
        %4187 = vmatpush.msra.mxu0 0.0
        %4188 = vmatpush.msra.mxu0 0.0
        %4189 = vmatpush.msra.mxu0 0.0
        %4190 = vmatpush.msra.mxu0 %v3747
        %4191 = vmatpush.msra.mxu0 %v3746
        %4192 = vmatpush.msra.mxu0 %v3745
        %4193 = vmatpush.msra.mxu0 %v3744
        %4194 = vmatpush.msra.mxu0 %v3743
        %4195 = vmatpush.msra.mxu0 %v3205
        %4196 = vmatpush.msra.mxu0 %v3204
        %4197 = vmatpush.msra.mxu0 %v3203
        %4198 = vmatpush.msra.mxu0 %v3202
        %4199 = vmatmul.f32.gmra.mxu0 %v3228
        %v4200 = vpop.f32.mrf.mxu0
        %v4201 = vadd.f32 %v4172, %v4200
        %4202 = vmatmul.f32.gmra.mxu0 %v3231
        %v4203 = vpop.f32.mrf.mxu0
        %v4204 = vadd.f32 %v4175, %v4203
        %4205 = vmatmul.f32.gmra.mxu0 %v3234
        %v4206 = vpop.f32.mrf.mxu0
        %v4207 = vadd.f32 %v4178, %v4206
        %4208 = vmatmul.f32.gmra.mxu0 %v3237
        %v4209 = vpop.f32.mrf.mxu0
        %v4210 = vadd.f32 %v4181, %v4209
        %4211 = vdwg.mxu0
        %v4212 = vmax.f32 %v3795, 0.0
        %v4213 = vmax.f32 %v3853, 0.0
        %v4214 = vmax.f32 %v3911, 0.0
        %v4215 = vmax.f32 %v3969, 0.0
        %v4216 = vmax.f32 %v4027, 0.0
        %v4217 = vmax.f32 %v4085, 0.0
        %v4218 = vmax.f32 %v4143, 0.0
        %v4219 = vmax.f32 %v4201, 0.0
        %v4220 = vmax.f32 %v3798, 0.0
        %v4221 = vmax.f32 %v3856, 0.0
        %v4222 = vmax.f32 %v3914, 0.0
        %v4223 = vmax.f32 %v3972, 0.0
        %v4224 = vmax.f32 %v4030, 0.0
        %v4225 = vmax.f32 %v4088, 0.0
        %v4226 = vmax.f32 %v4146, 0.0
        %v4227 = vmax.f32 %v4204, 0.0
        %v4228 = vmax.f32 %v3801, 0.0
        %v4229 = vmax.f32 %v3859, 0.0
        %v4230 = vmax.f32 %v3917, 0.0
        %v4231 = vmax.f32 %v3975, 0.0
        %v4232 = vmax.f32 %v4033, 0.0
        %v4233 = vmax.f32 %v4091, 0.0
        %v4234 = vmax.f32 %v4149, 0.0
        %v4235 = vmax.f32 %v4207, 0.0
        %v4236 = vmax.f32 %v3804, 0.0
        %v4237 = vmax.f32 %v3862, 0.0
        %v4238 = vmax.f32 %v3920, 0.0
        %v4239 = vmax.f32 %v3978, 0.0
        %v4240 = vmax.f32 %v4036, 0.0
        %v4241 = vmax.f32 %v4094, 0.0
        %v4242 = vmax.f32 %v4152, 0.0
        %v4243 = vmax.f32 %v4210, 0.0
        %v4244 = vmax.f32 %v3703, %v4212
        %v4245 = vmax.f32 %v3704, %v4213
        %v4246 = vmax.f32 %v3705, %v4214
        %v4247 = vmax.f32 %v3706, %v4215
        %v4248 = vmax.f32 %v3707, %v4216
        %v4249 = vmax.f32 %v3708, %v4217
        %v4250 = vmax.f32 %v3709, %v4218
        %v4251 = vmax.f32 %v3710, %v4219
        %v4252 = vmax.f32 %v3711, %v4220
        %v4253 = vmax.f32 %v3712, %v4221
        %v4254 = vmax.f32 %v3713, %v4222
        %v4255 = vmax.f32 %v3714, %v4223
        %v4256 = vmax.f32 %v3715, %v4224
        %v4257 = vmax.f32 %v3716, %v4225
        %v4258 = vmax.f32 %v3717, %v4226
        %v4259 = vmax.f32 %v3718, %v4227
        %v4260 = vmax.f32 %v3719, %v4228
        %v4261 = vmax.f32 %v3720, %v4229
        %v4262 = vmax.f32 %v3721, %v4230
        %v4263 = vmax.f32 %v3722, %v4231
        %v4264 = vmax.f32 %v3723, %v4232
        %v4265 = vmax.f32 %v3724, %v4233
        %v4266 = vmax.f32 %v3725, %v4234
        %v4267 = vmax.f32 %v3726, %v4235
        %v4268 = vmax.f32 %v3727, %v4236
        %v4269 = vmax.f32 %v3728, %v4237
        %v4270 = vmax.f32 %v3729, %v4238
        %v4271 = vmax.f32 %v3730, %v4239
        %v4272 = vmax.f32 %v3731, %v4240
        %v4273 = vmax.f32 %v3732, %v4241
        %v4274 = vmax.f32 %v3733, %v4242
        %v4275 = vmax.f32 %v3734, %v4243
        %v4276 = vmax.f32 %v4244, %v4245
        %v4277 = vmax.f32 %v4252, %v4253
        %v4278 = vmax.f32 %v4260, %v4261
        %v4279 = vmax.f32 %v4268, %v4269
        %v4280 = vadd.f32 %v4276, 0.0
        %v4281 = vadd.f32 %v4277, 0.0
        %v4282 = vadd.f32 %v4278, 0.0
        %v4283 = vadd.f32 %v4279, 0.0
        %v4284 = vmax.f32 %v4246, %v4247
        %v4285 = vmax.f32 %v4254, %v4255
        %v4286 = vmax.f32 %v4262, %v4263
        %v4287 = vmax.f32 %v4270, %v4271
        %v4288 = vadd.f32 %v4280, %v4284
        %v4289 = vadd.f32 %v4281, %v4285
        %v4290 = vadd.f32 %v4282, %v4286
        %v4291 = vadd.f32 %v4283, %v4287
        %v4292 = vmax.f32 %v4248, %v4249
        %v4293 = vmax.f32 %v4256, %v4257
        %v4294 = vmax.f32 %v4264, %v4265
        %v4295 = vmax.f32 %v4272, %v4273
        %v4296 = vadd.f32 %v4288, %v4292
        %v4297 = vadd.f32 %v4289, %v4293
        %v4298 = vadd.f32 %v4290, %v4294
        %v4299 = vadd.f32 %v4291, %v4295
        %v4300 = vmax.f32 %v4250, %v4251
        %v4301 = vmax.f32 %v4258, %v4259
        %v4302 = vmax.f32 %v4266, %v4267
        %v4303 = vmax.f32 %v4274, %v4275
        %v4304 = vadd.f32 %v4296, %v4300
        %v4305 = vadd.f32 %v4297, %v4301
        %v4306 = vadd.f32 %v4298, %v4302
        %v4307 = vadd.f32 %v4299, %v4303
        %s4308 = scalar_lea.vmem [#allocation2], 576
        %v4309 = vld [vmem:[%s4308] sm:$0xff]
        %v4310 = vld [vmem:[%s4308 + $0x8] sm:$0xff]
        %v4311 = vld [vmem:[%s4308 + $0x10] sm:$0xff]
        %v4312 = vld [vmem:[%s4308 + $0x18] sm:$0xff]
        %v4313 = vld [vmem:[%s4308 + $0x20] sm:$0xff]
        %v4314 = vld [vmem:[%s4308 + $0x28] sm:$0xff]
        %v4315 = vld [vmem:[%s4308 + $0x30] sm:$0xff]
        %v4316 = vld [vmem:[%s4308 + $0x38] sm:$0xff]
        %v4317 = vld [vmem:[%s4308 + $0x40] sm:$0xff]
        %v4318 = vld [vmem:[%s4308 + $0x48] sm:$0xff]
        %v4319 = vld [vmem:[%s4308 + $0x50] sm:$0xff]
        %v4320 = vld [vmem:[%s4308 + $0x58] sm:$0xff]
        %4321 = vmatpush.msra.mxu0 %v3736
        %4322 = vmatpush.msra.mxu0 %v3198
        %4323 = vmatpush.msra.mxu0 %v3197
        %4324 = vmatpush.msra.mxu0 %v3196
        %4325 = vmatpush.msra.mxu0 %v3195
        %4326 = vmatpush.msra.mxu0 %v3194
        %4327 = vmatpush.msra.mxu0 %v3185
        %4328 = vmatpush.msra.mxu0 %v3184
        %4329 = vmatpush.msra.mxu0 %v3183
        %4330 = vmatpush.msra.mxu0 %v3182
        %4331 = vmatpush.msra.mxu0 %v3181
        %4332 = vmatpush.msra.mxu0 %v3172
        %4333 = vmatpush.msra.mxu0 %v3171
        %4334 = vmatpush.msra.mxu0 %v3170
        %4335 = vmatpush.msra.mxu0 %v3169
        %4336 = vmatpush.msra.mxu0 %v3168
        %4337 = vmatmul.f32.gmra.mxu0 %v303
        %v4338 = vpop.f32.mrf.mxu0
        %v4339 = vadd.f32 %v3209, %v4338
        %4340 = vmatmul.f32.gmra.mxu0 %v305
        %v4341 = vpop.f32.mrf.mxu0
        %v4342 = vadd.f32 %v3214, %v4341
        %4343 = vmatmul.f32.gmra.mxu0 %v307
        %v4344 = vpop.f32.mrf.mxu0
        %v4345 = vadd.f32 %v3219, %v4344
        %4346 = vmatmul.f32.gmra.mxu0 %v309
        %v4347 = vpop.f32.mrf.mxu0
        %v4348 = vadd.f32 %v3224, %v4347
        %4349 = vdwg.mxu0
        %4350 = vmatpush.msra.mxu0 0.0
        %4351 = vmatpush.msra.mxu0 0.0
        %4352 = vmatpush.msra.mxu0 0.0
        %4353 = vmatpush.msra.mxu0 0.0
        %4354 = vmatpush.msra.mxu0 0.0
        %4355 = vmatpush.msra.mxu0 0.0
        %4356 = vmatpush.msra.mxu0 0.0
        %4357 = vmatpush.msra.mxu0 %v4313
        %4358 = vmatpush.msra.mxu0 %v4312
        %4359 = vmatpush.msra.mxu0 %v4311
        %4360 = vmatpush.msra.mxu0 %v4310
        %4361 = vmatpush.msra.mxu0 %v4309
        %4362 = vmatpush.msra.mxu0 %v3740
        %4363 = vmatpush.msra.mxu0 %v3739
        %4364 = vmatpush.msra.mxu0 %v3738
        %4365 = vmatpush.msra.mxu0 %v3737
        %4366 = vmatmul.f32.gmra.mxu0 %v3228
        %v4367 = vpop.f32.mrf.mxu0
        %v4368 = vadd.f32 %v4339, %v4367
        %4369 = vmatmul.f32.gmra.mxu0 %v3231
        %v4370 = vpop.f32.mrf.mxu0
        %v4371 = vadd.f32 %v4342, %v4370
        %4372 = vmatmul.f32.gmra.mxu0 %v3234
        %v4373 = vpop.f32.mrf.mxu0
        %v4374 = vadd.f32 %v4345, %v4373
        %4375 = vmatmul.f32.gmra.mxu0 %v3237
        %v4376 = vpop.f32.mrf.mxu0
        %v4377 = vadd.f32 %v4348, %v4376
        %4378 = vdwg.mxu0
        %4379 = vmatpush.msra.mxu0 %v3737
        %4380 = vmatpush.msra.mxu0 %v3199
        %4381 = vmatpush.msra.mxu0 %v3198
        %4382 = vmatpush.msra.mxu0 %v3197
        %4383 = vmatpush.msra.mxu0 %v3196
        %4384 = vmatpush.msra.mxu0 %v3195
        %4385 = vmatpush.msra.mxu0 %v3186
        %4386 = vmatpush.msra.mxu0 %v3185
        %4387 = vmatpush.msra.mxu0 %v3184
        %4388 = vmatpush.msra.mxu0 %v3183
        %4389 = vmatpush.msra.mxu0 %v3182
        %4390 = vmatpush.msra.mxu0 %v3173
        %4391 = vmatpush.msra.mxu0 %v3172
        %4392 = vmatpush.msra.mxu0 %v3171
        %4393 = vmatpush.msra.mxu0 %v3170
        %4394 = vmatpush.msra.mxu0 %v3169
        %4395 = vmatmul.f32.gmra.mxu0 %v303
        %v4396 = vpop.f32.mrf.mxu0
        %v4397 = vadd.f32 %v3209, %v4396
        %4398 = vmatmul.f32.gmra.mxu0 %v305
        %v4399 = vpop.f32.mrf.mxu0
        %v4400 = vadd.f32 %v3214, %v4399
        %4401 = vmatmul.f32.gmra.mxu0 %v307
        %v4402 = vpop.f32.mrf.mxu0
        %v4403 = vadd.f32 %v3219, %v4402
        %4404 = vmatmul.f32.gmra.mxu0 %v309
        %v4405 = vpop.f32.mrf.mxu0
        %v4406 = vadd.f32 %v3224, %v4405
        %4407 = vdwg.mxu0
        %4408 = vmatpush.msra.mxu0 0.0
        %4409 = vmatpush.msra.mxu0 0.0
        %4410 = vmatpush.msra.mxu0 0.0
        %4411 = vmatpush.msra.mxu0 0.0
        %4412 = vmatpush.msra.mxu0 0.0
        %4413 = vmatpush.msra.mxu0 0.0
        %4414 = vmatpush.msra.mxu0 0.0
        %4415 = vmatpush.msra.mxu0 %v4314
        %4416 = vmatpush.msra.mxu0 %v4313
        %4417 = vmatpush.msra.mxu0 %v4312
        %4418 = vmatpush.msra.mxu0 %v4311
        %4419 = vmatpush.msra.mxu0 %v4310
        %4420 = vmatpush.msra.mxu0 %v3741
        %4421 = vmatpush.msra.mxu0 %v3740
        %4422 = vmatpush.msra.mxu0 %v3739
        %4423 = vmatpush.msra.mxu0 %v3738
        %4424 = vmatmul.f32.gmra.mxu0 %v3228
        %v4425 = vpop.f32.mrf.mxu0
        %v4426 = vadd.f32 %v4397, %v4425
        %4427 = vmatmul.f32.gmra.mxu0 %v3231
        %v4428 = vpop.f32.mrf.mxu0
        %v4429 = vadd.f32 %v4400, %v4428
        %4430 = vmatmul.f32.gmra.mxu0 %v3234
        %v4431 = vpop.f32.mrf.mxu0
        %v4432 = vadd.f32 %v4403, %v4431
        %4433 = vmatmul.f32.gmra.mxu0 %v3237
        %v4434 = vpop.f32.mrf.mxu0
        %v4435 = vadd.f32 %v4406, %v4434
        %4436 = vdwg.mxu0
        %4437 = vmatpush.msra.mxu0 %v3738
        %4438 = vmatpush.msra.mxu0 %v3200
        %4439 = vmatpush.msra.mxu0 %v3199
        %4440 = vmatpush.msra.mxu0 %v3198
        %4441 = vmatpush.msra.mxu0 %v3197
        %4442 = vmatpush.msra.mxu0 %v3196
        %4443 = vmatpush.msra.mxu0 %v3187
        %4444 = vmatpush.msra.mxu0 %v3186
        %4445 = vmatpush.msra.mxu0 %v3185
        %4446 = vmatpush.msra.mxu0 %v3184
        %4447 = vmatpush.msra.mxu0 %v3183
        %4448 = vmatpush.msra.mxu0 %v3174
        %4449 = vmatpush.msra.mxu0 %v3173
        %4450 = vmatpush.msra.mxu0 %v3172
        %4451 = vmatpush.msra.mxu0 %v3171
        %4452 = vmatpush.msra.mxu0 %v3170
        %4453 = vmatmul.f32.gmra.mxu0 %v303
        %v4454 = vpop.f32.mrf.mxu0
        %v4455 = vadd.f32 %v3209, %v4454
        %4456 = vmatmul.f32.gmra.mxu0 %v305
        %v4457 = vpop.f32.mrf.mxu0
        %v4458 = vadd.f32 %v3214, %v4457
        %4459 = vmatmul.f32.gmra.mxu0 %v307
        %v4460 = vpop.f32.mrf.mxu0
        %v4461 = vadd.f32 %v3219, %v4460
        %4462 = vmatmul.f32.gmra.mxu0 %v309
        %v4463 = vpop.f32.mrf.mxu0
        %v4464 = vadd.f32 %v3224, %v4463
        %4465 = vdwg.mxu0
        %4466 = vmatpush.msra.mxu0 0.0
        %4467 = vmatpush.msra.mxu0 0.0
        %4468 = vmatpush.msra.mxu0 0.0
        %4469 = vmatpush.msra.mxu0 0.0
        %4470 = vmatpush.msra.mxu0 0.0
        %4471 = vmatpush.msra.mxu0 0.0
        %4472 = vmatpush.msra.mxu0 0.0
        %4473 = vmatpush.msra.mxu0 %v4315
        %4474 = vmatpush.msra.mxu0 %v4314
        %4475 = vmatpush.msra.mxu0 %v4313
        %4476 = vmatpush.msra.mxu0 %v4312
        %4477 = vmatpush.msra.mxu0 %v4311
        %4478 = vmatpush.msra.mxu0 %v3742
        %4479 = vmatpush.msra.mxu0 %v3741
        %4480 = vmatpush.msra.mxu0 %v3740
        %4481 = vmatpush.msra.mxu0 %v3739
        %4482 = vmatmul.f32.gmra.mxu0 %v3228
        %v4483 = vpop.f32.mrf.mxu0
        %v4484 = vadd.f32 %v4455, %v4483
        %4485 = vmatmul.f32.gmra.mxu0 %v3231
        %v4486 = vpop.f32.mrf.mxu0
        %v4487 = vadd.f32 %v4458, %v4486
        %4488 = vmatmul.f32.gmra.mxu0 %v3234
        %v4489 = vpop.f32.mrf.mxu0
        %v4490 = vadd.f32 %v4461, %v4489
        %4491 = vmatmul.f32.gmra.mxu0 %v3237
        %v4492 = vpop.f32.mrf.mxu0
        %v4493 = vadd.f32 %v4464, %v4492
        %4494 = vdwg.mxu0
        %4495 = vmatpush.msra.mxu0 %v3739
        %4496 = vmatpush.msra.mxu0 %v3201
        %4497 = vmatpush.msra.mxu0 %v3200
        %4498 = vmatpush.msra.mxu0 %v3199
        %4499 = vmatpush.msra.mxu0 %v3198
        %4500 = vmatpush.msra.mxu0 %v3197
        %4501 = vmatpush.msra.mxu0 %v3188
        %4502 = vmatpush.msra.mxu0 %v3187
        %4503 = vmatpush.msra.mxu0 %v3186
        %4504 = vmatpush.msra.mxu0 %v3185
        %4505 = vmatpush.msra.mxu0 %v3184
        %4506 = vmatpush.msra.mxu0 %v3175
        %4507 = vmatpush.msra.mxu0 %v3174
        %4508 = vmatpush.msra.mxu0 %v3173
        %4509 = vmatpush.msra.mxu0 %v3172
        %4510 = vmatpush.msra.mxu0 %v3171
        %4511 = vmatmul.f32.gmra.mxu0 %v303
        %v4512 = vpop.f32.mrf.mxu0
        %v4513 = vadd.f32 %v3209, %v4512
        %4514 = vmatmul.f32.gmra.mxu0 %v305
        %v4515 = vpop.f32.mrf.mxu0
        %v4516 = vadd.f32 %v3214, %v4515
        %4517 = vmatmul.f32.gmra.mxu0 %v307
        %v4518 = vpop.f32.mrf.mxu0
        %v4519 = vadd.f32 %v3219, %v4518
        %4520 = vmatmul.f32.gmra.mxu0 %v309
        %v4521 = vpop.f32.mrf.mxu0
        %v4522 = vadd.f32 %v3224, %v4521
        %4523 = vdwg.mxu0
        %4524 = vmatpush.msra.mxu0 0.0
        %4525 = vmatpush.msra.mxu0 0.0
        %4526 = vmatpush.msra.mxu0 0.0
        %4527 = vmatpush.msra.mxu0 0.0
        %4528 = vmatpush.msra.mxu0 0.0
        %4529 = vmatpush.msra.mxu0 0.0
        %4530 = vmatpush.msra.mxu0 0.0
        %4531 = vmatpush.msra.mxu0 %v4316
        %4532 = vmatpush.msra.mxu0 %v4315
        %4533 = vmatpush.msra.mxu0 %v4314
        %4534 = vmatpush.msra.mxu0 %v4313
        %4535 = vmatpush.msra.mxu0 %v4312
        %4536 = vmatpush.msra.mxu0 %v3743
        %4537 = vmatpush.msra.mxu0 %v3742
        %4538 = vmatpush.msra.mxu0 %v3741
        %4539 = vmatpush.msra.mxu0 %v3740
        %4540 = vmatmul.f32.gmra.mxu0 %v3228
        %v4541 = vpop.f32.mrf.mxu0
        %v4542 = vadd.f32 %v4513, %v4541
        %4543 = vmatmul.f32.gmra.mxu0 %v3231
        %v4544 = vpop.f32.mrf.mxu0
        %v4545 = vadd.f32 %v4516, %v4544
        %4546 = vmatmul.f32.gmra.mxu0 %v3234
        %v4547 = vpop.f32.mrf.mxu0
        %v4548 = vadd.f32 %v4519, %v4547
        %4549 = vmatmul.f32.gmra.mxu0 %v3237
        %v4550 = vpop.f32.mrf.mxu0
        %v4551 = vadd.f32 %v4522, %v4550
        %4552 = vdwg.mxu0
        %4553 = vmatpush.msra.mxu0 %v3740
        %4554 = vmatpush.msra.mxu0 %v3202
        %4555 = vmatpush.msra.mxu0 %v3201
        %4556 = vmatpush.msra.mxu0 %v3200
        %4557 = vmatpush.msra.mxu0 %v3199
        %4558 = vmatpush.msra.mxu0 %v3198
        %4559 = vmatpush.msra.mxu0 %v3189
        %4560 = vmatpush.msra.mxu0 %v3188
        %4561 = vmatpush.msra.mxu0 %v3187
        %4562 = vmatpush.msra.mxu0 %v3186
        %4563 = vmatpush.msra.mxu0 %v3185
        %4564 = vmatpush.msra.mxu0 %v3176
        %4565 = vmatpush.msra.mxu0 %v3175
        %4566 = vmatpush.msra.mxu0 %v3174
        %4567 = vmatpush.msra.mxu0 %v3173
        %4568 = vmatpush.msra.mxu0 %v3172
        %4569 = vmatmul.f32.gmra.mxu0 %v303
        %v4570 = vpop.f32.mrf.mxu0
        %v4571 = vadd.f32 %v3209, %v4570
        %4572 = vmatmul.f32.gmra.mxu0 %v305
        %v4573 = vpop.f32.mrf.mxu0
        %v4574 = vadd.f32 %v3214, %v4573
        %4575 = vmatmul.f32.gmra.mxu0 %v307
        %v4576 = vpop.f32.mrf.mxu0
        %v4577 = vadd.f32 %v3219, %v4576
        %4578 = vmatmul.f32.gmra.mxu0 %v309
        %v4579 = vpop.f32.mrf.mxu0
        %v4580 = vadd.f32 %v3224, %v4579
        %4581 = vdwg.mxu0
        %4582 = vmatpush.msra.mxu0 0.0
        %4583 = vmatpush.msra.mxu0 0.0
        %4584 = vmatpush.msra.mxu0 0.0
        %4585 = vmatpush.msra.mxu0 0.0
        %4586 = vmatpush.msra.mxu0 0.0
        %4587 = vmatpush.msra.mxu0 0.0
        %4588 = vmatpush.msra.mxu0 0.0
        %4589 = vmatpush.msra.mxu0 %v4317
        %4590 = vmatpush.msra.mxu0 %v4316
        %4591 = vmatpush.msra.mxu0 %v4315
        %4592 = vmatpush.msra.mxu0 %v4314
        %4593 = vmatpush.msra.mxu0 %v4313
        %4594 = vmatpush.msra.mxu0 %v3744
        %4595 = vmatpush.msra.mxu0 %v3743
        %4596 = vmatpush.msra.mxu0 %v3742
        %4597 = vmatpush.msra.mxu0 %v3741
        %4598 = vmatmul.f32.gmra.mxu0 %v3228
        %v4599 = vpop.f32.mrf.mxu0
        %v4600 = vadd.f32 %v4571, %v4599
        %4601 = vmatmul.f32.gmra.mxu0 %v3231
        %v4602 = vpop.f32.mrf.mxu0
        %v4603 = vadd.f32 %v4574, %v4602
        %4604 = vmatmul.f32.gmra.mxu0 %v3234
        %v4605 = vpop.f32.mrf.mxu0
        %v4606 = vadd.f32 %v4577, %v4605
        %4607 = vmatmul.f32.gmra.mxu0 %v3237
        %v4608 = vpop.f32.mrf.mxu0
        %v4609 = vadd.f32 %v4580, %v4608
        %4610 = vdwg.mxu0
        %4611 = vmatpush.msra.mxu0 %v3741
        %4612 = vmatpush.msra.mxu0 %v3203
        %4613 = vmatpush.msra.mxu0 %v3202
        %4614 = vmatpush.msra.mxu0 %v3201
        %4615 = vmatpush.msra.mxu0 %v3200
        %4616 = vmatpush.msra.mxu0 %v3199
        %4617 = vmatpush.msra.mxu0 %v3190
        %4618 = vmatpush.msra.mxu0 %v3189
        %4619 = vmatpush.msra.mxu0 %v3188
        %4620 = vmatpush.msra.mxu0 %v3187
        %4621 = vmatpush.msra.mxu0 %v3186
        %4622 = vmatpush.msra.mxu0 %v3177
        %4623 = vmatpush.msra.mxu0 %v3176
        %4624 = vmatpush.msra.mxu0 %v3175
        %4625 = vmatpush.msra.mxu0 %v3174
        %4626 = vmatpush.msra.mxu0 %v3173
        %4627 = vmatmul.f32.gmra.mxu0 %v303
        %v4628 = vpop.f32.mrf.mxu0
        %v4629 = vadd.f32 %v3209, %v4628
        %4630 = vmatmul.f32.gmra.mxu0 %v305
        %v4631 = vpop.f32.mrf.mxu0
        %v4632 = vadd.f32 %v3214, %v4631
        %4633 = vmatmul.f32.gmra.mxu0 %v307
        %v4634 = vpop.f32.mrf.mxu0
        %v4635 = vadd.f32 %v3219, %v4634
        %4636 = vmatmul.f32.gmra.mxu0 %v309
        %v4637 = vpop.f32.mrf.mxu0
        %v4638 = vadd.f32 %v3224, %v4637
        %4639 = vdwg.mxu0
        %4640 = vmatpush.msra.mxu0 0.0
        %4641 = vmatpush.msra.mxu0 0.0
        %4642 = vmatpush.msra.mxu0 0.0
        %4643 = vmatpush.msra.mxu0 0.0
        %4644 = vmatpush.msra.mxu0 0.0
        %4645 = vmatpush.msra.mxu0 0.0
        %4646 = vmatpush.msra.mxu0 0.0
        %4647 = vmatpush.msra.mxu0 %v4318
        %4648 = vmatpush.msra.mxu0 %v4317
        %4649 = vmatpush.msra.mxu0 %v4316
        %4650 = vmatpush.msra.mxu0 %v4315
        %4651 = vmatpush.msra.mxu0 %v4314
        %4652 = vmatpush.msra.mxu0 %v3745
        %4653 = vmatpush.msra.mxu0 %v3744
        %4654 = vmatpush.msra.mxu0 %v3743
        %4655 = vmatpush.msra.mxu0 %v3742
        %4656 = vmatmul.f32.gmra.mxu0 %v3228
        %v4657 = vpop.f32.mrf.mxu0
        %v4658 = vadd.f32 %v4629, %v4657
        %4659 = vmatmul.f32.gmra.mxu0 %v3231
        %v4660 = vpop.f32.mrf.mxu0
        %v4661 = vadd.f32 %v4632, %v4660
        %4662 = vmatmul.f32.gmra.mxu0 %v3234
        %v4663 = vpop.f32.mrf.mxu0
        %v4664 = vadd.f32 %v4635, %v4663
        %4665 = vmatmul.f32.gmra.mxu0 %v3237
        %v4666 = vpop.f32.mrf.mxu0
        %v4667 = vadd.f32 %v4638, %v4666
        %4668 = vdwg.mxu0
        %4669 = vmatpush.msra.mxu0 %v3742
        %4670 = vmatpush.msra.mxu0 %v3204
        %4671 = vmatpush.msra.mxu0 %v3203
        %4672 = vmatpush.msra.mxu0 %v3202
        %4673 = vmatpush.msra.mxu0 %v3201
        %4674 = vmatpush.msra.mxu0 %v3200
        %4675 = vmatpush.msra.mxu0 %v3191
        %4676 = vmatpush.msra.mxu0 %v3190
        %4677 = vmatpush.msra.mxu0 %v3189
        %4678 = vmatpush.msra.mxu0 %v3188
        %4679 = vmatpush.msra.mxu0 %v3187
        %4680 = vmatpush.msra.mxu0 %v3178
        %4681 = vmatpush.msra.mxu0 %v3177
        %4682 = vmatpush.msra.mxu0 %v3176
        %4683 = vmatpush.msra.mxu0 %v3175
        %4684 = vmatpush.msra.mxu0 %v3174
        %4685 = vmatmul.f32.gmra.mxu0 %v303
        %v4686 = vpop.f32.mrf.mxu0
        %v4687 = vadd.f32 %v3209, %v4686
        %4688 = vmatmul.f32.gmra.mxu0 %v305
        %v4689 = vpop.f32.mrf.mxu0
        %v4690 = vadd.f32 %v3214, %v4689
        %4691 = vmatmul.f32.gmra.mxu0 %v307
        %v4692 = vpop.f32.mrf.mxu0
        %v4693 = vadd.f32 %v3219, %v4692
        %4694 = vmatmul.f32.gmra.mxu0 %v309
        %v4695 = vpop.f32.mrf.mxu0
        %v4696 = vadd.f32 %v3224, %v4695
        %4697 = vdwg.mxu0
        %4698 = vmatpush.msra.mxu0 0.0
        %4699 = vmatpush.msra.mxu0 0.0
        %4700 = vmatpush.msra.mxu0 0.0
        %4701 = vmatpush.msra.mxu0 0.0
        %4702 = vmatpush.msra.mxu0 0.0
        %4703 = vmatpush.msra.mxu0 0.0
        %4704 = vmatpush.msra.mxu0 0.0
        %4705 = vmatpush.msra.mxu0 %v4319
        %4706 = vmatpush.msra.mxu0 %v4318
        %4707 = vmatpush.msra.mxu0 %v4317
        %4708 = vmatpush.msra.mxu0 %v4316
        %4709 = vmatpush.msra.mxu0 %v4315
        %4710 = vmatpush.msra.mxu0 %v3746
        %4711 = vmatpush.msra.mxu0 %v3745
        %4712 = vmatpush.msra.mxu0 %v3744
        %4713 = vmatpush.msra.mxu0 %v3743
        %4714 = vmatmul.f32.gmra.mxu0 %v3228
        %v4715 = vpop.f32.mrf.mxu0
        %v4716 = vadd.f32 %v4687, %v4715
        %4717 = vmatmul.f32.gmra.mxu0 %v3231
        %v4718 = vpop.f32.mrf.mxu0
        %v4719 = vadd.f32 %v4690, %v4718
        %4720 = vmatmul.f32.gmra.mxu0 %v3234
        %v4721 = vpop.f32.mrf.mxu0
        %v4722 = vadd.f32 %v4693, %v4721
        %4723 = vmatmul.f32.gmra.mxu0 %v3237
        %v4724 = vpop.f32.mrf.mxu0
        %v4725 = vadd.f32 %v4696, %v4724
        %4726 = vdwg.mxu0
        %4727 = vmatpush.msra.mxu0 %v3743
        %4728 = vmatpush.msra.mxu0 %v3205
        %4729 = vmatpush.msra.mxu0 %v3204
        %4730 = vmatpush.msra.mxu0 %v3203
        %4731 = vmatpush.msra.mxu0 %v3202
        %4732 = vmatpush.msra.mxu0 %v3201
        %4733 = vmatpush.msra.mxu0 %v3192
        %4734 = vmatpush.msra.mxu0 %v3191
        %4735 = vmatpush.msra.mxu0 %v3190
        %4736 = vmatpush.msra.mxu0 %v3189
        %4737 = vmatpush.msra.mxu0 %v3188
        %4738 = vmatpush.msra.mxu0 %v3179
        %4739 = vmatpush.msra.mxu0 %v3178
        %4740 = vmatpush.msra.mxu0 %v3177
        %4741 = vmatpush.msra.mxu0 %v3176
        %4742 = vmatpush.msra.mxu0 %v3175
        %4743 = vmatmul.f32.gmra.mxu0 %v303
        %v4744 = vpop.f32.mrf.mxu0
        %v4745 = vadd.f32 %v3209, %v4744
        %4746 = vmatmul.f32.gmra.mxu0 %v305
        %v4747 = vpop.f32.mrf.mxu0
        %v4748 = vadd.f32 %v3214, %v4747
        %4749 = vmatmul.f32.gmra.mxu0 %v307
        %v4750 = vpop.f32.mrf.mxu0
        %v4751 = vadd.f32 %v3219, %v4750
        %4752 = vmatmul.f32.gmra.mxu0 %v309
        %v4753 = vpop.f32.mrf.mxu0
        %v4754 = vadd.f32 %v3224, %v4753
        %4755 = vdwg.mxu0
        %4756 = vmatpush.msra.mxu0 0.0
        %4757 = vmatpush.msra.mxu0 0.0
        %4758 = vmatpush.msra.mxu0 0.0
        %4759 = vmatpush.msra.mxu0 0.0
        %4760 = vmatpush.msra.mxu0 0.0
        %4761 = vmatpush.msra.mxu0 0.0
        %4762 = vmatpush.msra.mxu0 0.0
        %4763 = vmatpush.msra.mxu0 %v4320
        %4764 = vmatpush.msra.mxu0 %v4319
        %4765 = vmatpush.msra.mxu0 %v4318
        %4766 = vmatpush.msra.mxu0 %v4317
        %4767 = vmatpush.msra.mxu0 %v4316
        %4768 = vmatpush.msra.mxu0 %v3747
        %4769 = vmatpush.msra.mxu0 %v3746
        %4770 = vmatpush.msra.mxu0 %v3745
        %4771 = vmatpush.msra.mxu0 %v3744
        %4772 = vmatmul.f32.gmra.mxu0 %v3228
        %v4773 = vpop.f32.mrf.mxu0
        %v4774 = vadd.f32 %v4745, %v4773
        %4775 = vmatmul.f32.gmra.mxu0 %v3231
        %v4776 = vpop.f32.mrf.mxu0
        %v4777 = vadd.f32 %v4748, %v4776
        %4778 = vmatmul.f32.gmra.mxu0 %v3234
        %v4779 = vpop.f32.mrf.mxu0
        %v4780 = vadd.f32 %v4751, %v4779
        %4781 = vmatmul.f32.gmra.mxu0 %v3237
        %v4782 = vpop.f32.mrf.mxu0
        %v4783 = vadd.f32 %v4754, %v4782
        %4784 = vdwg.mxu0
        %v4785 = vmax.f32 %v4368, 0.0
        %v4786 = vmax.f32 %v4426, 0.0
        %v4787 = vmax.f32 %v4484, 0.0
        %v4788 = vmax.f32 %v4542, 0.0
        %v4789 = vmax.f32 %v4600, 0.0
        %v4790 = vmax.f32 %v4658, 0.0
        %v4791 = vmax.f32 %v4716, 0.0
        %v4792 = vmax.f32 %v4774, 0.0
        %v4793 = vmax.f32 %v4371, 0.0
        %v4794 = vmax.f32 %v4429, 0.0
        %v4795 = vmax.f32 %v4487, 0.0
        %v4796 = vmax.f32 %v4545, 0.0
        %v4797 = vmax.f32 %v4603, 0.0
        %v4798 = vmax.f32 %v4661, 0.0
        %v4799 = vmax.f32 %v4719, 0.0
        %v4800 = vmax.f32 %v4777, 0.0
        %v4801 = vmax.f32 %v4374, 0.0
        %v4802 = vmax.f32 %v4432, 0.0
        %v4803 = vmax.f32 %v4490, 0.0
        %v4804 = vmax.f32 %v4548, 0.0
        %v4805 = vmax.f32 %v4606, 0.0
        %v4806 = vmax.f32 %v4664, 0.0
        %v4807 = vmax.f32 %v4722, 0.0
        %v4808 = vmax.f32 %v4780, 0.0
        %v4809 = vmax.f32 %v4377, 0.0
        %v4810 = vmax.f32 %v4435, 0.0
        %v4811 = vmax.f32 %v4493, 0.0
        %v4812 = vmax.f32 %v4551, 0.0
        %v4813 = vmax.f32 %v4609, 0.0
        %v4814 = vmax.f32 %v4667, 0.0
        %v4815 = vmax.f32 %v4725, 0.0
        %v4816 = vmax.f32 %v4783, 0.0
        %s4817 = scalar_lea.vmem [#allocation2], 672
        %v4818 = vld [vmem:[%s4817] sm:$0xff]
        %v4819 = vld [vmem:[%s4817 + $0x8] sm:$0xff]
        %v4820 = vld [vmem:[%s4817 + $0x10] sm:$0xff]
        %v4821 = vld [vmem:[%s4817 + $0x18] sm:$0xff]
        %v4822 = vld [vmem:[%s4817 + $0x20] sm:$0xff]
        %v4823 = vld [vmem:[%s4817 + $0x28] sm:$0xff]
        %v4824 = vld [vmem:[%s4817 + $0x30] sm:$0xff]
        %v4825 = vld [vmem:[%s4817 + $0x38] sm:$0xff]
        %v4826 = vld [vmem:[%s4817 + $0x40] sm:$0xff]
        %v4827 = vld [vmem:[%s4817 + $0x48] sm:$0xff]
        %v4828 = vld [vmem:[%s4817 + $0x50] sm:$0xff]
        %v4829 = vld [vmem:[%s4817 + $0x58] sm:$0xff]
        %4830 = vmatpush.msra.mxu0 %v4309
        %4831 = vmatpush.msra.mxu0 %v3740
        %4832 = vmatpush.msra.mxu0 %v3739
        %4833 = vmatpush.msra.mxu0 %v3738
        %4834 = vmatpush.msra.mxu0 %v3737
        %4835 = vmatpush.msra.mxu0 %v3736
        %4836 = vmatpush.msra.mxu0 %v3198
        %4837 = vmatpush.msra.mxu0 %v3197
        %4838 = vmatpush.msra.mxu0 %v3196
        %4839 = vmatpush.msra.mxu0 %v3195
        %4840 = vmatpush.msra.mxu0 %v3194
        %4841 = vmatpush.msra.mxu0 %v3185
        %4842 = vmatpush.msra.mxu0 %v3184
        %4843 = vmatpush.msra.mxu0 %v3183
        %4844 = vmatpush.msra.mxu0 %v3182
        %4845 = vmatpush.msra.mxu0 %v3181
        %4846 = vmatmul.f32.gmra.mxu0 %v303
        %v4847 = vpop.f32.mrf.mxu0
        %v4848 = vadd.f32 %v3209, %v4847
        %4849 = vmatmul.f32.gmra.mxu0 %v305
        %v4850 = vpop.f32.mrf.mxu0
        %v4851 = vadd.f32 %v3214, %v4850
        %4852 = vmatmul.f32.gmra.mxu0 %v307
        %v4853 = vpop.f32.mrf.mxu0
        %v4854 = vadd.f32 %v3219, %v4853
        %4855 = vmatmul.f32.gmra.mxu0 %v309
        %v4856 = vpop.f32.mrf.mxu0
        %v4857 = vadd.f32 %v3224, %v4856
        %4858 = vdwg.mxu0
        %4859 = vmatpush.msra.mxu0 0.0
        %4860 = vmatpush.msra.mxu0 0.0
        %4861 = vmatpush.msra.mxu0 0.0
        %4862 = vmatpush.msra.mxu0 0.0
        %4863 = vmatpush.msra.mxu0 0.0
        %4864 = vmatpush.msra.mxu0 0.0
        %4865 = vmatpush.msra.mxu0 0.0
        %4866 = vmatpush.msra.mxu0 %v4822
        %4867 = vmatpush.msra.mxu0 %v4821
        %4868 = vmatpush.msra.mxu0 %v4820
        %4869 = vmatpush.msra.mxu0 %v4819
        %4870 = vmatpush.msra.mxu0 %v4818
        %4871 = vmatpush.msra.mxu0 %v4313
        %4872 = vmatpush.msra.mxu0 %v4312
        %4873 = vmatpush.msra.mxu0 %v4311
        %4874 = vmatpush.msra.mxu0 %v4310
        %4875 = vmatmul.f32.gmra.mxu0 %v3228
        %v4876 = vpop.f32.mrf.mxu0
        %v4877 = vadd.f32 %v4848, %v4876
        %4878 = vmatmul.f32.gmra.mxu0 %v3231
        %v4879 = vpop.f32.mrf.mxu0
        %v4880 = vadd.f32 %v4851, %v4879
        %4881 = vmatmul.f32.gmra.mxu0 %v3234
        %v4882 = vpop.f32.mrf.mxu0
        %v4883 = vadd.f32 %v4854, %v4882
        %4884 = vmatmul.f32.gmra.mxu0 %v3237
        %v4885 = vpop.f32.mrf.mxu0
        %v4886 = vadd.f32 %v4857, %v4885
        %4887 = vdwg.mxu0
        %4888 = vmatpush.msra.mxu0 %v4310
        %4889 = vmatpush.msra.mxu0 %v3741
        %4890 = vmatpush.msra.mxu0 %v3740
        %4891 = vmatpush.msra.mxu0 %v3739
        %4892 = vmatpush.msra.mxu0 %v3738
        %4893 = vmatpush.msra.mxu0 %v3737
        %4894 = vmatpush.msra.mxu0 %v3199
        %4895 = vmatpush.msra.mxu0 %v3198
        %4896 = vmatpush.msra.mxu0 %v3197
        %4897 = vmatpush.msra.mxu0 %v3196
        %4898 = vmatpush.msra.mxu0 %v3195
        %4899 = vmatpush.msra.mxu0 %v3186
        %4900 = vmatpush.msra.mxu0 %v3185
        %4901 = vmatpush.msra.mxu0 %v3184
        %4902 = vmatpush.msra.mxu0 %v3183
        %4903 = vmatpush.msra.mxu0 %v3182
        %4904 = vmatmul.f32.gmra.mxu0 %v303
        %v4905 = vpop.f32.mrf.mxu0
        %v4906 = vadd.f32 %v3209, %v4905
        %4907 = vmatmul.f32.gmra.mxu0 %v305
        %v4908 = vpop.f32.mrf.mxu0
        %v4909 = vadd.f32 %v3214, %v4908
        %4910 = vmatmul.f32.gmra.mxu0 %v307
        %v4911 = vpop.f32.mrf.mxu0
        %v4912 = vadd.f32 %v3219, %v4911
        %4913 = vmatmul.f32.gmra.mxu0 %v309
        %v4914 = vpop.f32.mrf.mxu0
        %v4915 = vadd.f32 %v3224, %v4914
        %4916 = vdwg.mxu0
        %4917 = vmatpush.msra.mxu0 0.0
        %4918 = vmatpush.msra.mxu0 0.0
        %4919 = vmatpush.msra.mxu0 0.0
        %4920 = vmatpush.msra.mxu0 0.0
        %4921 = vmatpush.msra.mxu0 0.0
        %4922 = vmatpush.msra.mxu0 0.0
        %4923 = vmatpush.msra.mxu0 0.0
        %4924 = vmatpush.msra.mxu0 %v4823
        %4925 = vmatpush.msra.mxu0 %v4822
        %4926 = vmatpush.msra.mxu0 %v4821
        %4927 = vmatpush.msra.mxu0 %v4820
        %4928 = vmatpush.msra.mxu0 %v4819
        %4929 = vmatpush.msra.mxu0 %v4314
        %4930 = vmatpush.msra.mxu0 %v4313
        %4931 = vmatpush.msra.mxu0 %v4312
        %4932 = vmatpush.msra.mxu0 %v4311
        %4933 = vmatmul.f32.gmra.mxu0 %v3228
        %v4934 = vpop.f32.mrf.mxu0
        %v4935 = vadd.f32 %v4906, %v4934
        %4936 = vmatmul.f32.gmra.mxu0 %v3231
        %v4937 = vpop.f32.mrf.mxu0
        %v4938 = vadd.f32 %v4909, %v4937
        %4939 = vmatmul.f32.gmra.mxu0 %v3234
        %v4940 = vpop.f32.mrf.mxu0
        %v4941 = vadd.f32 %v4912, %v4940
        %4942 = vmatmul.f32.gmra.mxu0 %v3237
        %v4943 = vpop.f32.mrf.mxu0
        %v4944 = vadd.f32 %v4915, %v4943
        %4945 = vdwg.mxu0
        %4946 = vmatpush.msra.mxu0 %v4311
        %4947 = vmatpush.msra.mxu0 %v3742
        %4948 = vmatpush.msra.mxu0 %v3741
        %4949 = vmatpush.msra.mxu0 %v3740
        %4950 = vmatpush.msra.mxu0 %v3739
        %4951 = vmatpush.msra.mxu0 %v3738
        %4952 = vmatpush.msra.mxu0 %v3200
        %4953 = vmatpush.msra.mxu0 %v3199
        %4954 = vmatpush.msra.mxu0 %v3198
        %4955 = vmatpush.msra.mxu0 %v3197
        %4956 = vmatpush.msra.mxu0 %v3196
        %4957 = vmatpush.msra.mxu0 %v3187
        %4958 = vmatpush.msra.mxu0 %v3186
        %4959 = vmatpush.msra.mxu0 %v3185
        %4960 = vmatpush.msra.mxu0 %v3184
        %4961 = vmatpush.msra.mxu0 %v3183
        %4962 = vmatmul.f32.gmra.mxu0 %v303
        %v4963 = vpop.f32.mrf.mxu0
        %v4964 = vadd.f32 %v3209, %v4963
        %4965 = vmatmul.f32.gmra.mxu0 %v305
        %v4966 = vpop.f32.mrf.mxu0
        %v4967 = vadd.f32 %v3214, %v4966
        %4968 = vmatmul.f32.gmra.mxu0 %v307
        %v4969 = vpop.f32.mrf.mxu0
        %v4970 = vadd.f32 %v3219, %v4969
        %4971 = vmatmul.f32.gmra.mxu0 %v309
        %v4972 = vpop.f32.mrf.mxu0
        %v4973 = vadd.f32 %v3224, %v4972
        %4974 = vdwg.mxu0
        %4975 = vmatpush.msra.mxu0 0.0
        %4976 = vmatpush.msra.mxu0 0.0
        %4977 = vmatpush.msra.mxu0 0.0
        %4978 = vmatpush.msra.mxu0 0.0
        %4979 = vmatpush.msra.mxu0 0.0
        %4980 = vmatpush.msra.mxu0 0.0
        %4981 = vmatpush.msra.mxu0 0.0
        %4982 = vmatpush.msra.mxu0 %v4824
        %4983 = vmatpush.msra.mxu0 %v4823
        %4984 = vmatpush.msra.mxu0 %v4822
        %4985 = vmatpush.msra.mxu0 %v4821
        %4986 = vmatpush.msra.mxu0 %v4820
        %4987 = vmatpush.msra.mxu0 %v4315
        %4988 = vmatpush.msra.mxu0 %v4314
        %4989 = vmatpush.msra.mxu0 %v4313
        %4990 = vmatpush.msra.mxu0 %v4312
        %4991 = vmatmul.f32.gmra.mxu0 %v3228
        %v4992 = vpop.f32.mrf.mxu0
        %v4993 = vadd.f32 %v4964, %v4992
        %4994 = vmatmul.f32.gmra.mxu0 %v3231
        %v4995 = vpop.f32.mrf.mxu0
        %v4996 = vadd.f32 %v4967, %v4995
        %4997 = vmatmul.f32.gmra.mxu0 %v3234
        %v4998 = vpop.f32.mrf.mxu0
        %v4999 = vadd.f32 %v4970, %v4998
        %5000 = vmatmul.f32.gmra.mxu0 %v3237
        %v5001 = vpop.f32.mrf.mxu0
        %v5002 = vadd.f32 %v4973, %v5001
        %5003 = vdwg.mxu0
        %5004 = vmatpush.msra.mxu0 %v4312
        %5005 = vmatpush.msra.mxu0 %v3743
        %5006 = vmatpush.msra.mxu0 %v3742
        %5007 = vmatpush.msra.mxu0 %v3741
        %5008 = vmatpush.msra.mxu0 %v3740
        %5009 = vmatpush.msra.mxu0 %v3739
        %5010 = vmatpush.msra.mxu0 %v3201
        %5011 = vmatpush.msra.mxu0 %v3200
        %5012 = vmatpush.msra.mxu0 %v3199
        %5013 = vmatpush.msra.mxu0 %v3198
        %5014 = vmatpush.msra.mxu0 %v3197
        %5015 = vmatpush.msra.mxu0 %v3188
        %5016 = vmatpush.msra.mxu0 %v3187
        %5017 = vmatpush.msra.mxu0 %v3186
        %5018 = vmatpush.msra.mxu0 %v3185
        %5019 = vmatpush.msra.mxu0 %v3184
        %5020 = vmatmul.f32.gmra.mxu0 %v303
        %v5021 = vpop.f32.mrf.mxu0
        %v5022 = vadd.f32 %v3209, %v5021
        %5023 = vmatmul.f32.gmra.mxu0 %v305
        %v5024 = vpop.f32.mrf.mxu0
        %v5025 = vadd.f32 %v3214, %v5024
        %5026 = vmatmul.f32.gmra.mxu0 %v307
        %v5027 = vpop.f32.mrf.mxu0
        %v5028 = vadd.f32 %v3219, %v5027
        %5029 = vmatmul.f32.gmra.mxu0 %v309
        %v5030 = vpop.f32.mrf.mxu0
        %v5031 = vadd.f32 %v3224, %v5030
        %5032 = vdwg.mxu0
        %5033 = vmatpush.msra.mxu0 0.0
        %5034 = vmatpush.msra.mxu0 0.0
        %5035 = vmatpush.msra.mxu0 0.0
        %5036 = vmatpush.msra.mxu0 0.0
        %5037 = vmatpush.msra.mxu0 0.0
        %5038 = vmatpush.msra.mxu0 0.0
        %5039 = vmatpush.msra.mxu0 0.0
        %5040 = vmatpush.msra.mxu0 %v4825
        %5041 = vmatpush.msra.mxu0 %v4824
        %5042 = vmatpush.msra.mxu0 %v4823
        %5043 = vmatpush.msra.mxu0 %v4822
        %5044 = vmatpush.msra.mxu0 %v4821
        %5045 = vmatpush.msra.mxu0 %v4316
        %5046 = vmatpush.msra.mxu0 %v4315
        %5047 = vmatpush.msra.mxu0 %v4314
        %5048 = vmatpush.msra.mxu0 %v4313
        %5049 = vmatmul.f32.gmra.mxu0 %v3228
        %v5050 = vpop.f32.mrf.mxu0
        %v5051 = vadd.f32 %v5022, %v5050
        %5052 = vmatmul.f32.gmra.mxu0 %v3231
        %v5053 = vpop.f32.mrf.mxu0
        %v5054 = vadd.f32 %v5025, %v5053
        %5055 = vmatmul.f32.gmra.mxu0 %v3234
        %v5056 = vpop.f32.mrf.mxu0
        %v5057 = vadd.f32 %v5028, %v5056
        %5058 = vmatmul.f32.gmra.mxu0 %v3237
        %v5059 = vpop.f32.mrf.mxu0
        %v5060 = vadd.f32 %v5031, %v5059
        %5061 = vdwg.mxu0
        %5062 = vmatpush.msra.mxu0 %v4313
        %5063 = vmatpush.msra.mxu0 %v3744
        %5064 = vmatpush.msra.mxu0 %v3743
        %5065 = vmatpush.msra.mxu0 %v3742
        %5066 = vmatpush.msra.mxu0 %v3741
        %5067 = vmatpush.msra.mxu0 %v3740
        %5068 = vmatpush.msra.mxu0 %v3202
        %5069 = vmatpush.msra.mxu0 %v3201
        %5070 = vmatpush.msra.mxu0 %v3200
        %5071 = vmatpush.msra.mxu0 %v3199
        %5072 = vmatpush.msra.mxu0 %v3198
        %5073 = vmatpush.msra.mxu0 %v3189
        %5074 = vmatpush.msra.mxu0 %v3188
        %5075 = vmatpush.msra.mxu0 %v3187
        %5076 = vmatpush.msra.mxu0 %v3186
        %5077 = vmatpush.msra.mxu0 %v3185
        %5078 = vmatmul.f32.gmra.mxu0 %v303
        %v5079 = vpop.f32.mrf.mxu0
        %v5080 = vadd.f32 %v3209, %v5079
        %5081 = vmatmul.f32.gmra.mxu0 %v305
        %v5082 = vpop.f32.mrf.mxu0
        %v5083 = vadd.f32 %v3214, %v5082
        %5084 = vmatmul.f32.gmra.mxu0 %v307
        %v5085 = vpop.f32.mrf.mxu0
        %v5086 = vadd.f32 %v3219, %v5085
        %5087 = vmatmul.f32.gmra.mxu0 %v309
        %v5088 = vpop.f32.mrf.mxu0
        %v5089 = vadd.f32 %v3224, %v5088
        %5090 = vdwg.mxu0
        %5091 = vmatpush.msra.mxu0 0.0
        %5092 = vmatpush.msra.mxu0 0.0
        %5093 = vmatpush.msra.mxu0 0.0
        %5094 = vmatpush.msra.mxu0 0.0
        %5095 = vmatpush.msra.mxu0 0.0
        %5096 = vmatpush.msra.mxu0 0.0
        %5097 = vmatpush.msra.mxu0 0.0
        %5098 = vmatpush.msra.mxu0 %v4826
        %5099 = vmatpush.msra.mxu0 %v4825
        %5100 = vmatpush.msra.mxu0 %v4824
        %5101 = vmatpush.msra.mxu0 %v4823
        %5102 = vmatpush.msra.mxu0 %v4822
        %5103 = vmatpush.msra.mxu0 %v4317
        %5104 = vmatpush.msra.mxu0 %v4316
        %5105 = vmatpush.msra.mxu0 %v4315
        %5106 = vmatpush.msra.mxu0 %v4314
        %5107 = vmatmul.f32.gmra.mxu0 %v3228
        %v5108 = vpop.f32.mrf.mxu0
        %v5109 = vadd.f32 %v5080, %v5108
        %5110 = vmatmul.f32.gmra.mxu0 %v3231
        %v5111 = vpop.f32.mrf.mxu0
        %v5112 = vadd.f32 %v5083, %v5111
        %5113 = vmatmul.f32.gmra.mxu0 %v3234
        %v5114 = vpop.f32.mrf.mxu0
        %v5115 = vadd.f32 %v5086, %v5114
        %5116 = vmatmul.f32.gmra.mxu0 %v3237
        %v5117 = vpop.f32.mrf.mxu0
        %v5118 = vadd.f32 %v5089, %v5117
        %5119 = vdwg.mxu0
        %5120 = vmatpush.msra.mxu0 %v4314
        %5121 = vmatpush.msra.mxu0 %v3745
        %5122 = vmatpush.msra.mxu0 %v3744
        %5123 = vmatpush.msra.mxu0 %v3743
        %5124 = vmatpush.msra.mxu0 %v3742
        %5125 = vmatpush.msra.mxu0 %v3741
        %5126 = vmatpush.msra.mxu0 %v3203
        %5127 = vmatpush.msra.mxu0 %v3202
        %5128 = vmatpush.msra.mxu0 %v3201
        %5129 = vmatpush.msra.mxu0 %v3200
        %5130 = vmatpush.msra.mxu0 %v3199
        %5131 = vmatpush.msra.mxu0 %v3190
        %5132 = vmatpush.msra.mxu0 %v3189
        %5133 = vmatpush.msra.mxu0 %v3188
        %5134 = vmatpush.msra.mxu0 %v3187
        %5135 = vmatpush.msra.mxu0 %v3186
        %5136 = vmatmul.f32.gmra.mxu0 %v303
        %v5137 = vpop.f32.mrf.mxu0
        %v5138 = vadd.f32 %v3209, %v5137
        %5139 = vmatmul.f32.gmra.mxu0 %v305
        %v5140 = vpop.f32.mrf.mxu0
        %v5141 = vadd.f32 %v3214, %v5140
        %5142 = vmatmul.f32.gmra.mxu0 %v307
        %v5143 = vpop.f32.mrf.mxu0
        %v5144 = vadd.f32 %v3219, %v5143
        %5145 = vmatmul.f32.gmra.mxu0 %v309
        %v5146 = vpop.f32.mrf.mxu0
        %v5147 = vadd.f32 %v3224, %v5146
        %5148 = vdwg.mxu0
        %5149 = vmatpush.msra.mxu0 0.0
        %5150 = vmatpush.msra.mxu0 0.0
        %5151 = vmatpush.msra.mxu0 0.0
        %5152 = vmatpush.msra.mxu0 0.0
        %5153 = vmatpush.msra.mxu0 0.0
        %5154 = vmatpush.msra.mxu0 0.0
        %5155 = vmatpush.msra.mxu0 0.0
        %5156 = vmatpush.msra.mxu0 %v4827
        %5157 = vmatpush.msra.mxu0 %v4826
        %5158 = vmatpush.msra.mxu0 %v4825
        %5159 = vmatpush.msra.mxu0 %v4824
        %5160 = vmatpush.msra.mxu0 %v4823
        %5161 = vmatpush.msra.mxu0 %v4318
        %5162 = vmatpush.msra.mxu0 %v4317
        %5163 = vmatpush.msra.mxu0 %v4316
        %5164 = vmatpush.msra.mxu0 %v4315
        %5165 = vmatmul.f32.gmra.mxu0 %v3228
        %v5166 = vpop.f32.mrf.mxu0
        %v5167 = vadd.f32 %v5138, %v5166
        %5168 = vmatmul.f32.gmra.mxu0 %v3231
        %v5169 = vpop.f32.mrf.mxu0
        %v5170 = vadd.f32 %v5141, %v5169
        %5171 = vmatmul.f32.gmra.mxu0 %v3234
        %v5172 = vpop.f32.mrf.mxu0
        %v5173 = vadd.f32 %v5144, %v5172
        %5174 = vmatmul.f32.gmra.mxu0 %v3237
        %v5175 = vpop.f32.mrf.mxu0
        %v5176 = vadd.f32 %v5147, %v5175
        %5177 = vdwg.mxu0
        %5178 = vmatpush.msra.mxu0 %v4315
        %5179 = vmatpush.msra.mxu0 %v3746
        %5180 = vmatpush.msra.mxu0 %v3745
        %5181 = vmatpush.msra.mxu0 %v3744
        %5182 = vmatpush.msra.mxu0 %v3743
        %5183 = vmatpush.msra.mxu0 %v3742
        %5184 = vmatpush.msra.mxu0 %v3204
        %5185 = vmatpush.msra.mxu0 %v3203
        %5186 = vmatpush.msra.mxu0 %v3202
        %5187 = vmatpush.msra.mxu0 %v3201
        %5188 = vmatpush.msra.mxu0 %v3200
        %5189 = vmatpush.msra.mxu0 %v3191
        %5190 = vmatpush.msra.mxu0 %v3190
        %5191 = vmatpush.msra.mxu0 %v3189
        %5192 = vmatpush.msra.mxu0 %v3188
        %5193 = vmatpush.msra.mxu0 %v3187
        %5194 = vmatmul.f32.gmra.mxu0 %v303
        %v5195 = vpop.f32.mrf.mxu0
        %v5196 = vadd.f32 %v3209, %v5195
        %5197 = vmatmul.f32.gmra.mxu0 %v305
        %v5198 = vpop.f32.mrf.mxu0
        %v5199 = vadd.f32 %v3214, %v5198
        %5200 = vmatmul.f32.gmra.mxu0 %v307
        %v5201 = vpop.f32.mrf.mxu0
        %v5202 = vadd.f32 %v3219, %v5201
        %5203 = vmatmul.f32.gmra.mxu0 %v309
        %v5204 = vpop.f32.mrf.mxu0
        %v5205 = vadd.f32 %v3224, %v5204
        %5206 = vdwg.mxu0
        %5207 = vmatpush.msra.mxu0 0.0
        %5208 = vmatpush.msra.mxu0 0.0
        %5209 = vmatpush.msra.mxu0 0.0
        %5210 = vmatpush.msra.mxu0 0.0
        %5211 = vmatpush.msra.mxu0 0.0
        %5212 = vmatpush.msra.mxu0 0.0
        %5213 = vmatpush.msra.mxu0 0.0
        %5214 = vmatpush.msra.mxu0 %v4828
        %5215 = vmatpush.msra.mxu0 %v4827
        %5216 = vmatpush.msra.mxu0 %v4826
        %5217 = vmatpush.msra.mxu0 %v4825
        %5218 = vmatpush.msra.mxu0 %v4824
        %5219 = vmatpush.msra.mxu0 %v4319
        %5220 = vmatpush.msra.mxu0 %v4318
        %5221 = vmatpush.msra.mxu0 %v4317
        %5222 = vmatpush.msra.mxu0 %v4316
        %5223 = vmatmul.f32.gmra.mxu0 %v3228
        %v5224 = vpop.f32.mrf.mxu0
        %v5225 = vadd.f32 %v5196, %v5224
        %5226 = vmatmul.f32.gmra.mxu0 %v3231
        %v5227 = vpop.f32.mrf.mxu0
        %v5228 = vadd.f32 %v5199, %v5227
        %5229 = vmatmul.f32.gmra.mxu0 %v3234
        %v5230 = vpop.f32.mrf.mxu0
        %v5231 = vadd.f32 %v5202, %v5230
        %5232 = vmatmul.f32.gmra.mxu0 %v3237
        %v5233 = vpop.f32.mrf.mxu0
        %v5234 = vadd.f32 %v5205, %v5233
        %5235 = vdwg.mxu0
        %5236 = vmatpush.msra.mxu0 %v4316
        %5237 = vmatpush.msra.mxu0 %v3747
        %5238 = vmatpush.msra.mxu0 %v3746
        %5239 = vmatpush.msra.mxu0 %v3745
        %5240 = vmatpush.msra.mxu0 %v3744
        %5241 = vmatpush.msra.mxu0 %v3743
        %5242 = vmatpush.msra.mxu0 %v3205
        %5243 = vmatpush.msra.mxu0 %v3204
        %5244 = vmatpush.msra.mxu0 %v3203
        %5245 = vmatpush.msra.mxu0 %v3202
        %5246 = vmatpush.msra.mxu0 %v3201
        %5247 = vmatpush.msra.mxu0 %v3192
        %5248 = vmatpush.msra.mxu0 %v3191
        %5249 = vmatpush.msra.mxu0 %v3190
        %5250 = vmatpush.msra.mxu0 %v3189
        %5251 = vmatpush.msra.mxu0 %v3188
        %5252 = vmatmul.f32.gmra.mxu0 %v303
        %v5253 = vpop.f32.mrf.mxu0
        %v5254 = vadd.f32 %v3209, %v5253
        %5255 = vmatmul.f32.gmra.mxu0 %v305
        %v5256 = vpop.f32.mrf.mxu0
        %v5257 = vadd.f32 %v3214, %v5256
        %5258 = vmatmul.f32.gmra.mxu0 %v307
        %v5259 = vpop.f32.mrf.mxu0
        %v5260 = vadd.f32 %v3219, %v5259
        %5261 = vmatmul.f32.gmra.mxu0 %v309
        %v5262 = vpop.f32.mrf.mxu0
        %v5263 = vadd.f32 %v3224, %v5262
        %5264 = vdwg.mxu0
        %5265 = vmatpush.msra.mxu0 0.0
        %5266 = vmatpush.msra.mxu0 0.0
        %5267 = vmatpush.msra.mxu0 0.0
        %5268 = vmatpush.msra.mxu0 0.0
        %5269 = vmatpush.msra.mxu0 0.0
        %5270 = vmatpush.msra.mxu0 0.0
        %5271 = vmatpush.msra.mxu0 0.0
        %5272 = vmatpush.msra.mxu0 %v4829
        %5273 = vmatpush.msra.mxu0 %v4828
        %5274 = vmatpush.msra.mxu0 %v4827
        %5275 = vmatpush.msra.mxu0 %v4826
        %5276 = vmatpush.msra.mxu0 %v4825
        %5277 = vmatpush.msra.mxu0 %v4320
        %5278 = vmatpush.msra.mxu0 %v4319
        %5279 = vmatpush.msra.mxu0 %v4318
        %5280 = vmatpush.msra.mxu0 %v4317
        %5281 = vmatmul.f32.gmra.mxu0 %v3228
        %v5282 = vpop.f32.mrf.mxu0
        %v5283 = vadd.f32 %v5254, %v5282
        %5284 = vmatmul.f32.gmra.mxu0 %v3231
        %v5285 = vpop.f32.mrf.mxu0
        %v5286 = vadd.f32 %v5257, %v5285
        %5287 = vmatmul.f32.gmra.mxu0 %v3234
        %v5288 = vpop.f32.mrf.mxu0
        %v5289 = vadd.f32 %v5260, %v5288
        %5290 = vmatmul.f32.gmra.mxu0 %v3237
        %v5291 = vpop.f32.mrf.mxu0
        %v5292 = vadd.f32 %v5263, %v5291
        %5293 = vdwg.mxu0
        %v5294 = vmax.f32 %v4877, 0.0
        %v5295 = vmax.f32 %v4935, 0.0
        %v5296 = vmax.f32 %v4993, 0.0
        %v5297 = vmax.f32 %v5051, 0.0
        %v5298 = vmax.f32 %v5109, 0.0
        %v5299 = vmax.f32 %v5167, 0.0
        %v5300 = vmax.f32 %v5225, 0.0
        %v5301 = vmax.f32 %v5283, 0.0
        %v5302 = vmax.f32 %v4880, 0.0
        %v5303 = vmax.f32 %v4938, 0.0
        %v5304 = vmax.f32 %v4996, 0.0
        %v5305 = vmax.f32 %v5054, 0.0
        %v5306 = vmax.f32 %v5112, 0.0
        %v5307 = vmax.f32 %v5170, 0.0
        %v5308 = vmax.f32 %v5228, 0.0
        %v5309 = vmax.f32 %v5286, 0.0
        %v5310 = vmax.f32 %v4883, 0.0
        %v5311 = vmax.f32 %v4941, 0.0
        %v5312 = vmax.f32 %v4999, 0.0
        %v5313 = vmax.f32 %v5057, 0.0
        %v5314 = vmax.f32 %v5115, 0.0
        %v5315 = vmax.f32 %v5173, 0.0
        %v5316 = vmax.f32 %v5231, 0.0
        %v5317 = vmax.f32 %v5289, 0.0
        %v5318 = vmax.f32 %v4886, 0.0
        %v5319 = vmax.f32 %v4944, 0.0
        %v5320 = vmax.f32 %v5002, 0.0
        %v5321 = vmax.f32 %v5060, 0.0
        %v5322 = vmax.f32 %v5118, 0.0
        %v5323 = vmax.f32 %v5176, 0.0
        %v5324 = vmax.f32 %v5234, 0.0
        %v5325 = vmax.f32 %v5292, 0.0
        %v5326 = vmax.f32 %v4785, %v5294
        %v5327 = vmax.f32 %v4786, %v5295
        %v5328 = vmax.f32 %v4787, %v5296
        %v5329 = vmax.f32 %v4788, %v5297
        %v5330 = vmax.f32 %v4789, %v5298
        %v5331 = vmax.f32 %v4790, %v5299
        %v5332 = vmax.f32 %v4791, %v5300
        %v5333 = vmax.f32 %v4792, %v5301
        %v5334 = vmax.f32 %v4793, %v5302
        %v5335 = vmax.f32 %v4794, %v5303
        %v5336 = vmax.f32 %v4795, %v5304
        %v5337 = vmax.f32 %v4796, %v5305
        %v5338 = vmax.f32 %v4797, %v5306
        %v5339 = vmax.f32 %v4798, %v5307
        %v5340 = vmax.f32 %v4799, %v5308
        %v5341 = vmax.f32 %v4800, %v5309
        %v5342 = vmax.f32 %v4801, %v5310
        %v5343 = vmax.f32 %v4802, %v5311
        %v5344 = vmax.f32 %v4803, %v5312
        %v5345 = vmax.f32 %v4804, %v5313
        %v5346 = vmax.f32 %v4805, %v5314
        %v5347 = vmax.f32 %v4806, %v5315
        %v5348 = vmax.f32 %v4807, %v5316
        %v5349 = vmax.f32 %v4808, %v5317
        %v5350 = vmax.f32 %v4809, %v5318
        %v5351 = vmax.f32 %v4810, %v5319
        %v5352 = vmax.f32 %v4811, %v5320
        %v5353 = vmax.f32 %v4812, %v5321
        %v5354 = vmax.f32 %v4813, %v5322
        %v5355 = vmax.f32 %v4814, %v5323
        %v5356 = vmax.f32 %v4815, %v5324
        %v5357 = vmax.f32 %v4816, %v5325
        %v5358 = vmax.f32 %v5326, %v5327
        %v5359 = vmax.f32 %v5334, %v5335
        %v5360 = vmax.f32 %v5342, %v5343
        %v5361 = vmax.f32 %v5350, %v5351
        %v5362 = vadd.f32 %v4304, %v5358
        %v5363 = vadd.f32 %v4305, %v5359
        %v5364 = vadd.f32 %v4306, %v5360
        %v5365 = vadd.f32 %v4307, %v5361
        %v5366 = vmax.f32 %v5328, %v5329
        %v5367 = vmax.f32 %v5336, %v5337
        %v5368 = vmax.f32 %v5344, %v5345
        %v5369 = vmax.f32 %v5352, %v5353
        %v5370 = vadd.f32 %v5362, %v5366
        %v5371 = vadd.f32 %v5363, %v5367
        %v5372 = vadd.f32 %v5364, %v5368
        %v5373 = vadd.f32 %v5365, %v5369
        %v5374 = vmax.f32 %v5330, %v5331
        %v5375 = vmax.f32 %v5338, %v5339
        %v5376 = vmax.f32 %v5346, %v5347
        %v5377 = vmax.f32 %v5354, %v5355
        %v5378 = vadd.f32 %v5370, %v5374
        %v5379 = vadd.f32 %v5371, %v5375
        %v5380 = vadd.f32 %v5372, %v5376
        %v5381 = vadd.f32 %v5373, %v5377
        %v5382 = vmax.f32 %v5332, %v5333
        %v5383 = vmax.f32 %v5340, %v5341
        %v5384 = vmax.f32 %v5348, %v5349
        %v5385 = vmax.f32 %v5356, %v5357
        %v5386 = vadd.f32 %v5378, %v5382
        %v5387 = vadd.f32 %v5379, %v5383
        %v5388 = vadd.f32 %v5380, %v5384
        %v5389 = vadd.f32 %v5381, %v5385
        %s5390 = scalar_lea.vmem [#allocation2], 768
        %v5391 = vld [vmem:[%s5390] sm:$0xff]
        %v5392 = vld [vmem:[%s5390 + $0x8] sm:$0xff]
        %v5393 = vld [vmem:[%s5390 + $0x10] sm:$0xff]
        %v5394 = vld [vmem:[%s5390 + $0x18] sm:$0xff]
        %v5395 = vld [vmem:[%s5390 + $0x20] sm:$0xff]
        %v5396 = vld [vmem:[%s5390 + $0x28] sm:$0xff]
        %v5397 = vld [vmem:[%s5390 + $0x30] sm:$0xff]
        %v5398 = vld [vmem:[%s5390 + $0x38] sm:$0xff]
        %v5399 = vld [vmem:[%s5390 + $0x40] sm:$0xff]
        %v5400 = vld [vmem:[%s5390 + $0x48] sm:$0xff]
        %v5401 = vld [vmem:[%s5390 + $0x50] sm:$0xff]
        %v5402 = vld [vmem:[%s5390 + $0x58] sm:$0xff]
        %5403 = vmatpush.msra.mxu0 %v4818
        %5404 = vmatpush.msra.mxu0 %v4313
        %5405 = vmatpush.msra.mxu0 %v4312
        %5406 = vmatpush.msra.mxu0 %v4311
        %5407 = vmatpush.msra.mxu0 %v4310
        %5408 = vmatpush.msra.mxu0 %v4309
        %5409 = vmatpush.msra.mxu0 %v3740
        %5410 = vmatpush.msra.mxu0 %v3739
        %5411 = vmatpush.msra.mxu0 %v3738
        %5412 = vmatpush.msra.mxu0 %v3737
        %5413 = vmatpush.msra.mxu0 %v3736
        %5414 = vmatpush.msra.mxu0 %v3198
        %5415 = vmatpush.msra.mxu0 %v3197
        %5416 = vmatpush.msra.mxu0 %v3196
        %5417 = vmatpush.msra.mxu0 %v3195
        %5418 = vmatpush.msra.mxu0 %v3194
        %5419 = vmatmul.f32.gmra.mxu0 %v303
        %v5420 = vpop.f32.mrf.mxu0
        %v5421 = vadd.f32 %v3209, %v5420
        %5422 = vmatmul.f32.gmra.mxu0 %v305
        %v5423 = vpop.f32.mrf.mxu0
        %v5424 = vadd.f32 %v3214, %v5423
        %5425 = vmatmul.f32.gmra.mxu0 %v307
        %v5426 = vpop.f32.mrf.mxu0
        %v5427 = vadd.f32 %v3219, %v5426
        %5428 = vmatmul.f32.gmra.mxu0 %v309
        %v5429 = vpop.f32.mrf.mxu0
        %v5430 = vadd.f32 %v3224, %v5429
        %5431 = vdwg.mxu0
        %5432 = vmatpush.msra.mxu0 0.0
        %5433 = vmatpush.msra.mxu0 0.0
        %5434 = vmatpush.msra.mxu0 0.0
        %5435 = vmatpush.msra.mxu0 0.0
        %5436 = vmatpush.msra.mxu0 0.0
        %5437 = vmatpush.msra.mxu0 0.0
        %5438 = vmatpush.msra.mxu0 0.0
        %5439 = vmatpush.msra.mxu0 %v5395
        %5440 = vmatpush.msra.mxu0 %v5394
        %5441 = vmatpush.msra.mxu0 %v5393
        %5442 = vmatpush.msra.mxu0 %v5392
        %5443 = vmatpush.msra.mxu0 %v5391
        %5444 = vmatpush.msra.mxu0 %v4822
        %5445 = vmatpush.msra.mxu0 %v4821
        %5446 = vmatpush.msra.mxu0 %v4820
        %5447 = vmatpush.msra.mxu0 %v4819
        %5448 = vmatmul.f32.gmra.mxu0 %v3228
        %v5449 = vpop.f32.mrf.mxu0
        %v5450 = vadd.f32 %v5421, %v5449
        %5451 = vmatmul.f32.gmra.mxu0 %v3231
        %v5452 = vpop.f32.mrf.mxu0
        %v5453 = vadd.f32 %v5424, %v5452
        %5454 = vmatmul.f32.gmra.mxu0 %v3234
        %v5455 = vpop.f32.mrf.mxu0
        %v5456 = vadd.f32 %v5427, %v5455
        %5457 = vmatmul.f32.gmra.mxu0 %v3237
        %v5458 = vpop.f32.mrf.mxu0
        %v5459 = vadd.f32 %v5430, %v5458
        %5460 = vdwg.mxu0
        %5461 = vmatpush.msra.mxu0 %v4819
        %5462 = vmatpush.msra.mxu0 %v4314
        %5463 = vmatpush.msra.mxu0 %v4313
        %5464 = vmatpush.msra.mxu0 %v4312
        %5465 = vmatpush.msra.mxu0 %v4311
        %5466 = vmatpush.msra.mxu0 %v4310
        %5467 = vmatpush.msra.mxu0 %v3741
        %5468 = vmatpush.msra.mxu0 %v3740
        %5469 = vmatpush.msra.mxu0 %v3739
        %5470 = vmatpush.msra.mxu0 %v3738
        %5471 = vmatpush.msra.mxu0 %v3737
        %5472 = vmatpush.msra.mxu0 %v3199
        %5473 = vmatpush.msra.mxu0 %v3198
        %5474 = vmatpush.msra.mxu0 %v3197
        %5475 = vmatpush.msra.mxu0 %v3196
        %5476 = vmatpush.msra.mxu0 %v3195
        %5477 = vmatmul.f32.gmra.mxu0 %v303
        %v5478 = vpop.f32.mrf.mxu0
        %v5479 = vadd.f32 %v3209, %v5478
        %5480 = vmatmul.f32.gmra.mxu0 %v305
        %v5481 = vpop.f32.mrf.mxu0
        %v5482 = vadd.f32 %v3214, %v5481
        %5483 = vmatmul.f32.gmra.mxu0 %v307
        %v5484 = vpop.f32.mrf.mxu0
        %v5485 = vadd.f32 %v3219, %v5484
        %5486 = vmatmul.f32.gmra.mxu0 %v309
        %v5487 = vpop.f32.mrf.mxu0
        %v5488 = vadd.f32 %v3224, %v5487
        %5489 = vdwg.mxu0
        %5490 = vmatpush.msra.mxu0 0.0
        %5491 = vmatpush.msra.mxu0 0.0
        %5492 = vmatpush.msra.mxu0 0.0
        %5493 = vmatpush.msra.mxu0 0.0
        %5494 = vmatpush.msra.mxu0 0.0
        %5495 = vmatpush.msra.mxu0 0.0
        %5496 = vmatpush.msra.mxu0 0.0
        %5497 = vmatpush.msra.mxu0 %v5396
        %5498 = vmatpush.msra.mxu0 %v5395
        %5499 = vmatpush.msra.mxu0 %v5394
        %5500 = vmatpush.msra.mxu0 %v5393
        %5501 = vmatpush.msra.mxu0 %v5392
        %5502 = vmatpush.msra.mxu0 %v4823
        %5503 = vmatpush.msra.mxu0 %v4822
        %5504 = vmatpush.msra.mxu0 %v4821
        %5505 = vmatpush.msra.mxu0 %v4820
        %5506 = vmatmul.f32.gmra.mxu0 %v3228
        %v5507 = vpop.f32.mrf.mxu0
        %v5508 = vadd.f32 %v5479, %v5507
        %5509 = vmatmul.f32.gmra.mxu0 %v3231
        %v5510 = vpop.f32.mrf.mxu0
        %v5511 = vadd.f32 %v5482, %v5510
        %5512 = vmatmul.f32.gmra.mxu0 %v3234
        %v5513 = vpop.f32.mrf.mxu0
        %v5514 = vadd.f32 %v5485, %v5513
        %5515 = vmatmul.f32.gmra.mxu0 %v3237
        %v5516 = vpop.f32.mrf.mxu0
        %v5517 = vadd.f32 %v5488, %v5516
        %5518 = vdwg.mxu0
        %5519 = vmatpush.msra.mxu0 %v4820
        %5520 = vmatpush.msra.mxu0 %v4315
        %5521 = vmatpush.msra.mxu0 %v4314
        %5522 = vmatpush.msra.mxu0 %v4313
        %5523 = vmatpush.msra.mxu0 %v4312
        %5524 = vmatpush.msra.mxu0 %v4311
        %5525 = vmatpush.msra.mxu0 %v3742
        %5526 = vmatpush.msra.mxu0 %v3741
        %5527 = vmatpush.msra.mxu0 %v3740
        %5528 = vmatpush.msra.mxu0 %v3739
        %5529 = vmatpush.msra.mxu0 %v3738
        %5530 = vmatpush.msra.mxu0 %v3200
        %5531 = vmatpush.msra.mxu0 %v3199
        %5532 = vmatpush.msra.mxu0 %v3198
        %5533 = vmatpush.msra.mxu0 %v3197
        %5534 = vmatpush.msra.mxu0 %v3196
        %5535 = vmatmul.f32.gmra.mxu0 %v303
        %v5536 = vpop.f32.mrf.mxu0
        %v5537 = vadd.f32 %v3209, %v5536
        %5538 = vmatmul.f32.gmra.mxu0 %v305
        %v5539 = vpop.f32.mrf.mxu0
        %v5540 = vadd.f32 %v3214, %v5539
        %5541 = vmatmul.f32.gmra.mxu0 %v307
        %v5542 = vpop.f32.mrf.mxu0
        %v5543 = vadd.f32 %v3219, %v5542
        %5544 = vmatmul.f32.gmra.mxu0 %v309
        %v5545 = vpop.f32.mrf.mxu0
        %v5546 = vadd.f32 %v3224, %v5545
        %5547 = vdwg.mxu0
        %5548 = vmatpush.msra.mxu0 0.0
        %5549 = vmatpush.msra.mxu0 0.0
        %5550 = vmatpush.msra.mxu0 0.0
        %5551 = vmatpush.msra.mxu0 0.0
        %5552 = vmatpush.msra.mxu0 0.0
        %5553 = vmatpush.msra.mxu0 0.0
        %5554 = vmatpush.msra.mxu0 0.0
        %5555 = vmatpush.msra.mxu0 %v5397
        %5556 = vmatpush.msra.mxu0 %v5396
        %5557 = vmatpush.msra.mxu0 %v5395
        %5558 = vmatpush.msra.mxu0 %v5394
        %5559 = vmatpush.msra.mxu0 %v5393
        %5560 = vmatpush.msra.mxu0 %v4824
        %5561 = vmatpush.msra.mxu0 %v4823
        %5562 = vmatpush.msra.mxu0 %v4822
        %5563 = vmatpush.msra.mxu0 %v4821
        %5564 = vmatmul.f32.gmra.mxu0 %v3228
        %v5565 = vpop.f32.mrf.mxu0
        %v5566 = vadd.f32 %v5537, %v5565
        %5567 = vmatmul.f32.gmra.mxu0 %v3231
        %v5568 = vpop.f32.mrf.mxu0
        %v5569 = vadd.f32 %v5540, %v5568
        %5570 = vmatmul.f32.gmra.mxu0 %v3234
        %v5571 = vpop.f32.mrf.mxu0
        %v5572 = vadd.f32 %v5543, %v5571
        %5573 = vmatmul.f32.gmra.mxu0 %v3237
        %v5574 = vpop.f32.mrf.mxu0
        %v5575 = vadd.f32 %v5546, %v5574
        %5576 = vdwg.mxu0
        %5577 = vmatpush.msra.mxu0 %v4821
        %5578 = vmatpush.msra.mxu0 %v4316
        %5579 = vmatpush.msra.mxu0 %v4315
        %5580 = vmatpush.msra.mxu0 %v4314
        %5581 = vmatpush.msra.mxu0 %v4313
        %5582 = vmatpush.msra.mxu0 %v4312
        %5583 = vmatpush.msra.mxu0 %v3743
        %5584 = vmatpush.msra.mxu0 %v3742
        %5585 = vmatpush.msra.mxu0 %v3741
        %5586 = vmatpush.msra.mxu0 %v3740
        %5587 = vmatpush.msra.mxu0 %v3739
        %5588 = vmatpush.msra.mxu0 %v3201
        %5589 = vmatpush.msra.mxu0 %v3200
        %5590 = vmatpush.msra.mxu0 %v3199
        %5591 = vmatpush.msra.mxu0 %v3198
        %5592 = vmatpush.msra.mxu0 %v3197
        %5593 = vmatmul.f32.gmra.mxu0 %v303
        %v5594 = vpop.f32.mrf.mxu0
        %v5595 = vadd.f32 %v3209, %v5594
        %5596 = vmatmul.f32.gmra.mxu0 %v305
        %v5597 = vpop.f32.mrf.mxu0
        %v5598 = vadd.f32 %v3214, %v5597
        %5599 = vmatmul.f32.gmra.mxu0 %v307
        %v5600 = vpop.f32.mrf.mxu0
        %v5601 = vadd.f32 %v3219, %v5600
        %5602 = vmatmul.f32.gmra.mxu0 %v309
        %v5603 = vpop.f32.mrf.mxu0
        %v5604 = vadd.f32 %v3224, %v5603
        %5605 = vdwg.mxu0
        %5606 = vmatpush.msra.mxu0 0.0
        %5607 = vmatpush.msra.mxu0 0.0
        %5608 = vmatpush.msra.mxu0 0.0
        %5609 = vmatpush.msra.mxu0 0.0
        %5610 = vmatpush.msra.mxu0 0.0
        %5611 = vmatpush.msra.mxu0 0.0
        %5612 = vmatpush.msra.mxu0 0.0
        %5613 = vmatpush.msra.mxu0 %v5398
        %5614 = vmatpush.msra.mxu0 %v5397
        %5615 = vmatpush.msra.mxu0 %v5396
        %5616 = vmatpush.msra.mxu0 %v5395
        %5617 = vmatpush.msra.mxu0 %v5394
        %5618 = vmatpush.msra.mxu0 %v4825
        %5619 = vmatpush.msra.mxu0 %v4824
        %5620 = vmatpush.msra.mxu0 %v4823
        %5621 = vmatpush.msra.mxu0 %v4822
        %5622 = vmatmul.f32.gmra.mxu0 %v3228
        %v5623 = vpop.f32.mrf.mxu0
        %v5624 = vadd.f32 %v5595, %v5623
        %5625 = vmatmul.f32.gmra.mxu0 %v3231
        %v5626 = vpop.f32.mrf.mxu0
        %v5627 = vadd.f32 %v5598, %v5626
        %5628 = vmatmul.f32.gmra.mxu0 %v3234
        %v5629 = vpop.f32.mrf.mxu0
        %v5630 = vadd.f32 %v5601, %v5629
        %5631 = vmatmul.f32.gmra.mxu0 %v3237
        %v5632 = vpop.f32.mrf.mxu0
        %v5633 = vadd.f32 %v5604, %v5632
        %5634 = vdwg.mxu0
        %5635 = vmatpush.msra.mxu0 %v4822
        %5636 = vmatpush.msra.mxu0 %v4317
        %5637 = vmatpush.msra.mxu0 %v4316
        %5638 = vmatpush.msra.mxu0 %v4315
        %5639 = vmatpush.msra.mxu0 %v4314
        %5640 = vmatpush.msra.mxu0 %v4313
        %5641 = vmatpush.msra.mxu0 %v3744
        %5642 = vmatpush.msra.mxu0 %v3743
        %5643 = vmatpush.msra.mxu0 %v3742
        %5644 = vmatpush.msra.mxu0 %v3741
        %5645 = vmatpush.msra.mxu0 %v3740
        %5646 = vmatpush.msra.mxu0 %v3202
        %5647 = vmatpush.msra.mxu0 %v3201
        %5648 = vmatpush.msra.mxu0 %v3200
        %5649 = vmatpush.msra.mxu0 %v3199
        %5650 = vmatpush.msra.mxu0 %v3198
        %5651 = vmatmul.f32.gmra.mxu0 %v303
        %v5652 = vpop.f32.mrf.mxu0
        %v5653 = vadd.f32 %v3209, %v5652
        %5654 = vmatmul.f32.gmra.mxu0 %v305
        %v5655 = vpop.f32.mrf.mxu0
        %v5656 = vadd.f32 %v3214, %v5655
        %5657 = vmatmul.f32.gmra.mxu0 %v307
        %v5658 = vpop.f32.mrf.mxu0
        %v5659 = vadd.f32 %v3219, %v5658
        %5660 = vmatmul.f32.gmra.mxu0 %v309
        %v5661 = vpop.f32.mrf.mxu0
        %v5662 = vadd.f32 %v3224, %v5661
        %5663 = vdwg.mxu0
        %5664 = vmatpush.msra.mxu0 0.0
        %5665 = vmatpush.msra.mxu0 0.0
        %5666 = vmatpush.msra.mxu0 0.0
        %5667 = vmatpush.msra.mxu0 0.0
        %5668 = vmatpush.msra.mxu0 0.0
        %5669 = vmatpush.msra.mxu0 0.0
        %5670 = vmatpush.msra.mxu0 0.0
        %5671 = vmatpush.msra.mxu0 %v5399
        %5672 = vmatpush.msra.mxu0 %v5398
        %5673 = vmatpush.msra.mxu0 %v5397
        %5674 = vmatpush.msra.mxu0 %v5396
        %5675 = vmatpush.msra.mxu0 %v5395
        %5676 = vmatpush.msra.mxu0 %v4826
        %5677 = vmatpush.msra.mxu0 %v4825
        %5678 = vmatpush.msra.mxu0 %v4824
        %5679 = vmatpush.msra.mxu0 %v4823
        %5680 = vmatmul.f32.gmra.mxu0 %v3228
        %v5681 = vpop.f32.mrf.mxu0
        %v5682 = vadd.f32 %v5653, %v5681
        %5683 = vmatmul.f32.gmra.mxu0 %v3231
        %v5684 = vpop.f32.mrf.mxu0
        %v5685 = vadd.f32 %v5656, %v5684
        %5686 = vmatmul.f32.gmra.mxu0 %v3234
        %v5687 = vpop.f32.mrf.mxu0
        %v5688 = vadd.f32 %v5659, %v5687
        %5689 = vmatmul.f32.gmra.mxu0 %v3237
        %v5690 = vpop.f32.mrf.mxu0
        %v5691 = vadd.f32 %v5662, %v5690
        %5692 = vdwg.mxu0
        %5693 = vmatpush.msra.mxu0 %v4823
        %5694 = vmatpush.msra.mxu0 %v4318
        %5695 = vmatpush.msra.mxu0 %v4317
        %5696 = vmatpush.msra.mxu0 %v4316
        %5697 = vmatpush.msra.mxu0 %v4315
        %5698 = vmatpush.msra.mxu0 %v4314
        %5699 = vmatpush.msra.mxu0 %v3745
        %5700 = vmatpush.msra.mxu0 %v3744
        %5701 = vmatpush.msra.mxu0 %v3743
        %5702 = vmatpush.msra.mxu0 %v3742
        %5703 = vmatpush.msra.mxu0 %v3741
        %5704 = vmatpush.msra.mxu0 %v3203
        %5705 = vmatpush.msra.mxu0 %v3202
        %5706 = vmatpush.msra.mxu0 %v3201
        %5707 = vmatpush.msra.mxu0 %v3200
        %5708 = vmatpush.msra.mxu0 %v3199
        %5709 = vmatmul.f32.gmra.mxu0 %v303
        %v5710 = vpop.f32.mrf.mxu0
        %v5711 = vadd.f32 %v3209, %v5710
        %5712 = vmatmul.f32.gmra.mxu0 %v305
        %v5713 = vpop.f32.mrf.mxu0
        %v5714 = vadd.f32 %v3214, %v5713
        %5715 = vmatmul.f32.gmra.mxu0 %v307
        %v5716 = vpop.f32.mrf.mxu0
        %v5717 = vadd.f32 %v3219, %v5716
        %5718 = vmatmul.f32.gmra.mxu0 %v309
        %v5719 = vpop.f32.mrf.mxu0
        %v5720 = vadd.f32 %v3224, %v5719
        %5721 = vdwg.mxu0
        %5722 = vmatpush.msra.mxu0 0.0
        %5723 = vmatpush.msra.mxu0 0.0
        %5724 = vmatpush.msra.mxu0 0.0
        %5725 = vmatpush.msra.mxu0 0.0
        %5726 = vmatpush.msra.mxu0 0.0
        %5727 = vmatpush.msra.mxu0 0.0
        %5728 = vmatpush.msra.mxu0 0.0
        %5729 = vmatpush.msra.mxu0 %v5400
        %5730 = vmatpush.msra.mxu0 %v5399
        %5731 = vmatpush.msra.mxu0 %v5398
        %5732 = vmatpush.msra.mxu0 %v5397
        %5733 = vmatpush.msra.mxu0 %v5396
        %5734 = vmatpush.msra.mxu0 %v4827
        %5735 = vmatpush.msra.mxu0 %v4826
        %5736 = vmatpush.msra.mxu0 %v4825
        %5737 = vmatpush.msra.mxu0 %v4824
        %5738 = vmatmul.f32.gmra.mxu0 %v3228
        %v5739 = vpop.f32.mrf.mxu0
        %v5740 = vadd.f32 %v5711, %v5739
        %5741 = vmatmul.f32.gmra.mxu0 %v3231
        %v5742 = vpop.f32.mrf.mxu0
        %v5743 = vadd.f32 %v5714, %v5742
        %5744 = vmatmul.f32.gmra.mxu0 %v3234
        %v5745 = vpop.f32.mrf.mxu0
        %v5746 = vadd.f32 %v5717, %v5745
        %5747 = vmatmul.f32.gmra.mxu0 %v3237
        %v5748 = vpop.f32.mrf.mxu0
        %v5749 = vadd.f32 %v5720, %v5748
        %5750 = vdwg.mxu0
        %5751 = vmatpush.msra.mxu0 %v4824
        %5752 = vmatpush.msra.mxu0 %v4319
        %5753 = vmatpush.msra.mxu0 %v4318
        %5754 = vmatpush.msra.mxu0 %v4317
        %5755 = vmatpush.msra.mxu0 %v4316
        %5756 = vmatpush.msra.mxu0 %v4315
        %5757 = vmatpush.msra.mxu0 %v3746
        %5758 = vmatpush.msra.mxu0 %v3745
        %5759 = vmatpush.msra.mxu0 %v3744
        %5760 = vmatpush.msra.mxu0 %v3743
        %5761 = vmatpush.msra.mxu0 %v3742
        %5762 = vmatpush.msra.mxu0 %v3204
        %5763 = vmatpush.msra.mxu0 %v3203
        %5764 = vmatpush.msra.mxu0 %v3202
        %5765 = vmatpush.msra.mxu0 %v3201
        %5766 = vmatpush.msra.mxu0 %v3200
        %5767 = vmatmul.f32.gmra.mxu0 %v303
        %v5768 = vpop.f32.mrf.mxu0
        %v5769 = vadd.f32 %v3209, %v5768
        %5770 = vmatmul.f32.gmra.mxu0 %v305
        %v5771 = vpop.f32.mrf.mxu0
        %v5772 = vadd.f32 %v3214, %v5771
        %5773 = vmatmul.f32.gmra.mxu0 %v307
        %v5774 = vpop.f32.mrf.mxu0
        %v5775 = vadd.f32 %v3219, %v5774
        %5776 = vmatmul.f32.gmra.mxu0 %v309
        %v5777 = vpop.f32.mrf.mxu0
        %v5778 = vadd.f32 %v3224, %v5777
        %5779 = vdwg.mxu0
        %5780 = vmatpush.msra.mxu0 0.0
        %5781 = vmatpush.msra.mxu0 0.0
        %5782 = vmatpush.msra.mxu0 0.0
        %5783 = vmatpush.msra.mxu0 0.0
        %5784 = vmatpush.msra.mxu0 0.0
        %5785 = vmatpush.msra.mxu0 0.0
        %5786 = vmatpush.msra.mxu0 0.0
        %5787 = vmatpush.msra.mxu0 %v5401
        %5788 = vmatpush.msra.mxu0 %v5400
        %5789 = vmatpush.msra.mxu0 %v5399
        %5790 = vmatpush.msra.mxu0 %v5398
        %5791 = vmatpush.msra.mxu0 %v5397
        %5792 = vmatpush.msra.mxu0 %v4828
        %5793 = vmatpush.msra.mxu0 %v4827
        %5794 = vmatpush.msra.mxu0 %v4826
        %5795 = vmatpush.msra.mxu0 %v4825
        %5796 = vmatmul.f32.gmra.mxu0 %v3228
        %v5797 = vpop.f32.mrf.mxu0
        %v5798 = vadd.f32 %v5769, %v5797
        %5799 = vmatmul.f32.gmra.mxu0 %v3231
        %v5800 = vpop.f32.mrf.mxu0
        %v5801 = vadd.f32 %v5772, %v5800
        %5802 = vmatmul.f32.gmra.mxu0 %v3234
        %v5803 = vpop.f32.mrf.mxu0
        %v5804 = vadd.f32 %v5775, %v5803
        %5805 = vmatmul.f32.gmra.mxu0 %v3237
        %v5806 = vpop.f32.mrf.mxu0
        %v5807 = vadd.f32 %v5778, %v5806
        %5808 = vdwg.mxu0
        %5809 = vmatpush.msra.mxu0 %v4825
        %5810 = vmatpush.msra.mxu0 %v4320
        %5811 = vmatpush.msra.mxu0 %v4319
        %5812 = vmatpush.msra.mxu0 %v4318
        %5813 = vmatpush.msra.mxu0 %v4317
        %5814 = vmatpush.msra.mxu0 %v4316
        %5815 = vmatpush.msra.mxu0 %v3747
        %5816 = vmatpush.msra.mxu0 %v3746
        %5817 = vmatpush.msra.mxu0 %v3745
        %5818 = vmatpush.msra.mxu0 %v3744
        %5819 = vmatpush.msra.mxu0 %v3743
        %5820 = vmatpush.msra.mxu0 %v3205
        %5821 = vmatpush.msra.mxu0 %v3204
        %5822 = vmatpush.msra.mxu0 %v3203
        %5823 = vmatpush.msra.mxu0 %v3202
        %5824 = vmatpush.msra.mxu0 %v3201
        %5825 = vmatmul.f32.gmra.mxu0 %v303
        %v5826 = vpop.f32.mrf.mxu0
        %v5827 = vadd.f32 %v3209, %v5826
        %5828 = vmatmul.f32.gmra.mxu0 %v305
        %v5829 = vpop.f32.mrf.mxu0
        %v5830 = vadd.f32 %v3214, %v5829
        %5831 = vmatmul.f32.gmra.mxu0 %v307
        %v5832 = vpop.f32.mrf.mxu0
        %v5833 = vadd.f32 %v3219, %v5832
        %5834 = vmatmul.f32.gmra.mxu0 %v309
        %v5835 = vpop.f32.mrf.mxu0
        %v5836 = vadd.f32 %v3224, %v5835
        %5837 = vdwg.mxu0
        %5838 = vmatpush.msra.mxu0 0.0
        %5839 = vmatpush.msra.mxu0 0.0
        %5840 = vmatpush.msra.mxu0 0.0
        %5841 = vmatpush.msra.mxu0 0.0
        %5842 = vmatpush.msra.mxu0 0.0
        %5843 = vmatpush.msra.mxu0 0.0
        %5844 = vmatpush.msra.mxu0 0.0
        %5845 = vmatpush.msra.mxu0 %v5402
        %5846 = vmatpush.msra.mxu0 %v5401
        %5847 = vmatpush.msra.mxu0 %v5400
        %5848 = vmatpush.msra.mxu0 %v5399
        %5849 = vmatpush.msra.mxu0 %v5398
        %5850 = vmatpush.msra.mxu0 %v4829
        %5851 = vmatpush.msra.mxu0 %v4828
        %5852 = vmatpush.msra.mxu0 %v4827
        %5853 = vmatpush.msra.mxu0 %v4826
        %5854 = vmatmul.f32.gmra.mxu0 %v3228
        %v5855 = vpop.f32.mrf.mxu0
        %v5856 = vadd.f32 %v5827, %v5855
        %5857 = vmatmul.f32.gmra.mxu0 %v3231
        %v5858 = vpop.f32.mrf.mxu0
        %v5859 = vadd.f32 %v5830, %v5858
        %5860 = vmatmul.f32.gmra.mxu0 %v3234
        %v5861 = vpop.f32.mrf.mxu0
        %v5862 = vadd.f32 %v5833, %v5861
        %5863 = vmatmul.f32.gmra.mxu0 %v3237
        %v5864 = vpop.f32.mrf.mxu0
        %v5865 = vadd.f32 %v5836, %v5864
        %5866 = vdwg.mxu0
        %v5867 = vmax.f32 %v5450, 0.0
        %v5868 = vmax.f32 %v5508, 0.0
        %v5869 = vmax.f32 %v5566, 0.0
        %v5870 = vmax.f32 %v5624, 0.0
        %v5871 = vmax.f32 %v5682, 0.0
        %v5872 = vmax.f32 %v5740, 0.0
        %v5873 = vmax.f32 %v5798, 0.0
        %v5874 = vmax.f32 %v5856, 0.0
        %v5875 = vmax.f32 %v5453, 0.0
        %v5876 = vmax.f32 %v5511, 0.0
        %v5877 = vmax.f32 %v5569, 0.0
        %v5878 = vmax.f32 %v5627, 0.0
        %v5879 = vmax.f32 %v5685, 0.0
        %v5880 = vmax.f32 %v5743, 0.0
        %v5881 = vmax.f32 %v5801, 0.0
        %v5882 = vmax.f32 %v5859, 0.0
        %v5883 = vmax.f32 %v5456, 0.0
        %v5884 = vmax.f32 %v5514, 0.0
        %v5885 = vmax.f32 %v5572, 0.0
        %v5886 = vmax.f32 %v5630, 0.0
        %v5887 = vmax.f32 %v5688, 0.0
        %v5888 = vmax.f32 %v5746, 0.0
        %v5889 = vmax.f32 %v5804, 0.0
        %v5890 = vmax.f32 %v5862, 0.0
        %v5891 = vmax.f32 %v5459, 0.0
        %v5892 = vmax.f32 %v5517, 0.0
        %v5893 = vmax.f32 %v5575, 0.0
        %v5894 = vmax.f32 %v5633, 0.0
        %v5895 = vmax.f32 %v5691, 0.0
        %v5896 = vmax.f32 %v5749, 0.0
        %v5897 = vmax.f32 %v5807, 0.0
        %v5898 = vmax.f32 %v5865, 0.0
        %s5899 = scalar_lea.vmem [#allocation2], 864
        %v5900 = vld [vmem:[%s5899] sm:$0xff]
        %v5901 = vld [vmem:[%s5899 + $0x8] sm:$0xff]
        %v5902 = vld [vmem:[%s5899 + $0x10] sm:$0xff]
        %v5903 = vld [vmem:[%s5899 + $0x18] sm:$0xff]
        %v5904 = vld [vmem:[%s5899 + $0x20] sm:$0xff]
        %v5905 = vld [vmem:[%s5899 + $0x28] sm:$0xff]
        %v5906 = vld [vmem:[%s5899 + $0x30] sm:$0xff]
        %v5907 = vld [vmem:[%s5899 + $0x38] sm:$0xff]
        %v5908 = vld [vmem:[%s5899 + $0x40] sm:$0xff]
        %v5909 = vld [vmem:[%s5899 + $0x48] sm:$0xff]
        %v5910 = vld [vmem:[%s5899 + $0x50] sm:$0xff]
        %v5911 = vld [vmem:[%s5899 + $0x58] sm:$0xff]
        %5912 = vmatpush.msra.mxu0 %v5391
        %5913 = vmatpush.msra.mxu0 %v4822
        %5914 = vmatpush.msra.mxu0 %v4821
        %5915 = vmatpush.msra.mxu0 %v4820
        %5916 = vmatpush.msra.mxu0 %v4819
        %5917 = vmatpush.msra.mxu0 %v4818
        %5918 = vmatpush.msra.mxu0 %v4313
        %5919 = vmatpush.msra.mxu0 %v4312
        %5920 = vmatpush.msra.mxu0 %v4311
        %5921 = vmatpush.msra.mxu0 %v4310
        %5922 = vmatpush.msra.mxu0 %v4309
        %5923 = vmatpush.msra.mxu0 %v3740
        %5924 = vmatpush.msra.mxu0 %v3739
        %5925 = vmatpush.msra.mxu0 %v3738
        %5926 = vmatpush.msra.mxu0 %v3737
        %5927 = vmatpush.msra.mxu0 %v3736
        %5928 = vmatmul.f32.gmra.mxu0 %v303
        %v5929 = vpop.f32.mrf.mxu0
        %v5930 = vadd.f32 %v3209, %v5929
        %5931 = vmatmul.f32.gmra.mxu0 %v305
        %v5932 = vpop.f32.mrf.mxu0
        %v5933 = vadd.f32 %v3214, %v5932
        %5934 = vmatmul.f32.gmra.mxu0 %v307
        %v5935 = vpop.f32.mrf.mxu0
        %v5936 = vadd.f32 %v3219, %v5935
        %5937 = vmatmul.f32.gmra.mxu0 %v309
        %v5938 = vpop.f32.mrf.mxu0
        %v5939 = vadd.f32 %v3224, %v5938
        %5940 = vdwg.mxu0
        %5941 = vmatpush.msra.mxu0 0.0
        %5942 = vmatpush.msra.mxu0 0.0
        %5943 = vmatpush.msra.mxu0 0.0
        %5944 = vmatpush.msra.mxu0 0.0
        %5945 = vmatpush.msra.mxu0 0.0
        %5946 = vmatpush.msra.mxu0 0.0
        %5947 = vmatpush.msra.mxu0 0.0
        %5948 = vmatpush.msra.mxu0 %v5904
        %5949 = vmatpush.msra.mxu0 %v5903
        %5950 = vmatpush.msra.mxu0 %v5902
        %5951 = vmatpush.msra.mxu0 %v5901
        %5952 = vmatpush.msra.mxu0 %v5900
        %5953 = vmatpush.msra.mxu0 %v5395
        %5954 = vmatpush.msra.mxu0 %v5394
        %5955 = vmatpush.msra.mxu0 %v5393
        %5956 = vmatpush.msra.mxu0 %v5392
        %5957 = vmatmul.f32.gmra.mxu0 %v3228
        %v5958 = vpop.f32.mrf.mxu0
        %v5959 = vadd.f32 %v5930, %v5958
        %5960 = vmatmul.f32.gmra.mxu0 %v3231
        %v5961 = vpop.f32.mrf.mxu0
        %v5962 = vadd.f32 %v5933, %v5961
        %5963 = vmatmul.f32.gmra.mxu0 %v3234
        %v5964 = vpop.f32.mrf.mxu0
        %v5965 = vadd.f32 %v5936, %v5964
        %5966 = vmatmul.f32.gmra.mxu0 %v3237
        %v5967 = vpop.f32.mrf.mxu0
        %v5968 = vadd.f32 %v5939, %v5967
        %5969 = vdwg.mxu0
        %5970 = vmatpush.msra.mxu0 %v5392
        %5971 = vmatpush.msra.mxu0 %v4823
        %5972 = vmatpush.msra.mxu0 %v4822
        %5973 = vmatpush.msra.mxu0 %v4821
        %5974 = vmatpush.msra.mxu0 %v4820
        %5975 = vmatpush.msra.mxu0 %v4819
        %5976 = vmatpush.msra.mxu0 %v4314
        %5977 = vmatpush.msra.mxu0 %v4313
        %5978 = vmatpush.msra.mxu0 %v4312
        %5979 = vmatpush.msra.mxu0 %v4311
        %5980 = vmatpush.msra.mxu0 %v4310
        %5981 = vmatpush.msra.mxu0 %v3741
        %5982 = vmatpush.msra.mxu0 %v3740
        %5983 = vmatpush.msra.mxu0 %v3739
        %5984 = vmatpush.msra.mxu0 %v3738
        %5985 = vmatpush.msra.mxu0 %v3737
        %5986 = vmatmul.f32.gmra.mxu0 %v303
        %v5987 = vpop.f32.mrf.mxu0
        %v5988 = vadd.f32 %v3209, %v5987
        %5989 = vmatmul.f32.gmra.mxu0 %v305
        %v5990 = vpop.f32.mrf.mxu0
        %v5991 = vadd.f32 %v3214, %v5990
        %5992 = vmatmul.f32.gmra.mxu0 %v307
        %v5993 = vpop.f32.mrf.mxu0
        %v5994 = vadd.f32 %v3219, %v5993
        %5995 = vmatmul.f32.gmra.mxu0 %v309
        %v5996 = vpop.f32.mrf.mxu0
        %v5997 = vadd.f32 %v3224, %v5996
        %5998 = vdwg.mxu0
        %5999 = vmatpush.msra.mxu0 0.0
        %6000 = vmatpush.msra.mxu0 0.0
        %6001 = vmatpush.msra.mxu0 0.0
        %6002 = vmatpush.msra.mxu0 0.0
        %6003 = vmatpush.msra.mxu0 0.0
        %6004 = vmatpush.msra.mxu0 0.0
        %6005 = vmatpush.msra.mxu0 0.0
        %6006 = vmatpush.msra.mxu0 %v5905
        %6007 = vmatpush.msra.mxu0 %v5904
        %6008 = vmatpush.msra.mxu0 %v5903
        %6009 = vmatpush.msra.mxu0 %v5902
        %6010 = vmatpush.msra.mxu0 %v5901
        %6011 = vmatpush.msra.mxu0 %v5396
        %6012 = vmatpush.msra.mxu0 %v5395
        %6013 = vmatpush.msra.mxu0 %v5394
        %6014 = vmatpush.msra.mxu0 %v5393
        %6015 = vmatmul.f32.gmra.mxu0 %v3228
        %v6016 = vpop.f32.mrf.mxu0
        %v6017 = vadd.f32 %v5988, %v6016
        %6018 = vmatmul.f32.gmra.mxu0 %v3231
        %v6019 = vpop.f32.mrf.mxu0
        %v6020 = vadd.f32 %v5991, %v6019
        %6021 = vmatmul.f32.gmra.mxu0 %v3234
        %v6022 = vpop.f32.mrf.mxu0
        %v6023 = vadd.f32 %v5994, %v6022
        %6024 = vmatmul.f32.gmra.mxu0 %v3237
        %v6025 = vpop.f32.mrf.mxu0
        %v6026 = vadd.f32 %v5997, %v6025
        %6027 = vdwg.mxu0
        %6028 = vmatpush.msra.mxu0 %v5393
        %6029 = vmatpush.msra.mxu0 %v4824
        %6030 = vmatpush.msra.mxu0 %v4823
        %6031 = vmatpush.msra.mxu0 %v4822
        %6032 = vmatpush.msra.mxu0 %v4821
        %6033 = vmatpush.msra.mxu0 %v4820
        %6034 = vmatpush.msra.mxu0 %v4315
        %6035 = vmatpush.msra.mxu0 %v4314
        %6036 = vmatpush.msra.mxu0 %v4313
        %6037 = vmatpush.msra.mxu0 %v4312
        %6038 = vmatpush.msra.mxu0 %v4311
        %6039 = vmatpush.msra.mxu0 %v3742
        %6040 = vmatpush.msra.mxu0 %v3741
        %6041 = vmatpush.msra.mxu0 %v3740
        %6042 = vmatpush.msra.mxu0 %v3739
        %6043 = vmatpush.msra.mxu0 %v3738
        %6044 = vmatmul.f32.gmra.mxu0 %v303
        %v6045 = vpop.f32.mrf.mxu0
        %v6046 = vadd.f32 %v3209, %v6045
        %6047 = vmatmul.f32.gmra.mxu0 %v305
        %v6048 = vpop.f32.mrf.mxu0
        %v6049 = vadd.f32 %v3214, %v6048
        %6050 = vmatmul.f32.gmra.mxu0 %v307
        %v6051 = vpop.f32.mrf.mxu0
        %v6052 = vadd.f32 %v3219, %v6051
        %6053 = vmatmul.f32.gmra.mxu0 %v309
        %v6054 = vpop.f32.mrf.mxu0
        %v6055 = vadd.f32 %v3224, %v6054
        %6056 = vdwg.mxu0
        %6057 = vmatpush.msra.mxu0 0.0
        %6058 = vmatpush.msra.mxu0 0.0
        %6059 = vmatpush.msra.mxu0 0.0
        %6060 = vmatpush.msra.mxu0 0.0
        %6061 = vmatpush.msra.mxu0 0.0
        %6062 = vmatpush.msra.mxu0 0.0
        %6063 = vmatpush.msra.mxu0 0.0
        %6064 = vmatpush.msra.mxu0 %v5906
        %6065 = vmatpush.msra.mxu0 %v5905
        %6066 = vmatpush.msra.mxu0 %v5904
        %6067 = vmatpush.msra.mxu0 %v5903
        %6068 = vmatpush.msra.mxu0 %v5902
        %6069 = vmatpush.msra.mxu0 %v5397
        %6070 = vmatpush.msra.mxu0 %v5396
        %6071 = vmatpush.msra.mxu0 %v5395
        %6072 = vmatpush.msra.mxu0 %v5394
        %6073 = vmatmul.f32.gmra.mxu0 %v3228
        %v6074 = vpop.f32.mrf.mxu0
        %v6075 = vadd.f32 %v6046, %v6074
        %6076 = vmatmul.f32.gmra.mxu0 %v3231
        %v6077 = vpop.f32.mrf.mxu0
        %v6078 = vadd.f32 %v6049, %v6077
        %6079 = vmatmul.f32.gmra.mxu0 %v3234
        %v6080 = vpop.f32.mrf.mxu0
        %v6081 = vadd.f32 %v6052, %v6080
        %6082 = vmatmul.f32.gmra.mxu0 %v3237
        %v6083 = vpop.f32.mrf.mxu0
        %v6084 = vadd.f32 %v6055, %v6083
        %6085 = vdwg.mxu0
        %6086 = vmatpush.msra.mxu0 %v5394
        %6087 = vmatpush.msra.mxu0 %v4825
        %6088 = vmatpush.msra.mxu0 %v4824
        %6089 = vmatpush.msra.mxu0 %v4823
        %6090 = vmatpush.msra.mxu0 %v4822
        %6091 = vmatpush.msra.mxu0 %v4821
        %6092 = vmatpush.msra.mxu0 %v4316
        %6093 = vmatpush.msra.mxu0 %v4315
        %6094 = vmatpush.msra.mxu0 %v4314
        %6095 = vmatpush.msra.mxu0 %v4313
        %6096 = vmatpush.msra.mxu0 %v4312
        %6097 = vmatpush.msra.mxu0 %v3743
        %6098 = vmatpush.msra.mxu0 %v3742
        %6099 = vmatpush.msra.mxu0 %v3741
        %6100 = vmatpush.msra.mxu0 %v3740
        %6101 = vmatpush.msra.mxu0 %v3739
        %6102 = vmatmul.f32.gmra.mxu0 %v303
        %v6103 = vpop.f32.mrf.mxu0
        %v6104 = vadd.f32 %v3209, %v6103
        %6105 = vmatmul.f32.gmra.mxu0 %v305
        %v6106 = vpop.f32.mrf.mxu0
        %v6107 = vadd.f32 %v3214, %v6106
        %6108 = vmatmul.f32.gmra.mxu0 %v307
        %v6109 = vpop.f32.mrf.mxu0
        %v6110 = vadd.f32 %v3219, %v6109
        %6111 = vmatmul.f32.gmra.mxu0 %v309
        %v6112 = vpop.f32.mrf.mxu0
        %v6113 = vadd.f32 %v3224, %v6112
        %6114 = vdwg.mxu0
        %6115 = vmatpush.msra.mxu0 0.0
        %6116 = vmatpush.msra.mxu0 0.0
        %6117 = vmatpush.msra.mxu0 0.0
        %6118 = vmatpush.msra.mxu0 0.0
        %6119 = vmatpush.msra.mxu0 0.0
        %6120 = vmatpush.msra.mxu0 0.0
        %6121 = vmatpush.msra.mxu0 0.0
        %6122 = vmatpush.msra.mxu0 %v5907
        %6123 = vmatpush.msra.mxu0 %v5906
        %6124 = vmatpush.msra.mxu0 %v5905
        %6125 = vmatpush.msra.mxu0 %v5904
        %6126 = vmatpush.msra.mxu0 %v5903
        %6127 = vmatpush.msra.mxu0 %v5398
        %6128 = vmatpush.msra.mxu0 %v5397
        %6129 = vmatpush.msra.mxu0 %v5396
        %6130 = vmatpush.msra.mxu0 %v5395
        %6131 = vmatmul.f32.gmra.mxu0 %v3228
        %v6132 = vpop.f32.mrf.mxu0
        %v6133 = vadd.f32 %v6104, %v6132
        %6134 = vmatmul.f32.gmra.mxu0 %v3231
        %v6135 = vpop.f32.mrf.mxu0
        %v6136 = vadd.f32 %v6107, %v6135
        %6137 = vmatmul.f32.gmra.mxu0 %v3234
        %v6138 = vpop.f32.mrf.mxu0
        %v6139 = vadd.f32 %v6110, %v6138
        %6140 = vmatmul.f32.gmra.mxu0 %v3237
        %v6141 = vpop.f32.mrf.mxu0
        %v6142 = vadd.f32 %v6113, %v6141
        %6143 = vdwg.mxu0
        %6144 = vmatpush.msra.mxu0 %v5395
        %6145 = vmatpush.msra.mxu0 %v4826
        %6146 = vmatpush.msra.mxu0 %v4825
        %6147 = vmatpush.msra.mxu0 %v4824
        %6148 = vmatpush.msra.mxu0 %v4823
        %6149 = vmatpush.msra.mxu0 %v4822
        %6150 = vmatpush.msra.mxu0 %v4317
        %6151 = vmatpush.msra.mxu0 %v4316
        %6152 = vmatpush.msra.mxu0 %v4315
        %6153 = vmatpush.msra.mxu0 %v4314
        %6154 = vmatpush.msra.mxu0 %v4313
        %6155 = vmatpush.msra.mxu0 %v3744
        %6156 = vmatpush.msra.mxu0 %v3743
        %6157 = vmatpush.msra.mxu0 %v3742
        %6158 = vmatpush.msra.mxu0 %v3741
        %6159 = vmatpush.msra.mxu0 %v3740
        %6160 = vmatmul.f32.gmra.mxu0 %v303
        %v6161 = vpop.f32.mrf.mxu0
        %v6162 = vadd.f32 %v3209, %v6161
        %6163 = vmatmul.f32.gmra.mxu0 %v305
        %v6164 = vpop.f32.mrf.mxu0
        %v6165 = vadd.f32 %v3214, %v6164
        %6166 = vmatmul.f32.gmra.mxu0 %v307
        %v6167 = vpop.f32.mrf.mxu0
        %v6168 = vadd.f32 %v3219, %v6167
        %6169 = vmatmul.f32.gmra.mxu0 %v309
        %v6170 = vpop.f32.mrf.mxu0
        %v6171 = vadd.f32 %v3224, %v6170
        %6172 = vdwg.mxu0
        %6173 = vmatpush.msra.mxu0 0.0
        %6174 = vmatpush.msra.mxu0 0.0
        %6175 = vmatpush.msra.mxu0 0.0
        %6176 = vmatpush.msra.mxu0 0.0
        %6177 = vmatpush.msra.mxu0 0.0
        %6178 = vmatpush.msra.mxu0 0.0
        %6179 = vmatpush.msra.mxu0 0.0
        %6180 = vmatpush.msra.mxu0 %v5908
        %6181 = vmatpush.msra.mxu0 %v5907
        %6182 = vmatpush.msra.mxu0 %v5906
        %6183 = vmatpush.msra.mxu0 %v5905
        %6184 = vmatpush.msra.mxu0 %v5904
        %6185 = vmatpush.msra.mxu0 %v5399
        %6186 = vmatpush.msra.mxu0 %v5398
        %6187 = vmatpush.msra.mxu0 %v5397
        %6188 = vmatpush.msra.mxu0 %v5396
        %6189 = vmatmul.f32.gmra.mxu0 %v3228
        %v6190 = vpop.f32.mrf.mxu0
        %v6191 = vadd.f32 %v6162, %v6190
        %6192 = vmatmul.f32.gmra.mxu0 %v3231
        %v6193 = vpop.f32.mrf.mxu0
        %v6194 = vadd.f32 %v6165, %v6193
        %6195 = vmatmul.f32.gmra.mxu0 %v3234
        %v6196 = vpop.f32.mrf.mxu0
        %v6197 = vadd.f32 %v6168, %v6196
        %6198 = vmatmul.f32.gmra.mxu0 %v3237
        %v6199 = vpop.f32.mrf.mxu0
        %v6200 = vadd.f32 %v6171, %v6199
        %6201 = vdwg.mxu0
        %6202 = vmatpush.msra.mxu0 %v5396
        %6203 = vmatpush.msra.mxu0 %v4827
        %6204 = vmatpush.msra.mxu0 %v4826
        %6205 = vmatpush.msra.mxu0 %v4825
        %6206 = vmatpush.msra.mxu0 %v4824
        %6207 = vmatpush.msra.mxu0 %v4823
        %6208 = vmatpush.msra.mxu0 %v4318
        %6209 = vmatpush.msra.mxu0 %v4317
        %6210 = vmatpush.msra.mxu0 %v4316
        %6211 = vmatpush.msra.mxu0 %v4315
        %6212 = vmatpush.msra.mxu0 %v4314
        %6213 = vmatpush.msra.mxu0 %v3745
        %6214 = vmatpush.msra.mxu0 %v3744
        %6215 = vmatpush.msra.mxu0 %v3743
        %6216 = vmatpush.msra.mxu0 %v3742
        %6217 = vmatpush.msra.mxu0 %v3741
        %6218 = vmatmul.f32.gmra.mxu0 %v303
        %v6219 = vpop.f32.mrf.mxu0
        %v6220 = vadd.f32 %v3209, %v6219
        %6221 = vmatmul.f32.gmra.mxu0 %v305
        %v6222 = vpop.f32.mrf.mxu0
        %v6223 = vadd.f32 %v3214, %v6222
        %6224 = vmatmul.f32.gmra.mxu0 %v307
        %v6225 = vpop.f32.mrf.mxu0
        %v6226 = vadd.f32 %v3219, %v6225
        %6227 = vmatmul.f32.gmra.mxu0 %v309
        %v6228 = vpop.f32.mrf.mxu0
        %v6229 = vadd.f32 %v3224, %v6228
        %6230 = vdwg.mxu0
        %6231 = vmatpush.msra.mxu0 0.0
        %6232 = vmatpush.msra.mxu0 0.0
        %6233 = vmatpush.msra.mxu0 0.0
        %6234 = vmatpush.msra.mxu0 0.0
        %6235 = vmatpush.msra.mxu0 0.0
        %6236 = vmatpush.msra.mxu0 0.0
        %6237 = vmatpush.msra.mxu0 0.0
        %6238 = vmatpush.msra.mxu0 %v5909
        %6239 = vmatpush.msra.mxu0 %v5908
        %6240 = vmatpush.msra.mxu0 %v5907
        %6241 = vmatpush.msra.mxu0 %v5906
        %6242 = vmatpush.msra.mxu0 %v5905
        %6243 = vmatpush.msra.mxu0 %v5400
        %6244 = vmatpush.msra.mxu0 %v5399
        %6245 = vmatpush.msra.mxu0 %v5398
        %6246 = vmatpush.msra.mxu0 %v5397
        %6247 = vmatmul.f32.gmra.mxu0 %v3228
        %v6248 = vpop.f32.mrf.mxu0
        %v6249 = vadd.f32 %v6220, %v6248
        %6250 = vmatmul.f32.gmra.mxu0 %v3231
        %v6251 = vpop.f32.mrf.mxu0
        %v6252 = vadd.f32 %v6223, %v6251
        %6253 = vmatmul.f32.gmra.mxu0 %v3234
        %v6254 = vpop.f32.mrf.mxu0
        %v6255 = vadd.f32 %v6226, %v6254
        %6256 = vmatmul.f32.gmra.mxu0 %v3237
        %v6257 = vpop.f32.mrf.mxu0
        %v6258 = vadd.f32 %v6229, %v6257
        %6259 = vdwg.mxu0
        %6260 = vmatpush.msra.mxu0 %v5397
        %6261 = vmatpush.msra.mxu0 %v4828
        %6262 = vmatpush.msra.mxu0 %v4827
        %6263 = vmatpush.msra.mxu0 %v4826
        %6264 = vmatpush.msra.mxu0 %v4825
        %6265 = vmatpush.msra.mxu0 %v4824
        %6266 = vmatpush.msra.mxu0 %v4319
        %6267 = vmatpush.msra.mxu0 %v4318
        %6268 = vmatpush.msra.mxu0 %v4317
        %6269 = vmatpush.msra.mxu0 %v4316
        %6270 = vmatpush.msra.mxu0 %v4315
        %6271 = vmatpush.msra.mxu0 %v3746
        %6272 = vmatpush.msra.mxu0 %v3745
        %6273 = vmatpush.msra.mxu0 %v3744
        %6274 = vmatpush.msra.mxu0 %v3743
        %6275 = vmatpush.msra.mxu0 %v3742
        %6276 = vmatmul.f32.gmra.mxu0 %v303
        %v6277 = vpop.f32.mrf.mxu0
        %v6278 = vadd.f32 %v3209, %v6277
        %6279 = vmatmul.f32.gmra.mxu0 %v305
        %v6280 = vpop.f32.mrf.mxu0
        %v6281 = vadd.f32 %v3214, %v6280
        %6282 = vmatmul.f32.gmra.mxu0 %v307
        %v6283 = vpop.f32.mrf.mxu0
        %v6284 = vadd.f32 %v3219, %v6283
        %6285 = vmatmul.f32.gmra.mxu0 %v309
        %v6286 = vpop.f32.mrf.mxu0
        %v6287 = vadd.f32 %v3224, %v6286
        %6288 = vdwg.mxu0
        %6289 = vmatpush.msra.mxu0 0.0
        %6290 = vmatpush.msra.mxu0 0.0
        %6291 = vmatpush.msra.mxu0 0.0
        %6292 = vmatpush.msra.mxu0 0.0
        %6293 = vmatpush.msra.mxu0 0.0
        %6294 = vmatpush.msra.mxu0 0.0
        %6295 = vmatpush.msra.mxu0 0.0
        %6296 = vmatpush.msra.mxu0 %v5910
        %6297 = vmatpush.msra.mxu0 %v5909
        %6298 = vmatpush.msra.mxu0 %v5908
        %6299 = vmatpush.msra.mxu0 %v5907
        %6300 = vmatpush.msra.mxu0 %v5906
        %6301 = vmatpush.msra.mxu0 %v5401
        %6302 = vmatpush.msra.mxu0 %v5400
        %6303 = vmatpush.msra.mxu0 %v5399
        %6304 = vmatpush.msra.mxu0 %v5398
        %6305 = vmatmul.f32.gmra.mxu0 %v3228
        %v6306 = vpop.f32.mrf.mxu0
        %v6307 = vadd.f32 %v6278, %v6306
        %6308 = vmatmul.f32.gmra.mxu0 %v3231
        %v6309 = vpop.f32.mrf.mxu0
        %v6310 = vadd.f32 %v6281, %v6309
        %6311 = vmatmul.f32.gmra.mxu0 %v3234
        %v6312 = vpop.f32.mrf.mxu0
        %v6313 = vadd.f32 %v6284, %v6312
        %6314 = vmatmul.f32.gmra.mxu0 %v3237
        %v6315 = vpop.f32.mrf.mxu0
        %v6316 = vadd.f32 %v6287, %v6315
        %6317 = vdwg.mxu0
        %6318 = vmatpush.msra.mxu0 %v5398
        %6319 = vmatpush.msra.mxu0 %v4829
        %6320 = vmatpush.msra.mxu0 %v4828
        %6321 = vmatpush.msra.mxu0 %v4827
        %6322 = vmatpush.msra.mxu0 %v4826
        %6323 = vmatpush.msra.mxu0 %v4825
        %6324 = vmatpush.msra.mxu0 %v4320
        %6325 = vmatpush.msra.mxu0 %v4319
        %6326 = vmatpush.msra.mxu0 %v4318
        %6327 = vmatpush.msra.mxu0 %v4317
        %6328 = vmatpush.msra.mxu0 %v4316
        %6329 = vmatpush.msra.mxu0 %v3747
        %6330 = vmatpush.msra.mxu0 %v3746
        %6331 = vmatpush.msra.mxu0 %v3745
        %6332 = vmatpush.msra.mxu0 %v3744
        %6333 = vmatpush.msra.mxu0 %v3743
        %6334 = vmatmul.f32.gmra.mxu0 %v303
        %v6335 = vpop.f32.mrf.mxu0
        %v6336 = vadd.f32 %v3209, %v6335
        %6337 = vmatmul.f32.gmra.mxu0 %v305
        %v6338 = vpop.f32.mrf.mxu0
        %v6339 = vadd.f32 %v3214, %v6338
        %6340 = vmatmul.f32.gmra.mxu0 %v307
        %v6341 = vpop.f32.mrf.mxu0
        %v6342 = vadd.f32 %v3219, %v6341
        %6343 = vmatmul.f32.gmra.mxu0 %v309
        %v6344 = vpop.f32.mrf.mxu0
        %v6345 = vadd.f32 %v3224, %v6344
        %6346 = vdwg.mxu0
        %6347 = vmatpush.msra.mxu0 0.0
        %6348 = vmatpush.msra.mxu0 0.0
        %6349 = vmatpush.msra.mxu0 0.0
        %6350 = vmatpush.msra.mxu0 0.0
        %6351 = vmatpush.msra.mxu0 0.0
        %6352 = vmatpush.msra.mxu0 0.0
        %6353 = vmatpush.msra.mxu0 0.0
        %6354 = vmatpush.msra.mxu0 %v5911
        %6355 = vmatpush.msra.mxu0 %v5910
        %6356 = vmatpush.msra.mxu0 %v5909
        %6357 = vmatpush.msra.mxu0 %v5908
        %6358 = vmatpush.msra.mxu0 %v5907
        %6359 = vmatpush.msra.mxu0 %v5402
        %6360 = vmatpush.msra.mxu0 %v5401
        %6361 = vmatpush.msra.mxu0 %v5400
        %6362 = vmatpush.msra.mxu0 %v5399
        %6363 = vmatmul.f32.gmra.mxu0 %v3228
        %v6364 = vpop.f32.mrf.mxu0
        %v6365 = vadd.f32 %v6336, %v6364
        %6366 = vmatmul.f32.gmra.mxu0 %v3231
        %v6367 = vpop.f32.mrf.mxu0
        %v6368 = vadd.f32 %v6339, %v6367
        %6369 = vmatmul.f32.gmra.mxu0 %v3234
        %v6370 = vpop.f32.mrf.mxu0
        %v6371 = vadd.f32 %v6342, %v6370
        %6372 = vmatmul.f32.gmra.mxu0 %v3237
        %v6373 = vpop.f32.mrf.mxu0
        %v6374 = vadd.f32 %v6345, %v6373
        %6375 = vdwg.mxu0
        %v6376 = vmax.f32 %v5959, 0.0
        %v6377 = vmax.f32 %v6017, 0.0
        %v6378 = vmax.f32 %v6075, 0.0
        %v6379 = vmax.f32 %v6133, 0.0
        %v6380 = vmax.f32 %v6191, 0.0
        %v6381 = vmax.f32 %v6249, 0.0
        %v6382 = vmax.f32 %v6307, 0.0
        %v6383 = vmax.f32 %v6365, 0.0
        %v6384 = vmax.f32 %v5962, 0.0
        %v6385 = vmax.f32 %v6020, 0.0
        %v6386 = vmax.f32 %v6078, 0.0
        %v6387 = vmax.f32 %v6136, 0.0
        %v6388 = vmax.f32 %v6194, 0.0
        %v6389 = vmax.f32 %v6252, 0.0
        %v6390 = vmax.f32 %v6310, 0.0
        %v6391 = vmax.f32 %v6368, 0.0
        %v6392 = vmax.f32 %v5965, 0.0
        %v6393 = vmax.f32 %v6023, 0.0
        %v6394 = vmax.f32 %v6081, 0.0
        %v6395 = vmax.f32 %v6139, 0.0
        %v6396 = vmax.f32 %v6197, 0.0
        %v6397 = vmax.f32 %v6255, 0.0
        %v6398 = vmax.f32 %v6313, 0.0
        %v6399 = vmax.f32 %v6371, 0.0
        %v6400 = vmax.f32 %v5968, 0.0
        %v6401 = vmax.f32 %v6026, 0.0
        %v6402 = vmax.f32 %v6084, 0.0
        %v6403 = vmax.f32 %v6142, 0.0
        %v6404 = vmax.f32 %v6200, 0.0
        %v6405 = vmax.f32 %v6258, 0.0
        %v6406 = vmax.f32 %v6316, 0.0
        %v6407 = vmax.f32 %v6374, 0.0
        %v6408 = vmax.f32 %v5867, %v6376
        %v6409 = vmax.f32 %v5868, %v6377
        %v6410 = vmax.f32 %v5869, %v6378
        %v6411 = vmax.f32 %v5870, %v6379
        %v6412 = vmax.f32 %v5871, %v6380
        %v6413 = vmax.f32 %v5872, %v6381
        %v6414 = vmax.f32 %v5873, %v6382
        %v6415 = vmax.f32 %v5874, %v6383
        %v6416 = vmax.f32 %v5875, %v6384
        %v6417 = vmax.f32 %v5876, %v6385
        %v6418 = vmax.f32 %v5877, %v6386
        %v6419 = vmax.f32 %v5878, %v6387
        %v6420 = vmax.f32 %v5879, %v6388
        %v6421 = vmax.f32 %v5880, %v6389
        %v6422 = vmax.f32 %v5881, %v6390
        %v6423 = vmax.f32 %v5882, %v6391
        %v6424 = vmax.f32 %v5883, %v6392
        %v6425 = vmax.f32 %v5884, %v6393
        %v6426 = vmax.f32 %v5885, %v6394
        %v6427 = vmax.f32 %v5886, %v6395
        %v6428 = vmax.f32 %v5887, %v6396
        %v6429 = vmax.f32 %v5888, %v6397
        %v6430 = vmax.f32 %v5889, %v6398
        %v6431 = vmax.f32 %v5890, %v6399
        %v6432 = vmax.f32 %v5891, %v6400
        %v6433 = vmax.f32 %v5892, %v6401
        %v6434 = vmax.f32 %v5893, %v6402
        %v6435 = vmax.f32 %v5894, %v6403
        %v6436 = vmax.f32 %v5895, %v6404
        %v6437 = vmax.f32 %v5896, %v6405
        %v6438 = vmax.f32 %v5897, %v6406
        %v6439 = vmax.f32 %v5898, %v6407
        %v6440 = vmax.f32 %v6408, %v6409
        %v6441 = vmax.f32 %v6416, %v6417
        %v6442 = vmax.f32 %v6424, %v6425
        %v6443 = vmax.f32 %v6432, %v6433
        %v6444 = vadd.f32 %v5386, %v6440
        %v6445 = vadd.f32 %v5387, %v6441
        %v6446 = vadd.f32 %v5388, %v6442
        %v6447 = vadd.f32 %v5389, %v6443
        %v6448 = vmax.f32 %v6410, %v6411
        %v6449 = vmax.f32 %v6418, %v6419
        %v6450 = vmax.f32 %v6426, %v6427
        %v6451 = vmax.f32 %v6434, %v6435
        %v6452 = vadd.f32 %v6444, %v6448
        %v6453 = vadd.f32 %v6445, %v6449
        %v6454 = vadd.f32 %v6446, %v6450
        %v6455 = vadd.f32 %v6447, %v6451
        %v6456 = vmax.f32 %v6412, %v6413
        %v6457 = vmax.f32 %v6420, %v6421
        %v6458 = vmax.f32 %v6428, %v6429
        %v6459 = vmax.f32 %v6436, %v6437
        %v6460 = vadd.f32 %v6452, %v6456
        %v6461 = vadd.f32 %v6453, %v6457
        %v6462 = vadd.f32 %v6454, %v6458
        %v6463 = vadd.f32 %v6455, %v6459
        %v6464 = vmax.f32 %v6414, %v6415
        %v6465 = vmax.f32 %v6422, %v6423
        %v6466 = vmax.f32 %v6430, %v6431
        %v6467 = vmax.f32 %v6438, %v6439
        %v6468 = vadd.f32 %v6460, %v6464
        %v6469 = vadd.f32 %v6461, %v6465
        %v6470 = vadd.f32 %v6462, %v6466
        %v6471 = vadd.f32 %v6463, %v6467
        %s6472 = scalar_lea.vmem [#allocation2], 960
        %v6473 = vld [vmem:[%s6472] sm:$0xff]
        %v6474 = vld [vmem:[%s6472 + $0x8] sm:$0xff]
        %v6475 = vld [vmem:[%s6472 + $0x10] sm:$0xff]
        %v6476 = vld [vmem:[%s6472 + $0x18] sm:$0xff]
        %v6477 = vld [vmem:[%s6472 + $0x20] sm:$0xff]
        %v6478 = vld [vmem:[%s6472 + $0x28] sm:$0xff]
        %v6479 = vld [vmem:[%s6472 + $0x30] sm:$0xff]
        %v6480 = vld [vmem:[%s6472 + $0x38] sm:$0xff]
        %v6481 = vld [vmem:[%s6472 + $0x40] sm:$0xff]
        %v6482 = vld [vmem:[%s6472 + $0x48] sm:$0xff]
        %v6483 = vld [vmem:[%s6472 + $0x50] sm:$0xff]
        %v6484 = vld [vmem:[%s6472 + $0x58] sm:$0xff]
        %6485 = vmatpush.msra.mxu0 %v5900
        %6486 = vmatpush.msra.mxu0 %v5395
        %6487 = vmatpush.msra.mxu0 %v5394
        %6488 = vmatpush.msra.mxu0 %v5393
        %6489 = vmatpush.msra.mxu0 %v5392
        %6490 = vmatpush.msra.mxu0 %v5391
        %6491 = vmatpush.msra.mxu0 %v4822
        %6492 = vmatpush.msra.mxu0 %v4821
        %6493 = vmatpush.msra.mxu0 %v4820
        %6494 = vmatpush.msra.mxu0 %v4819
        %6495 = vmatpush.msra.mxu0 %v4818
        %6496 = vmatpush.msra.mxu0 %v4313
        %6497 = vmatpush.msra.mxu0 %v4312
        %6498 = vmatpush.msra.mxu0 %v4311
        %6499 = vmatpush.msra.mxu0 %v4310
        %6500 = vmatpush.msra.mxu0 %v4309
        %6501 = vmatmul.f32.gmra.mxu0 %v303
        %v6502 = vpop.f32.mrf.mxu0
        %v6503 = vadd.f32 %v3209, %v6502
        %6504 = vmatmul.f32.gmra.mxu0 %v305
        %v6505 = vpop.f32.mrf.mxu0
        %v6506 = vadd.f32 %v3214, %v6505
        %6507 = vmatmul.f32.gmra.mxu0 %v307
        %v6508 = vpop.f32.mrf.mxu0
        %v6509 = vadd.f32 %v3219, %v6508
        %6510 = vmatmul.f32.gmra.mxu0 %v309
        %v6511 = vpop.f32.mrf.mxu0
        %v6512 = vadd.f32 %v3224, %v6511
        %6513 = vdwg.mxu0
        %6514 = vmatpush.msra.mxu0 0.0
        %6515 = vmatpush.msra.mxu0 0.0
        %6516 = vmatpush.msra.mxu0 0.0
        %6517 = vmatpush.msra.mxu0 0.0
        %6518 = vmatpush.msra.mxu0 0.0
        %6519 = vmatpush.msra.mxu0 0.0
        %6520 = vmatpush.msra.mxu0 0.0
        %6521 = vmatpush.msra.mxu0 %v6477
        %6522 = vmatpush.msra.mxu0 %v6476
        %6523 = vmatpush.msra.mxu0 %v6475
        %6524 = vmatpush.msra.mxu0 %v6474
        %6525 = vmatpush.msra.mxu0 %v6473
        %6526 = vmatpush.msra.mxu0 %v5904
        %6527 = vmatpush.msra.mxu0 %v5903
        %6528 = vmatpush.msra.mxu0 %v5902
        %6529 = vmatpush.msra.mxu0 %v5901
        %6530 = vmatmul.f32.gmra.mxu0 %v3228
        %v6531 = vpop.f32.mrf.mxu0
        %v6532 = vadd.f32 %v6503, %v6531
        %6533 = vmatmul.f32.gmra.mxu0 %v3231
        %v6534 = vpop.f32.mrf.mxu0
        %v6535 = vadd.f32 %v6506, %v6534
        %6536 = vmatmul.f32.gmra.mxu0 %v3234
        %v6537 = vpop.f32.mrf.mxu0
        %v6538 = vadd.f32 %v6509, %v6537
        %6539 = vmatmul.f32.gmra.mxu0 %v3237
        %v6540 = vpop.f32.mrf.mxu0
        %v6541 = vadd.f32 %v6512, %v6540
        %6542 = vdwg.mxu0
        %6543 = vmatpush.msra.mxu0 %v5901
        %6544 = vmatpush.msra.mxu0 %v5396
        %6545 = vmatpush.msra.mxu0 %v5395
        %6546 = vmatpush.msra.mxu0 %v5394
        %6547 = vmatpush.msra.mxu0 %v5393
        %6548 = vmatpush.msra.mxu0 %v5392
        %6549 = vmatpush.msra.mxu0 %v4823
        %6550 = vmatpush.msra.mxu0 %v4822
        %6551 = vmatpush.msra.mxu0 %v4821
        %6552 = vmatpush.msra.mxu0 %v4820
        %6553 = vmatpush.msra.mxu0 %v4819
        %6554 = vmatpush.msra.mxu0 %v4314
        %6555 = vmatpush.msra.mxu0 %v4313
        %6556 = vmatpush.msra.mxu0 %v4312
        %6557 = vmatpush.msra.mxu0 %v4311
        %6558 = vmatpush.msra.mxu0 %v4310
        %6559 = vmatmul.f32.gmra.mxu0 %v303
        %v6560 = vpop.f32.mrf.mxu0
        %v6561 = vadd.f32 %v3209, %v6560
        %6562 = vmatmul.f32.gmra.mxu0 %v305
        %v6563 = vpop.f32.mrf.mxu0
        %v6564 = vadd.f32 %v3214, %v6563
        %6565 = vmatmul.f32.gmra.mxu0 %v307
        %v6566 = vpop.f32.mrf.mxu0
        %v6567 = vadd.f32 %v3219, %v6566
        %6568 = vmatmul.f32.gmra.mxu0 %v309
        %v6569 = vpop.f32.mrf.mxu0
        %v6570 = vadd.f32 %v3224, %v6569
        %6571 = vdwg.mxu0
        %6572 = vmatpush.msra.mxu0 0.0
        %6573 = vmatpush.msra.mxu0 0.0
        %6574 = vmatpush.msra.mxu0 0.0
        %6575 = vmatpush.msra.mxu0 0.0
        %6576 = vmatpush.msra.mxu0 0.0
        %6577 = vmatpush.msra.mxu0 0.0
        %6578 = vmatpush.msra.mxu0 0.0
        %6579 = vmatpush.msra.mxu0 %v6478
        %6580 = vmatpush.msra.mxu0 %v6477
        %6581 = vmatpush.msra.mxu0 %v6476
        %6582 = vmatpush.msra.mxu0 %v6475
        %6583 = vmatpush.msra.mxu0 %v6474
        %6584 = vmatpush.msra.mxu0 %v5905
        %6585 = vmatpush.msra.mxu0 %v5904
        %6586 = vmatpush.msra.mxu0 %v5903
        %6587 = vmatpush.msra.mxu0 %v5902
        %6588 = vmatmul.f32.gmra.mxu0 %v3228
        %v6589 = vpop.f32.mrf.mxu0
        %v6590 = vadd.f32 %v6561, %v6589
        %6591 = vmatmul.f32.gmra.mxu0 %v3231
        %v6592 = vpop.f32.mrf.mxu0
        %v6593 = vadd.f32 %v6564, %v6592
        %6594 = vmatmul.f32.gmra.mxu0 %v3234
        %v6595 = vpop.f32.mrf.mxu0
        %v6596 = vadd.f32 %v6567, %v6595
        %6597 = vmatmul.f32.gmra.mxu0 %v3237
        %v6598 = vpop.f32.mrf.mxu0
        %v6599 = vadd.f32 %v6570, %v6598
        %6600 = vdwg.mxu0
        %6601 = vmatpush.msra.mxu0 %v5902
        %6602 = vmatpush.msra.mxu0 %v5397
        %6603 = vmatpush.msra.mxu0 %v5396
        %6604 = vmatpush.msra.mxu0 %v5395
        %6605 = vmatpush.msra.mxu0 %v5394
        %6606 = vmatpush.msra.mxu0 %v5393
        %6607 = vmatpush.msra.mxu0 %v4824
        %6608 = vmatpush.msra.mxu0 %v4823
        %6609 = vmatpush.msra.mxu0 %v4822
        %6610 = vmatpush.msra.mxu0 %v4821
        %6611 = vmatpush.msra.mxu0 %v4820
        %6612 = vmatpush.msra.mxu0 %v4315
        %6613 = vmatpush.msra.mxu0 %v4314
        %6614 = vmatpush.msra.mxu0 %v4313
        %6615 = vmatpush.msra.mxu0 %v4312
        %6616 = vmatpush.msra.mxu0 %v4311
        %6617 = vmatmul.f32.gmra.mxu0 %v303
        %v6618 = vpop.f32.mrf.mxu0
        %v6619 = vadd.f32 %v3209, %v6618
        %6620 = vmatmul.f32.gmra.mxu0 %v305
        %v6621 = vpop.f32.mrf.mxu0
        %v6622 = vadd.f32 %v3214, %v6621
        %6623 = vmatmul.f32.gmra.mxu0 %v307
        %v6624 = vpop.f32.mrf.mxu0
        %v6625 = vadd.f32 %v3219, %v6624
        %6626 = vmatmul.f32.gmra.mxu0 %v309
        %v6627 = vpop.f32.mrf.mxu0
        %v6628 = vadd.f32 %v3224, %v6627
        %6629 = vdwg.mxu0
        %6630 = vmatpush.msra.mxu0 0.0
        %6631 = vmatpush.msra.mxu0 0.0
        %6632 = vmatpush.msra.mxu0 0.0
        %6633 = vmatpush.msra.mxu0 0.0
        %6634 = vmatpush.msra.mxu0 0.0
        %6635 = vmatpush.msra.mxu0 0.0
        %6636 = vmatpush.msra.mxu0 0.0
        %6637 = vmatpush.msra.mxu0 %v6479
        %6638 = vmatpush.msra.mxu0 %v6478
        %6639 = vmatpush.msra.mxu0 %v6477
        %6640 = vmatpush.msra.mxu0 %v6476
        %6641 = vmatpush.msra.mxu0 %v6475
        %6642 = vmatpush.msra.mxu0 %v5906
        %6643 = vmatpush.msra.mxu0 %v5905
        %6644 = vmatpush.msra.mxu0 %v5904
        %6645 = vmatpush.msra.mxu0 %v5903
        %6646 = vmatmul.f32.gmra.mxu0 %v3228
        %v6647 = vpop.f32.mrf.mxu0
        %v6648 = vadd.f32 %v6619, %v6647
        %6649 = vmatmul.f32.gmra.mxu0 %v3231
        %v6650 = vpop.f32.mrf.mxu0
        %v6651 = vadd.f32 %v6622, %v6650
        %6652 = vmatmul.f32.gmra.mxu0 %v3234
        %v6653 = vpop.f32.mrf.mxu0
        %v6654 = vadd.f32 %v6625, %v6653
        %6655 = vmatmul.f32.gmra.mxu0 %v3237
        %v6656 = vpop.f32.mrf.mxu0
        %v6657 = vadd.f32 %v6628, %v6656
        %6658 = vdwg.mxu0
        %6659 = vmatpush.msra.mxu0 %v5903
        %6660 = vmatpush.msra.mxu0 %v5398
        %6661 = vmatpush.msra.mxu0 %v5397
        %6662 = vmatpush.msra.mxu0 %v5396
        %6663 = vmatpush.msra.mxu0 %v5395
        %6664 = vmatpush.msra.mxu0 %v5394
        %6665 = vmatpush.msra.mxu0 %v4825
        %6666 = vmatpush.msra.mxu0 %v4824
        %6667 = vmatpush.msra.mxu0 %v4823
        %6668 = vmatpush.msra.mxu0 %v4822
        %6669 = vmatpush.msra.mxu0 %v4821
        %6670 = vmatpush.msra.mxu0 %v4316
        %6671 = vmatpush.msra.mxu0 %v4315
        %6672 = vmatpush.msra.mxu0 %v4314
        %6673 = vmatpush.msra.mxu0 %v4313
        %6674 = vmatpush.msra.mxu0 %v4312
        %6675 = vmatmul.f32.gmra.mxu0 %v303
        %v6676 = vpop.f32.mrf.mxu0
        %v6677 = vadd.f32 %v3209, %v6676
        %6678 = vmatmul.f32.gmra.mxu0 %v305
        %v6679 = vpop.f32.mrf.mxu0
        %v6680 = vadd.f32 %v3214, %v6679
        %6681 = vmatmul.f32.gmra.mxu0 %v307
        %v6682 = vpop.f32.mrf.mxu0
        %v6683 = vadd.f32 %v3219, %v6682
        %6684 = vmatmul.f32.gmra.mxu0 %v309
        %v6685 = vpop.f32.mrf.mxu0
        %v6686 = vadd.f32 %v3224, %v6685
        %6687 = vdwg.mxu0
        %6688 = vmatpush.msra.mxu0 0.0
        %6689 = vmatpush.msra.mxu0 0.0
        %6690 = vmatpush.msra.mxu0 0.0
        %6691 = vmatpush.msra.mxu0 0.0
        %6692 = vmatpush.msra.mxu0 0.0
        %6693 = vmatpush.msra.mxu0 0.0
        %6694 = vmatpush.msra.mxu0 0.0
        %6695 = vmatpush.msra.mxu0 %v6480
        %6696 = vmatpush.msra.mxu0 %v6479
        %6697 = vmatpush.msra.mxu0 %v6478
        %6698 = vmatpush.msra.mxu0 %v6477
        %6699 = vmatpush.msra.mxu0 %v6476
        %6700 = vmatpush.msra.mxu0 %v5907
        %6701 = vmatpush.msra.mxu0 %v5906
        %6702 = vmatpush.msra.mxu0 %v5905
        %6703 = vmatpush.msra.mxu0 %v5904
        %6704 = vmatmul.f32.gmra.mxu0 %v3228
        %v6705 = vpop.f32.mrf.mxu0
        %v6706 = vadd.f32 %v6677, %v6705
        %6707 = vmatmul.f32.gmra.mxu0 %v3231
        %v6708 = vpop.f32.mrf.mxu0
        %v6709 = vadd.f32 %v6680, %v6708
        %6710 = vmatmul.f32.gmra.mxu0 %v3234
        %v6711 = vpop.f32.mrf.mxu0
        %v6712 = vadd.f32 %v6683, %v6711
        %6713 = vmatmul.f32.gmra.mxu0 %v3237
        %v6714 = vpop.f32.mrf.mxu0
        %v6715 = vadd.f32 %v6686, %v6714
        %6716 = vdwg.mxu0
        %6717 = vmatpush.msra.mxu0 %v5904
        %6718 = vmatpush.msra.mxu0 %v5399
        %6719 = vmatpush.msra.mxu0 %v5398
        %6720 = vmatpush.msra.mxu0 %v5397
        %6721 = vmatpush.msra.mxu0 %v5396
        %6722 = vmatpush.msra.mxu0 %v5395
        %6723 = vmatpush.msra.mxu0 %v4826
        %6724 = vmatpush.msra.mxu0 %v4825
        %6725 = vmatpush.msra.mxu0 %v4824
        %6726 = vmatpush.msra.mxu0 %v4823
        %6727 = vmatpush.msra.mxu0 %v4822
        %6728 = vmatpush.msra.mxu0 %v4317
        %6729 = vmatpush.msra.mxu0 %v4316
        %6730 = vmatpush.msra.mxu0 %v4315
        %6731 = vmatpush.msra.mxu0 %v4314
        %6732 = vmatpush.msra.mxu0 %v4313
        %6733 = vmatmul.f32.gmra.mxu0 %v303
        %v6734 = vpop.f32.mrf.mxu0
        %v6735 = vadd.f32 %v3209, %v6734
        %6736 = vmatmul.f32.gmra.mxu0 %v305
        %v6737 = vpop.f32.mrf.mxu0
        %v6738 = vadd.f32 %v3214, %v6737
        %6739 = vmatmul.f32.gmra.mxu0 %v307
        %v6740 = vpop.f32.mrf.mxu0
        %v6741 = vadd.f32 %v3219, %v6740
        %6742 = vmatmul.f32.gmra.mxu0 %v309
        %v6743 = vpop.f32.mrf.mxu0
        %v6744 = vadd.f32 %v3224, %v6743
        %6745 = vdwg.mxu0
        %6746 = vmatpush.msra.mxu0 0.0
        %6747 = vmatpush.msra.mxu0 0.0
        %6748 = vmatpush.msra.mxu0 0.0
        %6749 = vmatpush.msra.mxu0 0.0
        %6750 = vmatpush.msra.mxu0 0.0
        %6751 = vmatpush.msra.mxu0 0.0
        %6752 = vmatpush.msra.mxu0 0.0
        %6753 = vmatpush.msra.mxu0 %v6481
        %6754 = vmatpush.msra.mxu0 %v6480
        %6755 = vmatpush.msra.mxu0 %v6479
        %6756 = vmatpush.msra.mxu0 %v6478
        %6757 = vmatpush.msra.mxu0 %v6477
        %6758 = vmatpush.msra.mxu0 %v5908
        %6759 = vmatpush.msra.mxu0 %v5907
        %6760 = vmatpush.msra.mxu0 %v5906
        %6761 = vmatpush.msra.mxu0 %v5905
        %6762 = vmatmul.f32.gmra.mxu0 %v3228
        %v6763 = vpop.f32.mrf.mxu0
        %v6764 = vadd.f32 %v6735, %v6763
        %6765 = vmatmul.f32.gmra.mxu0 %v3231
        %v6766 = vpop.f32.mrf.mxu0
        %v6767 = vadd.f32 %v6738, %v6766
        %6768 = vmatmul.f32.gmra.mxu0 %v3234
        %v6769 = vpop.f32.mrf.mxu0
        %v6770 = vadd.f32 %v6741, %v6769
        %6771 = vmatmul.f32.gmra.mxu0 %v3237
        %v6772 = vpop.f32.mrf.mxu0
        %v6773 = vadd.f32 %v6744, %v6772
        %6774 = vdwg.mxu0
        %6775 = vmatpush.msra.mxu0 %v5905
        %6776 = vmatpush.msra.mxu0 %v5400
        %6777 = vmatpush.msra.mxu0 %v5399
        %6778 = vmatpush.msra.mxu0 %v5398
        %6779 = vmatpush.msra.mxu0 %v5397
        %6780 = vmatpush.msra.mxu0 %v5396
        %6781 = vmatpush.msra.mxu0 %v4827
        %6782 = vmatpush.msra.mxu0 %v4826
        %6783 = vmatpush.msra.mxu0 %v4825
        %6784 = vmatpush.msra.mxu0 %v4824
        %6785 = vmatpush.msra.mxu0 %v4823
        %6786 = vmatpush.msra.mxu0 %v4318
        %6787 = vmatpush.msra.mxu0 %v4317
        %6788 = vmatpush.msra.mxu0 %v4316
        %6789 = vmatpush.msra.mxu0 %v4315
        %6790 = vmatpush.msra.mxu0 %v4314
        %6791 = vmatmul.f32.gmra.mxu0 %v303
        %v6792 = vpop.f32.mrf.mxu0
        %v6793 = vadd.f32 %v3209, %v6792
        %6794 = vmatmul.f32.gmra.mxu0 %v305
        %v6795 = vpop.f32.mrf.mxu0
        %v6796 = vadd.f32 %v3214, %v6795
        %6797 = vmatmul.f32.gmra.mxu0 %v307
        %v6798 = vpop.f32.mrf.mxu0
        %v6799 = vadd.f32 %v3219, %v6798
        %6800 = vmatmul.f32.gmra.mxu0 %v309
        %v6801 = vpop.f32.mrf.mxu0
        %v6802 = vadd.f32 %v3224, %v6801
        %6803 = vdwg.mxu0
        %6804 = vmatpush.msra.mxu0 0.0
        %6805 = vmatpush.msra.mxu0 0.0
        %6806 = vmatpush.msra.mxu0 0.0
        %6807 = vmatpush.msra.mxu0 0.0
        %6808 = vmatpush.msra.mxu0 0.0
        %6809 = vmatpush.msra.mxu0 0.0
        %6810 = vmatpush.msra.mxu0 0.0
        %6811 = vmatpush.msra.mxu0 %v6482
        %6812 = vmatpush.msra.mxu0 %v6481
        %6813 = vmatpush.msra.mxu0 %v6480
        %6814 = vmatpush.msra.mxu0 %v6479
        %6815 = vmatpush.msra.mxu0 %v6478
        %6816 = vmatpush.msra.mxu0 %v5909
        %6817 = vmatpush.msra.mxu0 %v5908
        %6818 = vmatpush.msra.mxu0 %v5907
        %6819 = vmatpush.msra.mxu0 %v5906
        %6820 = vmatmul.f32.gmra.mxu0 %v3228
        %v6821 = vpop.f32.mrf.mxu0
        %v6822 = vadd.f32 %v6793, %v6821
        %6823 = vmatmul.f32.gmra.mxu0 %v3231
        %v6824 = vpop.f32.mrf.mxu0
        %v6825 = vadd.f32 %v6796, %v6824
        %6826 = vmatmul.f32.gmra.mxu0 %v3234
        %v6827 = vpop.f32.mrf.mxu0
        %v6828 = vadd.f32 %v6799, %v6827
        %6829 = vmatmul.f32.gmra.mxu0 %v3237
        %v6830 = vpop.f32.mrf.mxu0
        %v6831 = vadd.f32 %v6802, %v6830
        %6832 = vdwg.mxu0
        %6833 = vmatpush.msra.mxu0 %v5906
        %6834 = vmatpush.msra.mxu0 %v5401
        %6835 = vmatpush.msra.mxu0 %v5400
        %6836 = vmatpush.msra.mxu0 %v5399
        %6837 = vmatpush.msra.mxu0 %v5398
        %6838 = vmatpush.msra.mxu0 %v5397
        %6839 = vmatpush.msra.mxu0 %v4828
        %6840 = vmatpush.msra.mxu0 %v4827
        %6841 = vmatpush.msra.mxu0 %v4826
        %6842 = vmatpush.msra.mxu0 %v4825
        %6843 = vmatpush.msra.mxu0 %v4824
        %6844 = vmatpush.msra.mxu0 %v4319
        %6845 = vmatpush.msra.mxu0 %v4318
        %6846 = vmatpush.msra.mxu0 %v4317
        %6847 = vmatpush.msra.mxu0 %v4316
        %6848 = vmatpush.msra.mxu0 %v4315
        %6849 = vmatmul.f32.gmra.mxu0 %v303
        %v6850 = vpop.f32.mrf.mxu0
        %v6851 = vadd.f32 %v3209, %v6850
        %6852 = vmatmul.f32.gmra.mxu0 %v305
        %v6853 = vpop.f32.mrf.mxu0
        %v6854 = vadd.f32 %v3214, %v6853
        %6855 = vmatmul.f32.gmra.mxu0 %v307
        %v6856 = vpop.f32.mrf.mxu0
        %v6857 = vadd.f32 %v3219, %v6856
        %6858 = vmatmul.f32.gmra.mxu0 %v309
        %v6859 = vpop.f32.mrf.mxu0
        %v6860 = vadd.f32 %v3224, %v6859
        %6861 = vdwg.mxu0
        %6862 = vmatpush.msra.mxu0 0.0
        %6863 = vmatpush.msra.mxu0 0.0
        %6864 = vmatpush.msra.mxu0 0.0
        %6865 = vmatpush.msra.mxu0 0.0
        %6866 = vmatpush.msra.mxu0 0.0
        %6867 = vmatpush.msra.mxu0 0.0
        %6868 = vmatpush.msra.mxu0 0.0
        %6869 = vmatpush.msra.mxu0 %v6483
        %6870 = vmatpush.msra.mxu0 %v6482
        %6871 = vmatpush.msra.mxu0 %v6481
        %6872 = vmatpush.msra.mxu0 %v6480
        %6873 = vmatpush.msra.mxu0 %v6479
        %6874 = vmatpush.msra.mxu0 %v5910
        %6875 = vmatpush.msra.mxu0 %v5909
        %6876 = vmatpush.msra.mxu0 %v5908
        %6877 = vmatpush.msra.mxu0 %v5907
        %6878 = vmatmul.f32.gmra.mxu0 %v3228
        %v6879 = vpop.f32.mrf.mxu0
        %v6880 = vadd.f32 %v6851, %v6879
        %6881 = vmatmul.f32.gmra.mxu0 %v3231
        %v6882 = vpop.f32.mrf.mxu0
        %v6883 = vadd.f32 %v6854, %v6882
        %6884 = vmatmul.f32.gmra.mxu0 %v3234
        %v6885 = vpop.f32.mrf.mxu0
        %v6886 = vadd.f32 %v6857, %v6885
        %6887 = vmatmul.f32.gmra.mxu0 %v3237
        %v6888 = vpop.f32.mrf.mxu0
        %v6889 = vadd.f32 %v6860, %v6888
        %6890 = vdwg.mxu0
        %6891 = vmatpush.msra.mxu0 %v5907
        %6892 = vmatpush.msra.mxu0 %v5402
        %6893 = vmatpush.msra.mxu0 %v5401
        %6894 = vmatpush.msra.mxu0 %v5400
        %6895 = vmatpush.msra.mxu0 %v5399
        %6896 = vmatpush.msra.mxu0 %v5398
        %6897 = vmatpush.msra.mxu0 %v4829
        %6898 = vmatpush.msra.mxu0 %v4828
        %6899 = vmatpush.msra.mxu0 %v4827
        %6900 = vmatpush.msra.mxu0 %v4826
        %6901 = vmatpush.msra.mxu0 %v4825
        %6902 = vmatpush.msra.mxu0 %v4320
        %6903 = vmatpush.msra.mxu0 %v4319
        %6904 = vmatpush.msra.mxu0 %v4318
        %6905 = vmatpush.msra.mxu0 %v4317
        %6906 = vmatpush.msra.mxu0 %v4316
        %6907 = vmatmul.f32.gmra.mxu0 %v303
        %v6908 = vpop.f32.mrf.mxu0
        %v6909 = vadd.f32 %v3209, %v6908
        %6910 = vmatmul.f32.gmra.mxu0 %v305
        %v6911 = vpop.f32.mrf.mxu0
        %v6912 = vadd.f32 %v3214, %v6911
        %6913 = vmatmul.f32.gmra.mxu0 %v307
        %v6914 = vpop.f32.mrf.mxu0
        %v6915 = vadd.f32 %v3219, %v6914
        %6916 = vmatmul.f32.gmra.mxu0 %v309
        %v6917 = vpop.f32.mrf.mxu0
        %v6918 = vadd.f32 %v3224, %v6917
        %6919 = vdwg.mxu0
        %6920 = vmatpush.msra.mxu0 0.0
        %6921 = vmatpush.msra.mxu0 0.0
        %6922 = vmatpush.msra.mxu0 0.0
        %6923 = vmatpush.msra.mxu0 0.0
        %6924 = vmatpush.msra.mxu0 0.0
        %6925 = vmatpush.msra.mxu0 0.0
        %6926 = vmatpush.msra.mxu0 0.0
        %6927 = vmatpush.msra.mxu0 %v6484
        %6928 = vmatpush.msra.mxu0 %v6483
        %6929 = vmatpush.msra.mxu0 %v6482
        %6930 = vmatpush.msra.mxu0 %v6481
        %6931 = vmatpush.msra.mxu0 %v6480
        %6932 = vmatpush.msra.mxu0 %v5911
        %6933 = vmatpush.msra.mxu0 %v5910
        %6934 = vmatpush.msra.mxu0 %v5909
        %6935 = vmatpush.msra.mxu0 %v5908
        %6936 = vmatmul.f32.gmra.mxu0 %v3228
        %v6937 = vpop.f32.mrf.mxu0
        %v6938 = vadd.f32 %v6909, %v6937
        %6939 = vmatmul.f32.gmra.mxu0 %v3231
        %v6940 = vpop.f32.mrf.mxu0
        %v6941 = vadd.f32 %v6912, %v6940
        %6942 = vmatmul.f32.gmra.mxu0 %v3234
        %v6943 = vpop.f32.mrf.mxu0
        %v6944 = vadd.f32 %v6915, %v6943
        %6945 = vmatmul.f32.gmra.mxu0 %v3237
        %v6946 = vpop.f32.mrf.mxu0
        %v6947 = vadd.f32 %v6918, %v6946
        %6948 = vdwg.mxu0
        %v6949 = vmax.f32 %v6532, 0.0
        %v6950 = vmax.f32 %v6590, 0.0
        %v6951 = vmax.f32 %v6648, 0.0
        %v6952 = vmax.f32 %v6706, 0.0
        %v6953 = vmax.f32 %v6764, 0.0
        %v6954 = vmax.f32 %v6822, 0.0
        %v6955 = vmax.f32 %v6880, 0.0
        %v6956 = vmax.f32 %v6938, 0.0
        %v6957 = vmax.f32 %v6535, 0.0
        %v6958 = vmax.f32 %v6593, 0.0
        %v6959 = vmax.f32 %v6651, 0.0
        %v6960 = vmax.f32 %v6709, 0.0
        %v6961 = vmax.f32 %v6767, 0.0
        %v6962 = vmax.f32 %v6825, 0.0
        %v6963 = vmax.f32 %v6883, 0.0
        %v6964 = vmax.f32 %v6941, 0.0
        %v6965 = vmax.f32 %v6538, 0.0
        %v6966 = vmax.f32 %v6596, 0.0
        %v6967 = vmax.f32 %v6654, 0.0
        %v6968 = vmax.f32 %v6712, 0.0
        %v6969 = vmax.f32 %v6770, 0.0
        %v6970 = vmax.f32 %v6828, 0.0
        %v6971 = vmax.f32 %v6886, 0.0
        %v6972 = vmax.f32 %v6944, 0.0
        %v6973 = vmax.f32 %v6541, 0.0
        %v6974 = vmax.f32 %v6599, 0.0
        %v6975 = vmax.f32 %v6657, 0.0
        %v6976 = vmax.f32 %v6715, 0.0
        %v6977 = vmax.f32 %v6773, 0.0
        %v6978 = vmax.f32 %v6831, 0.0
        %v6979 = vmax.f32 %v6889, 0.0
        %v6980 = vmax.f32 %v6947, 0.0
        %s6981 = scalar_lea.vmem [#allocation2], 1056
        %v6982 = vld [vmem:[%s6981] sm:$0xff]
        %v6983 = vld [vmem:[%s6981 + $0x8] sm:$0xff]
        %v6984 = vld [vmem:[%s6981 + $0x10] sm:$0xff]
        %v6985 = vld [vmem:[%s6981 + $0x18] sm:$0xff]
        %v6986 = vld [vmem:[%s6981 + $0x20] sm:$0xff]
        %v6987 = vld [vmem:[%s6981 + $0x28] sm:$0xff]
        %v6988 = vld [vmem:[%s6981 + $0x30] sm:$0xff]
        %v6989 = vld [vmem:[%s6981 + $0x38] sm:$0xff]
        %v6990 = vld [vmem:[%s6981 + $0x40] sm:$0xff]
        %v6991 = vld [vmem:[%s6981 + $0x48] sm:$0xff]
        %v6992 = vld [vmem:[%s6981 + $0x50] sm:$0xff]
        %v6993 = vld [vmem:[%s6981 + $0x58] sm:$0xff]
        %6994 = vmatpush.msra.mxu0 %v6473
        %6995 = vmatpush.msra.mxu0 %v5904
        %6996 = vmatpush.msra.mxu0 %v5903
        %6997 = vmatpush.msra.mxu0 %v5902
        %6998 = vmatpush.msra.mxu0 %v5901
        %6999 = vmatpush.msra.mxu0 %v5900
        %7000 = vmatpush.msra.mxu0 %v5395
        %7001 = vmatpush.msra.mxu0 %v5394
        %7002 = vmatpush.msra.mxu0 %v5393
        %7003 = vmatpush.msra.mxu0 %v5392
        %7004 = vmatpush.msra.mxu0 %v5391
        %7005 = vmatpush.msra.mxu0 %v4822
        %7006 = vmatpush.msra.mxu0 %v4821
        %7007 = vmatpush.msra.mxu0 %v4820
        %7008 = vmatpush.msra.mxu0 %v4819
        %7009 = vmatpush.msra.mxu0 %v4818
        %7010 = vmatmul.f32.gmra.mxu0 %v303
        %v7011 = vpop.f32.mrf.mxu0
        %v7012 = vadd.f32 %v3209, %v7011
        %7013 = vmatmul.f32.gmra.mxu0 %v305
        %v7014 = vpop.f32.mrf.mxu0
        %v7015 = vadd.f32 %v3214, %v7014
        %7016 = vmatmul.f32.gmra.mxu0 %v307
        %v7017 = vpop.f32.mrf.mxu0
        %v7018 = vadd.f32 %v3219, %v7017
        %7019 = vmatmul.f32.gmra.mxu0 %v309
        %v7020 = vpop.f32.mrf.mxu0
        %v7021 = vadd.f32 %v3224, %v7020
        %7022 = vdwg.mxu0
        %7023 = vmatpush.msra.mxu0 0.0
        %7024 = vmatpush.msra.mxu0 0.0
        %7025 = vmatpush.msra.mxu0 0.0
        %7026 = vmatpush.msra.mxu0 0.0
        %7027 = vmatpush.msra.mxu0 0.0
        %7028 = vmatpush.msra.mxu0 0.0
        %7029 = vmatpush.msra.mxu0 0.0
        %7030 = vmatpush.msra.mxu0 %v6986
        %7031 = vmatpush.msra.mxu0 %v6985
        %7032 = vmatpush.msra.mxu0 %v6984
        %7033 = vmatpush.msra.mxu0 %v6983
        %7034 = vmatpush.msra.mxu0 %v6982
        %7035 = vmatpush.msra.mxu0 %v6477
        %7036 = vmatpush.msra.mxu0 %v6476
        %7037 = vmatpush.msra.mxu0 %v6475
        %7038 = vmatpush.msra.mxu0 %v6474
        %7039 = vmatmul.f32.gmra.mxu0 %v3228
        %v7040 = vpop.f32.mrf.mxu0
        %v7041 = vadd.f32 %v7012, %v7040
        %7042 = vmatmul.f32.gmra.mxu0 %v3231
        %v7043 = vpop.f32.mrf.mxu0
        %v7044 = vadd.f32 %v7015, %v7043
        %7045 = vmatmul.f32.gmra.mxu0 %v3234
        %v7046 = vpop.f32.mrf.mxu0
        %v7047 = vadd.f32 %v7018, %v7046
        %7048 = vmatmul.f32.gmra.mxu0 %v3237
        %v7049 = vpop.f32.mrf.mxu0
        %v7050 = vadd.f32 %v7021, %v7049
        %7051 = vdwg.mxu0
        %7052 = vmatpush.msra.mxu0 %v6474
        %7053 = vmatpush.msra.mxu0 %v5905
        %7054 = vmatpush.msra.mxu0 %v5904
        %7055 = vmatpush.msra.mxu0 %v5903
        %7056 = vmatpush.msra.mxu0 %v5902
        %7057 = vmatpush.msra.mxu0 %v5901
        %7058 = vmatpush.msra.mxu0 %v5396
        %7059 = vmatpush.msra.mxu0 %v5395
        %7060 = vmatpush.msra.mxu0 %v5394
        %7061 = vmatpush.msra.mxu0 %v5393
        %7062 = vmatpush.msra.mxu0 %v5392
        %7063 = vmatpush.msra.mxu0 %v4823
        %7064 = vmatpush.msra.mxu0 %v4822
        %7065 = vmatpush.msra.mxu0 %v4821
        %7066 = vmatpush.msra.mxu0 %v4820
        %7067 = vmatpush.msra.mxu0 %v4819
        %7068 = vmatmul.f32.gmra.mxu0 %v303
        %v7069 = vpop.f32.mrf.mxu0
        %v7070 = vadd.f32 %v3209, %v7069
        %7071 = vmatmul.f32.gmra.mxu0 %v305
        %v7072 = vpop.f32.mrf.mxu0
        %v7073 = vadd.f32 %v3214, %v7072
        %7074 = vmatmul.f32.gmra.mxu0 %v307
        %v7075 = vpop.f32.mrf.mxu0
        %v7076 = vadd.f32 %v3219, %v7075
        %7077 = vmatmul.f32.gmra.mxu0 %v309
        %v7078 = vpop.f32.mrf.mxu0
        %v7079 = vadd.f32 %v3224, %v7078
        %7080 = vdwg.mxu0
        %7081 = vmatpush.msra.mxu0 0.0
        %7082 = vmatpush.msra.mxu0 0.0
        %7083 = vmatpush.msra.mxu0 0.0
        %7084 = vmatpush.msra.mxu0 0.0
        %7085 = vmatpush.msra.mxu0 0.0
        %7086 = vmatpush.msra.mxu0 0.0
        %7087 = vmatpush.msra.mxu0 0.0
        %7088 = vmatpush.msra.mxu0 %v6987
        %7089 = vmatpush.msra.mxu0 %v6986
        %7090 = vmatpush.msra.mxu0 %v6985
        %7091 = vmatpush.msra.mxu0 %v6984
        %7092 = vmatpush.msra.mxu0 %v6983
        %7093 = vmatpush.msra.mxu0 %v6478
        %7094 = vmatpush.msra.mxu0 %v6477
        %7095 = vmatpush.msra.mxu0 %v6476
        %7096 = vmatpush.msra.mxu0 %v6475
        %7097 = vmatmul.f32.gmra.mxu0 %v3228
        %v7098 = vpop.f32.mrf.mxu0
        %v7099 = vadd.f32 %v7070, %v7098
        %7100 = vmatmul.f32.gmra.mxu0 %v3231
        %v7101 = vpop.f32.mrf.mxu0
        %v7102 = vadd.f32 %v7073, %v7101
        %7103 = vmatmul.f32.gmra.mxu0 %v3234
        %v7104 = vpop.f32.mrf.mxu0
        %v7105 = vadd.f32 %v7076, %v7104
        %7106 = vmatmul.f32.gmra.mxu0 %v3237
        %v7107 = vpop.f32.mrf.mxu0
        %v7108 = vadd.f32 %v7079, %v7107
        %7109 = vdwg.mxu0
        %7110 = vmatpush.msra.mxu0 %v6475
        %7111 = vmatpush.msra.mxu0 %v5906
        %7112 = vmatpush.msra.mxu0 %v5905
        %7113 = vmatpush.msra.mxu0 %v5904
        %7114 = vmatpush.msra.mxu0 %v5903
        %7115 = vmatpush.msra.mxu0 %v5902
        %7116 = vmatpush.msra.mxu0 %v5397
        %7117 = vmatpush.msra.mxu0 %v5396
        %7118 = vmatpush.msra.mxu0 %v5395
        %7119 = vmatpush.msra.mxu0 %v5394
        %7120 = vmatpush.msra.mxu0 %v5393
        %7121 = vmatpush.msra.mxu0 %v4824
        %7122 = vmatpush.msra.mxu0 %v4823
        %7123 = vmatpush.msra.mxu0 %v4822
        %7124 = vmatpush.msra.mxu0 %v4821
        %7125 = vmatpush.msra.mxu0 %v4820
        %7126 = vmatmul.f32.gmra.mxu0 %v303
        %v7127 = vpop.f32.mrf.mxu0
        %v7128 = vadd.f32 %v3209, %v7127
        %7129 = vmatmul.f32.gmra.mxu0 %v305
        %v7130 = vpop.f32.mrf.mxu0
        %v7131 = vadd.f32 %v3214, %v7130
        %7132 = vmatmul.f32.gmra.mxu0 %v307
        %v7133 = vpop.f32.mrf.mxu0
        %v7134 = vadd.f32 %v3219, %v7133
        %7135 = vmatmul.f32.gmra.mxu0 %v309
        %v7136 = vpop.f32.mrf.mxu0
        %v7137 = vadd.f32 %v3224, %v7136
        %7138 = vdwg.mxu0
        %7139 = vmatpush.msra.mxu0 0.0
        %7140 = vmatpush.msra.mxu0 0.0
        %7141 = vmatpush.msra.mxu0 0.0
        %7142 = vmatpush.msra.mxu0 0.0
        %7143 = vmatpush.msra.mxu0 0.0
        %7144 = vmatpush.msra.mxu0 0.0
        %7145 = vmatpush.msra.mxu0 0.0
        %7146 = vmatpush.msra.mxu0 %v6988
        %7147 = vmatpush.msra.mxu0 %v6987
        %7148 = vmatpush.msra.mxu0 %v6986
        %7149 = vmatpush.msra.mxu0 %v6985
        %7150 = vmatpush.msra.mxu0 %v6984
        %7151 = vmatpush.msra.mxu0 %v6479
        %7152 = vmatpush.msra.mxu0 %v6478
        %7153 = vmatpush.msra.mxu0 %v6477
        %7154 = vmatpush.msra.mxu0 %v6476
        %7155 = vmatmul.f32.gmra.mxu0 %v3228
        %v7156 = vpop.f32.mrf.mxu0
        %v7157 = vadd.f32 %v7128, %v7156
        %7158 = vmatmul.f32.gmra.mxu0 %v3231
        %v7159 = vpop.f32.mrf.mxu0
        %v7160 = vadd.f32 %v7131, %v7159
        %7161 = vmatmul.f32.gmra.mxu0 %v3234
        %v7162 = vpop.f32.mrf.mxu0
        %v7163 = vadd.f32 %v7134, %v7162
        %7164 = vmatmul.f32.gmra.mxu0 %v3237
        %v7165 = vpop.f32.mrf.mxu0
        %v7166 = vadd.f32 %v7137, %v7165
        %7167 = vdwg.mxu0
        %7168 = vmatpush.msra.mxu0 %v6476
        %7169 = vmatpush.msra.mxu0 %v5907
        %7170 = vmatpush.msra.mxu0 %v5906
        %7171 = vmatpush.msra.mxu0 %v5905
        %7172 = vmatpush.msra.mxu0 %v5904
        %7173 = vmatpush.msra.mxu0 %v5903
        %7174 = vmatpush.msra.mxu0 %v5398
        %7175 = vmatpush.msra.mxu0 %v5397
        %7176 = vmatpush.msra.mxu0 %v5396
        %7177 = vmatpush.msra.mxu0 %v5395
        %7178 = vmatpush.msra.mxu0 %v5394
        %7179 = vmatpush.msra.mxu0 %v4825
        %7180 = vmatpush.msra.mxu0 %v4824
        %7181 = vmatpush.msra.mxu0 %v4823
        %7182 = vmatpush.msra.mxu0 %v4822
        %7183 = vmatpush.msra.mxu0 %v4821
        %7184 = vmatmul.f32.gmra.mxu0 %v303
        %v7185 = vpop.f32.mrf.mxu0
        %v7186 = vadd.f32 %v3209, %v7185
        %7187 = vmatmul.f32.gmra.mxu0 %v305
        %v7188 = vpop.f32.mrf.mxu0
        %v7189 = vadd.f32 %v3214, %v7188
        %7190 = vmatmul.f32.gmra.mxu0 %v307
        %v7191 = vpop.f32.mrf.mxu0
        %v7192 = vadd.f32 %v3219, %v7191
        %7193 = vmatmul.f32.gmra.mxu0 %v309
        %v7194 = vpop.f32.mrf.mxu0
        %v7195 = vadd.f32 %v3224, %v7194
        %7196 = vdwg.mxu0
        %7197 = vmatpush.msra.mxu0 0.0
        %7198 = vmatpush.msra.mxu0 0.0
        %7199 = vmatpush.msra.mxu0 0.0
        %7200 = vmatpush.msra.mxu0 0.0
        %7201 = vmatpush.msra.mxu0 0.0
        %7202 = vmatpush.msra.mxu0 0.0
        %7203 = vmatpush.msra.mxu0 0.0
        %7204 = vmatpush.msra.mxu0 %v6989
        %7205 = vmatpush.msra.mxu0 %v6988
        %7206 = vmatpush.msra.mxu0 %v6987
        %7207 = vmatpush.msra.mxu0 %v6986
        %7208 = vmatpush.msra.mxu0 %v6985
        %7209 = vmatpush.msra.mxu0 %v6480
        %7210 = vmatpush.msra.mxu0 %v6479
        %7211 = vmatpush.msra.mxu0 %v6478
        %7212 = vmatpush.msra.mxu0 %v6477
        %7213 = vmatmul.f32.gmra.mxu0 %v3228
        %v7214 = vpop.f32.mrf.mxu0
        %v7215 = vadd.f32 %v7186, %v7214
        %7216 = vmatmul.f32.gmra.mxu0 %v3231
        %v7217 = vpop.f32.mrf.mxu0
        %v7218 = vadd.f32 %v7189, %v7217
        %7219 = vmatmul.f32.gmra.mxu0 %v3234
        %v7220 = vpop.f32.mrf.mxu0
        %v7221 = vadd.f32 %v7192, %v7220
        %7222 = vmatmul.f32.gmra.mxu0 %v3237
        %v7223 = vpop.f32.mrf.mxu0
        %v7224 = vadd.f32 %v7195, %v7223
        %7225 = vdwg.mxu0
        %7226 = vmatpush.msra.mxu0 %v6477
        %7227 = vmatpush.msra.mxu0 %v5908
        %7228 = vmatpush.msra.mxu0 %v5907
        %7229 = vmatpush.msra.mxu0 %v5906
        %7230 = vmatpush.msra.mxu0 %v5905
        %7231 = vmatpush.msra.mxu0 %v5904
        %7232 = vmatpush.msra.mxu0 %v5399
        %7233 = vmatpush.msra.mxu0 %v5398
        %7234 = vmatpush.msra.mxu0 %v5397
        %7235 = vmatpush.msra.mxu0 %v5396
        %7236 = vmatpush.msra.mxu0 %v5395
        %7237 = vmatpush.msra.mxu0 %v4826
        %7238 = vmatpush.msra.mxu0 %v4825
        %7239 = vmatpush.msra.mxu0 %v4824
        %7240 = vmatpush.msra.mxu0 %v4823
        %7241 = vmatpush.msra.mxu0 %v4822
        %7242 = vmatmul.f32.gmra.mxu0 %v303
        %v7243 = vpop.f32.mrf.mxu0
        %v7244 = vadd.f32 %v3209, %v7243
        %7245 = vmatmul.f32.gmra.mxu0 %v305
        %v7246 = vpop.f32.mrf.mxu0
        %v7247 = vadd.f32 %v3214, %v7246
        %7248 = vmatmul.f32.gmra.mxu0 %v307
        %v7249 = vpop.f32.mrf.mxu0
        %v7250 = vadd.f32 %v3219, %v7249
        %7251 = vmatmul.f32.gmra.mxu0 %v309
        %v7252 = vpop.f32.mrf.mxu0
        %v7253 = vadd.f32 %v3224, %v7252
        %7254 = vdwg.mxu0
        %7255 = vmatpush.msra.mxu0 0.0
        %7256 = vmatpush.msra.mxu0 0.0
        %7257 = vmatpush.msra.mxu0 0.0
        %7258 = vmatpush.msra.mxu0 0.0
        %7259 = vmatpush.msra.mxu0 0.0
        %7260 = vmatpush.msra.mxu0 0.0
        %7261 = vmatpush.msra.mxu0 0.0
        %7262 = vmatpush.msra.mxu0 %v6990
        %7263 = vmatpush.msra.mxu0 %v6989
        %7264 = vmatpush.msra.mxu0 %v6988
        %7265 = vmatpush.msra.mxu0 %v6987
        %7266 = vmatpush.msra.mxu0 %v6986
        %7267 = vmatpush.msra.mxu0 %v6481
        %7268 = vmatpush.msra.mxu0 %v6480
        %7269 = vmatpush.msra.mxu0 %v6479
        %7270 = vmatpush.msra.mxu0 %v6478
        %7271 = vmatmul.f32.gmra.mxu0 %v3228
        %v7272 = vpop.f32.mrf.mxu0
        %v7273 = vadd.f32 %v7244, %v7272
        %7274 = vmatmul.f32.gmra.mxu0 %v3231
        %v7275 = vpop.f32.mrf.mxu0
        %v7276 = vadd.f32 %v7247, %v7275
        %7277 = vmatmul.f32.gmra.mxu0 %v3234
        %v7278 = vpop.f32.mrf.mxu0
        %v7279 = vadd.f32 %v7250, %v7278
        %7280 = vmatmul.f32.gmra.mxu0 %v3237
        %v7281 = vpop.f32.mrf.mxu0
        %v7282 = vadd.f32 %v7253, %v7281
        %7283 = vdwg.mxu0
        %7284 = vmatpush.msra.mxu0 %v6478
        %7285 = vmatpush.msra.mxu0 %v5909
        %7286 = vmatpush.msra.mxu0 %v5908
        %7287 = vmatpush.msra.mxu0 %v5907
        %7288 = vmatpush.msra.mxu0 %v5906
        %7289 = vmatpush.msra.mxu0 %v5905
        %7290 = vmatpush.msra.mxu0 %v5400
        %7291 = vmatpush.msra.mxu0 %v5399
        %7292 = vmatpush.msra.mxu0 %v5398
        %7293 = vmatpush.msra.mxu0 %v5397
        %7294 = vmatpush.msra.mxu0 %v5396
        %7295 = vmatpush.msra.mxu0 %v4827
        %7296 = vmatpush.msra.mxu0 %v4826
        %7297 = vmatpush.msra.mxu0 %v4825
        %7298 = vmatpush.msra.mxu0 %v4824
        %7299 = vmatpush.msra.mxu0 %v4823
        %7300 = vmatmul.f32.gmra.mxu0 %v303
        %v7301 = vpop.f32.mrf.mxu0
        %v7302 = vadd.f32 %v3209, %v7301
        %7303 = vmatmul.f32.gmra.mxu0 %v305
        %v7304 = vpop.f32.mrf.mxu0
        %v7305 = vadd.f32 %v3214, %v7304
        %7306 = vmatmul.f32.gmra.mxu0 %v307
        %v7307 = vpop.f32.mrf.mxu0
        %v7308 = vadd.f32 %v3219, %v7307
        %7309 = vmatmul.f32.gmra.mxu0 %v309
        %v7310 = vpop.f32.mrf.mxu0
        %v7311 = vadd.f32 %v3224, %v7310
        %7312 = vdwg.mxu0
        %7313 = vmatpush.msra.mxu0 0.0
        %7314 = vmatpush.msra.mxu0 0.0
        %7315 = vmatpush.msra.mxu0 0.0
        %7316 = vmatpush.msra.mxu0 0.0
        %7317 = vmatpush.msra.mxu0 0.0
        %7318 = vmatpush.msra.mxu0 0.0
        %7319 = vmatpush.msra.mxu0 0.0
        %7320 = vmatpush.msra.mxu0 %v6991
        %7321 = vmatpush.msra.mxu0 %v6990
        %7322 = vmatpush.msra.mxu0 %v6989
        %7323 = vmatpush.msra.mxu0 %v6988
        %7324 = vmatpush.msra.mxu0 %v6987
        %7325 = vmatpush.msra.mxu0 %v6482
        %7326 = vmatpush.msra.mxu0 %v6481
        %7327 = vmatpush.msra.mxu0 %v6480
        %7328 = vmatpush.msra.mxu0 %v6479
        %7329 = vmatmul.f32.gmra.mxu0 %v3228
        %v7330 = vpop.f32.mrf.mxu0
        %v7331 = vadd.f32 %v7302, %v7330
        %7332 = vmatmul.f32.gmra.mxu0 %v3231
        %v7333 = vpop.f32.mrf.mxu0
        %v7334 = vadd.f32 %v7305, %v7333
        %7335 = vmatmul.f32.gmra.mxu0 %v3234
        %v7336 = vpop.f32.mrf.mxu0
        %v7337 = vadd.f32 %v7308, %v7336
        %7338 = vmatmul.f32.gmra.mxu0 %v3237
        %v7339 = vpop.f32.mrf.mxu0
        %v7340 = vadd.f32 %v7311, %v7339
        %7341 = vdwg.mxu0
        %7342 = vmatpush.msra.mxu0 %v6479
        %7343 = vmatpush.msra.mxu0 %v5910
        %7344 = vmatpush.msra.mxu0 %v5909
        %7345 = vmatpush.msra.mxu0 %v5908
        %7346 = vmatpush.msra.mxu0 %v5907
        %7347 = vmatpush.msra.mxu0 %v5906
        %7348 = vmatpush.msra.mxu0 %v5401
        %7349 = vmatpush.msra.mxu0 %v5400
        %7350 = vmatpush.msra.mxu0 %v5399
        %7351 = vmatpush.msra.mxu0 %v5398
        %7352 = vmatpush.msra.mxu0 %v5397
        %7353 = vmatpush.msra.mxu0 %v4828
        %7354 = vmatpush.msra.mxu0 %v4827
        %7355 = vmatpush.msra.mxu0 %v4826
        %7356 = vmatpush.msra.mxu0 %v4825
        %7357 = vmatpush.msra.mxu0 %v4824
        %7358 = vmatmul.f32.gmra.mxu0 %v303
        %v7359 = vpop.f32.mrf.mxu0
        %v7360 = vadd.f32 %v3209, %v7359
        %7361 = vmatmul.f32.gmra.mxu0 %v305
        %v7362 = vpop.f32.mrf.mxu0
        %v7363 = vadd.f32 %v3214, %v7362
        %7364 = vmatmul.f32.gmra.mxu0 %v307
        %v7365 = vpop.f32.mrf.mxu0
        %v7366 = vadd.f32 %v3219, %v7365
        %7367 = vmatmul.f32.gmra.mxu0 %v309
        %v7368 = vpop.f32.mrf.mxu0
        %v7369 = vadd.f32 %v3224, %v7368
        %7370 = vdwg.mxu0
        %7371 = vmatpush.msra.mxu0 0.0
        %7372 = vmatpush.msra.mxu0 0.0
        %7373 = vmatpush.msra.mxu0 0.0
        %7374 = vmatpush.msra.mxu0 0.0
        %7375 = vmatpush.msra.mxu0 0.0
        %7376 = vmatpush.msra.mxu0 0.0
        %7377 = vmatpush.msra.mxu0 0.0
        %7378 = vmatpush.msra.mxu0 %v6992
        %7379 = vmatpush.msra.mxu0 %v6991
        %7380 = vmatpush.msra.mxu0 %v6990
        %7381 = vmatpush.msra.mxu0 %v6989
        %7382 = vmatpush.msra.mxu0 %v6988
        %7383 = vmatpush.msra.mxu0 %v6483
        %7384 = vmatpush.msra.mxu0 %v6482
        %7385 = vmatpush.msra.mxu0 %v6481
        %7386 = vmatpush.msra.mxu0 %v6480
        %7387 = vmatmul.f32.gmra.mxu0 %v3228
        %v7388 = vpop.f32.mrf.mxu0
        %v7389 = vadd.f32 %v7360, %v7388
        %7390 = vmatmul.f32.gmra.mxu0 %v3231
        %v7391 = vpop.f32.mrf.mxu0
        %v7392 = vadd.f32 %v7363, %v7391
        %7393 = vmatmul.f32.gmra.mxu0 %v3234
        %v7394 = vpop.f32.mrf.mxu0
        %v7395 = vadd.f32 %v7366, %v7394
        %7396 = vmatmul.f32.gmra.mxu0 %v3237
        %v7397 = vpop.f32.mrf.mxu0
        %v7398 = vadd.f32 %v7369, %v7397
        %7399 = vdwg.mxu0
        %7400 = vmatpush.msra.mxu0 %v6480
        %7401 = vmatpush.msra.mxu0 %v5911
        %7402 = vmatpush.msra.mxu0 %v5910
        %7403 = vmatpush.msra.mxu0 %v5909
        %7404 = vmatpush.msra.mxu0 %v5908
        %7405 = vmatpush.msra.mxu0 %v5907
        %7406 = vmatpush.msra.mxu0 %v5402
        %7407 = vmatpush.msra.mxu0 %v5401
        %7408 = vmatpush.msra.mxu0 %v5400
        %7409 = vmatpush.msra.mxu0 %v5399
        %7410 = vmatpush.msra.mxu0 %v5398
        %7411 = vmatpush.msra.mxu0 %v4829
        %7412 = vmatpush.msra.mxu0 %v4828
        %7413 = vmatpush.msra.mxu0 %v4827
        %7414 = vmatpush.msra.mxu0 %v4826
        %7415 = vmatpush.msra.mxu0 %v4825
        %7416 = vmatmul.f32.gmra.mxu0 %v303
        %v7417 = vpop.f32.mrf.mxu0
        %v7418 = vadd.f32 %v3209, %v7417
        %7419 = vmatmul.f32.gmra.mxu0 %v305
        %v7420 = vpop.f32.mrf.mxu0
        %v7421 = vadd.f32 %v3214, %v7420
        %7422 = vmatmul.f32.gmra.mxu0 %v307
        %v7423 = vpop.f32.mrf.mxu0
        %v7424 = vadd.f32 %v3219, %v7423
        %7425 = vmatmul.f32.gmra.mxu0 %v309
        %v7426 = vpop.f32.mrf.mxu0
        %v7427 = vadd.f32 %v3224, %v7426
        %7428 = vdwg.mxu0
        %7429 = vmatpush.msra.mxu0 0.0
        %7430 = vmatpush.msra.mxu0 0.0
        %7431 = vmatpush.msra.mxu0 0.0
        %7432 = vmatpush.msra.mxu0 0.0
        %7433 = vmatpush.msra.mxu0 0.0
        %7434 = vmatpush.msra.mxu0 0.0
        %7435 = vmatpush.msra.mxu0 0.0
        %7436 = vmatpush.msra.mxu0 %v6993
        %7437 = vmatpush.msra.mxu0 %v6992
        %7438 = vmatpush.msra.mxu0 %v6991
        %7439 = vmatpush.msra.mxu0 %v6990
        %7440 = vmatpush.msra.mxu0 %v6989
        %7441 = vmatpush.msra.mxu0 %v6484
        %7442 = vmatpush.msra.mxu0 %v6483
        %7443 = vmatpush.msra.mxu0 %v6482
        %7444 = vmatpush.msra.mxu0 %v6481
        %7445 = vmatmul.f32.gmra.mxu0 %v3228
        %v7446 = vpop.f32.mrf.mxu0
        %v7447 = vadd.f32 %v7418, %v7446
        %7448 = vmatmul.f32.gmra.mxu0 %v3231
        %v7449 = vpop.f32.mrf.mxu0
        %v7450 = vadd.f32 %v7421, %v7449
        %7451 = vmatmul.f32.gmra.mxu0 %v3234
        %v7452 = vpop.f32.mrf.mxu0
        %v7453 = vadd.f32 %v7424, %v7452
        %7454 = vmatmul.f32.gmra.mxu0 %v3237
        %v7455 = vpop.f32.mrf.mxu0
        %v7456 = vadd.f32 %v7427, %v7455
        %7457 = vdwg.mxu0
        %v7458 = vmax.f32 %v7041, 0.0
        %v7459 = vmax.f32 %v7099, 0.0
        %v7460 = vmax.f32 %v7157, 0.0
        %v7461 = vmax.f32 %v7215, 0.0
        %v7462 = vmax.f32 %v7273, 0.0
        %v7463 = vmax.f32 %v7331, 0.0
        %v7464 = vmax.f32 %v7389, 0.0
        %v7465 = vmax.f32 %v7447, 0.0
        %v7466 = vmax.f32 %v7044, 0.0
        %v7467 = vmax.f32 %v7102, 0.0
        %v7468 = vmax.f32 %v7160, 0.0
        %v7469 = vmax.f32 %v7218, 0.0
        %v7470 = vmax.f32 %v7276, 0.0
        %v7471 = vmax.f32 %v7334, 0.0
        %v7472 = vmax.f32 %v7392, 0.0
        %v7473 = vmax.f32 %v7450, 0.0
        %v7474 = vmax.f32 %v7047, 0.0
        %v7475 = vmax.f32 %v7105, 0.0
        %v7476 = vmax.f32 %v7163, 0.0
        %v7477 = vmax.f32 %v7221, 0.0
        %v7478 = vmax.f32 %v7279, 0.0
        %v7479 = vmax.f32 %v7337, 0.0
        %v7480 = vmax.f32 %v7395, 0.0
        %v7481 = vmax.f32 %v7453, 0.0
        %v7482 = vmax.f32 %v7050, 0.0
        %v7483 = vmax.f32 %v7108, 0.0
        %v7484 = vmax.f32 %v7166, 0.0
        %v7485 = vmax.f32 %v7224, 0.0
        %v7486 = vmax.f32 %v7282, 0.0
        %v7487 = vmax.f32 %v7340, 0.0
        %v7488 = vmax.f32 %v7398, 0.0
        %v7489 = vmax.f32 %v7456, 0.0
        %v7490 = vmax.f32 %v6949, %v7458
        %v7491 = vmax.f32 %v6950, %v7459
        %v7492 = vmax.f32 %v6951, %v7460
        %v7493 = vmax.f32 %v6952, %v7461
        %v7494 = vmax.f32 %v6953, %v7462
        %v7495 = vmax.f32 %v6954, %v7463
        %v7496 = vmax.f32 %v6955, %v7464
        %v7497 = vmax.f32 %v6956, %v7465
        %v7498 = vmax.f32 %v6957, %v7466
        %v7499 = vmax.f32 %v6958, %v7467
        %v7500 = vmax.f32 %v6959, %v7468
        %v7501 = vmax.f32 %v6960, %v7469
        %v7502 = vmax.f32 %v6961, %v7470
        %v7503 = vmax.f32 %v6962, %v7471
        %v7504 = vmax.f32 %v6963, %v7472
        %v7505 = vmax.f32 %v6964, %v7473
        %v7506 = vmax.f32 %v6965, %v7474
        %v7507 = vmax.f32 %v6966, %v7475
        %v7508 = vmax.f32 %v6967, %v7476
        %v7509 = vmax.f32 %v6968, %v7477
        %v7510 = vmax.f32 %v6969, %v7478
        %v7511 = vmax.f32 %v6970, %v7479
        %v7512 = vmax.f32 %v6971, %v7480
        %v7513 = vmax.f32 %v6972, %v7481
        %v7514 = vmax.f32 %v6973, %v7482
        %v7515 = vmax.f32 %v6974, %v7483
        %v7516 = vmax.f32 %v6975, %v7484
        %v7517 = vmax.f32 %v6976, %v7485
        %v7518 = vmax.f32 %v6977, %v7486
        %v7519 = vmax.f32 %v6978, %v7487
        %v7520 = vmax.f32 %v6979, %v7488
        %v7521 = vmax.f32 %v6980, %v7489
        %v7522 = vmax.f32 %v7490, %v7491
        %v7523 = vmax.f32 %v7498, %v7499
        %v7524 = vmax.f32 %v7506, %v7507
        %v7525 = vmax.f32 %v7514, %v7515
        %v7526 = vadd.f32 %v6468, %v7522
        %v7527 = vadd.f32 %v6469, %v7523
        %v7528 = vadd.f32 %v6470, %v7524
        %v7529 = vadd.f32 %v6471, %v7525
        %v7530 = vmax.f32 %v7492, %v7493
        %v7531 = vmax.f32 %v7500, %v7501
        %v7532 = vmax.f32 %v7508, %v7509
        %v7533 = vmax.f32 %v7516, %v7517
        %v7534 = vadd.f32 %v7526, %v7530
        %v7535 = vadd.f32 %v7527, %v7531
        %v7536 = vadd.f32 %v7528, %v7532
        %v7537 = vadd.f32 %v7529, %v7533
        %v7538 = vmax.f32 %v7494, %v7495
        %v7539 = vmax.f32 %v7502, %v7503
        %v7540 = vmax.f32 %v7510, %v7511
        %v7541 = vmax.f32 %v7518, %v7519
        %v7542 = vadd.f32 %v7534, %v7538
        %v7543 = vadd.f32 %v7535, %v7539
        %v7544 = vadd.f32 %v7536, %v7540
        %v7545 = vadd.f32 %v7537, %v7541
        %v7546 = vmax.f32 %v7496, %v7497
        %v7547 = vmax.f32 %v7504, %v7505
        %v7548 = vmax.f32 %v7512, %v7513
        %v7549 = vmax.f32 %v7520, %v7521
        %v7550 = vadd.f32 %v7542, %v7546
        %v7551 = vadd.f32 %v7543, %v7547
        %v7552 = vadd.f32 %v7544, %v7548
        %v7553 = vadd.f32 %v7545, %v7549
        %v7554 = vmul.f32 %v7550, 0.0625
        %v7555 = vmul.f32 %v7551, 0.0625
        %v7556 = vmul.f32 %v7552, 0.0625
        %v7557 = vmul.f32 %v7553, 0.0625
        %v7558 = vld [vmem:[%s5] sm:$0xff]
        %v7559 = vld [vmem:[%s5 + $0x8] sm:$0x3]
        %v7560 = vld [vmem:[%s6] sm:$0xff]
        %v7561 = vld [vmem:[%s6 + $0x8] sm:$0x3]
        %7563 = vset.pattern.permute.xlu0 0
        %7564 = vperm.xlu0 %7563, %v7560
        %v7565 = vpop.permute.xlu0 %7564
        %7568 = vset.pattern.permute.xlu0 0
        %7569 = vperm.xlu0 %7568, %v7561
        %v7570 = vpop.permute.xlu0 %7569
        %vm7572 = vcmask 261120
        %v7574 = vsel %vm7572, %v7558, 0
        %v7577 = vsel %vm7572, %v7559, 0
        %7579 = vmatpush.msra.mxu0 0.0
        %7580 = vmatpush.msra.mxu0 0.0
        %7581 = vmatpush.msra.mxu0 0.0
        %7582 = vmatpush.msra.mxu0 0.0
        %7583 = vmatpush.msra.mxu0 0.0
        %7584 = vmatpush.msra.mxu0 0.0
        %7585 = vmatpush.msra.mxu0 0.0
        %7586 = vmatpush.msra.mxu0 0.0
        %7587 = vmatpush.msra.mxu0 0.0
        %7588 = vmatpush.msra.mxu0 0.0
        %7589 = vmatpush.msra.mxu0 0.0
        %7590 = vmatpush.msra.mxu0 0.0
        %7591 = vmatpush.msra.mxu0 %v7557
        %7592 = vmatpush.msra.mxu0 %v7556
        %7593 = vmatpush.msra.mxu0 %v7555
        %7594 = vmatpush.msra.mxu0 %v7554
        %7595 = vmatmul.f32.gmra.mxu0 %v7574
        %v7596 = vpop.f32.mrf.mxu0
        %v7597 = vadd.f32 %v7565, %v7596
        %7598 = vmatmul.f32.gmra.mxu0 %v7577
        %v7599 = vpop.f32.mrf.mxu0
        %v7600 = vadd.f32 %v7570, %v7599
        %7601 = vdwg.mxu0
        %7602 = vst [vmem:[%s271] sm:$0xff] %v7597
        %7603 = vst [vmem:[%s271 + $0x8] sm:$0x3] %v7600
        %s7604 = sand.u32 %s181, 1
        %s7605 = scalar_lea.sflag [#allocation4], %s7604
        %s7606 = sand.u32 %s181, 1
        %s7607 = smul.addr %s7606, 16
        %s7608 = scalar_lea.vmem [#allocation3], %s7607
        // Predicated region
        $region56: #{net_forward.1} parent=47 // pred_check
          %p7609 = pneg %p191
        $region57: #{net_forward.1} parent=47 // pred_check_branch
          %7611 = sbr.rel (%p7609) target = $region59
        $region58: #{net_forward.1} parent=47 // pred_region
          %7613 = vsyncadd %s7605, 0
          %s7614 = smul.addr %s21, 8
          %s7615 = scalar_lea.hbm %s7, %s7614
          %s7616 = sshll.u32 %s7608, 4
          %s7617 = int_to_ptr.vmem [resolvable:$true] %s7616
          %s7618 = sshll.u32 %s7615, 4
          %s7619 = int_to_ptr.hbm [resolvable:$true] %s7618
          %7624 = dma.vmem_to_hbm [thread:$0]  %s7617, 256, %s7619, %s7605, 128, 256, 8
        $region59: #{net_forward.1} parent=47 // pred_fallthru
          _
      $region48: #{net_forward.1} parent=5 // pred_fallthru
        _
      %p7625 = scmp.le.s32.totalorder 2, %s16
      // Predicated region
      $region60: #{net_forward.1} parent=5 // pred_check
        %p7626 = pneg %p7625
      $region61: #{net_forward.1} parent=5 // pred_check_branch
        %7628 = sbr.rel (%p7626) target = $region63
      $region62: #{net_forward.1} parent=5 // pred_region
        %s7629 = ssub.s32 %s16, 2
        // Predicated region
        $region64: #{net_forward.1} parent=62 // pred_check
          %p7630 = pneg %p197
        $region65: #{net_forward.1} parent=62 // pred_check_branch
          %7632 = sbr.rel (%p7630) target = $region67
        $region66: #{net_forward.1} parent=62 // pred_region
          %s7633 = sand.u32 %s182, 1
          %s7634 = scalar_lea.sflag [#allocation4], %s7633
          %s7635 = sand.u32 %s182, 1
          %s7636 = smul.addr %s7635, 16
          %s7637 = scalar_lea.vmem [#allocation3], %s7636
          %7639 = dma.done %s7634, 256
        $region67: #{net_forward.1} parent=62 // pred_fallthru
          _
      $region63: #{net_forward.1} parent=5 // pred_fallthru
        _
    $region6: #{net_forward.1} parent=1 // loop_footer
      %s20 = sadd.s32 1, %s16
    $region7: #{net_forward.1} parent=1 // loop_footer_branch
      %15 = sbr.rel target = $region3
    $region8: #{net_forward.1} parent=1 // loop_exit
      _
    %7640 = vsyncpa [#allocation4], 1
    %s7641 = scalar_lea.sflag [#allocation4], 1
    %7642 = vsyncpa %s7641, 1

</llo_original>
